<compile_context>
chip_gen: v7x
topology: tpu7x:2x2x1
jax: 0.10.0
libtpu: 0.0.40
codegen_flags: <defaults>
</compile_context>

<pallas_src>
from functools import partial

import jax
import jax.numpy as jnp
from jax.experimental import pallas as pl
from jax.experimental.pallas import tpu as pltpu


# ----------------------------------------------------------------------------
# Fused kernel
# ----------------------------------------------------------------------------
def _fsrcnn_kernel(x_ref,
                   fe_w, fe_b, sh_w, sh_b,
                   m1_w, m1_b, m2_w, m2_b, m3_w, m3_b,
                   ex_w, ex_b, dc_w, dc_b,
                   o_ref,
                   c56, c12a, c12b, imcol,
                   *, H, W, WP, OFF):
    WIN = H * WP                      # flattened window (multiple of 128 lanes)
    CLEN = c56.shape[1]               # canvas length (window + zero halo)

    # Zero ONLY the canvas borders (outside [OFF, OFF+WIN)); the interior is
    # fully overwritten (masked) by every layer.  Done every grid step because
    # each TensorCore owns its scratch under "parallel" semantics.
    for c in (c56, c12a, c12b):
        cc = c.shape[0]
        c[:, :OFF] = jnp.zeros((cc, OFF), c.dtype)
        c[:, OFF + WIN:] = jnp.zeros((cc, CLEN - OFF - WIN), c.dtype)

    # Interior-column mask: lane m of the window is image column (m % WP); the
    # pad columns [W, WP) must be re-zeroed so the next layer's shifted taps
    # still see a zero halo between rows.
    col = jax.lax.broadcasted_iota(jnp.int32, (1, WIN), 1) % WP
    interior = col < W                                     # (1, WIN) bool

    def epilogue(acc, b_ref, relu, dst):
        # f32 bias + fused (ReLU & pad-mask) select, cast to bf16 on store.
        y = acc + b_ref[...]
        keep = (interior & (y > 0.0)) if relu else interior
        dst[:, OFF:OFF + WIN] = jnp.where(keep, y, 0.0).astype(dst.dtype)

    def conv_kxk(src, K, pad, w_ref, b_ref, relu, dst):
        """KxK 'same' conv as ONE fat MXU dot via a mini im2col in VMEM."""
        cin = src.shape[0]
        rows = 0
        for dy in range(K):
            for dx in range(K):
                start = OFF + (dy - pad) * WP + (dx - pad)
                imcol[rows:rows + cin, :] = src[:, start:start + WIN]
                rows += cin
        acc = jnp.dot(w_ref[...], imcol[:rows, :],
                      preferred_element_type=jnp.float32)
        epilogue(acc, b_ref, relu, dst)

    def conv_1x1(src, w_ref, b_ref, relu, dst):
        acc = jnp.dot(w_ref[...], src[:, OFF:OFF + WIN],
                      preferred_element_type=jnp.float32)
        epilogue(acc, b_ref, relu, dst)

    conv_kxk(x_ref, 5, 2, fe_w, fe_b, True, c56)     # feature_extraction + relu
    conv_1x1(c56, sh_w, sh_b, True, c12a)            # shrinking + relu
    conv_kxk(c12a, 3, 1, m1_w, m1_b, True, c12b)     # mapping[0] + relu
    conv_kxk(c12b, 3, 1, m2_w, m2_b, True, c12a)     # mapping[2] + relu
    conv_kxk(c12a, 3, 1, m3_w, m3_b, False, c12b)    # mapping[4] (no relu)
    conv_1x1(c12b, ex_w, ex_b, True, c56)            # expanding + relu

    # Polyphase ConvTranspose2d(k=9, s=2, p=4): 25 taps, all 4 output phases
    # fused into a single (12, 56) weight per tap -> one (12, WIN) accumulator
    # initialized from the first tap's dot (no zeros+add chain).
    base = OFF - 2 * WP - 2
    acc = jnp.dot(dc_w[0], c56[:, base:base + WIN],
                  preferred_element_type=jnp.float32)
    for t in range(1, 25):
        start = base + (t // 5) * WP + (t % 5)
        acc = acc + jnp.dot(dc_w[t], c56[:, start:start + WIN],
                            preferred_element_type=jnp.float32)
    o_ref[...] = acc + dc_b[...]


# ----------------------------------------------------------------------------
# Wrapper (one pallas_call for the whole network)
# ----------------------------------------------------------------------------
def fsrcnn_pallas(x_nchw, kp):
    """x_nchw: (N, 3, H, W) f32.  Returns (N, 3, 2H-1, 2W-1) f32 (NCHW)."""
    N, C, H, W = x_nchw.shape
    assert C == 3
    CIN = 4                                    # input channels padded to 4

    # Lane pitch: >= W+4 (2-pixel halo on each side of every image row in the
    # flattened layout) and chosen so H*WP is a multiple of 128 (full vregs).
    WP = W + 4
    for extra in range(128):
        if (H * (W + 4 + extra)) % 128 == 0:
            WP = W + 4 + extra
            break
    WIN = H * WP
    OFF = ((2 * WP + 2 + 127) // 128) * 128    # lane-aligned image origin
    CLEN = OFF + WIN + 2 * WP + 2              # covers every tap's window

    # Single input pad into the flat zero-bordered canvas layout; cast to bf16
    # (MXU-native operand dtype on v5e/v6e/v7x).
    xr = jnp.pad(x_nchw, ((0, 0), (0, CIN - C), (0, 0), (0, WP - W)))
    xr = xr.reshape(N, CIN, WIN)
    xp = jnp.pad(xr, ((0, 0), (0, 0), (OFF, CLEN - OFF - WIN))).astype(jnp.bfloat16)

    def _const(shape):
        return pl.BlockSpec(shape, lambda n: (0,) * len(shape))

    in_specs = [
        pl.BlockSpec((None, CIN, CLEN), lambda n: (n, 0, 0)),
        _const(kp["fe_w"].shape), _const(kp["fe_b"].shape),
        _const(kp["sh_w"].shape), _const(kp["sh_b"].shape),
        _const(kp["m1_w"].shape), _const(kp["m1_b"].shape),
        _const(kp["m2_w"].shape), _const(kp["m2_b"].shape),
        _const(kp["m3_w"].shape), _const(kp["m3_b"].shape),
        _const(kp["ex_w"].shape), _const(kp["ex_b"].shape),
        _const(kp["dc_w"].shape), _const(kp["dc_b"].shape),
    ]

    imrows = max(25 * CIN, 9 * 12)             # im2col rows: FE vs 3x3 mapping

    phases = pl.pallas_call(
        partial(_fsrcnn_kernel, H=H, W=W, WP=WP, OFF=OFF),
        out_shape=jax.ShapeDtypeStruct((N, 12, WIN), jnp.float32),
        grid=(N,),
        in_specs=in_specs,
        out_specs=pl.BlockSpec((None, 12, WIN), lambda n: (n, 0, 0)),
        scratch_shapes=[
            pltpu.VMEM((56, CLEN), jnp.bfloat16),     # FE / expand canvas
            pltpu.VMEM((12, CLEN), jnp.bfloat16),     # mapping ping
            pltpu.VMEM((12, CLEN), jnp.bfloat16),     # mapping pong
            pltpu.VMEM((imrows, WIN), jnp.bfloat16),  # shared im2col buffer
        ],
        compiler_params=pltpu.CompilerParams(
            dimension_semantics=("parallel",)),
    )(xp, kp["fe_w"], kp["fe_b"], kp["sh_w"], kp["sh_b"],
      kp["m1_w"], kp["m1_b"], kp["m2_w"], kp["m2_b"], kp["m3_w"], kp["m3_b"],
      kp["ex_w"], kp["ex_b"], kp["dc_w"], kp["dc_b"])

    # Pixel shuffle via transpose+reshape (no strided scatters):
    # kernel rows are ordered (r, s, c); window lane a*WP+b holds phase pixel
    # (2a+r, 2b+s).
    ph = phases.reshape(N, 2, 2, 3, H, WP)[..., :W]   # (n, r, s, c, a, b)
    out = jnp.transpose(ph, (0, 3, 4, 1, 5, 2))       # (n, c, a, r, b, s)
    out = out.reshape(N, 3, 2 * H, 2 * W)
    return out[:, :, :2 * H - 1, :2 * W - 1].astype(x_nchw.dtype)


# ----------------------------------------------------------------------------
# Parameters (PyTorch layouts) + one-time kernel re-layout
# ----------------------------------------------------------------------------
def init_params(key):
    def conv(k, cout, cin, ksz):
        kw_, kb_ = jax.random.split(k)
        fan_in = cin * ksz * ksz
        w = jax.random.normal(kw_, (cout, cin, ksz, ksz), jnp.float32) / jnp.sqrt(fan_in)
        b = 0.01 * jax.random.normal(kb_, (cout,), jnp.float32)
        return w, b

    ks = jax.random.split(key, 7)
    p = {}
    p["fe_w"], p["fe_b"] = conv(ks[0], 56, 3, 5)     # feature_extraction
    p["sh_w"], p["sh_b"] = conv(ks[1], 12, 56, 1)    # shrinking
    p["m1_w"], p["m1_b"] = conv(ks[2], 12, 12, 3)    # mapping[0]
    p["m2_w"], p["m2_b"] = conv(ks[3], 12, 12, 3)    # mapping[2]
    p["m3_w"], p["m3_b"] = conv(ks[4], 12, 12, 3)    # mapping[4]
    p["ex_w"], p["ex_b"] = conv(ks[5], 56, 12, 1)    # expanding
    kw_, kb_ = jax.random.split(ks[6])
    # PyTorch ConvTranspose2d layout: (Cin, Cout, kH, kW)
    p["dc_w"] = jax.random.normal(kw_, (56, 3, 9, 9), jnp.float32) / jnp.sqrt(56 * 81)
    p["dc_b"] = 0.01 * jax.random.normal(kb_, (3,), jnp.float32)
    return p


def prepare_kernel_params(p):
    """One-time re-layout of PyTorch-style params into kernel-friendly bf16 tensors."""
    bf = jnp.bfloat16

    def im2col_w(w, cin_pad):          # (Cout,Cin,K,K) -> (Cout, K*K*cin_pad)
        co, ci, kh, kw = w.shape
        wt = jnp.transpose(w, (2, 3, 1, 0))                    # (K,K,Cin,Cout)
        wt = jnp.pad(wt, ((0, 0), (0, 0), (0, cin_pad - ci), (0, 0)))
        return wt.reshape(kh * kw * cin_pad, co).T.astype(bf)

    def w1x1(w):                       # (Cout,Cin,1,1) -> (Cout,Cin)
        return w.reshape(w.shape[0], w.shape[1]).astype(bf)

    def bias(b):                       # (Cout,) -> (Cout,1) f32
        return b.reshape(-1, 1).astype(jnp.float32)

    # Polyphase decomposition of ConvTranspose2d(k=9, s=2, p=4), all 4 phases
    # fused along the output-row axis:
    #   dc_w[dy*5+dx][3*(2r+s)+co, ci] = W[ci, co, 8-2*dy+r, 8-2*dx+s]
    # (zero when the kernel index falls outside [0,9) -> encodes dy>=r, dx>=s).
    wdc = p["dc_w"]                                      # (56, 3, 9, 9)
    cin, cout = wdc.shape[0], wdc.shape[1]
    taps = []
    for dy in range(5):
        for dx in range(5):
            rows = []
            for r in range(2):
                for s in range(2):
                    kh, kw = 8 - 2 * dy + r, 8 - 2 * dx + s
                    if 0 <= kh < 9 and 0 <= kw < 9:
                        rows.append(wdc[:, :, kh, kw].T)             # (3, 56)
                    else:
                        rows.append(jnp.zeros((cout, cin), wdc.dtype))
            taps.append(jnp.concatenate(rows, axis=0))               # (12, 56)
    dc_w = jnp.stack(taps).astype(bf)                                # (25,12,56)

    return {
        "fe_w": im2col_w(p["fe_w"], 4),  "fe_b": bias(p["fe_b"]),
        "sh_w": w1x1(p["sh_w"]),         "sh_b": bias(p["sh_b"]),
        "m1_w": im2col_w(p["m1_w"], 12), "m1_b": bias(p["m1_b"]),
        "m2_w": im2col_w(p["m2_w"], 12), "m2_b": bias(p["m2_b"]),
        "m3_w": im2col_w(p["m3_w"], 12), "m3_b": bias(p["m3_b"]),
        "ex_w": w1x1(p["ex_w"]),         "ex_b": bias(p["ex_b"]),
        "dc_w": dc_w,                    "dc_b": jnp.tile(bias(p["dc_b"]), (4, 1)),
    }


# ----------------------------------------------------------------------------
# Pure-JAX reference (for correctness check)
# ----------------------------------------------------------------------------
def fsrcnn_reference(x, p):
    dn = ("NCHW", "OIHW", "NCHW")
    prec = jax.lax.Precision.HIGHEST

    def conv(x, w, b, pad):
        y = jax.lax.conv_general_dilated(x, w, (1, 1), [(pad, pad), (pad, pad)],
                                         dimension_numbers=dn, precision=prec)
        return y + b.reshape(1, -1, 1, 1)

    y = jax.nn.relu(conv(x, p["fe_w"], p["fe_b"], 2))
    y = jax.nn.relu(conv(y, p["sh_w"], p["sh_b"], 0))
    y = jax.nn.relu(conv(y, p["m1_w"], p["m1_b"], 1))
    y = jax.nn.relu(conv(y, p["m2_w"], p["m2_b"], 1))
    y = conv(y, p["m3_w"], p["m3_b"], 1)
    y = jax.nn.relu(conv(y, p["ex_w"], p["ex_b"], 0))
    # ConvTranspose2d(k=9, s=2, p=4) == dilated conv with flipped kernel, pad k-1-p.
    wf = jnp.transpose(p["dc_w"], (1, 0, 2, 3))[:, :, ::-1, ::-1]
    y = jax.lax.conv_general_dilated(y, wf, (1, 1), [(4, 4), (4, 4)],
                                     lhs_dilation=(2, 2), dimension_numbers=dn,
                                     precision=prec)
    return y + p["dc_b"].reshape(1, -1, 1, 1)


if __name__ == "__main__":
    key = jax.random.PRNGKey(0)
    k_x, k_p = jax.random.split(key)
    x = jax.random.normal(k_x, (2, 3, 16, 16), jnp.float32)   # NCHW like PyTorch
    params = init_params(k_p)
    kparams = prepare_kernel_params(params)                   # one-time re-layout

    fwd = jax.jit(fsrcnn_pallas)
    out = jax.block_until_ready(fwd(x, kparams))

    # ConvTranspose2d(k=9, s=2, p=4): Hout = (H-1)*2 - 8 + 9 = 2H - 1
    assert out.shape == (2, 3, 31, 31), out.shape
    assert bool(jnp.all(jnp.isfinite(out)))

    ref = fsrcnn_reference(x, params)
    rel_err = float(jnp.linalg.norm(out - ref) / jnp.linalg.norm(ref))
    # Tolerance deliberately re-baselined for bf16 MXU operands (~1e-2 noise);
    # structural / indexing bugs in this layout produce O(1) relative error.
    assert rel_err < 4e-2, rel_err

    print("KERNEL_OK")
</pallas_src>

<mosaic_0001>
module attributes {stable_mosaic.version = 11 : i64} {
  func.func @_fsrcnn_kernel(%arg0: i32, %arg1: memref<1x4x562xbf16, #tpu.memory_space<vmem>>, %arg2: memref<56x100xbf16, #tpu.memory_space<vmem>>, %arg3: memref<56x1xf32, #tpu.memory_space<vmem>>, %arg4: memref<12x56xbf16, #tpu.memory_space<vmem>>, %arg5: memref<12x1xf32, #tpu.memory_space<vmem>>, %arg6: memref<12x108xbf16, #tpu.memory_space<vmem>>, %arg7: memref<12x1xf32, #tpu.memory_space<vmem>>, %arg8: memref<12x108xbf16, #tpu.memory_space<vmem>>, %arg9: memref<12x1xf32, #tpu.memory_space<vmem>>, %arg10: memref<12x108xbf16, #tpu.memory_space<vmem>>, %arg11: memref<12x1xf32, #tpu.memory_space<vmem>>, %arg12: memref<56x12xbf16, #tpu.memory_space<vmem>>, %arg13: memref<56x1xf32, #tpu.memory_space<vmem>>, %arg14: memref<25x12x56xbf16, #tpu.memory_space<vmem>>, %arg15: memref<12x1xf32, #tpu.memory_space<vmem>>, %arg16: memref<1x12x384xf32, #tpu.memory_space<vmem>>, %arg17: memref<56x562xbf16, #tpu.memory_space<vmem>>, %arg18: memref<12x562xbf16, #tpu.memory_space<vmem>>, %arg19: memref<12x562xbf16, #tpu.memory_space<vmem>>, %arg20: memref<108x384xbf16, #tpu.memory_space<vmem>>) attributes {dimension_semantics = [#tpu.dimension_semantics<parallel>], iteration_bounds = array<i64: 2>, scalar_prefetch = 0 : i64, scratch_operands = 4 : i64, tpu.core_type = #tpu.core_type<tc>, window_params = [{transform_indices = @transform_0, window_bounds = array<i64: 1, 4, 562>}, {pipeline_mode = #tpu.pipeline_mode<synchronous>, transform_indices = @transform_1, window_bounds = array<i64: 56, 100>}, {pipeline_mode = #tpu.pipeline_mode<synchronous>, transform_indices = @transform_2, window_bounds = array<i64: 56, 1>}, {pipeline_mode = #tpu.pipeline_mode<synchronous>, transform_indices = @transform_3, window_bounds = array<i64: 12, 56>}, {pipeline_mode = #tpu.pipeline_mode<synchronous>, transform_indices = @transform_4, window_bounds = array<i64: 12, 1>}, {pipeline_mode = #tpu.pipeline_mode<synchronous>, transform_indices = @transform_5, window_bounds = array<i64: 12, 108>}, {pipeline_mode = #tpu.pipeline_mode<synchronous>, transform_indices = @transform_6, window_bounds = array<i64: 12, 1>}, {pipeline_mode = #tpu.pipeline_mode<synchronous>, transform_indices = @transform_7, window_bounds = array<i64: 12, 108>}, {pipeline_mode = #tpu.pipeline_mode<synchronous>, transform_indices = @transform_8, window_bounds = array<i64: 12, 1>}, {pipeline_mode = #tpu.pipeline_mode<synchronous>, transform_indices = @transform_9, window_bounds = array<i64: 12, 108>}, {pipeline_mode = #tpu.pipeline_mode<synchronous>, transform_indices = @transform_10, window_bounds = array<i64: 12, 1>}, {pipeline_mode = #tpu.pipeline_mode<synchronous>, transform_indices = @transform_11, window_bounds = array<i64: 56, 12>}, {pipeline_mode = #tpu.pipeline_mode<synchronous>, transform_indices = @transform_12, window_bounds = array<i64: 56, 1>}, {pipeline_mode = #tpu.pipeline_mode<synchronous>, transform_indices = @transform_13, window_bounds = array<i64: 25, 12, 56>}, {pipeline_mode = #tpu.pipeline_mode<synchronous>, transform_indices = @transform_14, window_bounds = array<i64: 12, 1>}, {transform_indices = @transform_15, window_bounds = array<i64: 1, 12, 384>}]} {
    %cst = arith.constant 0.000000e+00 : bf16
    %0 = vector.broadcast %cst : bf16 to vector<56x128xbf16>
    %c0 = arith.constant 0 : index
    %c0_0 = arith.constant 0 : index
    %1 = vector.load %arg17[%c0, %c0_0] : memref<56x562xbf16, #tpu.memory_space<vmem>>, vector<56x128xbf16>
    tpu.vector_store %arg17[%c0, %c0_0], %0 {strides = array<i32>} : memref<56x562xbf16, #tpu.memory_space<vmem>>, vector<56x128xbf16>,
    %cst_1 = arith.constant 0.000000e+00 : bf16
    %2 = vector.broadcast %cst_1 : bf16 to vector<56x50xbf16>
    %c0_2 = arith.constant 0 : index
    %c512 = arith.constant 512 : index
    %3 = vector.load %arg17[%c0_2, %c512] : memref<56x562xbf16, #tpu.memory_space<vmem>>, vector<56x50xbf16>
    tpu.vector_store %arg17[%c0_2, %c512], %2 {strides = array<i32>} : memref<56x562xbf16, #tpu.memory_space<vmem>>, vector<56x50xbf16>,
    %cst_3 = arith.constant 0.000000e+00 : bf16
    %4 = vector.broadcast %cst_3 : bf16 to vector<12x128xbf16>
    %c0_4 = arith.constant 0 : index
    %c0_5 = arith.constant 0 : index
    %5 = vector.load %arg18[%c0_4, %c0_5] : memref<12x562xbf16, #tpu.memory_space<vmem>>, vector<12x128xbf16>
    tpu.vector_store %arg18[%c0_4, %c0_5], %4 {strides = array<i32>} : memref<12x562xbf16, #tpu.memory_space<vmem>>, vector<12x128xbf16>,
    %cst_6 = arith.constant 0.000000e+00 : bf16
    %6 = vector.broadcast %cst_6 : bf16 to vector<12x50xbf16>
    %c0_7 = arith.constant 0 : index
    %c512_8 = arith.constant 512 : index
    %7 = vector.load %arg18[%c0_7, %c512_8] : memref<12x562xbf16, #tpu.memory_space<vmem>>, vector<12x50xbf16>
    tpu.vector_store %arg18[%c0_7, %c512_8], %6 {strides = array<i32>} : memref<12x562xbf16, #tpu.memory_space<vmem>>, vector<12x50xbf16>,
    %cst_9 = arith.constant 0.000000e+00 : bf16
    %8 = vector.broadcast %cst_9 : bf16 to vector<12x128xbf16>
    %c0_10 = arith.constant 0 : index
    %c0_11 = arith.constant 0 : index
    %9 = vector.load %arg19[%c0_10, %c0_11] : memref<12x562xbf16, #tpu.memory_space<vmem>>, vector<12x128xbf16>
    tpu.vector_store %arg19[%c0_10, %c0_11], %8 {strides = array<i32>} : memref<12x562xbf16, #tpu.memory_space<vmem>>, vector<12x128xbf16>,
    %cst_12 = arith.constant 0.000000e+00 : bf16
    %10 = vector.broadcast %cst_12 : bf16 to vector<12x50xbf16>
    %c0_13 = arith.constant 0 : index
    %c512_14 = arith.constant 512 : index
    %11 = vector.load %arg19[%c0_13, %c512_14] : memref<12x562xbf16, #tpu.memory_space<vmem>>, vector<12x50xbf16>
    tpu.vector_store %arg19[%c0_13, %c512_14], %10 {strides = array<i32>} : memref<12x562xbf16, #tpu.memory_space<vmem>>, vector<12x50xbf16>,
    %12 = tpu.iota {dimensions = array<i32: 1>} : vector<1x384xi32>
    %c24_i32 = arith.constant 24 : i32
    %c0_i32 = arith.constant 0 : i32
    %13 = arith.cmpi eq, %c24_i32, %c0_i32 : i32
    %c1_i32 = arith.constant 1 : i32
    %14 = arith.select %13, %c1_i32, %c24_i32 : i32
    %15 = vector.broadcast %14 : i32 to vector<1x384xi32>
    %16 = arith.remsi %12, %15 : vector<1x384xi32>
    %c0_i32_15 = arith.constant 0 : i32
    %17 = vector.broadcast %c0_i32_15 : i32 to vector<1x384xi32>
    %18 = arith.cmpi ne, %16, %17 : vector<1x384xi32>
    %c0_i32_16 = arith.constant 0 : i32
    %19 = vector.broadcast %c0_i32_16 : i32 to vector<1x384xi32>
    %20 = arith.cmpi slt, %16, %19 : vector<1x384xi32>
    %c0_i32_17 = arith.constant 0 : i32
    %21 = arith.cmpi slt, %14, %c0_i32_17 : i32
    %22 = vector.broadcast %21 : i1 to vector<1x384xi1>
    %23 = vector.broadcast %22 : vector<1x384xi1> to vector<1x384xi1>
    %24 = arith.xori %20, %23 : vector<1x384xi1>
    %25 = arith.andi %24, %18 : vector<1x384xi1>
    %26 = vector.broadcast %14 : i32 to vector<1x384xi32>
    %27 = arith.addi %16, %26 : vector<1x384xi32>
    %28 = arith.select %25, %27, %16 : vector<1x384xi1>, vector<1x384xi32>
    %c16_i32 = arith.constant 16 : i32
    %29 = vector.broadcast %c16_i32 : i32 to vector<1x384xi32>
    %30 = arith.cmpi slt, %28, %29 : vector<1x384xi32>
    %c0_18 = arith.constant 0 : index
    %c0_19 = arith.constant 0 : index
    %c78 = arith.constant 78 : index
    %31 = vector.load %arg1[%c0_18, %c0_19, %c78] : memref<1x4x562xbf16, #tpu.memory_space<vmem>>, vector<1x4x384xbf16>
    %32 = vector.shape_cast %31 : vector<1x4x384xbf16> to vector<4x384xbf16>
    %c0_20 = arith.constant 0 : index
    %c0_21 = arith.constant 0 : index
    %33 = vector.load %arg20[%c0_20, %c0_21] : memref<108x384xbf16, #tpu.memory_space<vmem>>, vector<4x384xbf16>
    tpu.vector_store %arg20[%c0_20, %c0_21], %32 {strides = array<i32>} : memref<108x384xbf16, #tpu.memory_space<vmem>>, vector<4x384xbf16>,
    %c0_22 = arith.constant 0 : index
    %c0_23 = arith.constant 0 : index
    %c79 = arith.constant 79 : index
    %34 = vector.load %arg1[%c0_22, %c0_23, %c79] : memref<1x4x562xbf16, #tpu.memory_space<vmem>>, vector<1x4x384xbf16>
    %35 = vector.shape_cast %34 : vector<1x4x384xbf16> to vector<4x384xbf16>
    %c4 = arith.constant 4 : index
    %c0_24 = arith.constant 0 : index
    %36 = vector.load %arg20[%c4, %c0_24] : memref<108x384xbf16, #tpu.memory_space<vmem>>, vector<4x384xbf16>
    tpu.vector_store %arg20[%c4, %c0_24], %35 {strides = array<i32>} : memref<108x384xbf16, #tpu.memory_space<vmem>>, vector<4x384xbf16>,
    %c0_25 = arith.constant 0 : index
    %c0_26 = arith.constant 0 : index
    %c80 = arith.constant 80 : index
    %37 = vector.load %arg1[%c0_25, %c0_26, %c80] : memref<1x4x562xbf16, #tpu.memory_space<vmem>>, vector<1x4x384xbf16>
    %38 = vector.shape_cast %37 : vector<1x4x384xbf16> to vector<4x384xbf16>
    %c8 = arith.constant 8 : index
    %c0_27 = arith.constant 0 : index
    %39 = vector.load %arg20[%c8, %c0_27] : memref<108x384xbf16, #tpu.memory_space<vmem>>, vector<4x384xbf16>
    tpu.vector_store %arg20[%c8, %c0_27], %38 {strides = array<i32>} : memref<108x384xbf16, #tpu.memory_space<vmem>>, vector<4x384xbf16>,
    %c0_28 = arith.constant 0 : index
    %c0_29 = arith.constant 0 : index
    %c81 = arith.constant 81 : index
    %40 = vector.load %arg1[%c0_28, %c0_29, %c81] : memref<1x4x562xbf16, #tpu.memory_space<vmem>>, vector<1x4x384xbf16>
    %41 = vector.shape_cast %40 : vector<1x4x384xbf16> to vector<4x384xbf16>
    %c12 = arith.constant 12 : index
    %c0_30 = arith.constant 0 : index
    %42 = vector.load %arg20[%c12, %c0_30] : memref<108x384xbf16, #tpu.memory_space<vmem>>, vector<4x384xbf16>
    tpu.vector_store %arg20[%c12, %c0_30], %41 {strides = array<i32>} : memref<108x384xbf16, #tpu.memory_space<vmem>>, vector<4x384xbf16>,
    %c0_31 = arith.constant 0 : index
    %c0_32 = arith.constant 0 : index
    %c82 = arith.constant 82 : index
    %43 = vector.load %arg1[%c0_31, %c0_32, %c82] : memref<1x4x562xbf16, #tpu.memory_space<vmem>>, vector<1x4x384xbf16>
    %44 = vector.shape_cast %43 : vector<1x4x384xbf16> to vector<4x384xbf16>
    %c16 = arith.constant 16 : index
    %c0_33 = arith.constant 0 : index
    %45 = vector.load %arg20[%c16, %c0_33] : memref<108x384xbf16, #tpu.memory_space<vmem>>, vector<4x384xbf16>
    tpu.vector_store %arg20[%c16, %c0_33], %44 {strides = array<i32>} : memref<108x384xbf16, #tpu.memory_space<vmem>>, vector<4x384xbf16>,
    %c0_34 = arith.constant 0 : index
    %c0_35 = arith.constant 0 : index
    %c102 = arith.constant 102 : index
    %46 = vector.load %arg1[%c0_34, %c0_35, %c102] : memref<1x4x562xbf16, #tpu.memory_space<vmem>>, vector<1x4x384xbf16>
    %47 = vector.shape_cast %46 : vector<1x4x384xbf16> to vector<4x384xbf16>
    %c20 = arith.constant 20 : index
    %c0_36 = arith.constant 0 : index
    %48 = vector.load %arg20[%c20, %c0_36] : memref<108x384xbf16, #tpu.memory_space<vmem>>, vector<4x384xbf16>
    tpu.vector_store %arg20[%c20, %c0_36], %47 {strides = array<i32>} : memref<108x384xbf16, #tpu.memory_space<vmem>>, vector<4x384xbf16>,
    %c0_37 = arith.constant 0 : index
    %c0_38 = arith.constant 0 : index
    %c103 = arith.constant 103 : index
    %49 = vector.load %arg1[%c0_37, %c0_38, %c103] : memref<1x4x562xbf16, #tpu.memory_space<vmem>>, vector<1x4x384xbf16>
    %50 = vector.shape_cast %49 : vector<1x4x384xbf16> to vector<4x384xbf16>
    %c24 = arith.constant 24 : index
    %c0_39 = arith.constant 0 : index
    %51 = vector.load %arg20[%c24, %c0_39] : memref<108x384xbf16, #tpu.memory_space<vmem>>, vector<4x384xbf16>
    tpu.vector_store %arg20[%c24, %c0_39], %50 {strides = array<i32>} : memref<108x384xbf16, #tpu.memory_space<vmem>>, vector<4x384xbf16>,
    %c0_40 = arith.constant 0 : index
    %c0_41 = arith.constant 0 : index
    %c104 = arith.constant 104 : index
    %52 = vector.load %arg1[%c0_40, %c0_41, %c104] : memref<1x4x562xbf16, #tpu.memory_space<vmem>>, vector<1x4x384xbf16>
    %53 = vector.shape_cast %52 : vector<1x4x384xbf16> to vector<4x384xbf16>
    %c28 = arith.constant 28 : index
    %c0_42 = arith.constant 0 : index
    %54 = vector.load %arg20[%c28, %c0_42] : memref<108x384xbf16, #tpu.memory_space<vmem>>, vector<4x384xbf16>
    tpu.vector_store %arg20[%c28, %c0_42], %53 {strides = array<i32>} : memref<108x384xbf16, #tpu.memory_space<vmem>>, vector<4x384xbf16>,
    %c0_43 = arith.constant 0 : index
    %c0_44 = arith.constant 0 : index
    %c105 = arith.constant 105 : index
    %55 = vector.load %arg1[%c0_43, %c0_44, %c105] : memref<1x4x562xbf16, #tpu.memory_space<vmem>>, vector<1x4x384xbf16>
    %56 = vector.shape_cast %55 : vector<1x4x384xbf16> to vector<4x384xbf16>
    %c32 = arith.constant 32 : index
    %c0_45 = arith.constant 0 : index
    %57 = vector.load %arg20[%c32, %c0_45] : memref<108x384xbf16, #tpu.memory_space<vmem>>, vector<4x384xbf16>
    tpu.vector_store %arg20[%c32, %c0_45], %56 {strides = array<i32>} : memref<108x384xbf16, #tpu.memory_space<vmem>>, vector<4x384xbf16>,
    %c0_46 = arith.constant 0 : index
    %c0_47 = arith.constant 0 : index
    %c106 = arith.constant 106 : index
    %58 = vector.load %arg1[%c0_46, %c0_47, %c106] : memref<1x4x562xbf16, #tpu.memory_space<vmem>>, vector<1x4x384xbf16>
    %59 = vector.shape_cast %58 : vector<1x4x384xbf16> to vector<4x384xbf16>
    %c36 = arith.constant 36 : index
    %c0_48 = arith.constant 0 : index
    %60 = vector.load %arg20[%c36, %c0_48] : memref<108x384xbf16, #tpu.memory_space<vmem>>, vector<4x384xbf16>
    tpu.vector_store %arg20[%c36, %c0_48], %59 {strides = array<i32>} : memref<108x384xbf16, #tpu.memory_space<vmem>>, vector<4x384xbf16>,
    %c0_49 = arith.constant 0 : index
    %c0_50 = arith.constant 0 : index
    %c126 = arith.constant 126 : index
    %61 = vector.load %arg1[%c0_49, %c0_50, %c126] : memref<1x4x562xbf16, #tpu.memory_space<vmem>>, vector<1x4x384xbf16>
    %62 = vector.shape_cast %61 : vector<1x4x384xbf16> to vector<4x384xbf16>
    %c40 = arith.constant 40 : index
    %c0_51 = arith.constant 0 : index
    %63 = vector.load %arg20[%c40, %c0_51] : memref<108x384xbf16, #tpu.memory_space<vmem>>, vector<4x384xbf16>
    tpu.vector_store %arg20[%c40, %c0_51], %62 {strides = array<i32>} : memref<108x384xbf16, #tpu.memory_space<vmem>>, vector<4x384xbf16>,
    %c0_52 = arith.constant 0 : index
    %c0_53 = arith.constant 0 : index
    %c127 = arith.constant 127 : index
    %64 = vector.load %arg1[%c0_52, %c0_53, %c127] : memref<1x4x562xbf16, #tpu.memory_space<vmem>>, vector<1x4x384xbf16>
    %65 = vector.shape_cast %64 : vector<1x4x384xbf16> to vector<4x384xbf16>
    %c44 = arith.constant 44 : index
    %c0_54 = arith.constant 0 : index
    %66 = vector.load %arg20[%c44, %c0_54] : memref<108x384xbf16, #tpu.memory_space<vmem>>, vector<4x384xbf16>
    tpu.vector_store %arg20[%c44, %c0_54], %65 {strides = array<i32>} : memref<108x384xbf16, #tpu.memory_space<vmem>>, vector<4x384xbf16>,
    %c0_55 = arith.constant 0 : index
    %c0_56 = arith.constant 0 : index
    %c128 = arith.constant 128 : index
    %67 = vector.load %arg1[%c0_55, %c0_56, %c128] : memref<1x4x562xbf16, #tpu.memory_space<vmem>>, vector<1x4x384xbf16>
    %68 = vector.shape_cast %67 : vector<1x4x384xbf16> to vector<4x384xbf16>
    %c48 = arith.constant 48 : index
    %c0_57 = arith.constant 0 : index
    %69 = vector.load %arg20[%c48, %c0_57] : memref<108x384xbf16, #tpu.memory_space<vmem>>, vector<4x384xbf16>
    tpu.vector_store %arg20[%c48, %c0_57], %68 {strides = array<i32>} : memref<108x384xbf16, #tpu.memory_space<vmem>>, vector<4x384xbf16>,
    %c0_58 = arith.constant 0 : index
    %c0_59 = arith.constant 0 : index
    %c129 = arith.constant 129 : index
    %70 = vector.load %arg1[%c0_58, %c0_59, %c129] : memref<1x4x562xbf16, #tpu.memory_space<vmem>>, vector<1x4x384xbf16>
    %71 = vector.shape_cast %70 : vector<1x4x384xbf16> to vector<4x384xbf16>
    %c52 = arith.constant 52 : index
    %c0_60 = arith.constant 0 : index
    %72 = vector.load %arg20[%c52, %c0_60] : memref<108x384xbf16, #tpu.memory_space<vmem>>, vector<4x384xbf16>
    tpu.vector_store %arg20[%c52, %c0_60], %71 {strides = array<i32>} : memref<108x384xbf16, #tpu.memory_space<vmem>>, vector<4x384xbf16>,
    %c0_61 = arith.constant 0 : index
    %c0_62 = arith.constant 0 : index
    %c130 = arith.constant 130 : index
    %73 = vector.load %arg1[%c0_61, %c0_62, %c130] : memref<1x4x562xbf16, #tpu.memory_space<vmem>>, vector<1x4x384xbf16>
    %74 = vector.shape_cast %73 : vector<1x4x384xbf16> to vector<4x384xbf16>
    %c56 = arith.constant 56 : index
    %c0_63 = arith.constant 0 : index
    %75 = vector.load %arg20[%c56, %c0_63] : memref<108x384xbf16, #tpu.memory_space<vmem>>, vector<4x384xbf16>
    tpu.vector_store %arg20[%c56, %c0_63], %74 {strides = array<i32>} : memref<108x384xbf16, #tpu.memory_space<vmem>>, vector<4x384xbf16>,
    %c0_64 = arith.constant 0 : index
    %c0_65 = arith.constant 0 : index
    %c150 = arith.constant 150 : index
    %76 = vector.load %arg1[%c0_64, %c0_65, %c150] : memref<1x4x562xbf16, #tpu.memory_space<vmem>>, vector<1x4x384xbf16>
    %77 = vector.shape_cast %76 : vector<1x4x384xbf16> to vector<4x384xbf16>
    %c60 = arith.constant 60 : index
    %c0_66 = arith.constant 0 : index
    %78 = vector.load %arg20[%c60, %c0_66] : memref<108x384xbf16, #tpu.memory_space<vmem>>, vector<4x384xbf16>
    tpu.vector_store %arg20[%c60, %c0_66], %77 {strides = array<i32>} : memref<108x384xbf16, #tpu.memory_space<vmem>>, vector<4x384xbf16>,
    %c0_67 = arith.constant 0 : index
    %c0_68 = arith.constant 0 : index
    %c151 = arith.constant 151 : index
    %79 = vector.load %arg1[%c0_67, %c0_68, %c151] : memref<1x4x562xbf16, #tpu.memory_space<vmem>>, vector<1x4x384xbf16>
    %80 = vector.shape_cast %79 : vector<1x4x384xbf16> to vector<4x384xbf16>
    %c64 = arith.constant 64 : index
    %c0_69 = arith.constant 0 : index
    %81 = vector.load %arg20[%c64, %c0_69] : memref<108x384xbf16, #tpu.memory_space<vmem>>, vector<4x384xbf16>
    tpu.vector_store %arg20[%c64, %c0_69], %80 {strides = array<i32>} : memref<108x384xbf16, #tpu.memory_space<vmem>>, vector<4x384xbf16>,
    %c0_70 = arith.constant 0 : index
    %c0_71 = arith.constant 0 : index
    %c152 = arith.constant 152 : index
    %82 = vector.load %arg1[%c0_70, %c0_71, %c152] : memref<1x4x562xbf16, #tpu.memory_space<vmem>>, vector<1x4x384xbf16>
    %83 = vector.shape_cast %82 : vector<1x4x384xbf16> to vector<4x384xbf16>
    %c68 = arith.constant 68 : index
    %c0_72 = arith.constant 0 : index
    %84 = vector.load %arg20[%c68, %c0_72] : memref<108x384xbf16, #tpu.memory_space<vmem>>, vector<4x384xbf16>
    tpu.vector_store %arg20[%c68, %c0_72], %83 {strides = array<i32>} : memref<108x384xbf16, #tpu.memory_space<vmem>>, vector<4x384xbf16>,
    %c0_73 = arith.constant 0 : index
    %c0_74 = arith.constant 0 : index
    %c153 = arith.constant 153 : index
    %85 = vector.load %arg1[%c0_73, %c0_74, %c153] : memref<1x4x562xbf16, #tpu.memory_space<vmem>>, vector<1x4x384xbf16>
    %86 = vector.shape_cast %85 : vector<1x4x384xbf16> to vector<4x384xbf16>
    %c72 = arith.constant 72 : index
    %c0_75 = arith.constant 0 : index
    %87 = vector.load %arg20[%c72, %c0_75] : memref<108x384xbf16, #tpu.memory_space<vmem>>, vector<4x384xbf16>
    tpu.vector_store %arg20[%c72, %c0_75], %86 {strides = array<i32>} : memref<108x384xbf16, #tpu.memory_space<vmem>>, vector<4x384xbf16>,
    %c0_76 = arith.constant 0 : index
    %c0_77 = arith.constant 0 : index
    %c154 = arith.constant 154 : index
    %88 = vector.load %arg1[%c0_76, %c0_77, %c154] : memref<1x4x562xbf16, #tpu.memory_space<vmem>>, vector<1x4x384xbf16>
    %89 = vector.shape_cast %88 : vector<1x4x384xbf16> to vector<4x384xbf16>
    %c76 = arith.constant 76 : index
    %c0_78 = arith.constant 0 : index
    %90 = vector.load %arg20[%c76, %c0_78] : memref<108x384xbf16, #tpu.memory_space<vmem>>, vector<4x384xbf16>
    tpu.vector_store %arg20[%c76, %c0_78], %89 {strides = array<i32>} : memref<108x384xbf16, #tpu.memory_space<vmem>>, vector<4x384xbf16>,
    %c0_79 = arith.constant 0 : index
    %c0_80 = arith.constant 0 : index
    %c174 = arith.constant 174 : index
    %91 = vector.load %arg1[%c0_79, %c0_80, %c174] : memref<1x4x562xbf16, #tpu.memory_space<vmem>>, vector<1x4x384xbf16>
    %92 = vector.shape_cast %91 : vector<1x4x384xbf16> to vector<4x384xbf16>
    %c80_81 = arith.constant 80 : index
    %c0_82 = arith.constant 0 : index
    %93 = vector.load %arg20[%c80_81, %c0_82] : memref<108x384xbf16, #tpu.memory_space<vmem>>, vector<4x384xbf16>
    tpu.vector_store %arg20[%c80_81, %c0_82], %92 {strides = array<i32>} : memref<108x384xbf16, #tpu.memory_space<vmem>>, vector<4x384xbf16>,
    %c0_83 = arith.constant 0 : index
    %c0_84 = arith.constant 0 : index
    %c175 = arith.constant 175 : index
    %94 = vector.load %arg1[%c0_83, %c0_84, %c175] : memref<1x4x562xbf16, #tpu.memory_space<vmem>>, vector<1x4x384xbf16>
    %95 = vector.shape_cast %94 : vector<1x4x384xbf16> to vector<4x384xbf16>
    %c84 = arith.constant 84 : index
    %c0_85 = arith.constant 0 : index
    %96 = vector.load %arg20[%c84, %c0_85] : memref<108x384xbf16, #tpu.memory_space<vmem>>, vector<4x384xbf16>
    tpu.vector_store %arg20[%c84, %c0_85], %95 {strides = array<i32>} : memref<108x384xbf16, #tpu.memory_space<vmem>>, vector<4x384xbf16>,
    %c0_86 = arith.constant 0 : index
    %c0_87 = arith.constant 0 : index
    %c176 = arith.constant 176 : index
    %97 = vector.load %arg1[%c0_86, %c0_87, %c176] : memref<1x4x562xbf16, #tpu.memory_space<vmem>>, vector<1x4x384xbf16>
    %98 = vector.shape_cast %97 : vector<1x4x384xbf16> to vector<4x384xbf16>
    %c88 = arith.constant 88 : index
    %c0_88 = arith.constant 0 : index
    %99 = vector.load %arg20[%c88, %c0_88] : memref<108x384xbf16, #tpu.memory_space<vmem>>, vector<4x384xbf16>
    tpu.vector_store %arg20[%c88, %c0_88], %98 {strides = array<i32>} : memref<108x384xbf16, #tpu.memory_space<vmem>>, vector<4x384xbf16>,
    %c0_89 = arith.constant 0 : index
    %c0_90 = arith.constant 0 : index
    %c177 = arith.constant 177 : index
    %100 = vector.load %arg1[%c0_89, %c0_90, %c177] : memref<1x4x562xbf16, #tpu.memory_space<vmem>>, vector<1x4x384xbf16>
    %101 = vector.shape_cast %100 : vector<1x4x384xbf16> to vector<4x384xbf16>
    %c92 = arith.constant 92 : index
    %c0_91 = arith.constant 0 : index
    %102 = vector.load %arg20[%c92, %c0_91] : memref<108x384xbf16, #tpu.memory_space<vmem>>, vector<4x384xbf16>
    tpu.vector_store %arg20[%c92, %c0_91], %101 {strides = array<i32>} : memref<108x384xbf16, #tpu.memory_space<vmem>>, vector<4x384xbf16>,
    %c0_92 = arith.constant 0 : index
    %c0_93 = arith.constant 0 : index
    %c178 = arith.constant 178 : index
    %103 = vector.load %arg1[%c0_92, %c0_93, %c178] : memref<1x4x562xbf16, #tpu.memory_space<vmem>>, vector<1x4x384xbf16>
    %104 = vector.shape_cast %103 : vector<1x4x384xbf16> to vector<4x384xbf16>
    %c96 = arith.constant 96 : index
    %c0_94 = arith.constant 0 : index
    %105 = vector.load %arg20[%c96, %c0_94] : memref<108x384xbf16, #tpu.memory_space<vmem>>, vector<4x384xbf16>
    tpu.vector_store %arg20[%c96, %c0_94], %104 {strides = array<i32>} : memref<108x384xbf16, #tpu.memory_space<vmem>>, vector<4x384xbf16>,
    %c0_95 = arith.constant 0 : index
    %c0_96 = arith.constant 0 : index
    %106 = vector.load %arg2[%c0_95, %c0_96] : memref<56x100xbf16, #tpu.memory_space<vmem>>, vector<56x100xbf16>
    %c0_97 = arith.constant 0 : index
    %c0_98 = arith.constant 0 : index
    %107 = vector.load %arg20[%c0_97, %c0_98] : memref<108x384xbf16, #tpu.memory_space<vmem>>, vector<100x384xbf16>
    %cst_99 = arith.constant dense<0.000000e+00> : vector<56x384xf32>
    %108 = tpu.matmul %106, %107, %cst_99 {dimension_numbers = #tpu.dot_dimension_numbers<[1], [0], [0], [1], [0, 0, 1, 1], [], []>} : vector<56x100xbf16>, vector<100x384xbf16>, vector<56x384xf32> -> vector<56x384xf32>
    %c0_100 = arith.constant 0 : index
    %c0_101 = arith.constant 0 : index
    %109 = vector.load %arg3[%c0_100, %c0_101] : memref<56x1xf32, #tpu.memory_space<vmem>>, vector<56x1xf32>
    %110 = vector.broadcast %109 : vector<56x1xf32> to vector<56x384xf32>
    %111 = arith.addf %108, %110 : vector<56x384xf32>
    %cst_102 = arith.constant 0.000000e+00 : f32
    %112 = vector.broadcast %cst_102 : f32 to vector<56x384xf32>
    %113 = arith.cmpf ogt, %111, %112 : vector<56x384xf32>
    %114 = vector.broadcast %30 : vector<1x384xi1> to vector<56x384xi1>
    %115 = arith.andi %114, %113 : vector<56x384xi1>
    %cst_103 = arith.constant 0.000000e+00 : f32
    %116 = vector.broadcast %cst_103 : f32 to vector<56x384xf32>
    %117 = arith.select %115, %111, %116 : vector<56x384xi1>, vector<56x384xf32>
    %118 = arith.truncf %117 : vector<56x384xf32> to vector<56x384xbf16>
    %c0_104 = arith.constant 0 : index
    %c128_105 = arith.constant 128 : index
    %119 = vector.load %arg17[%c0_104, %c128_105] : memref<56x562xbf16, #tpu.memory_space<vmem>>, vector<56x384xbf16>
    tpu.vector_store %arg17[%c0_104, %c128_105], %118 {strides = array<i32>} : memref<56x562xbf16, #tpu.memory_space<vmem>>, vector<56x384xbf16>,
    %c0_106 = arith.constant 0 : index
    %c0_107 = arith.constant 0 : index
    %120 = vector.load %arg4[%c0_106, %c0_107] : memref<12x56xbf16, #tpu.memory_space<vmem>>, vector<12x56xbf16>
    %c0_108 = arith.constant 0 : index
    %c128_109 = arith.constant 128 : index
    %121 = vector.load %arg17[%c0_108, %c128_109] : memref<56x562xbf16, #tpu.memory_space<vmem>>, vector<56x384xbf16>
    %cst_110 = arith.constant dense<0.000000e+00> : vector<12x384xf32>
    %122 = tpu.matmul %120, %121, %cst_110 {dimension_numbers = #tpu.dot_dimension_numbers<[1], [0], [0], [1], [0, 0, 1, 1], [], []>} : vector<12x56xbf16>, vector<56x384xbf16>, vector<12x384xf32> -> vector<12x384xf32>
    %c0_111 = arith.constant 0 : index
    %c0_112 = arith.constant 0 : index
    %123 = vector.load %arg5[%c0_111, %c0_112] : memref<12x1xf32, #tpu.memory_space<vmem>>, vector<12x1xf32>
    %124 = vector.broadcast %123 : vector<12x1xf32> to vector<12x384xf32>
    %125 = arith.addf %122, %124 : vector<12x384xf32>
    %cst_113 = arith.constant 0.000000e+00 : f32
    %126 = vector.broadcast %cst_113 : f32 to vector<12x384xf32>
    %127 = arith.cmpf ogt, %125, %126 : vector<12x384xf32>
    %128 = vector.broadcast %30 : vector<1x384xi1> to vector<12x384xi1>
    %129 = arith.andi %128, %127 : vector<12x384xi1>
    %cst_114 = arith.constant 0.000000e+00 : f32
    %130 = vector.broadcast %cst_114 : f32 to vector<12x384xf32>
    %131 = arith.select %129, %125, %130 : vector<12x384xi1>, vector<12x384xf32>
    %132 = arith.truncf %131 : vector<12x384xf32> to vector<12x384xbf16>
    %c0_115 = arith.constant 0 : index
    %c128_116 = arith.constant 128 : index
    %133 = vector.load %arg18[%c0_115, %c128_116] : memref<12x562xbf16, #tpu.memory_space<vmem>>, vector<12x384xbf16>
    tpu.vector_store %arg18[%c0_115, %c128_116], %132 {strides = array<i32>} : memref<12x562xbf16, #tpu.memory_space<vmem>>, vector<12x384xbf16>,
    %c0_117 = arith.constant 0 : index
    %c103_118 = arith.constant 103 : index
    %134 = vector.load %arg18[%c0_117, %c103_118] : memref<12x562xbf16, #tpu.memory_space<vmem>>, vector<12x384xbf16>
    %c0_119 = arith.constant 0 : index
    %c0_120 = arith.constant 0 : index
    %135 = vector.load %arg20[%c0_119, %c0_120] : memref<108x384xbf16, #tpu.memory_space<vmem>>, vector<12x384xbf16>
    tpu.vector_store %arg20[%c0_119, %c0_120], %134 {strides = array<i32>} : memref<108x384xbf16, #tpu.memory_space<vmem>>, vector<12x384xbf16>,
    %c0_121 = arith.constant 0 : index
    %c104_122 = arith.constant 104 : index
    %136 = vector.load %arg18[%c0_121, %c104_122] : memref<12x562xbf16, #tpu.memory_space<vmem>>, vector<12x384xbf16>
    %c12_123 = arith.constant 12 : index
    %c0_124 = arith.constant 0 : index
    %137 = vector.load %arg20[%c12_123, %c0_124] : memref<108x384xbf16, #tpu.memory_space<vmem>>, vector<12x384xbf16>
    tpu.vector_store %arg20[%c12_123, %c0_124], %136 {strides = array<i32>} : memref<108x384xbf16, #tpu.memory_space<vmem>>, vector<12x384xbf16>,
    %c0_125 = arith.constant 0 : index
    %c105_126 = arith.constant 105 : index
    %138 = vector.load %arg18[%c0_125, %c105_126] : memref<12x562xbf16, #tpu.memory_space<vmem>>, vector<12x384xbf16>
    %c24_127 = arith.constant 24 : index
    %c0_128 = arith.constant 0 : index
    %139 = vector.load %arg20[%c24_127, %c0_128] : memref<108x384xbf16, #tpu.memory_space<vmem>>, vector<12x384xbf16>
    tpu.vector_store %arg20[%c24_127, %c0_128], %138 {strides = array<i32>} : memref<108x384xbf16, #tpu.memory_space<vmem>>, vector<12x384xbf16>,
    %c0_129 = arith.constant 0 : index
    %c127_130 = arith.constant 127 : index
    %140 = vector.load %arg18[%c0_129, %c127_130] : memref<12x562xbf16, #tpu.memory_space<vmem>>, vector<12x384xbf16>
    %c36_131 = arith.constant 36 : index
    %c0_132 = arith.constant 0 : index
    %141 = vector.load %arg20[%c36_131, %c0_132] : memref<108x384xbf16, #tpu.memory_space<vmem>>, vector<12x384xbf16>
    tpu.vector_store %arg20[%c36_131, %c0_132], %140 {strides = array<i32>} : memref<108x384xbf16, #tpu.memory_space<vmem>>, vector<12x384xbf16>,
    %c0_133 = arith.constant 0 : index
    %c128_134 = arith.constant 128 : index
    %142 = vector.load %arg18[%c0_133, %c128_134] : memref<12x562xbf16, #tpu.memory_space<vmem>>, vector<12x384xbf16>
    %c48_135 = arith.constant 48 : index
    %c0_136 = arith.constant 0 : index
    %143 = vector.load %arg20[%c48_135, %c0_136] : memref<108x384xbf16, #tpu.memory_space<vmem>>, vector<12x384xbf16>
    tpu.vector_store %arg20[%c48_135, %c0_136], %142 {strides = array<i32>} : memref<108x384xbf16, #tpu.memory_space<vmem>>, vector<12x384xbf16>,
    %c0_137 = arith.constant 0 : index
    %c129_138 = arith.constant 129 : index
    %144 = vector.load %arg18[%c0_137, %c129_138] : memref<12x562xbf16, #tpu.memory_space<vmem>>, vector<12x384xbf16>
    %c60_139 = arith.constant 60 : index
    %c0_140 = arith.constant 0 : index
    %145 = vector.load %arg20[%c60_139, %c0_140] : memref<108x384xbf16, #tpu.memory_space<vmem>>, vector<12x384xbf16>
    tpu.vector_store %arg20[%c60_139, %c0_140], %144 {strides = array<i32>} : memref<108x384xbf16, #tpu.memory_space<vmem>>, vector<12x384xbf16>,
    %c0_141 = arith.constant 0 : index
    %c151_142 = arith.constant 151 : index
    %146 = vector.load %arg18[%c0_141, %c151_142] : memref<12x562xbf16, #tpu.memory_space<vmem>>, vector<12x384xbf16>
    %c72_143 = arith.constant 72 : index
    %c0_144 = arith.constant 0 : index
    %147 = vector.load %arg20[%c72_143, %c0_144] : memref<108x384xbf16, #tpu.memory_space<vmem>>, vector<12x384xbf16>
    tpu.vector_store %arg20[%c72_143, %c0_144], %146 {strides = array<i32>} : memref<108x384xbf16, #tpu.memory_space<vmem>>, vector<12x384xbf16>,
    %c0_145 = arith.constant 0 : index
    %c152_146 = arith.constant 152 : index
    %148 = vector.load %arg18[%c0_145, %c152_146] : memref<12x562xbf16, #tpu.memory_space<vmem>>, vector<12x384xbf16>
    %c84_147 = arith.constant 84 : index
    %c0_148 = arith.constant 0 : index
    %149 = vector.load %arg20[%c84_147, %c0_148] : memref<108x384xbf16, #tpu.memory_space<vmem>>, vector<12x384xbf16>
    tpu.vector_store %arg20[%c84_147, %c0_148], %148 {strides = array<i32>} : memref<108x384xbf16, #tpu.memory_space<vmem>>, vector<12x384xbf16>,
    %c0_149 = arith.constant 0 : index
    %c153_150 = arith.constant 153 : index
    %150 = vector.load %arg18[%c0_149, %c153_150] : memref<12x562xbf16, #tpu.memory_space<vmem>>, vector<12x384xbf16>
    %c96_151 = arith.constant 96 : index
    %c0_152 = arith.constant 0 : index
    %151 = vector.load %arg20[%c96_151, %c0_152] : memref<108x384xbf16, #tpu.memory_space<vmem>>, vector<12x384xbf16>
    tpu.vector_store %arg20[%c96_151, %c0_152], %150 {strides = array<i32>} : memref<108x384xbf16, #tpu.memory_space<vmem>>, vector<12x384xbf16>,
    %c0_153 = arith.constant 0 : index
    %c0_154 = arith.constant 0 : index
    %152 = vector.load %arg6[%c0_153, %c0_154] : memref<12x108xbf16, #tpu.memory_space<vmem>>, vector<12x108xbf16>
    %c0_155 = arith.constant 0 : index
    %c0_156 = arith.constant 0 : index
    %153 = vector.load %arg20[%c0_155, %c0_156] : memref<108x384xbf16, #tpu.memory_space<vmem>>, vector<108x384xbf16>
    %cst_157 = arith.constant dense<0.000000e+00> : vector<12x384xf32>
    %154 = tpu.matmul %152, %153, %cst_157 {dimension_numbers = #tpu.dot_dimension_numbers<[1], [0], [0], [1], [0, 0, 1, 1], [], []>} : vector<12x108xbf16>, vector<108x384xbf16>, vector<12x384xf32> -> vector<12x384xf32>
    %c0_158 = arith.constant 0 : index
    %c0_159 = arith.constant 0 : index
    %155 = vector.load %arg7[%c0_158, %c0_159] : memref<12x1xf32, #tpu.memory_space<vmem>>, vector<12x1xf32>
    %156 = vector.broadcast %155 : vector<12x1xf32> to vector<12x384xf32>
    %157 = arith.addf %154, %156 : vector<12x384xf32>
    %cst_160 = arith.constant 0.000000e+00 : f32
    %158 = vector.broadcast %cst_160 : f32 to vector<12x384xf32>
    %159 = arith.cmpf ogt, %157, %158 : vector<12x384xf32>
    %160 = vector.broadcast %30 : vector<1x384xi1> to vector<12x384xi1>
    %161 = arith.andi %160, %159 : vector<12x384xi1>
    %cst_161 = arith.constant 0.000000e+00 : f32
    %162 = vector.broadcast %cst_161 : f32 to vector<12x384xf32>
    %163 = arith.select %161, %157, %162 : vector<12x384xi1>, vector<12x384xf32>
    %164 = arith.truncf %163 : vector<12x384xf32> to vector<12x384xbf16>
    %c0_162 = arith.constant 0 : index
    %c128_163 = arith.constant 128 : index
    %165 = vector.load %arg19[%c0_162, %c128_163] : memref<12x562xbf16, #tpu.memory_space<vmem>>, vector<12x384xbf16>
    tpu.vector_store %arg19[%c0_162, %c128_163], %164 {strides = array<i32>} : memref<12x562xbf16, #tpu.memory_space<vmem>>, vector<12x384xbf16>,
    %c0_164 = arith.constant 0 : index
    %c103_165 = arith.constant 103 : index
    %166 = vector.load %arg19[%c0_164, %c103_165] : memref<12x562xbf16, #tpu.memory_space<vmem>>, vector<12x384xbf16>
    %c0_166 = arith.constant 0 : index
    %c0_167 = arith.constant 0 : index
    %167 = vector.load %arg20[%c0_166, %c0_167] : memref<108x384xbf16, #tpu.memory_space<vmem>>, vector<12x384xbf16>
    tpu.vector_store %arg20[%c0_166, %c0_167], %166 {strides = array<i32>} : memref<108x384xbf16, #tpu.memory_space<vmem>>, vector<12x384xbf16>,
    %c0_168 = arith.constant 0 : index
    %c104_169 = arith.constant 104 : index
    %168 = vector.load %arg19[%c0_168, %c104_169] : memref<12x562xbf16, #tpu.memory_space<vmem>>, vector<12x384xbf16>
    %c12_170 = arith.constant 12 : index
    %c0_171 = arith.constant 0 : index
    %169 = vector.load %arg20[%c12_170, %c0_171] : memref<108x384xbf16, #tpu.memory_space<vmem>>, vector<12x384xbf16>
    tpu.vector_store %arg20[%c12_170, %c0_171], %168 {strides = array<i32>} : memref<108x384xbf16, #tpu.memory_space<vmem>>, vector<12x384xbf16>,
    %c0_172 = arith.constant 0 : index
    %c105_173 = arith.constant 105 : index
    %170 = vector.load %arg19[%c0_172, %c105_173] : memref<12x562xbf16, #tpu.memory_space<vmem>>, vector<12x384xbf16>
    %c24_174 = arith.constant 24 : index
    %c0_175 = arith.constant 0 : index
    %171 = vector.load %arg20[%c24_174, %c0_175] : memref<108x384xbf16, #tpu.memory_space<vmem>>, vector<12x384xbf16>
    tpu.vector_store %arg20[%c24_174, %c0_175], %170 {strides = array<i32>} : memref<108x384xbf16, #tpu.memory_space<vmem>>, vector<12x384xbf16>,
    %c0_176 = arith.constant 0 : index
    %c127_177 = arith.constant 127 : index
    %172 = vector.load %arg19[%c0_176, %c127_177] : memref<12x562xbf16, #tpu.memory_space<vmem>>, vector<12x384xbf16>
    %c36_178 = arith.constant 36 : index
    %c0_179 = arith.constant 0 : index
    %173 = vector.load %arg20[%c36_178, %c0_179] : memref<108x384xbf16, #tpu.memory_space<vmem>>, vector<12x384xbf16>
    tpu.vector_store %arg20[%c36_178, %c0_179], %172 {strides = array<i32>} : memref<108x384xbf16, #tpu.memory_space<vmem>>, vector<12x384xbf16>,
    %c0_180 = arith.constant 0 : index
    %c128_181 = arith.constant 128 : index
    %174 = vector.load %arg19[%c0_180, %c128_181] : memref<12x562xbf16, #tpu.memory_space<vmem>>, vector<12x384xbf16>
    %c48_182 = arith.constant 48 : index
    %c0_183 = arith.constant 0 : index
    %175 = vector.load %arg20[%c48_182, %c0_183] : memref<108x384xbf16, #tpu.memory_space<vmem>>, vector<12x384xbf16>
    tpu.vector_store %arg20[%c48_182, %c0_183], %174 {strides = array<i32>} : memref<108x384xbf16, #tpu.memory_space<vmem>>, vector<12x384xbf16>,
    %c0_184 = arith.constant 0 : index
    %c129_185 = arith.constant 129 : index
    %176 = vector.load %arg19[%c0_184, %c129_185] : memref<12x562xbf16, #tpu.memory_space<vmem>>, vector<12x384xbf16>
    %c60_186 = arith.constant 60 : index
    %c0_187 = arith.constant 0 : index
    %177 = vector.load %arg20[%c60_186, %c0_187] : memref<108x384xbf16, #tpu.memory_space<vmem>>, vector<12x384xbf16>
    tpu.vector_store %arg20[%c60_186, %c0_187], %176 {strides = array<i32>} : memref<108x384xbf16, #tpu.memory_space<vmem>>, vector<12x384xbf16>,
    %c0_188 = arith.constant 0 : index
    %c151_189 = arith.constant 151 : index
    %178 = vector.load %arg19[%c0_188, %c151_189] : memref<12x562xbf16, #tpu.memory_space<vmem>>, vector<12x384xbf16>
    %c72_190 = arith.constant 72 : index
    %c0_191 = arith.constant 0 : index
    %179 = vector.load %arg20[%c72_190, %c0_191] : memref<108x384xbf16, #tpu.memory_space<vmem>>, vector<12x384xbf16>
    tpu.vector_store %arg20[%c72_190, %c0_191], %178 {strides = array<i32>} : memref<108x384xbf16, #tpu.memory_space<vmem>>, vector<12x384xbf16>,
    %c0_192 = arith.constant 0 : index
    %c152_193 = arith.constant 152 : index
    %180 = vector.load %arg19[%c0_192, %c152_193] : memref<12x562xbf16, #tpu.memory_space<vmem>>, vector<12x384xbf16>
    %c84_194 = arith.constant 84 : index
    %c0_195 = arith.constant 0 : index
    %181 = vector.load %arg20[%c84_194, %c0_195] : memref<108x384xbf16, #tpu.memory_space<vmem>>, vector<12x384xbf16>
    tpu.vector_store %arg20[%c84_194, %c0_195], %180 {strides = array<i32>} : memref<108x384xbf16, #tpu.memory_space<vmem>>, vector<12x384xbf16>,
    %c0_196 = arith.constant 0 : index
    %c153_197 = arith.constant 153 : index
    %182 = vector.load %arg19[%c0_196, %c153_197] : memref<12x562xbf16, #tpu.memory_space<vmem>>, vector<12x384xbf16>
    %c96_198 = arith.constant 96 : index
    %c0_199 = arith.constant 0 : index
    %183 = vector.load %arg20[%c96_198, %c0_199] : memref<108x384xbf16, #tpu.memory_space<vmem>>, vector<12x384xbf16>
    tpu.vector_store %arg20[%c96_198, %c0_199], %182 {strides = array<i32>} : memref<108x384xbf16, #tpu.memory_space<vmem>>, vector<12x384xbf16>,
    %c0_200 = arith.constant 0 : index
    %c0_201 = arith.constant 0 : index
    %184 = vector.load %arg8[%c0_200, %c0_201] : memref<12x108xbf16, #tpu.memory_space<vmem>>, vector<12x108xbf16>
    %c0_202 = arith.constant 0 : index
    %c0_203 = arith.constant 0 : index
    %185 = vector.load %arg20[%c0_202, %c0_203] : memref<108x384xbf16, #tpu.memory_space<vmem>>, vector<108x384xbf16>
    %cst_204 = arith.constant dense<0.000000e+00> : vector<12x384xf32>
    %186 = tpu.matmul %184, %185, %cst_204 {dimension_numbers = #tpu.dot_dimension_numbers<[1], [0], [0], [1], [0, 0, 1, 1], [], []>} : vector<12x108xbf16>, vector<108x384xbf16>, vector<12x384xf32> -> vector<12x384xf32>
    %c0_205 = arith.constant 0 : index
    %c0_206 = arith.constant 0 : index
    %187 = vector.load %arg9[%c0_205, %c0_206] : memref<12x1xf32, #tpu.memory_space<vmem>>, vector<12x1xf32>
    %188 = vector.broadcast %187 : vector<12x1xf32> to vector<12x384xf32>
    %189 = arith.addf %186, %188 : vector<12x384xf32>
    %cst_207 = arith.constant 0.000000e+00 : f32
    %190 = vector.broadcast %cst_207 : f32 to vector<12x384xf32>
    %191 = arith.cmpf ogt, %189, %190 : vector<12x384xf32>
    %192 = vector.broadcast %30 : vector<1x384xi1> to vector<12x384xi1>
    %193 = arith.andi %192, %191 : vector<12x384xi1>
    %cst_208 = arith.constant 0.000000e+00 : f32
    %194 = vector.broadcast %cst_208 : f32 to vector<12x384xf32>
    %195 = arith.select %193, %189, %194 : vector<12x384xi1>, vector<12x384xf32>
    %196 = arith.truncf %195 : vector<12x384xf32> to vector<12x384xbf16>
    %c0_209 = arith.constant 0 : index
    %c128_210 = arith.constant 128 : index
    %197 = vector.load %arg18[%c0_209, %c128_210] : memref<12x562xbf16, #tpu.memory_space<vmem>>, vector<12x384xbf16>
    tpu.vector_store %arg18[%c0_209, %c128_210], %196 {strides = array<i32>} : memref<12x562xbf16, #tpu.memory_space<vmem>>, vector<12x384xbf16>,
    %c0_211 = arith.constant 0 : index
    %c103_212 = arith.constant 103 : index
    %198 = vector.load %arg18[%c0_211, %c103_212] : memref<12x562xbf16, #tpu.memory_space<vmem>>, vector<12x384xbf16>
    %c0_213 = arith.constant 0 : index
    %c0_214 = arith.constant 0 : index
    %199 = vector.load %arg20[%c0_213, %c0_214] : memref<108x384xbf16, #tpu.memory_space<vmem>>, vector<12x384xbf16>
    tpu.vector_store %arg20[%c0_213, %c0_214], %198 {strides = array<i32>} : memref<108x384xbf16, #tpu.memory_space<vmem>>, vector<12x384xbf16>,
    %c0_215 = arith.constant 0 : index
    %c104_216 = arith.constant 104 : index
    %200 = vector.load %arg18[%c0_215, %c104_216] : memref<12x562xbf16, #tpu.memory_space<vmem>>, vector<12x384xbf16>
    %c12_217 = arith.constant 12 : index
    %c0_218 = arith.constant 0 : index
    %201 = vector.load %arg20[%c12_217, %c0_218] : memref<108x384xbf16, #tpu.memory_space<vmem>>, vector<12x384xbf16>
    tpu.vector_store %arg20[%c12_217, %c0_218], %200 {strides = array<i32>} : memref<108x384xbf16, #tpu.memory_space<vmem>>, vector<12x384xbf16>,
    %c0_219 = arith.constant 0 : index
    %c105_220 = arith.constant 105 : index
    %202 = vector.load %arg18[%c0_219, %c105_220] : memref<12x562xbf16, #tpu.memory_space<vmem>>, vector<12x384xbf16>
    %c24_221 = arith.constant 24 : index
    %c0_222 = arith.constant 0 : index
    %203 = vector.load %arg20[%c24_221, %c0_222] : memref<108x384xbf16, #tpu.memory_space<vmem>>, vector<12x384xbf16>
    tpu.vector_store %arg20[%c24_221, %c0_222], %202 {strides = array<i32>} : memref<108x384xbf16, #tpu.memory_space<vmem>>, vector<12x384xbf16>,
    %c0_223 = arith.constant 0 : index
    %c127_224 = arith.constant 127 : index
    %204 = vector.load %arg18[%c0_223, %c127_224] : memref<12x562xbf16, #tpu.memory_space<vmem>>, vector<12x384xbf16>
    %c36_225 = arith.constant 36 : index
    %c0_226 = arith.constant 0 : index
    %205 = vector.load %arg20[%c36_225, %c0_226] : memref<108x384xbf16, #tpu.memory_space<vmem>>, vector<12x384xbf16>
    tpu.vector_store %arg20[%c36_225, %c0_226], %204 {strides = array<i32>} : memref<108x384xbf16, #tpu.memory_space<vmem>>, vector<12x384xbf16>,
    %c0_227 = arith.constant 0 : index
    %c128_228 = arith.constant 128 : index
    %206 = vector.load %arg18[%c0_227, %c128_228] : memref<12x562xbf16, #tpu.memory_space<vmem>>, vector<12x384xbf16>
    %c48_229 = arith.constant 48 : index
    %c0_230 = arith.constant 0 : index
    %207 = vector.load %arg20[%c48_229, %c0_230] : memref<108x384xbf16, #tpu.memory_space<vmem>>, vector<12x384xbf16>
    tpu.vector_store %arg20[%c48_229, %c0_230], %206 {strides = array<i32>} : memref<108x384xbf16, #tpu.memory_space<vmem>>, vector<12x384xbf16>,
    %c0_231 = arith.constant 0 : index
    %c129_232 = arith.constant 129 : index
    %208 = vector.load %arg18[%c0_231, %c129_232] : memref<12x562xbf16, #tpu.memory_space<vmem>>, vector<12x384xbf16>
    %c60_233 = arith.constant 60 : index
    %c0_234 = arith.constant 0 : index
    %209 = vector.load %arg20[%c60_233, %c0_234] : memref<108x384xbf16, #tpu.memory_space<vmem>>, vector<12x384xbf16>
    tpu.vector_store %arg20[%c60_233, %c0_234], %208 {strides = array<i32>} : memref<108x384xbf16, #tpu.memory_space<vmem>>, vector<12x384xbf16>,
    %c0_235 = arith.constant 0 : index
    %c151_236 = arith.constant 151 : index
    %210 = vector.load %arg18[%c0_235, %c151_236] : memref<12x562xbf16, #tpu.memory_space<vmem>>, vector<12x384xbf16>
    %c72_237 = arith.constant 72 : index
    %c0_238 = arith.constant 0 : index
    %211 = vector.load %arg20[%c72_237, %c0_238] : memref<108x384xbf16, #tpu.memory_space<vmem>>, vector<12x384xbf16>
    tpu.vector_store %arg20[%c72_237, %c0_238], %210 {strides = array<i32>} : memref<108x384xbf16, #tpu.memory_space<vmem>>, vector<12x384xbf16>,
    %c0_239 = arith.constant 0 : index
    %c152_240 = arith.constant 152 : index
    %212 = vector.load %arg18[%c0_239, %c152_240] : memref<12x562xbf16, #tpu.memory_space<vmem>>, vector<12x384xbf16>
    %c84_241 = arith.constant 84 : index
    %c0_242 = arith.constant 0 : index
    %213 = vector.load %arg20[%c84_241, %c0_242] : memref<108x384xbf16, #tpu.memory_space<vmem>>, vector<12x384xbf16>
    tpu.vector_store %arg20[%c84_241, %c0_242], %212 {strides = array<i32>} : memref<108x384xbf16, #tpu.memory_space<vmem>>, vector<12x384xbf16>,
    %c0_243 = arith.constant 0 : index
    %c153_244 = arith.constant 153 : index
    %214 = vector.load %arg18[%c0_243, %c153_244] : memref<12x562xbf16, #tpu.memory_space<vmem>>, vector<12x384xbf16>
    %c96_245 = arith.constant 96 : index
    %c0_246 = arith.constant 0 : index
    %215 = vector.load %arg20[%c96_245, %c0_246] : memref<108x384xbf16, #tpu.memory_space<vmem>>, vector<12x384xbf16>
    tpu.vector_store %arg20[%c96_245, %c0_246], %214 {strides = array<i32>} : memref<108x384xbf16, #tpu.memory_space<vmem>>, vector<12x384xbf16>,
    %c0_247 = arith.constant 0 : index
    %c0_248 = arith.constant 0 : index
    %216 = vector.load %arg10[%c0_247, %c0_248] : memref<12x108xbf16, #tpu.memory_space<vmem>>, vector<12x108xbf16>
    %c0_249 = arith.constant 0 : index
    %c0_250 = arith.constant 0 : index
    %217 = vector.load %arg20[%c0_249, %c0_250] : memref<108x384xbf16, #tpu.memory_space<vmem>>, vector<108x384xbf16>
    %cst_251 = arith.constant dense<0.000000e+00> : vector<12x384xf32>
    %218 = tpu.matmul %216, %217, %cst_251 {dimension_numbers = #tpu.dot_dimension_numbers<[1], [0], [0], [1], [0, 0, 1, 1], [], []>} : vector<12x108xbf16>, vector<108x384xbf16>, vector<12x384xf32> -> vector<12x384xf32>
    %c0_252 = arith.constant 0 : index
    %c0_253 = arith.constant 0 : index
    %219 = vector.load %arg11[%c0_252, %c0_253] : memref<12x1xf32, #tpu.memory_space<vmem>>, vector<12x1xf32>
    %220 = vector.broadcast %219 : vector<12x1xf32> to vector<12x384xf32>
    %221 = arith.addf %218, %220 : vector<12x384xf32>
    %cst_254 = arith.constant 0.000000e+00 : f32
    %222 = vector.shape_cast %30 : vector<1x384xi1> to vector<1x384xi1>
    %223 = vector.broadcast %222 : vector<1x384xi1> to vector<12x384xi1>
    %224 = vector.broadcast %cst_254 : f32 to vector<12x384xf32>
    %225 = arith.select %223, %221, %224 : vector<12x384xi1>, vector<12x384xf32>
    %226 = arith.truncf %225 : vector<12x384xf32> to vector<12x384xbf16>
    %c0_255 = arith.constant 0 : index
    %c128_256 = arith.constant 128 : index
    %227 = vector.load %arg19[%c0_255, %c128_256] : memref<12x562xbf16, #tpu.memory_space<vmem>>, vector<12x384xbf16>
    tpu.vector_store %arg19[%c0_255, %c128_256], %226 {strides = array<i32>} : memref<12x562xbf16, #tpu.memory_space<vmem>>, vector<12x384xbf16>,
    %c0_257 = arith.constant 0 : index
    %c0_258 = arith.constant 0 : index
    %228 = vector.load %arg12[%c0_257, %c0_258] : memref<56x12xbf16, #tpu.memory_space<vmem>>, vector<56x12xbf16>
    %c0_259 = arith.constant 0 : index
    %c128_260 = arith.constant 128 : index
    %229 = vector.load %arg19[%c0_259, %c128_260] : memref<12x562xbf16, #tpu.memory_space<vmem>>, vector<12x384xbf16>
    %cst_261 = arith.constant dense<0.000000e+00> : vector<56x384xf32>
    %230 = tpu.matmul %228, %229, %cst_261 {dimension_numbers = #tpu.dot_dimension_numbers<[1], [0], [0], [1], [0, 0, 1, 1], [], []>} : vector<56x12xbf16>, vector<12x384xbf16>, vector<56x384xf32> -> vector<56x384xf32>
    %c0_262 = arith.constant 0 : index
    %c0_263 = arith.constant 0 : index
    %231 = vector.load %arg13[%c0_262, %c0_263] : memref<56x1xf32, #tpu.memory_space<vmem>>, vector<56x1xf32>
    %232 = vector.broadcast %231 : vector<56x1xf32> to vector<56x384xf32>
    %233 = arith.addf %230, %232 : vector<56x384xf32>
    %cst_264 = arith.constant 0.000000e+00 : f32
    %234 = vector.broadcast %cst_264 : f32 to vector<56x384xf32>
    %235 = arith.cmpf ogt, %233, %234 : vector<56x384xf32>
    %236 = vector.broadcast %30 : vector<1x384xi1> to vector<56x384xi1>
    %237 = arith.andi %236, %235 : vector<56x384xi1>
    %cst_265 = arith.constant 0.000000e+00 : f32
    %238 = vector.broadcast %cst_265 : f32 to vector<56x384xf32>
    %239 = arith.select %237, %233, %238 : vector<56x384xi1>, vector<56x384xf32>
    %240 = arith.truncf %239 : vector<56x384xf32> to vector<56x384xbf16>
    %c0_266 = arith.constant 0 : index
    %c128_267 = arith.constant 128 : index
    %241 = vector.load %arg17[%c0_266, %c128_267] : memref<56x562xbf16, #tpu.memory_space<vmem>>, vector<56x384xbf16>
    tpu.vector_store %arg17[%c0_266, %c128_267], %240 {strides = array<i32>} : memref<56x562xbf16, #tpu.memory_space<vmem>>, vector<56x384xbf16>,
    %c0_268 = arith.constant 0 : index
    %c0_269 = arith.constant 0 : index
    %c0_270 = arith.constant 0 : index
    %242 = vector.load %arg14[%c0_268, %c0_269, %c0_270] : memref<25x12x56xbf16, #tpu.memory_space<vmem>>, vector<1x12x56xbf16>
    %243 = vector.shape_cast %242 : vector<1x12x56xbf16> to vector<12x56xbf16>
    %c0_271 = arith.constant 0 : index
    %c78_272 = arith.constant 78 : index
    %244 = vector.load %arg17[%c0_271, %c78_272] : memref<56x562xbf16, #tpu.memory_space<vmem>>, vector<56x384xbf16>
    %cst_273 = arith.constant dense<0.000000e+00> : vector<12x384xf32>
    %245 = tpu.matmul %243, %244, %cst_273 {dimension_numbers = #tpu.dot_dimension_numbers<[1], [0], [0], [1], [0, 0, 1, 1], [], []>} : vector<12x56xbf16>, vector<56x384xbf16>, vector<12x384xf32> -> vector<12x384xf32>
    %c1 = arith.constant 1 : index
    %c0_274 = arith.constant 0 : index
    %c0_275 = arith.constant 0 : index
    %246 = vector.load %arg14[%c1, %c0_274, %c0_275] : memref<25x12x56xbf16, #tpu.memory_space<vmem>>, vector<1x12x56xbf16>
    %247 = vector.shape_cast %246 : vector<1x12x56xbf16> to vector<12x56xbf16>
    %c0_276 = arith.constant 0 : index
    %c79_277 = arith.constant 79 : index
    %248 = vector.load %arg17[%c0_276, %c79_277] : memref<56x562xbf16, #tpu.memory_space<vmem>>, vector<56x384xbf16>
    %cst_278 = arith.constant dense<0.000000e+00> : vector<12x384xf32>
    %249 = tpu.matmul %247, %248, %cst_278 {dimension_numbers = #tpu.dot_dimension_numbers<[1], [0], [0], [1], [0, 0, 1, 1], [], []>} : vector<12x56xbf16>, vector<56x384xbf16>, vector<12x384xf32> -> vector<12x384xf32>
    %250 = arith.addf %245, %249 : vector<12x384xf32>
    %c2 = arith.constant 2 : index
    %c0_279 = arith.constant 0 : index
    %c0_280 = arith.constant 0 : index
    %251 = vector.load %arg14[%c2, %c0_279, %c0_280] : memref<25x12x56xbf16, #tpu.memory_space<vmem>>, vector<1x12x56xbf16>
    %252 = vector.shape_cast %251 : vector<1x12x56xbf16> to vector<12x56xbf16>
    %c0_281 = arith.constant 0 : index
    %c80_282 = arith.constant 80 : index
    %253 = vector.load %arg17[%c0_281, %c80_282] : memref<56x562xbf16, #tpu.memory_space<vmem>>, vector<56x384xbf16>
    %cst_283 = arith.constant dense<0.000000e+00> : vector<12x384xf32>
    %254 = tpu.matmul %252, %253, %cst_283 {dimension_numbers = #tpu.dot_dimension_numbers<[1], [0], [0], [1], [0, 0, 1, 1], [], []>} : vector<12x56xbf16>, vector<56x384xbf16>, vector<12x384xf32> -> vector<12x384xf32>
    %255 = arith.addf %250, %254 : vector<12x384xf32>
    %c3 = arith.constant 3 : index
    %c0_284 = arith.constant 0 : index
    %c0_285 = arith.constant 0 : index
    %256 = vector.load %arg14[%c3, %c0_284, %c0_285] : memref<25x12x56xbf16, #tpu.memory_space<vmem>>, vector<1x12x56xbf16>
    %257 = vector.shape_cast %256 : vector<1x12x56xbf16> to vector<12x56xbf16>
    %c0_286 = arith.constant 0 : index
    %c81_287 = arith.constant 81 : index
    %258 = vector.load %arg17[%c0_286, %c81_287] : memref<56x562xbf16, #tpu.memory_space<vmem>>, vector<56x384xbf16>
    %cst_288 = arith.constant dense<0.000000e+00> : vector<12x384xf32>
    %259 = tpu.matmul %257, %258, %cst_288 {dimension_numbers = #tpu.dot_dimension_numbers<[1], [0], [0], [1], [0, 0, 1, 1], [], []>} : vector<12x56xbf16>, vector<56x384xbf16>, vector<12x384xf32> -> vector<12x384xf32>
    %260 = arith.addf %255, %259 : vector<12x384xf32>
    %c4_289 = arith.constant 4 : index
    %c0_290 = arith.constant 0 : index
    %c0_291 = arith.constant 0 : index
    %261 = vector.load %arg14[%c4_289, %c0_290, %c0_291] : memref<25x12x56xbf16, #tpu.memory_space<vmem>>, vector<1x12x56xbf16>
    %262 = vector.shape_cast %261 : vector<1x12x56xbf16> to vector<12x56xbf16>
    %c0_292 = arith.constant 0 : index
    %c82_293 = arith.constant 82 : index
    %263 = vector.load %arg17[%c0_292, %c82_293] : memref<56x562xbf16, #tpu.memory_space<vmem>>, vector<56x384xbf16>
    %cst_294 = arith.constant dense<0.000000e+00> : vector<12x384xf32>
    %264 = tpu.matmul %262, %263, %cst_294 {dimension_numbers = #tpu.dot_dimension_numbers<[1], [0], [0], [1], [0, 0, 1, 1], [], []>} : vector<12x56xbf16>, vector<56x384xbf16>, vector<12x384xf32> -> vector<12x384xf32>
    %265 = arith.addf %260, %264 : vector<12x384xf32>
    %c5 = arith.constant 5 : index
    %c0_295 = arith.constant 0 : index
    %c0_296 = arith.constant 0 : index
    %266 = vector.load %arg14[%c5, %c0_295, %c0_296] : memref<25x12x56xbf16, #tpu.memory_space<vmem>>, vector<1x12x56xbf16>
    %267 = vector.shape_cast %266 : vector<1x12x56xbf16> to vector<12x56xbf16>
    %c0_297 = arith.constant 0 : index
    %c102_298 = arith.constant 102 : index
    %268 = vector.load %arg17[%c0_297, %c102_298] : memref<56x562xbf16, #tpu.memory_space<vmem>>, vector<56x384xbf16>
    %cst_299 = arith.constant dense<0.000000e+00> : vector<12x384xf32>
    %269 = tpu.matmul %267, %268, %cst_299 {dimension_numbers = #tpu.dot_dimension_numbers<[1], [0], [0], [1], [0, 0, 1, 1], [], []>} : vector<12x56xbf16>, vector<56x384xbf16>, vector<12x384xf32> -> vector<12x384xf32>
    %270 = arith.addf %265, %269 : vector<12x384xf32>
    %c6 = arith.constant 6 : index
    %c0_300 = arith.constant 0 : index
    %c0_301 = arith.constant 0 : index
    %271 = vector.load %arg14[%c6, %c0_300, %c0_301] : memref<25x12x56xbf16, #tpu.memory_space<vmem>>, vector<1x12x56xbf16>
    %272 = vector.shape_cast %271 : vector<1x12x56xbf16> to vector<12x56xbf16>
    %c0_302 = arith.constant 0 : index
    %c103_303 = arith.constant 103 : index
    %273 = vector.load %arg17[%c0_302, %c103_303] : memref<56x562xbf16, #tpu.memory_space<vmem>>, vector<56x384xbf16>
    %cst_304 = arith.constant dense<0.000000e+00> : vector<12x384xf32>
    %274 = tpu.matmul %272, %273, %cst_304 {dimension_numbers = #tpu.dot_dimension_numbers<[1], [0], [0], [1], [0, 0, 1, 1], [], []>} : vector<12x56xbf16>, vector<56x384xbf16>, vector<12x384xf32> -> vector<12x384xf32>
    %275 = arith.addf %270, %274 : vector<12x384xf32>
    %c7 = arith.constant 7 : index
    %c0_305 = arith.constant 0 : index
    %c0_306 = arith.constant 0 : index
    %276 = vector.load %arg14[%c7, %c0_305, %c0_306] : memref<25x12x56xbf16, #tpu.memory_space<vmem>>, vector<1x12x56xbf16>
    %277 = vector.shape_cast %276 : vector<1x12x56xbf16> to vector<12x56xbf16>
    %c0_307 = arith.constant 0 : index
    %c104_308 = arith.constant 104 : index
    %278 = vector.load %arg17[%c0_307, %c104_308] : memref<56x562xbf16, #tpu.memory_space<vmem>>, vector<56x384xbf16>
    %cst_309 = arith.constant dense<0.000000e+00> : vector<12x384xf32>
    %279 = tpu.matmul %277, %278, %cst_309 {dimension_numbers = #tpu.dot_dimension_numbers<[1], [0], [0], [1], [0, 0, 1, 1], [], []>} : vector<12x56xbf16>, vector<56x384xbf16>, vector<12x384xf32> -> vector<12x384xf32>
    %280 = arith.addf %275, %279 : vector<12x384xf32>
    %c8_310 = arith.constant 8 : index
    %c0_311 = arith.constant 0 : index
    %c0_312 = arith.constant 0 : index
    %281 = vector.load %arg14[%c8_310, %c0_311, %c0_312] : memref<25x12x56xbf16, #tpu.memory_space<vmem>>, vector<1x12x56xbf16>
    %282 = vector.shape_cast %281 : vector<1x12x56xbf16> to vector<12x56xbf16>
    %c0_313 = arith.constant 0 : index
    %c105_314 = arith.constant 105 : index
    %283 = vector.load %arg17[%c0_313, %c105_314] : memref<56x562xbf16, #tpu.memory_space<vmem>>, vector<56x384xbf16>
    %cst_315 = arith.constant dense<0.000000e+00> : vector<12x384xf32>
    %284 = tpu.matmul %282, %283, %cst_315 {dimension_numbers = #tpu.dot_dimension_numbers<[1], [0], [0], [1], [0, 0, 1, 1], [], []>} : vector<12x56xbf16>, vector<56x384xbf16>, vector<12x384xf32> -> vector<12x384xf32>
    %285 = arith.addf %280, %284 : vector<12x384xf32>
    %c9 = arith.constant 9 : index
    %c0_316 = arith.constant 0 : index
    %c0_317 = arith.constant 0 : index
    %286 = vector.load %arg14[%c9, %c0_316, %c0_317] : memref<25x12x56xbf16, #tpu.memory_space<vmem>>, vector<1x12x56xbf16>
    %287 = vector.shape_cast %286 : vector<1x12x56xbf16> to vector<12x56xbf16>
    %c0_318 = arith.constant 0 : index
    %c106_319 = arith.constant 106 : index
    %288 = vector.load %arg17[%c0_318, %c106_319] : memref<56x562xbf16, #tpu.memory_space<vmem>>, vector<56x384xbf16>
    %cst_320 = arith.constant dense<0.000000e+00> : vector<12x384xf32>
    %289 = tpu.matmul %287, %288, %cst_320 {dimension_numbers = #tpu.dot_dimension_numbers<[1], [0], [0], [1], [0, 0, 1, 1], [], []>} : vector<12x56xbf16>, vector<56x384xbf16>, vector<12x384xf32> -> vector<12x384xf32>
    %290 = arith.addf %285, %289 : vector<12x384xf32>
    %c10 = arith.constant 10 : index
    %c0_321 = arith.constant 0 : index
    %c0_322 = arith.constant 0 : index
    %291 = vector.load %arg14[%c10, %c0_321, %c0_322] : memref<25x12x56xbf16, #tpu.memory_space<vmem>>, vector<1x12x56xbf16>
    %292 = vector.shape_cast %291 : vector<1x12x56xbf16> to vector<12x56xbf16>
    %c0_323 = arith.constant 0 : index
    %c126_324 = arith.constant 126 : index
    %293 = vector.load %arg17[%c0_323, %c126_324] : memref<56x562xbf16, #tpu.memory_space<vmem>>, vector<56x384xbf16>
    %cst_325 = arith.constant dense<0.000000e+00> : vector<12x384xf32>
    %294 = tpu.matmul %292, %293, %cst_325 {dimension_numbers = #tpu.dot_dimension_numbers<[1], [0], [0], [1], [0, 0, 1, 1], [], []>} : vector<12x56xbf16>, vector<56x384xbf16>, vector<12x384xf32> -> vector<12x384xf32>
    %295 = arith.addf %290, %294 : vector<12x384xf32>
    %c11 = arith.constant 11 : index
    %c0_326 = arith.constant 0 : index
    %c0_327 = arith.constant 0 : index
    %296 = vector.load %arg14[%c11, %c0_326, %c0_327] : memref<25x12x56xbf16, #tpu.memory_space<vmem>>, vector<1x12x56xbf16>
    %297 = vector.shape_cast %296 : vector<1x12x56xbf16> to vector<12x56xbf16>
    %c0_328 = arith.constant 0 : index
    %c127_329 = arith.constant 127 : index
    %298 = vector.load %arg17[%c0_328, %c127_329] : memref<56x562xbf16, #tpu.memory_space<vmem>>, vector<56x384xbf16>
    %cst_330 = arith.constant dense<0.000000e+00> : vector<12x384xf32>
    %299 = tpu.matmul %297, %298, %cst_330 {dimension_numbers = #tpu.dot_dimension_numbers<[1], [0], [0], [1], [0, 0, 1, 1], [], []>} : vector<12x56xbf16>, vector<56x384xbf16>, vector<12x384xf32> -> vector<12x384xf32>
    %300 = arith.addf %295, %299 : vector<12x384xf32>
    %c12_331 = arith.constant 12 : index
    %c0_332 = arith.constant 0 : index
    %c0_333 = arith.constant 0 : index
    %301 = vector.load %arg14[%c12_331, %c0_332, %c0_333] : memref<25x12x56xbf16, #tpu.memory_space<vmem>>, vector<1x12x56xbf16>
    %302 = vector.shape_cast %301 : vector<1x12x56xbf16> to vector<12x56xbf16>
    %c0_334 = arith.constant 0 : index
    %c128_335 = arith.constant 128 : index
    %303 = vector.load %arg17[%c0_334, %c128_335] : memref<56x562xbf16, #tpu.memory_space<vmem>>, vector<56x384xbf16>
    %cst_336 = arith.constant dense<0.000000e+00> : vector<12x384xf32>
    %304 = tpu.matmul %302, %303, %cst_336 {dimension_numbers = #tpu.dot_dimension_numbers<[1], [0], [0], [1], [0, 0, 1, 1], [], []>} : vector<12x56xbf16>, vector<56x384xbf16>, vector<12x384xf32> -> vector<12x384xf32>
    %305 = arith.addf %300, %304 : vector<12x384xf32>
    %c13 = arith.constant 13 : index
    %c0_337 = arith.constant 0 : index
    %c0_338 = arith.constant 0 : index
    %306 = vector.load %arg14[%c13, %c0_337, %c0_338] : memref<25x12x56xbf16, #tpu.memory_space<vmem>>, vector<1x12x56xbf16>
    %307 = vector.shape_cast %306 : vector<1x12x56xbf16> to vector<12x56xbf16>
    %c0_339 = arith.constant 0 : index
    %c129_340 = arith.constant 129 : index
    %308 = vector.load %arg17[%c0_339, %c129_340] : memref<56x562xbf16, #tpu.memory_space<vmem>>, vector<56x384xbf16>
    %cst_341 = arith.constant dense<0.000000e+00> : vector<12x384xf32>
    %309 = tpu.matmul %307, %308, %cst_341 {dimension_numbers = #tpu.dot_dimension_numbers<[1], [0], [0], [1], [0, 0, 1, 1], [], []>} : vector<12x56xbf16>, vector<56x384xbf16>, vector<12x384xf32> -> vector<12x384xf32>
    %310 = arith.addf %305, %309 : vector<12x384xf32>
    %c14 = arith.constant 14 : index
    %c0_342 = arith.constant 0 : index
    %c0_343 = arith.constant 0 : index
    %311 = vector.load %arg14[%c14, %c0_342, %c0_343] : memref<25x12x56xbf16, #tpu.memory_space<vmem>>, vector<1x12x56xbf16>
    %312 = vector.shape_cast %311 : vector<1x12x56xbf16> to vector<12x56xbf16>
    %c0_344 = arith.constant 0 : index
    %c130_345 = arith.constant 130 : index
    %313 = vector.load %arg17[%c0_344, %c130_345] : memref<56x562xbf16, #tpu.memory_space<vmem>>, vector<56x384xbf16>
    %cst_346 = arith.constant dense<0.000000e+00> : vector<12x384xf32>
    %314 = tpu.matmul %312, %313, %cst_346 {dimension_numbers = #tpu.dot_dimension_numbers<[1], [0], [0], [1], [0, 0, 1, 1], [], []>} : vector<12x56xbf16>, vector<56x384xbf16>, vector<12x384xf32> -> vector<12x384xf32>
    %315 = arith.addf %310, %314 : vector<12x384xf32>
    %c15 = arith.constant 15 : index
    %c0_347 = arith.constant 0 : index
    %c0_348 = arith.constant 0 : index
    %316 = vector.load %arg14[%c15, %c0_347, %c0_348] : memref<25x12x56xbf16, #tpu.memory_space<vmem>>, vector<1x12x56xbf16>
    %317 = vector.shape_cast %316 : vector<1x12x56xbf16> to vector<12x56xbf16>
    %c0_349 = arith.constant 0 : index
    %c150_350 = arith.constant 150 : index
    %318 = vector.load %arg17[%c0_349, %c150_350] : memref<56x562xbf16, #tpu.memory_space<vmem>>, vector<56x384xbf16>
    %cst_351 = arith.constant dense<0.000000e+00> : vector<12x384xf32>
    %319 = tpu.matmul %317, %318, %cst_351 {dimension_numbers = #tpu.dot_dimension_numbers<[1], [0], [0], [1], [0, 0, 1, 1], [], []>} : vector<12x56xbf16>, vector<56x384xbf16>, vector<12x384xf32> -> vector<12x384xf32>
    %320 = arith.addf %315, %319 : vector<12x384xf32>
    %c16_352 = arith.constant 16 : index
    %c0_353 = arith.constant 0 : index
    %c0_354 = arith.constant 0 : index
    %321 = vector.load %arg14[%c16_352, %c0_353, %c0_354] : memref<25x12x56xbf16, #tpu.memory_space<vmem>>, vector<1x12x56xbf16>
    %322 = vector.shape_cast %321 : vector<1x12x56xbf16> to vector<12x56xbf16>
    %c0_355 = arith.constant 0 : index
    %c151_356 = arith.constant 151 : index
    %323 = vector.load %arg17[%c0_355, %c151_356] : memref<56x562xbf16, #tpu.memory_space<vmem>>, vector<56x384xbf16>
    %cst_357 = arith.constant dense<0.000000e+00> : vector<12x384xf32>
    %324 = tpu.matmul %322, %323, %cst_357 {dimension_numbers = #tpu.dot_dimension_numbers<[1], [0], [0], [1], [0, 0, 1, 1], [], []>} : vector<12x56xbf16>, vector<56x384xbf16>, vector<12x384xf32> -> vector<12x384xf32>
    %325 = arith.addf %320, %324 : vector<12x384xf32>
    %c17 = arith.constant 17 : index
    %c0_358 = arith.constant 0 : index
    %c0_359 = arith.constant 0 : index
    %326 = vector.load %arg14[%c17, %c0_358, %c0_359] : memref<25x12x56xbf16, #tpu.memory_space<vmem>>, vector<1x12x56xbf16>
    %327 = vector.shape_cast %326 : vector<1x12x56xbf16> to vector<12x56xbf16>
    %c0_360 = arith.constant 0 : index
    %c152_361 = arith.constant 152 : index
    %328 = vector.load %arg17[%c0_360, %c152_361] : memref<56x562xbf16, #tpu.memory_space<vmem>>, vector<56x384xbf16>
    %cst_362 = arith.constant dense<0.000000e+00> : vector<12x384xf32>
    %329 = tpu.matmul %327, %328, %cst_362 {dimension_numbers = #tpu.dot_dimension_numbers<[1], [0], [0], [1], [0, 0, 1, 1], [], []>} : vector<12x56xbf16>, vector<56x384xbf16>, vector<12x384xf32> -> vector<12x384xf32>
    %330 = arith.addf %325, %329 : vector<12x384xf32>
    %c18 = arith.constant 18 : index
    %c0_363 = arith.constant 0 : index
    %c0_364 = arith.constant 0 : index
    %331 = vector.load %arg14[%c18, %c0_363, %c0_364] : memref<25x12x56xbf16, #tpu.memory_space<vmem>>, vector<1x12x56xbf16>
    %332 = vector.shape_cast %331 : vector<1x12x56xbf16> to vector<12x56xbf16>
    %c0_365 = arith.constant 0 : index
    %c153_366 = arith.constant 153 : index
    %333 = vector.load %arg17[%c0_365, %c153_366] : memref<56x562xbf16, #tpu.memory_space<vmem>>, vector<56x384xbf16>
    %cst_367 = arith.constant dense<0.000000e+00> : vector<12x384xf32>
    %334 = tpu.matmul %332, %333, %cst_367 {dimension_numbers = #tpu.dot_dimension_numbers<[1], [0], [0], [1], [0, 0, 1, 1], [], []>} : vector<12x56xbf16>, vector<56x384xbf16>, vector<12x384xf32> -> vector<12x384xf32>
    %335 = arith.addf %330, %334 : vector<12x384xf32>
    %c19 = arith.constant 19 : index
    %c0_368 = arith.constant 0 : index
    %c0_369 = arith.constant 0 : index
    %336 = vector.load %arg14[%c19, %c0_368, %c0_369] : memref<25x12x56xbf16, #tpu.memory_space<vmem>>, vector<1x12x56xbf16>
    %337 = vector.shape_cast %336 : vector<1x12x56xbf16> to vector<12x56xbf16>
    %c0_370 = arith.constant 0 : index
    %c154_371 = arith.constant 154 : index
    %338 = vector.load %arg17[%c0_370, %c154_371] : memref<56x562xbf16, #tpu.memory_space<vmem>>, vector<56x384xbf16>
    %cst_372 = arith.constant dense<0.000000e+00> : vector<12x384xf32>
    %339 = tpu.matmul %337, %338, %cst_372 {dimension_numbers = #tpu.dot_dimension_numbers<[1], [0], [0], [1], [0, 0, 1, 1], [], []>} : vector<12x56xbf16>, vector<56x384xbf16>, vector<12x384xf32> -> vector<12x384xf32>
    %340 = arith.addf %335, %339 : vector<12x384xf32>
    %c20_373 = arith.constant 20 : index
    %c0_374 = arith.constant 0 : index
    %c0_375 = arith.constant 0 : index
    %341 = vector.load %arg14[%c20_373, %c0_374, %c0_375] : memref<25x12x56xbf16, #tpu.memory_space<vmem>>, vector<1x12x56xbf16>
    %342 = vector.shape_cast %341 : vector<1x12x56xbf16> to vector<12x56xbf16>
    %c0_376 = arith.constant 0 : index
    %c174_377 = arith.constant 174 : index
    %343 = vector.load %arg17[%c0_376, %c174_377] : memref<56x562xbf16, #tpu.memory_space<vmem>>, vector<56x384xbf16>
    %cst_378 = arith.constant dense<0.000000e+00> : vector<12x384xf32>
    %344 = tpu.matmul %342, %343, %cst_378 {dimension_numbers = #tpu.dot_dimension_numbers<[1], [0], [0], [1], [0, 0, 1, 1], [], []>} : vector<12x56xbf16>, vector<56x384xbf16>, vector<12x384xf32> -> vector<12x384xf32>
    %345 = arith.addf %340, %344 : vector<12x384xf32>
    %c21 = arith.constant 21 : index
    %c0_379 = arith.constant 0 : index
    %c0_380 = arith.constant 0 : index
    %346 = vector.load %arg14[%c21, %c0_379, %c0_380] : memref<25x12x56xbf16, #tpu.memory_space<vmem>>, vector<1x12x56xbf16>
    %347 = vector.shape_cast %346 : vector<1x12x56xbf16> to vector<12x56xbf16>
    %c0_381 = arith.constant 0 : index
    %c175_382 = arith.constant 175 : index
    %348 = vector.load %arg17[%c0_381, %c175_382] : memref<56x562xbf16, #tpu.memory_space<vmem>>, vector<56x384xbf16>
    %cst_383 = arith.constant dense<0.000000e+00> : vector<12x384xf32>
    %349 = tpu.matmul %347, %348, %cst_383 {dimension_numbers = #tpu.dot_dimension_numbers<[1], [0], [0], [1], [0, 0, 1, 1], [], []>} : vector<12x56xbf16>, vector<56x384xbf16>, vector<12x384xf32> -> vector<12x384xf32>
    %350 = arith.addf %345, %349 : vector<12x384xf32>
    %c22 = arith.constant 22 : index
    %c0_384 = arith.constant 0 : index
    %c0_385 = arith.constant 0 : index
    %351 = vector.load %arg14[%c22, %c0_384, %c0_385] : memref<25x12x56xbf16, #tpu.memory_space<vmem>>, vector<1x12x56xbf16>
    %352 = vector.shape_cast %351 : vector<1x12x56xbf16> to vector<12x56xbf16>
    %c0_386 = arith.constant 0 : index
    %c176_387 = arith.constant 176 : index
    %353 = vector.load %arg17[%c0_386, %c176_387] : memref<56x562xbf16, #tpu.memory_space<vmem>>, vector<56x384xbf16>
    %cst_388 = arith.constant dense<0.000000e+00> : vector<12x384xf32>
    %354 = tpu.matmul %352, %353, %cst_388 {dimension_numbers = #tpu.dot_dimension_numbers<[1], [0], [0], [1], [0, 0, 1, 1], [], []>} : vector<12x56xbf16>, vector<56x384xbf16>, vector<12x384xf32> -> vector<12x384xf32>
    %355 = arith.addf %350, %354 : vector<12x384xf32>
    %c23 = arith.constant 23 : index
    %c0_389 = arith.constant 0 : index
    %c0_390 = arith.constant 0 : index
    %356 = vector.load %arg14[%c23, %c0_389, %c0_390] : memref<25x12x56xbf16, #tpu.memory_space<vmem>>, vector<1x12x56xbf16>
    %357 = vector.shape_cast %356 : vector<1x12x56xbf16> to vector<12x56xbf16>
    %c0_391 = arith.constant 0 : index
    %c177_392 = arith.constant 177 : index
    %358 = vector.load %arg17[%c0_391, %c177_392] : memref<56x562xbf16, #tpu.memory_space<vmem>>, vector<56x384xbf16>
    %cst_393 = arith.constant dense<0.000000e+00> : vector<12x384xf32>
    %359 = tpu.matmul %357, %358, %cst_393 {dimension_numbers = #tpu.dot_dimension_numbers<[1], [0], [0], [1], [0, 0, 1, 1], [], []>} : vector<12x56xbf16>, vector<56x384xbf16>, vector<12x384xf32> -> vector<12x384xf32>
    %360 = arith.addf %355, %359 : vector<12x384xf32>
    %c24_394 = arith.constant 24 : index
    %c0_395 = arith.constant 0 : index
    %c0_396 = arith.constant 0 : index
    %361 = vector.load %arg14[%c24_394, %c0_395, %c0_396] : memref<25x12x56xbf16, #tpu.memory_space<vmem>>, vector<1x12x56xbf16>
    %362 = vector.shape_cast %361 : vector<1x12x56xbf16> to vector<12x56xbf16>
    %c0_397 = arith.constant 0 : index
    %c178_398 = arith.constant 178 : index
    %363 = vector.load %arg17[%c0_397, %c178_398] : memref<56x562xbf16, #tpu.memory_space<vmem>>, vector<56x384xbf16>
    %cst_399 = arith.constant dense<0.000000e+00> : vector<12x384xf32>
    %364 = tpu.matmul %362, %363, %cst_399 {dimension_numbers = #tpu.dot_dimension_numbers<[1], [0], [0], [1], [0, 0, 1, 1], [], []>} : vector<12x56xbf16>, vector<56x384xbf16>, vector<12x384xf32> -> vector<12x384xf32>
    %365 = arith.addf %360, %364 : vector<12x384xf32>
    %c0_400 = arith.constant 0 : index
    %c0_401 = arith.constant 0 : index
    %366 = vector.load %arg15[%c0_400, %c0_401] : memref<12x1xf32, #tpu.memory_space<vmem>>, vector<12x1xf32>
    %367 = vector.broadcast %366 : vector<12x1xf32> to vector<12x384xf32>
    %368 = arith.addf %365, %367 : vector<12x384xf32>
    %c0_402 = arith.constant 0 : index
    %c0_403 = arith.constant 0 : index
    %c0_404 = arith.constant 0 : index
    %369 = vector.load %arg16[%c0_402, %c0_403, %c0_404] : memref<1x12x384xf32, #tpu.memory_space<vmem>>, vector<1x12x384xf32>
    %370 = vector.shape_cast %369 : vector<1x12x384xf32> to vector<12x384xf32>
    %371 = vector.shape_cast %368 : vector<12x384xf32> to vector<1x12x384xf32>
    tpu.vector_store %arg16[%c0_402, %c0_403, %c0_404], %371 {strides = array<i32>} : memref<1x12x384xf32, #tpu.memory_space<vmem>>, vector<1x12x384xf32>,
    return
  }
  func.func @transform_0(%arg0: i32) -> (i32, i32, i32) {
    %c0_i32 = arith.constant 0 : i32
    %c0_i32_0 = arith.constant 0 : i32
    %c0_i32_1 = arith.constant 0 : i32
    return %arg0, %c0_i32, %c0_i32_0 : i32, i32, i32
  }
  func.func @transform_1(%arg0: i32) -> (i32, i32) {
    %c0_i32 = arith.constant 0 : i32
    %c0_i32_0 = arith.constant 0 : i32
    %c0_i32_1 = arith.constant 0 : i32
    return %c0_i32, %c0_i32_0 : i32, i32
  }
  func.func @transform_2(%arg0: i32) -> (i32, i32) {
    %c0_i32 = arith.constant 0 : i32
    %c0_i32_0 = arith.constant 0 : i32
    %c0_i32_1 = arith.constant 0 : i32
    return %c0_i32, %c0_i32_0 : i32, i32
  }
  func.func @transform_3(%arg0: i32) -> (i32, i32) {
    %c0_i32 = arith.constant 0 : i32
    %c0_i32_0 = arith.constant 0 : i32
    %c0_i32_1 = arith.constant 0 : i32
    return %c0_i32, %c0_i32_0 : i32, i32
  }
  func.func @transform_4(%arg0: i32) -> (i32, i32) {
    %c0_i32 = arith.constant 0 : i32
    %c0_i32_0 = arith.constant 0 : i32
    %c0_i32_1 = arith.constant 0 : i32
    return %c0_i32, %c0_i32_0 : i32, i32
  }
  func.func @transform_5(%arg0: i32) -> (i32, i32) {
    %c0_i32 = arith.constant 0 : i32
    %c0_i32_0 = arith.constant 0 : i32
    %c0_i32_1 = arith.constant 0 : i32
    return %c0_i32, %c0_i32_0 : i32, i32
  }
  func.func @transform_6(%arg0: i32) -> (i32, i32) {
    %c0_i32 = arith.constant 0 : i32
    %c0_i32_0 = arith.constant 0 : i32
    %c0_i32_1 = arith.constant 0 : i32
    return %c0_i32, %c0_i32_0 : i32, i32
  }
  func.func @transform_7(%arg0: i32) -> (i32, i32) {
    %c0_i32 = arith.constant 0 : i32
    %c0_i32_0 = arith.constant 0 : i32
    %c0_i32_1 = arith.constant 0 : i32
    return %c0_i32, %c0_i32_0 : i32, i32
  }
  func.func @transform_8(%arg0: i32) -> (i32, i32) {
    %c0_i32 = arith.constant 0 : i32
    %c0_i32_0 = arith.constant 0 : i32
    %c0_i32_1 = arith.constant 0 : i32
    return %c0_i32, %c0_i32_0 : i32, i32
  }
  func.func @transform_9(%arg0: i32) -> (i32, i32) {
    %c0_i32 = arith.constant 0 : i32
    %c0_i32_0 = arith.constant 0 : i32
    %c0_i32_1 = arith.constant 0 : i32
    return %c0_i32, %c0_i32_0 : i32, i32
  }
  func.func @transform_10(%arg0: i32) -> (i32, i32) {
    %c0_i32 = arith.constant 0 : i32
    %c0_i32_0 = arith.constant 0 : i32
    %c0_i32_1 = arith.constant 0 : i32
    return %c0_i32, %c0_i32_0 : i32, i32
  }
  func.func @transform_11(%arg0: i32) -> (i32, i32) {
    %c0_i32 = arith.constant 0 : i32
    %c0_i32_0 = arith.constant 0 : i32
    %c0_i32_1 = arith.constant 0 : i32
    return %c0_i32, %c0_i32_0 : i32, i32
  }
  func.func @transform_12(%arg0: i32) -> (i32, i32) {
    %c0_i32 = arith.constant 0 : i32
    %c0_i32_0 = arith.constant 0 : i32
    %c0_i32_1 = arith.constant 0 : i32
    return %c0_i32, %c0_i32_0 : i32, i32
  }
  func.func @transform_13(%arg0: i32) -> (i32, i32, i32) {
    %c0_i32 = arith.constant 0 : i32
    %c0_i32_0 = arith.constant 0 : i32
    %c0_i32_1 = arith.constant 0 : i32
    %c0_i32_2 = arith.constant 0 : i32
    return %c0_i32, %c0_i32_0, %c0_i32_1 : i32, i32, i32
  }
  func.func @transform_14(%arg0: i32) -> (i32, i32) {
    %c0_i32 = arith.constant 0 : i32
    %c0_i32_0 = arith.constant 0 : i32
    %c0_i32_1 = arith.constant 0 : i32
    return %c0_i32, %c0_i32_0 : i32, i32
  }
  func.func @transform_15(%arg0: i32) -> (i32, i32, i32) {
    %c0_i32 = arith.constant 0 : i32
    %c0_i32_0 = arith.constant 0 : i32
    %c0_i32_1 = arith.constant 0 : i32
    return %arg0, %c0_i32, %c0_i32_0 : i32, i32, i32
  }
}

</mosaic_0001>

<llo_original>
// kernel: fsrcnn_pallas.1
$region0: #{fsrcnn_pallas.1}
  #allocation0 [shape = 'u32[]', space=smem, size = 0x4, offset = 0x4, fixed_abs, tag = 'smem constant byte address 0x4 - core index']
  #allocation1 [shape = 'u32[144,128]{1,0:T(1,128)}', space=vmem, size = 0x12000, scoped, tag = 'internal scratch']
  #allocation2 [shape = 'bf16[56,562]{1,0:T(8,128)(2,1)}', space=vmem, size = 0x11800, scoped, tag = 'scratch operand']
  #allocation3 [shape = 'bf16[12,562]{1,0:T(8,128)(2,1)}', space=vmem, size = 0x5000, scoped, tag = 'scratch operand']
  #allocation4 [shape = 'bf16[12,562]{1,0:T(8,128)(2,1)}', space=vmem, size = 0x5000, scoped, tag = 'scratch operand']
  #allocation5 [shape = 'bf16[108,384]{1,0:T(8,128)(2,1)}', space=vmem, size = 0x15000, scoped, tag = 'scratch operand']
  %s0 = inlined_call_operand.vmem [shape: bf16[2,4,562], index: 0, kind: input, shape index: {}]
  %s1 = inlined_call_operand.hbm [shape: bf16[56,100], index: 1, kind: input, shape index: {}]
  %s2 = inlined_call_operand.vmem [shape: f32[56,1], index: 2, kind: input, shape index: {}]
  %s3 = inlined_call_operand.hbm [shape: bf16[12,56], index: 3, kind: input, shape index: {}]
  %s4 = inlined_call_operand.vmem [shape: f32[12,1], index: 4, kind: input, shape index: {}]
  %s5 = inlined_call_operand.hbm [shape: bf16[12,108], index: 5, kind: input, shape index: {}]
  %s6 = inlined_call_operand.vmem [shape: f32[12,1], index: 6, kind: input, shape index: {}]
  %s7 = inlined_call_operand.hbm [shape: bf16[12,108], index: 7, kind: input, shape index: {}]
  %s8 = inlined_call_operand.vmem [shape: f32[12,1], index: 8, kind: input, shape index: {}]
  %s9 = inlined_call_operand.hbm [shape: bf16[12,108], index: 9, kind: input, shape index: {}]
  %s10 = inlined_call_operand.vmem [shape: f32[12,1], index: 10, kind: input, shape index: {}]
  %s11 = inlined_call_operand.vmem [shape: bf16[56,12], index: 11, kind: input, shape index: {}]
  %s12 = inlined_call_operand.vmem [shape: f32[56,1], index: 12, kind: input, shape index: {}]
  %s13 = inlined_call_operand.vmem [shape: bf16[25,12,56], index: 13, kind: input, shape index: {}]
  %s14 = inlined_call_operand.vmem [shape: f32[12,1], index: 14, kind: input, shape index: {}]
  %s15 = inlined_call_operand.vmem [shape: f32[2,12,384], index: 15, kind: output, shape index: {}]
  %s16 = sld [smem:[#allocation0]]
  $region113: #{fsrcnn_pallas.1} parent=0
    _
  %s18 = ssub.s32 1, %s16
  %s19 = scalar_select 0, %s18, %s16
  $region1: #{fsrcnn_pallas.1} parent=0
    #allocation6 [shape = 'u8[14336]{0}', space=vmem, size = 0x3800, scoped, tag = 'input window, operand 1, single buffered']
    #allocation7 [shape = 's32[2]{0}', space=sflag, size = 0x8, scoped, tag = 'scoped memory for fsrcnn_pallas.1']
    #allocation8 [shape = 'u8[4096]{0}', space=vmem, size = 0x1000, scoped, tag = 'input window, operand 3, single buffered']
    #allocation9 [shape = 's32[1]{0}', space=sflag, size = 0x4, scoped, tag = 'scoped memory for fsrcnn_pallas.1']
    #allocation10 [shape = 'u8[4096]{0}', space=vmem, size = 0x1000, scoped, tag = 'input window, operand 5, single buffered']
    #allocation11 [shape = 'u8[4096]{0}', space=vmem, size = 0x1000, scoped, tag = 'input window, operand 7, single buffered']
    #allocation12 [shape = 's32[1]{0}', space=sflag, size = 0x4, scoped, tag = 'scoped memory for fsrcnn_pallas.1']
    #allocation13 [shape = 'u8[4096]{0}', space=vmem, size = 0x1000, scoped, tag = 'input window, operand 9, single buffered']
    %20 = vsyncpa [#allocation7], 0
    %21 = vsyncpa [#allocation9], 0
    %22 = vsyncpa [#allocation12], 0
    loop: start=0, step=1, limit=4
    $region2: #{fsrcnn_pallas.1} parent=1 // loop_pre_header
      _
    $region3: #{fsrcnn_pallas.1} parent=1 // loop_header
      %s24 = sphi 0, %s28
      %p25 = scmp.ge.s32.totalorder %s24, 4
      %s34 = sphi 0, %s36
      %s37 = sphi 0, %s34
      %s38 = sphi 0, %s37
      %s54 = sphi 0, %s38
      %s58 = sphi 0, %s58
      %s60 = sphi 0, %s58
      %s61 = sphi 0, %s60
      %s75 = sphi 0, %s61
      %s79 = sphi 0, %s79
      %s81 = sphi 0, %s79
      %s82 = sphi 0, %s81
      %s96 = sphi 0, %s82
      %s100 = sphi 0, %s100
      %s102 = sphi 0, %s100
      %s103 = sphi 0, %s102
      %s117 = sphi 0, %s103
      %s121 = sphi 0, %s121
      %s123 = sphi 0, %s121
      %s124 = sphi 0, %s123
      %s138 = sphi 0, %s124
      %s142 = sphi 0, %s142
      %s144 = sphi 0, %s142
      %s145 = sphi 0, %s144
      %s159 = sphi 0, %s145
      %s163 = sphi 0, %s163
      %s165 = sphi 0, %s163
      %s166 = sphi 0, %s165
      %s180 = sphi 0, %s166
      %s184 = sphi 0, %s184
      %s186 = sphi 0, %s184
      %s187 = sphi 0, %s186
      %s201 = sphi 0, %s187
      %s205 = sphi 0, %s205
      %s207 = sphi 0, %s205
      %s208 = sphi 0, %s207
      %s222 = sphi 0, %s208
      %s226 = sphi 0, %s226
      %s228 = sphi 0, %s226
      %s229 = sphi 0, %s228
      %s243 = sphi 0, %s229
      %s247 = sphi 0, %s247
      %s249 = sphi 0, %s247
      %s250 = sphi 0, %s249
      %s264 = sphi 0, %s250
      %s268 = sphi 0, %s268
      %s270 = sphi 0, %s268
      %s271 = sphi 0, %s270
      %s285 = sphi 0, %s271
      %s289 = sphi 0, %s289
      %s291 = sphi 0, %s289
      %s292 = sphi 0, %s291
      %s306 = sphi 0, %s292
      %s310 = sphi 0, %s310
      %s312 = sphi 0, %s310
      %s313 = sphi 0, %s312
      %s327 = sphi 0, %s313
      %s331 = sphi 0, %s331
      %s333 = sphi 0, %s331
      %s334 = sphi 0, %s333
      %s348 = sphi 0, %s334
      %s354 = sphi 0, %s356
      %s357 = sphi 0, %s354
      %s358 = sphi 0, %s357
      %s374 = sphi 0, %s358
    $region4: #{fsrcnn_pallas.1} parent=1 // loop_header_branch
      %27 = sbr.rel (%p25) target = $region8
    $region5: #{fsrcnn_pallas.1} parent=1 // loop_body
      %s29 = ssub.s32 %s24, 1
      %s30 = ssub.s32 %s24, 2
      %s31 = sadd.s32 %s24, 1
      %s32 = ssub.s32 %s24, %s31
      %p33 = scmp.eq.s32.totalorder %s32, 0
      %s35 = sadd.s32 %s34, 1
      %s36 = scalar_select %p33, %s34, %s35
      %p39 = pneg %p33
      %p40 = scmp.eq.s32.totalorder %s24, 1
      %p41 = por %p39, %p40
      %p42 = scmp.ne.s32.totalorder %s34, %s37
      %p43 = scmp.eq.s32.totalorder %s24, 0
      %p44 = por %p42, %p43
      %p45 = scmp.ne.s32.totalorder %s34, %s37
      %p46 = scmp.eq.s32.totalorder %s29, 1
      %p47 = por %p45, %p46
      %p48 = scmp.ne.s32.totalorder %s37, %s38
      %p49 = scmp.eq.s32.totalorder %s29, 0
      %p50 = por %p48, %p49
      %p51 = scmp.ne.s32.totalorder %s37, %s38
      %p52 = scmp.eq.s32.totalorder %s30, 1
      %p53 = por %p51, %p52
      %p55 = scmp.ne.s32.totalorder %s38, %s54
      %p56 = scmp.eq.s32.totalorder %s30, 0
      %p57 = por %p55, %p56
      %s59 = sadd.s32 %s58, 1
      %p62 = scmp.eq.s32.totalorder %s24, 1
      %p63 = scmp.ne.s32.totalorder %s58, %s60
      %p64 = scmp.eq.s32.totalorder %s24, 0
      %p65 = por %p63, %p64
      %p66 = scmp.ne.s32.totalorder %s58, %s60
      %p67 = scmp.eq.s32.totalorder %s29, 1
      %p68 = por %p66, %p67
      %p69 = scmp.ne.s32.totalorder %s60, %s61
      %p70 = scmp.eq.s32.totalorder %s29, 0
      %p71 = por %p69, %p70
      %p72 = scmp.ne.s32.totalorder %s60, %s61
      %p73 = scmp.eq.s32.totalorder %s30, 1
      %p74 = por %p72, %p73
      %p76 = scmp.ne.s32.totalorder %s61, %s75
      %p77 = scmp.eq.s32.totalorder %s30, 0
      %p78 = por %p76, %p77
      %s80 = sadd.s32 %s79, 1
      %p83 = scmp.eq.s32.totalorder %s24, 1
      %p84 = scmp.ne.s32.totalorder %s79, %s81
      %p85 = scmp.eq.s32.totalorder %s24, 0
      %p86 = por %p84, %p85
      %p87 = scmp.ne.s32.totalorder %s79, %s81
      %p88 = scmp.eq.s32.totalorder %s29, 1
      %p89 = por %p87, %p88
      %p90 = scmp.ne.s32.totalorder %s81, %s82
      %p91 = scmp.eq.s32.totalorder %s29, 0
      %p92 = por %p90, %p91
      %p93 = scmp.ne.s32.totalorder %s81, %s82
      %p94 = scmp.eq.s32.totalorder %s30, 1
      %p95 = por %p93, %p94
      %p97 = scmp.ne.s32.totalorder %s82, %s96
      %p98 = scmp.eq.s32.totalorder %s30, 0
      %p99 = por %p97, %p98
      %s101 = sadd.s32 %s100, 1
      %p104 = scmp.eq.s32.totalorder %s24, 1
      %p105 = scmp.ne.s32.totalorder %s100, %s102
      %p106 = scmp.eq.s32.totalorder %s24, 0
      %p107 = por %p105, %p106
      %p108 = scmp.ne.s32.totalorder %s100, %s102
      %p109 = scmp.eq.s32.totalorder %s29, 1
      %p110 = por %p108, %p109
      %p111 = scmp.ne.s32.totalorder %s102, %s103
      %p112 = scmp.eq.s32.totalorder %s29, 0
      %p113 = por %p111, %p112
      %p114 = scmp.ne.s32.totalorder %s102, %s103
      %p115 = scmp.eq.s32.totalorder %s30, 1
      %p116 = por %p114, %p115
      %p118 = scmp.ne.s32.totalorder %s103, %s117
      %p119 = scmp.eq.s32.totalorder %s30, 0
      %p120 = por %p118, %p119
      %s122 = sadd.s32 %s121, 1
      %p125 = scmp.eq.s32.totalorder %s24, 1
      %p126 = scmp.ne.s32.totalorder %s121, %s123
      %p127 = scmp.eq.s32.totalorder %s24, 0
      %p128 = por %p126, %p127
      %p129 = scmp.ne.s32.totalorder %s121, %s123
      %p130 = scmp.eq.s32.totalorder %s29, 1
      %p131 = por %p129, %p130
      %p132 = scmp.ne.s32.totalorder %s123, %s124
      %p133 = scmp.eq.s32.totalorder %s29, 0
      %p134 = por %p132, %p133
      %p135 = scmp.ne.s32.totalorder %s123, %s124
      %p136 = scmp.eq.s32.totalorder %s30, 1
      %p137 = por %p135, %p136
      %p139 = scmp.ne.s32.totalorder %s124, %s138
      %p140 = scmp.eq.s32.totalorder %s30, 0
      %p141 = por %p139, %p140
      %s143 = sadd.s32 %s142, 1
      %p146 = scmp.eq.s32.totalorder %s24, 1
      %p147 = scmp.ne.s32.totalorder %s142, %s144
      %p148 = scmp.eq.s32.totalorder %s24, 0
      %p149 = por %p147, %p148
      %p150 = scmp.ne.s32.totalorder %s142, %s144
      %p151 = scmp.eq.s32.totalorder %s29, 1
      %p152 = por %p150, %p151
      %p153 = scmp.ne.s32.totalorder %s144, %s145
      %p154 = scmp.eq.s32.totalorder %s29, 0
      %p155 = por %p153, %p154
      %p156 = scmp.ne.s32.totalorder %s144, %s145
      %p157 = scmp.eq.s32.totalorder %s30, 1
      %p158 = por %p156, %p157
      %p160 = scmp.ne.s32.totalorder %s145, %s159
      %p161 = scmp.eq.s32.totalorder %s30, 0
      %p162 = por %p160, %p161
      %s164 = sadd.s32 %s163, 1
      %p167 = scmp.eq.s32.totalorder %s24, 1
      %p168 = scmp.ne.s32.totalorder %s163, %s165
      %p169 = scmp.eq.s32.totalorder %s24, 0
      %p170 = por %p168, %p169
      %p171 = scmp.ne.s32.totalorder %s163, %s165
      %p172 = scmp.eq.s32.totalorder %s29, 1
      %p173 = por %p171, %p172
      %p174 = scmp.ne.s32.totalorder %s165, %s166
      %p175 = scmp.eq.s32.totalorder %s29, 0
      %p176 = por %p174, %p175
      %p177 = scmp.ne.s32.totalorder %s165, %s166
      %p178 = scmp.eq.s32.totalorder %s30, 1
      %p179 = por %p177, %p178
      %p181 = scmp.ne.s32.totalorder %s166, %s180
      %p182 = scmp.eq.s32.totalorder %s30, 0
      %p183 = por %p181, %p182
      %s185 = sadd.s32 %s184, 1
      %p188 = scmp.eq.s32.totalorder %s24, 1
      %p189 = scmp.ne.s32.totalorder %s184, %s186
      %p190 = scmp.eq.s32.totalorder %s24, 0
      %p191 = por %p189, %p190
      %p192 = scmp.ne.s32.totalorder %s184, %s186
      %p193 = scmp.eq.s32.totalorder %s29, 1
      %p194 = por %p192, %p193
      %p195 = scmp.ne.s32.totalorder %s186, %s187
      %p196 = scmp.eq.s32.totalorder %s29, 0
      %p197 = por %p195, %p196
      %p198 = scmp.ne.s32.totalorder %s186, %s187
      %p199 = scmp.eq.s32.totalorder %s30, 1
      %p200 = por %p198, %p199
      %p202 = scmp.ne.s32.totalorder %s187, %s201
      %p203 = scmp.eq.s32.totalorder %s30, 0
      %p204 = por %p202, %p203
      %s206 = sadd.s32 %s205, 1
      %p209 = scmp.eq.s32.totalorder %s24, 1
      %p210 = scmp.ne.s32.totalorder %s205, %s207
      %p211 = scmp.eq.s32.totalorder %s24, 0
      %p212 = por %p210, %p211
      %p213 = scmp.ne.s32.totalorder %s205, %s207
      %p214 = scmp.eq.s32.totalorder %s29, 1
      %p215 = por %p213, %p214
      %p216 = scmp.ne.s32.totalorder %s207, %s208
      %p217 = scmp.eq.s32.totalorder %s29, 0
      %p218 = por %p216, %p217
      %p219 = scmp.ne.s32.totalorder %s207, %s208
      %p220 = scmp.eq.s32.totalorder %s30, 1
      %p221 = por %p219, %p220
      %p223 = scmp.ne.s32.totalorder %s208, %s222
      %p224 = scmp.eq.s32.totalorder %s30, 0
      %p225 = por %p223, %p224
      %s227 = sadd.s32 %s226, 1
      %p230 = scmp.eq.s32.totalorder %s24, 1
      %p231 = scmp.ne.s32.totalorder %s226, %s228
      %p232 = scmp.eq.s32.totalorder %s24, 0
      %p233 = por %p231, %p232
      %p234 = scmp.ne.s32.totalorder %s226, %s228
      %p235 = scmp.eq.s32.totalorder %s29, 1
      %p236 = por %p234, %p235
      %p237 = scmp.ne.s32.totalorder %s228, %s229
      %p238 = scmp.eq.s32.totalorder %s29, 0
      %p239 = por %p237, %p238
      %p240 = scmp.ne.s32.totalorder %s228, %s229
      %p241 = scmp.eq.s32.totalorder %s30, 1
      %p242 = por %p240, %p241
      %p244 = scmp.ne.s32.totalorder %s229, %s243
      %p245 = scmp.eq.s32.totalorder %s30, 0
      %p246 = por %p244, %p245
      %s248 = sadd.s32 %s247, 1
      %p251 = scmp.eq.s32.totalorder %s24, 1
      %p252 = scmp.ne.s32.totalorder %s247, %s249
      %p253 = scmp.eq.s32.totalorder %s24, 0
      %p254 = por %p252, %p253
      %p255 = scmp.ne.s32.totalorder %s247, %s249
      %p256 = scmp.eq.s32.totalorder %s29, 1
      %p257 = por %p255, %p256
      %p258 = scmp.ne.s32.totalorder %s249, %s250
      %p259 = scmp.eq.s32.totalorder %s29, 0
      %p260 = por %p258, %p259
      %p261 = scmp.ne.s32.totalorder %s249, %s250
      %p262 = scmp.eq.s32.totalorder %s30, 1
      %p263 = por %p261, %p262
      %p265 = scmp.ne.s32.totalorder %s250, %s264
      %p266 = scmp.eq.s32.totalorder %s30, 0
      %p267 = por %p265, %p266
      %s269 = sadd.s32 %s268, 1
      %p272 = scmp.eq.s32.totalorder %s24, 1
      %p273 = scmp.ne.s32.totalorder %s268, %s270
      %p274 = scmp.eq.s32.totalorder %s24, 0
      %p275 = por %p273, %p274
      %p276 = scmp.ne.s32.totalorder %s268, %s270
      %p277 = scmp.eq.s32.totalorder %s29, 1
      %p278 = por %p276, %p277
      %p279 = scmp.ne.s32.totalorder %s270, %s271
      %p280 = scmp.eq.s32.totalorder %s29, 0
      %p281 = por %p279, %p280
      %p282 = scmp.ne.s32.totalorder %s270, %s271
      %p283 = scmp.eq.s32.totalorder %s30, 1
      %p284 = por %p282, %p283
      %p286 = scmp.ne.s32.totalorder %s271, %s285
      %p287 = scmp.eq.s32.totalorder %s30, 0
      %p288 = por %p286, %p287
      %s290 = sadd.s32 %s289, 1
      %p293 = scmp.eq.s32.totalorder %s24, 1
      %p294 = scmp.ne.s32.totalorder %s289, %s291
      %p295 = scmp.eq.s32.totalorder %s24, 0
      %p296 = por %p294, %p295
      %p297 = scmp.ne.s32.totalorder %s289, %s291
      %p298 = scmp.eq.s32.totalorder %s29, 1
      %p299 = por %p297, %p298
      %p300 = scmp.ne.s32.totalorder %s291, %s292
      %p301 = scmp.eq.s32.totalorder %s29, 0
      %p302 = por %p300, %p301
      %p303 = scmp.ne.s32.totalorder %s291, %s292
      %p304 = scmp.eq.s32.totalorder %s30, 1
      %p305 = por %p303, %p304
      %p307 = scmp.ne.s32.totalorder %s292, %s306
      %p308 = scmp.eq.s32.totalorder %s30, 0
      %p309 = por %p307, %p308
      %s311 = sadd.s32 %s310, 1
      %p314 = scmp.eq.s32.totalorder %s24, 1
      %p315 = scmp.ne.s32.totalorder %s310, %s312
      %p316 = scmp.eq.s32.totalorder %s24, 0
      %p317 = por %p315, %p316
      %p318 = scmp.ne.s32.totalorder %s310, %s312
      %p319 = scmp.eq.s32.totalorder %s29, 1
      %p320 = por %p318, %p319
      %p321 = scmp.ne.s32.totalorder %s312, %s313
      %p322 = scmp.eq.s32.totalorder %s29, 0
      %p323 = por %p321, %p322
      %p324 = scmp.ne.s32.totalorder %s312, %s313
      %p325 = scmp.eq.s32.totalorder %s30, 1
      %p326 = por %p324, %p325
      %p328 = scmp.ne.s32.totalorder %s313, %s327
      %p329 = scmp.eq.s32.totalorder %s30, 0
      %p330 = por %p328, %p329
      %s332 = sadd.s32 %s331, 1
      %p335 = scmp.eq.s32.totalorder %s24, 1
      %p336 = scmp.ne.s32.totalorder %s331, %s333
      %p337 = scmp.eq.s32.totalorder %s24, 0
      %p338 = por %p336, %p337
      %p339 = scmp.ne.s32.totalorder %s331, %s333
      %p340 = scmp.eq.s32.totalorder %s29, 1
      %p341 = por %p339, %p340
      %p342 = scmp.ne.s32.totalorder %s333, %s334
      %p343 = scmp.eq.s32.totalorder %s29, 0
      %p344 = por %p342, %p343
      %p345 = scmp.ne.s32.totalorder %s333, %s334
      %p346 = scmp.eq.s32.totalorder %s30, 1
      %p347 = por %p345, %p346
      %p349 = scmp.ne.s32.totalorder %s334, %s348
      %p350 = scmp.eq.s32.totalorder %s30, 0
      %p351 = por %p349, %p350
      %s352 = ssub.s32 %s24, %s31
      %p353 = scmp.eq.s32.totalorder %s352, 0
      %s355 = sadd.s32 %s354, 1
      %s356 = scalar_select %p353, %s354, %s355
      %p359 = pneg %p353
      %p360 = scmp.eq.s32.totalorder %s24, 1
      %p361 = por %p359, %p360
      %p362 = scmp.ne.s32.totalorder %s354, %s357
      %p363 = scmp.eq.s32.totalorder %s24, 0
      %p364 = por %p362, %p363
      %p365 = scmp.ne.s32.totalorder %s354, %s357
      %p366 = scmp.eq.s32.totalorder %s29, 1
      %p367 = por %p365, %p366
      %p368 = scmp.ne.s32.totalorder %s357, %s358
      %p369 = scmp.eq.s32.totalorder %s29, 0
      %p370 = por %p368, %p369
      %p371 = scmp.ne.s32.totalorder %s357, %s358
      %p372 = scmp.eq.s32.totalorder %s30, 1
      %p373 = por %p371, %p372
      %p375 = scmp.ne.s32.totalorder %s358, %s374
      %p376 = scmp.eq.s32.totalorder %s30, 0
      %p377 = por %p375, %p376
      %p378 = scmp.le.s32.totalorder 1, %s24
      %p379 = scmp.lt.s32.totalorder %s24, 3
      %p380 = pnand %p378, %p379
      %p381 = pneg %p380
      // Predicated region
      $region9: #{fsrcnn_pallas.1} parent=5 // pred_check
        _
      $region10: #{fsrcnn_pallas.1} parent=5 // pred_check_branch
        %383 = sbr.rel (%p380) target = $region12
      $region11: #{fsrcnn_pallas.1} parent=5 // pred_region
        %s384 = ssub.s32 %s24, 1
        // Predicated region
        $region13: #{fsrcnn_pallas.1} parent=11 // pred_check
          %p385 = pneg %p71
        $region14: #{fsrcnn_pallas.1} parent=11 // pred_check_branch
          %387 = sbr.rel (%p385) target = $region16
        $region15: #{fsrcnn_pallas.1} parent=11 // pred_region
          %s389 = ssub.s32 448, 448
          %390 = vsyncadd [#allocation7], %s389
          %s391 = sshll.u32 [#allocation6], 4
          %s392 = int_to_ptr.vmem [resolvable:$true] %s391
          %397 = dma.hbm_to_vmem [thread:$0]  %s1, 448, %s392, [#allocation7], 64, 64, 4
        $region16: #{fsrcnn_pallas.1} parent=11 // pred_fallthru
          _
        // Predicated region
        $region17: #{fsrcnn_pallas.1} parent=11 // pred_check
          %p398 = pneg %p92
        $region18: #{fsrcnn_pallas.1} parent=11 // pred_check_branch
          %400 = sbr.rel (%p398) target = $region20
        $region19: #{fsrcnn_pallas.1} parent=11 // pred_region
          _
        $region20: #{fsrcnn_pallas.1} parent=11 // pred_fallthru
          _
        // Predicated region
        $region21: #{fsrcnn_pallas.1} parent=11 // pred_check
          %p401 = pneg %p113
        $region22: #{fsrcnn_pallas.1} parent=11 // pred_check_branch
          %403 = sbr.rel (%p401) target = $region24
        $region23: #{fsrcnn_pallas.1} parent=11 // pred_region
          %s405 = ssub.s32 128, 128
          %406 = vsyncadd [#allocation9], %s405
          %s407 = sshll.u32 [#allocation8], 4
          %s408 = int_to_ptr.vmem [resolvable:$true] %s407
          %413 = dma.hbm_to_vmem [thread:$0]  %s3, 128, %s408, [#allocation9], 64, 64, 4
        $region24: #{fsrcnn_pallas.1} parent=11 // pred_fallthru
          _
        // Predicated region
        $region25: #{fsrcnn_pallas.1} parent=11 // pred_check
          %p414 = pneg %p134
        $region26: #{fsrcnn_pallas.1} parent=11 // pred_check_branch
          %416 = sbr.rel (%p414) target = $region28
        $region27: #{fsrcnn_pallas.1} parent=11 // pred_region
          _
        $region28: #{fsrcnn_pallas.1} parent=11 // pred_fallthru
          _
        // Predicated region
        $region29: #{fsrcnn_pallas.1} parent=11 // pred_check
          %p417 = pneg %p155
        $region30: #{fsrcnn_pallas.1} parent=11 // pred_check_branch
          %419 = sbr.rel (%p417) target = $region32
        $region31: #{fsrcnn_pallas.1} parent=11 // pred_region
          %s421 = ssub.s32 128, 128
          %422 = vsyncadd [#allocation9], %s421
          %s423 = sshll.u32 [#allocation10], 4
          %s424 = int_to_ptr.vmem [resolvable:$true] %s423
          %429 = dma.hbm_to_vmem [thread:$0]  %s5, 128, %s424, [#allocation9], 64, 64, 4
        $region32: #{fsrcnn_pallas.1} parent=11 // pred_fallthru
          _
        // Predicated region
        $region33: #{fsrcnn_pallas.1} parent=11 // pred_check
          %p430 = pneg %p176
        $region34: #{fsrcnn_pallas.1} parent=11 // pred_check_branch
          %432 = sbr.rel (%p430) target = $region36
        $region35: #{fsrcnn_pallas.1} parent=11 // pred_region
          _
        $region36: #{fsrcnn_pallas.1} parent=11 // pred_fallthru
          _
        // Predicated region
        $region37: #{fsrcnn_pallas.1} parent=11 // pred_check
          %p433 = pneg %p197
        $region38: #{fsrcnn_pallas.1} parent=11 // pred_check_branch
          %435 = sbr.rel (%p433) target = $region40
        $region39: #{fsrcnn_pallas.1} parent=11 // pred_region
          %s437 = ssub.s32 128, 128
          %438 = vsyncadd [#allocation12], %s437
          %s439 = sshll.u32 [#allocation11], 4
          %s440 = int_to_ptr.vmem [resolvable:$true] %s439
          %445 = dma.hbm_to_vmem [thread:$0]  %s7, 128, %s440, [#allocation12], 64, 64, 4
        $region40: #{fsrcnn_pallas.1} parent=11 // pred_fallthru
          _
        // Predicated region
        $region41: #{fsrcnn_pallas.1} parent=11 // pred_check
          %p446 = pneg %p218
        $region42: #{fsrcnn_pallas.1} parent=11 // pred_check_branch
          %448 = sbr.rel (%p446) target = $region44
        $region43: #{fsrcnn_pallas.1} parent=11 // pred_region
          _
        $region44: #{fsrcnn_pallas.1} parent=11 // pred_fallthru
          _
        // Predicated region
        $region45: #{fsrcnn_pallas.1} parent=11 // pred_check
          %p449 = pneg %p239
        $region46: #{fsrcnn_pallas.1} parent=11 // pred_check_branch
          %451 = sbr.rel (%p449) target = $region48
        $region47: #{fsrcnn_pallas.1} parent=11 // pred_region
          %s453 = ssub.s32 128, 128
          %454 = vsyncadd [#allocation12], %s453
          %s455 = sshll.u32 [#allocation13], 4
          %s456 = int_to_ptr.vmem [resolvable:$true] %s455
          %461 = dma.hbm_to_vmem [thread:$0]  %s9, 128, %s456, [#allocation12], 64, 64, 4
        $region48: #{fsrcnn_pallas.1} parent=11 // pred_fallthru
          _
        // Predicated region
        $region49: #{fsrcnn_pallas.1} parent=11 // pred_check
          %p462 = pneg %p260
        $region50: #{fsrcnn_pallas.1} parent=11 // pred_check_branch
          %464 = sbr.rel (%p462) target = $region52
        $region51: #{fsrcnn_pallas.1} parent=11 // pred_region
          _
        $region52: #{fsrcnn_pallas.1} parent=11 // pred_fallthru
          _
        // Predicated region
        $region53: #{fsrcnn_pallas.1} parent=11 // pred_check
          %p465 = pneg %p281
        $region54: #{fsrcnn_pallas.1} parent=11 // pred_check_branch
          %467 = sbr.rel (%p465) target = $region56
        $region55: #{fsrcnn_pallas.1} parent=11 // pred_region
          _
        $region56: #{fsrcnn_pallas.1} parent=11 // pred_fallthru
          _
        // Predicated region
        $region57: #{fsrcnn_pallas.1} parent=11 // pred_check
          %p468 = pneg %p302
        $region58: #{fsrcnn_pallas.1} parent=11 // pred_check_branch
          %470 = sbr.rel (%p468) target = $region60
        $region59: #{fsrcnn_pallas.1} parent=11 // pred_region
          _
        $region60: #{fsrcnn_pallas.1} parent=11 // pred_fallthru
          _
        // Predicated region
        $region61: #{fsrcnn_pallas.1} parent=11 // pred_check
          %p471 = pneg %p323
        $region62: #{fsrcnn_pallas.1} parent=11 // pred_check_branch
          %473 = sbr.rel (%p471) target = $region64
        $region63: #{fsrcnn_pallas.1} parent=11 // pred_region
          _
        $region64: #{fsrcnn_pallas.1} parent=11 // pred_fallthru
          _
        // Predicated region
        $region65: #{fsrcnn_pallas.1} parent=11 // pred_check
          %p474 = pneg %p344
        $region66: #{fsrcnn_pallas.1} parent=11 // pred_check_branch
          %476 = sbr.rel (%p474) target = $region68
        $region67: #{fsrcnn_pallas.1} parent=11 // pred_region
          _
        $region68: #{fsrcnn_pallas.1} parent=11 // pred_fallthru
          _
      $region12: #{fsrcnn_pallas.1} parent=5 // pred_fallthru
        _
      %p477 = scmp.lt.s32.totalorder %s24, 2
      // Predicated region
      $region69: #{fsrcnn_pallas.1} parent=5 // pred_check
        %p478 = pneg %p477
      $region70: #{fsrcnn_pallas.1} parent=5 // pred_check_branch
        %480 = sbr.rel (%p478) target = $region72
      $region71: #{fsrcnn_pallas.1} parent=5 // pred_region
        // Predicated region
        $region73: #{fsrcnn_pallas.1} parent=71 // pred_check
          %p481 = pneg %p44
        $region74: #{fsrcnn_pallas.1} parent=71 // pred_check_branch
          %483 = sbr.rel (%p481) target = $region76
        $region75: #{fsrcnn_pallas.1} parent=71 // pred_region
          %p484 = scmp.lt.s32.totalorder %s24, 1
          %s485 = scalar_select %p484, %s24, 1
          %s486 = smul.addr %s485, 5
          %s487 = smul.addr %s486, 2
          %s488 = scalar_lea.vmem %s0, %s487
        $region76: #{fsrcnn_pallas.1} parent=71 // pred_fallthru
          _
      $region72: #{fsrcnn_pallas.1} parent=5 // pred_fallthru
        _
      %p489 = scmp.le.s32.totalorder 1, %s24
      %p490 = scmp.lt.s32.totalorder %s24, 3
      %p491 = pnand %p489, %p490
      %p492 = pneg %p491
      // Predicated region
      $region77: #{fsrcnn_pallas.1} parent=5 // pred_check
        _
      $region78: #{fsrcnn_pallas.1} parent=5 // pred_check_branch
        %494 = sbr.rel (%p491) target = $region80
      $region79: #{fsrcnn_pallas.1} parent=5 // pred_region
        %s495 = ssub.s32 %s24, 1
        // Predicated region
        $region81: #{fsrcnn_pallas.1} parent=79 // pred_check
          %p496 = pneg %p71
        $region82: #{fsrcnn_pallas.1} parent=79 // pred_check_branch
          %498 = sbr.rel (%p496) target = $region84
        $region83: #{fsrcnn_pallas.1} parent=79 // pred_region
          %499 = dma.done [#allocation7], 448
        $region84: #{fsrcnn_pallas.1} parent=79 // pred_fallthru
          _
        // Predicated region
        $region85: #{fsrcnn_pallas.1} parent=79 // pred_check
          %p500 = pneg %p113
        $region86: #{fsrcnn_pallas.1} parent=79 // pred_check_branch
          %502 = sbr.rel (%p500) target = $region88
        $region87: #{fsrcnn_pallas.1} parent=79 // pred_region
          %503 = dma.done [#allocation9], 128
        $region88: #{fsrcnn_pallas.1} parent=79 // pred_fallthru
          _
        // Predicated region
        $region89: #{fsrcnn_pallas.1} parent=79 // pred_check
          %p504 = pneg %p155
        $region90: #{fsrcnn_pallas.1} parent=79 // pred_check_branch
          %506 = sbr.rel (%p504) target = $region92
        $region91: #{fsrcnn_pallas.1} parent=79 // pred_region
          %507 = dma.done [#allocation9], 128
        $region92: #{fsrcnn_pallas.1} parent=79 // pred_fallthru
          _
        // Predicated region
        $region93: #{fsrcnn_pallas.1} parent=79 // pred_check
          %p508 = pneg %p197
        $region94: #{fsrcnn_pallas.1} parent=79 // pred_check_branch
          %510 = sbr.rel (%p508) target = $region96
        $region95: #{fsrcnn_pallas.1} parent=79 // pred_region
          %511 = dma.done [#allocation12], 128
        $region96: #{fsrcnn_pallas.1} parent=79 // pred_fallthru
          _
        // Predicated region
        $region97: #{fsrcnn_pallas.1} parent=79 // pred_check
          %p512 = pneg %p239
        $region98: #{fsrcnn_pallas.1} parent=79 // pred_check_branch
          %514 = sbr.rel (%p512) target = $region100
        $region99: #{fsrcnn_pallas.1} parent=79 // pred_region
          %515 = dma.done [#allocation12], 128
        $region100: #{fsrcnn_pallas.1} parent=79 // pred_fallthru
          _
        %p516 = scmp.lt.s32.totalorder %s29, 1
        %s517 = scalar_select %p516, %s29, 1
        %s518 = smul.addr %s517, 5
        %s519 = smul.addr %s518, 2
        %s520 = scalar_lea.vmem %s0, %s519
        %p521 = pneg %p50
        %p522 = pneg %p47
        %p523 = pneg %p71
        %p524 = pneg %p68
        %p525 = pneg %p92
        %p526 = pneg %p89
        %p527 = pneg %p113
        %p528 = pneg %p110
        %p529 = pneg %p134
        %p530 = pneg %p131
        %p531 = pneg %p155
        %p532 = pneg %p152
        %p533 = pneg %p176
        %p534 = pneg %p173
        %p535 = pneg %p197
        %p536 = pneg %p194
        %p537 = pneg %p218
        %p538 = pneg %p215
        %p539 = pneg %p239
        %p540 = pneg %p236
        %p541 = pneg %p260
        %p542 = pneg %p257
        %p543 = pneg %p281
        %p544 = pneg %p278
        %p545 = pneg %p302
        %p546 = pneg %p299
        %p547 = pneg %p323
        %p548 = pneg %p320
        %p549 = pneg %p344
        %p550 = pneg %p341
        %p551 = pneg %p370
        %p552 = pneg %p367
        %p553 = scmp.lt.s32.totalorder %s29, 1
        %s554 = scalar_select %p553, %s29, 1
        %s555 = smul.addr %s554, 6
        %s556 = smul.addr %s555, 8
        %s557 = scalar_lea.vmem %s15, %s556
        %p558 = scmp.lt.s32.totalorder %s29, 1
        %s559 = scalar_select %p558, %s29, 1
        %s560 = smul.addr %s559, 5
        %s561 = smul.addr %s560, 2
        %s562 = scalar_lea.vmem %s0, %s561
        %p563 = scmp.lt.s32.totalorder %s29, 1
        %s564 = scalar_select %p563, %s29, 1
        %s565 = smul.addr %s564, 6
        %s566 = smul.addr %s565, 8
        %s567 = scalar_lea.vmem %s15, %s566
        %569 = vst [vmem:[#allocation2] sm:$0xf] 0
        %570 = vst [vmem:[#allocation2 + $0x14] sm:$0xf] 0
        %571 = vst [vmem:[#allocation2 + $0x28] sm:$0xf] 0
        %572 = vst [vmem:[#allocation2 + $0x3c] sm:$0xf] 0
        %573 = vst [vmem:[#allocation2 + $0x50] sm:$0xf] 0
        %574 = vst [vmem:[#allocation2 + $0x64] sm:$0xf] 0
        %575 = vst [vmem:[#allocation2 + $0x78] sm:$0xf] 0
        %vm576 = vcmask 404480
        %577 = vst.msk [vmem:[#allocation2 + $0x10] sm:$0xf] %vm576, 0
        %578 = vst.msk [vmem:[#allocation2 + $0x24] sm:$0xf] %vm576, 0
        %579 = vst.msk [vmem:[#allocation2 + $0x38] sm:$0xf] %vm576, 0
        %580 = vst.msk [vmem:[#allocation2 + $0x4c] sm:$0xf] %vm576, 0
        %581 = vst.msk [vmem:[#allocation2 + $0x60] sm:$0xf] %vm576, 0
        %582 = vst.msk [vmem:[#allocation2 + $0x74] sm:$0xf] %vm576, 0
        %583 = vst.msk [vmem:[#allocation2 + $0x88] sm:$0xf] %vm576, 0
        %584 = vst [vmem:[#allocation3] sm:$0xf] 0
        %585 = vst [vmem:[#allocation3 + $0x14] sm:$0x3] 0
        %586 = vst.msk [vmem:[#allocation3 + $0x10] sm:$0xf] %vm576, 0
        %vm587 = vcmask 402432
        %588 = vst.msk [vmem:[#allocation3 + $0x24] sm:$0x3] %vm587, 0
        %589 = vst [vmem:[#allocation4] sm:$0xf] 0
        %590 = vst [vmem:[#allocation4 + $0x14] sm:$0x3] 0
        %591 = vst.msk [vmem:[#allocation4 + $0x10] sm:$0xf] %vm576, 0
        %592 = vst.msk [vmem:[#allocation4 + $0x24] sm:$0x3] %vm587, 0
        %v593 = vlaneseq
        %v594 = vand.u32 %v593, 127
        %v595 = vadd.s32 %v594, 128
        %v596 = vadd.s32 %v594, 256
        %vm597 = vcmp.lt.s32.totalorder %v594, 0
        %v598 = vsub.s32 0, %v594
        %v599 = vsel %vm597, %v598, %v594
        %v600 = vmul.u32.u64.compose %v599, 2863311531
        %v601 = vextract.low.u32 %v600
        %v602 = vextract.high.u32 %v600
        %v603 = vshrl.u32 %v602, 4
        %v604 = vmul.u32 %v603, 24
        %v605 = vsub.s32 %v599, %v604
        %v606 = vsub.s32 0, %v605
        %v607 = vsel %vm597, %v606, %v605
        %vm608 = vcmp.lt.s32.totalorder %v595, 0
        %v609 = vsub.s32 0, %v595
        %v610 = vsel %vm608, %v609, %v595
        %v611 = vmul.u32.u64.compose %v610, 2863311531
        %v612 = vextract.low.u32 %v611
        %v613 = vextract.high.u32 %v611
        %v614 = vshrl.u32 %v613, 4
        %v615 = vmul.u32 %v614, 24
        %v616 = vsub.s32 %v610, %v615
        %v617 = vsub.s32 0, %v616
        %v618 = vsel %vm608, %v617, %v616
        %vm619 = vcmp.lt.s32.totalorder %v596, 0
        %v620 = vsub.s32 0, %v596
        %v621 = vsel %vm619, %v620, %v596
        %v622 = vmul.u32.u64.compose %v621, 2863311531
        %v623 = vextract.low.u32 %v622
        %v624 = vextract.high.u32 %v622
        %v625 = vshrl.u32 %v624, 4
        %v626 = vmul.u32 %v625, 24
        %v627 = vsub.s32 %v621, %v626
        %v628 = vsub.s32 0, %v627
        %v629 = vsel %vm619, %v628, %v627
        %vm630 = vcmp.ne.s32.totalorder %v607, 0
        %vm631 = vcmp.ne.s32.totalorder %v618, 0
        %vm632 = vcmp.ne.s32.totalorder %v629, 0
        %vm633 = vcmp.lt.s32.totalorder %v607, 0
        %vm634 = vcmp.lt.s32.totalorder %v618, 0
        %vm635 = vcmp.lt.s32.totalorder %v629, 0
        %vm636 = vmand %vm633, %vm630
        %vm637 = vmand %vm634, %vm631
        %vm638 = vmand %vm635, %vm632
        %v639 = vadd.s32 %v607, 24
        %v640 = vadd.s32 %v618, 24
        %v641 = vadd.s32 %v629, 24
        %v642 = vsel %vm636, %v639, %v607
        %v643 = vsel %vm637, %v640, %v618
        %v644 = vsel %vm638, %v641, %v629
        %vm645 = vcmp.lt.s32.totalorder %v642, 16
        %vm646 = vcmp.lt.s32.totalorder %v643, 16
        %vm647 = vcmp.lt.s32.totalorder %v644, 16
        %v648 = vld [vmem:[%s562] sm:$0xff]
        %v650 = vcombine.high %v648, %v648
        %v652 = vunpack.c.l.s4 1983009808
        %v653 = vunpack.c.0.s8 %v652
        %v654 = vlaneseq
        %v655 = vshrl.u32 %v654, 7
        %v656 = vsub.s32 %v653, %v655
        %v657 = vrot.slane %v648, %v656
        %v659 = vunpack.c.l.s4 1983009808
        %v660 = vunpack.c.0.s8 %v659
        %v661 = vlaneseq
        %v662 = vshrl.u32 %v661, 7
        %v663 = vsub.s32 %v660, %v662
        %v664 = vrot.slane %v650, %v663
        %665 = vrot.lane.b32.xlu0 %v657, 50
        %v666 = vpop.permute.xlu0 %665
        %667 = vrot.lane.b32.xlu0 %v664, 50
        %v668 = vpop.permute.xlu0 %667
        %v669 = vrot.slane %v666, 4
        %v670 = vrot.slane %v668, 4
        %vm671 = vcmask 1043456
        %v672 = vsel %vm671, %v669, %v670
        %vm673 = vcmask 408576
        %v674 = vsel %vm673, %v666, %v672
        %v675 = vsel %vm673, %v668, %v670
        %678 = vst [vmem:[#allocation5] sm:$0x33] %v674
        %679 = vst [vmem:[#allocation5 + $0x8] sm:$0x3] %v675
        %v680 = vld [vmem:[%s562] sm:$0xff]
        %v682 = vcombine.low %v680, %v680
        %v684 = vunpack.c.l.s4 1983009808
        %v685 = vunpack.c.0.s8 %v684
        %v686 = vlaneseq
        %v687 = vshrl.u32 %v686, 7
        %v688 = vsub.s32 %v685, %v687
        %v689 = vrot.slane %v682, %v688
        %v691 = vunpack.c.l.s4 1983009808
        %v692 = vunpack.c.0.s8 %v691
        %v693 = vlaneseq
        %v694 = vshrl.u32 %v693, 7
        %v695 = vsub.s32 %v692, %v694
        %v696 = vrot.slane %v680, %v695
        %697 = vrot.lane.b32.xlu0 %v689, 49
        %v698 = vpop.permute.xlu0 %697
        %699 = vrot.lane.b32.xlu0 %v696, 49
        %v700 = vpop.permute.xlu0 %699
        %v701 = vrot.slane %v698, 4
        %v702 = vrot.slane %v700, 4
        %v703 = vsel %vm671, %v701, %v702
        %vm704 = vcmask 400384
        %v705 = vsel %vm704, %v698, %v703
        %v706 = vsel %vm704, %v700, %v702
        %709 = vst [vmem:[#allocation5] sm:$0xcc] %v705
        %710 = vst [vmem:[#allocation5 + $0x8] sm:$0xc] %v706
        %v711 = vld [vmem:[%s562] sm:$0xff]
        %v713 = vcombine.high %v711, %v711
        %v715 = vunpack.c.l.s4 1983009808
        %v716 = vunpack.c.0.s8 %v715
        %v717 = vlaneseq
        %v718 = vshrl.u32 %v717, 7
        %v719 = vsub.s32 %v716, %v718
        %v720 = vrot.slane %v711, %v719
        %v722 = vunpack.c.l.s4 1983009808
        %v723 = vunpack.c.0.s8 %v722
        %v724 = vlaneseq
        %v725 = vshrl.u32 %v724, 7
        %v726 = vsub.s32 %v723, %v725
        %v727 = vrot.slane %v713, %v726
        %728 = vrot.lane.b32.xlu0 %v720, 48
        %v729 = vpop.permute.xlu0 %728
        %730 = vrot.lane.b32.xlu0 %v727, 48
        %v731 = vpop.permute.xlu0 %730
        %v732 = vrot.slane %v729, 4
        %v733 = vrot.slane %v731, 4
        %v734 = vsel %vm671, %v732, %v733
        %vm735 = vcmask 392192
        %v736 = vsel %vm735, %v729, %v734
        %v737 = vsel %vm735, %v731, %v733
        %740 = vst [vmem:[#allocation5 + $0xc] sm:$0x33] %v736
        %741 = vst [vmem:[#allocation5 + $0x14] sm:$0x3] %v737
        %v742 = vld [vmem:[%s562] sm:$0xff]
        %v744 = vcombine.low %v742, %v742
        %v746 = vunpack.c.l.s4 1983009808
        %v747 = vunpack.c.0.s8 %v746
        %v748 = vlaneseq
        %v749 = vshrl.u32 %v748, 7
        %v750 = vsub.s32 %v747, %v749
        %v751 = vrot.slane %v744, %v750
        %v753 = vunpack.c.l.s4 1983009808
        %v754 = vunpack.c.0.s8 %v753
        %v755 = vlaneseq
        %v756 = vshrl.u32 %v755, 7
        %v757 = vsub.s32 %v754, %v756
        %v758 = vrot.slane %v742, %v757
        %759 = vrot.lane.b32.xlu0 %v751, 47
        %v760 = vpop.permute.xlu0 %759
        %761 = vrot.lane.b32.xlu0 %v758, 47
        %v762 = vpop.permute.xlu0 %761
        %v763 = vrot.slane %v760, 4
        %v764 = vrot.slane %v762, 4
        %v765 = vsel %vm671, %v763, %v764
        %vm766 = vcmask 384000
        %v767 = vsel %vm766, %v760, %v765
        %v768 = vsel %vm766, %v762, %v764
        %771 = vst [vmem:[#allocation5 + $0xc] sm:$0xcc] %v767
        %772 = vst [vmem:[#allocation5 + $0x14] sm:$0xc] %v768
        %v773 = vld [vmem:[%s562] sm:$0xff]
        %v775 = vcombine.high %v773, %v773
        %v777 = vunpack.c.l.s4 1983009808
        %v778 = vunpack.c.0.s8 %v777
        %v779 = vlaneseq
        %v780 = vshrl.u32 %v779, 7
        %v781 = vsub.s32 %v778, %v780
        %v782 = vrot.slane %v773, %v781
        %v784 = vunpack.c.l.s4 1983009808
        %v785 = vunpack.c.0.s8 %v784
        %v786 = vlaneseq
        %v787 = vshrl.u32 %v786, 7
        %v788 = vsub.s32 %v785, %v787
        %v789 = vrot.slane %v775, %v788
        %790 = vrot.lane.b32.xlu0 %v782, 46
        %v791 = vpop.permute.xlu0 %790
        %792 = vrot.lane.b32.xlu0 %v789, 46
        %v793 = vpop.permute.xlu0 %792
        %v794 = vrot.slane %v791, 4
        %v795 = vrot.slane %v793, 4
        %v796 = vsel %vm671, %v794, %v795
        %vm797 = vcmask 375808
        %v798 = vsel %vm797, %v791, %v796
        %v799 = vsel %vm797, %v793, %v795
        %802 = vst [vmem:[#allocation5 + $0x18] sm:$0x33] %v798
        %803 = vst [vmem:[#allocation5 + $0x20] sm:$0x3] %v799
        %v804 = vld [vmem:[%s562] sm:$0xff]
        %v806 = vcombine.low %v804, %v804
        %v808 = vunpack.c.l.s4 1983009808
        %v809 = vunpack.c.0.s8 %v808
        %v810 = vlaneseq
        %v811 = vshrl.u32 %v810, 7
        %v812 = vsub.s32 %v809, %v811
        %v813 = vrot.slane %v806, %v812
        %v815 = vunpack.c.l.s4 1983009808
        %v816 = vunpack.c.0.s8 %v815
        %v817 = vlaneseq
        %v818 = vshrl.u32 %v817, 7
        %v819 = vsub.s32 %v816, %v818
        %v820 = vrot.slane %v804, %v819
        %821 = vrot.lane.b32.xlu0 %v813, 26
        %v822 = vpop.permute.xlu0 %821
        %823 = vrot.lane.b32.xlu0 %v820, 26
        %v824 = vpop.permute.xlu0 %823
        %v825 = vrot.slane %v822, 4
        %v826 = vrot.slane %v824, 4
        %v827 = vsel %vm671, %v825, %v826
        %vm828 = vcmask 211968
        %v829 = vsel %vm828, %v822, %v827
        %v830 = vsel %vm828, %v824, %v826
        %833 = vst [vmem:[#allocation5 + $0x18] sm:$0xcc] %v829
        %834 = vst [vmem:[#allocation5 + $0x20] sm:$0xc] %v830
        %v835 = vld [vmem:[%s562] sm:$0xff]
        %v837 = vcombine.high %v835, %v835
        %v839 = vunpack.c.l.s4 1983009808
        %v840 = vunpack.c.0.s8 %v839
        %v841 = vlaneseq
        %v842 = vshrl.u32 %v841, 7
        %v843 = vsub.s32 %v840, %v842
        %v844 = vrot.slane %v835, %v843
        %v846 = vunpack.c.l.s4 1983009808
        %v847 = vunpack.c.0.s8 %v846
        %v848 = vlaneseq
        %v849 = vshrl.u32 %v848, 7
        %v850 = vsub.s32 %v847, %v849
        %v851 = vrot.slane %v837, %v850
        %852 = vrot.lane.b32.xlu0 %v844, 25
        %v853 = vpop.permute.xlu0 %852
        %854 = vrot.lane.b32.xlu0 %v851, 25
        %v855 = vpop.permute.xlu0 %854
        %v856 = vrot.slane %v853, 4
        %v857 = vrot.slane %v855, 4
        %v858 = vsel %vm671, %v856, %v857
        %vm859 = vcmask 203776
        %v860 = vsel %vm859, %v853, %v858
        %v861 = vsel %vm859, %v855, %v857
        %864 = vst [vmem:[#allocation5 + $0x24] sm:$0x33] %v860
        %865 = vst [vmem:[#allocation5 + $0x2c] sm:$0x3] %v861
        %v866 = vld [vmem:[%s562] sm:$0xff]
        %v868 = vcombine.low %v866, %v866
        %v870 = vunpack.c.l.s4 1983009808
        %v871 = vunpack.c.0.s8 %v870
        %v872 = vlaneseq
        %v873 = vshrl.u32 %v872, 7
        %v874 = vsub.s32 %v871, %v873
        %v875 = vrot.slane %v868, %v874
        %v877 = vunpack.c.l.s4 1983009808
        %v878 = vunpack.c.0.s8 %v877
        %v879 = vlaneseq
        %v880 = vshrl.u32 %v879, 7
        %v881 = vsub.s32 %v878, %v880
        %v882 = vrot.slane %v866, %v881
        %883 = vrot.lane.b32.xlu0 %v875, 24
        %v884 = vpop.permute.xlu0 %883
        %885 = vrot.lane.b32.xlu0 %v882, 24
        %v886 = vpop.permute.xlu0 %885
        %v887 = vrot.slane %v884, 4
        %v888 = vrot.slane %v886, 4
        %v889 = vsel %vm671, %v887, %v888
        %vm890 = vcmask 195584
        %v891 = vsel %vm890, %v884, %v889
        %v892 = vsel %vm890, %v886, %v888
        %895 = vst [vmem:[#allocation5 + $0x24] sm:$0xcc] %v891
        %896 = vst [vmem:[#allocation5 + $0x2c] sm:$0xc] %v892
        %v897 = vld [vmem:[%s562] sm:$0xff]
        %v899 = vcombine.high %v897, %v897
        %v901 = vunpack.c.l.s4 1983009808
        %v902 = vunpack.c.0.s8 %v901
        %v903 = vlaneseq
        %v904 = vshrl.u32 %v903, 7
        %v905 = vsub.s32 %v902, %v904
        %v906 = vrot.slane %v897, %v905
        %v908 = vunpack.c.l.s4 1983009808
        %v909 = vunpack.c.0.s8 %v908
        %v910 = vlaneseq
        %v911 = vshrl.u32 %v910, 7
        %v912 = vsub.s32 %v909, %v911
        %v913 = vrot.slane %v899, %v912
        %914 = vrot.lane.b32.xlu0 %v906, 23
        %v915 = vpop.permute.xlu0 %914
        %916 = vrot.lane.b32.xlu0 %v913, 23
        %v917 = vpop.permute.xlu0 %916
        %v918 = vrot.slane %v915, 4
        %v919 = vrot.slane %v917, 4
        %v920 = vsel %vm671, %v918, %v919
        %vm921 = vcmask 187392
        %v922 = vsel %vm921, %v915, %v920
        %v923 = vsel %vm921, %v917, %v919
        %926 = vst [vmem:[#allocation5 + $0x30] sm:$0x33] %v922
        %927 = vst [vmem:[#allocation5 + $0x38] sm:$0x3] %v923
        %v928 = vld [vmem:[%s562] sm:$0xff]
        %v930 = vcombine.low %v928, %v928
        %v932 = vunpack.c.l.s4 1983009808
        %v933 = vunpack.c.0.s8 %v932
        %v934 = vlaneseq
        %v935 = vshrl.u32 %v934, 7
        %v936 = vsub.s32 %v933, %v935
        %v937 = vrot.slane %v930, %v936
        %v939 = vunpack.c.l.s4 1983009808
        %v940 = vunpack.c.0.s8 %v939
        %v941 = vlaneseq
        %v942 = vshrl.u32 %v941, 7
        %v943 = vsub.s32 %v940, %v942
        %v944 = vrot.slane %v928, %v943
        %945 = vrot.lane.b32.xlu0 %v937, 22
        %v946 = vpop.permute.xlu0 %945
        %947 = vrot.lane.b32.xlu0 %v944, 22
        %v948 = vpop.permute.xlu0 %947
        %v949 = vrot.slane %v946, 4
        %v950 = vrot.slane %v948, 4
        %v951 = vsel %vm671, %v949, %v950
        %vm952 = vcmask 179200
        %v953 = vsel %vm952, %v946, %v951
        %v954 = vsel %vm952, %v948, %v950
        %957 = vst [vmem:[#allocation5 + $0x30] sm:$0xcc] %v953
        %958 = vst [vmem:[#allocation5 + $0x38] sm:$0xc] %v954
        %v959 = vld [vmem:[%s562] sm:$0xff]
        %v961 = vcombine.high %v959, %v959
        %v963 = vunpack.c.l.s4 1983009808
        %v964 = vunpack.c.0.s8 %v963
        %v965 = vlaneseq
        %v966 = vshrl.u32 %v965, 7
        %v967 = vsub.s32 %v964, %v966
        %v968 = vrot.slane %v959, %v967
        %v970 = vunpack.c.l.s4 1983009808
        %v971 = vunpack.c.0.s8 %v970
        %v972 = vlaneseq
        %v973 = vshrl.u32 %v972, 7
        %v974 = vsub.s32 %v971, %v973
        %v975 = vrot.slane %v961, %v974
        %976 = vrot.lane.b32.xlu0 %v968, 2
        %v977 = vpop.permute.xlu0 %976
        %978 = vrot.lane.b32.xlu0 %v975, 2
        %v979 = vpop.permute.xlu0 %978
        %v980 = vrot.slane %v977, 4
        %v981 = vrot.slane %v979, 4
        %v982 = vsel %vm671, %v980, %v981
        %vm983 = vcmask 15360
        %v984 = vsel %vm983, %v977, %v982
        %v985 = vsel %vm983, %v979, %v981
        %988 = vst [vmem:[#allocation5 + $0x3c] sm:$0x33] %v984
        %989 = vst [vmem:[#allocation5 + $0x44] sm:$0x3] %v985
        %v990 = vld [vmem:[%s562] sm:$0xff]
        %v992 = vcombine.low %v990, %v990
        %v994 = vunpack.c.l.s4 1983009808
        %v995 = vunpack.c.0.s8 %v994
        %v996 = vlaneseq
        %v997 = vshrl.u32 %v996, 7
        %v998 = vsub.s32 %v995, %v997
        %v999 = vrot.slane %v992, %v998
        %v1001 = vunpack.c.l.s4 1983009808
        %v1002 = vunpack.c.0.s8 %v1001
        %v1003 = vlaneseq
        %v1004 = vshrl.u32 %v1003, 7
        %v1005 = vsub.s32 %v1002, %v1004
        %v1006 = vrot.slane %v990, %v1005
        %1007 = vrot.lane.b32.xlu0 %v999, 1
        %v1008 = vpop.permute.xlu0 %1007
        %1009 = vrot.lane.b32.xlu0 %v1006, 1
        %v1010 = vpop.permute.xlu0 %1009
        %v1011 = vrot.slane %v1008, 4
        %v1012 = vrot.slane %v1010, 4
        %v1013 = vsel %vm671, %v1011, %v1012
        %vm1014 = vcmask 7168
        %v1015 = vsel %vm1014, %v1008, %v1013
        %v1016 = vsel %vm1014, %v1010, %v1012
        %1019 = vst [vmem:[#allocation5 + $0x3c] sm:$0xcc] %v1015
        %1020 = vst [vmem:[#allocation5 + $0x44] sm:$0xc] %v1016
        %v1021 = vld [vmem:[%s562 + $0x2] sm:$0x3f]
        %v1023 = vcombine.high %v1021, %v1021
        %v1025 = vunpack.c.l.s4 1983009808
        %v1026 = vunpack.c.0.s8 %v1025
        %v1027 = vlaneseq
        %v1028 = vshrl.u32 %v1027, 7
        %v1029 = vsub.s32 %v1026, %v1028
        %v1030 = vrot.slane %v1021, %v1029
        %v1032 = vunpack.c.l.s4 1983009808
        %v1033 = vunpack.c.0.s8 %v1032
        %v1034 = vlaneseq
        %v1035 = vshrl.u32 %v1034, 7
        %v1036 = vsub.s32 %v1033, %v1035
        %v1037 = vrot.slane %v1023, %v1036
        %1040 = vst [vmem:[#allocation5 + $0x48] sm:$0x33] %v1030
        %1041 = vst [vmem:[#allocation5 + $0x50] sm:$0x3] %v1037
        %v1042 = vld [vmem:[%s562 + $0x2] sm:$0xff]
        %v1044 = vcombine.low %v1042, %v1042
        %v1046 = vunpack.c.l.s4 1983009808
        %v1047 = vunpack.c.0.s8 %v1046
        %v1048 = vlaneseq
        %v1049 = vshrl.u32 %v1048, 7
        %v1050 = vsub.s32 %v1047, %v1049
        %v1051 = vrot.slane %v1044, %v1050
        %v1053 = vunpack.c.l.s4 1983009808
        %v1054 = vunpack.c.0.s8 %v1053
        %v1055 = vlaneseq
        %v1056 = vshrl.u32 %v1055, 7
        %v1057 = vsub.s32 %v1054, %v1056
        %v1058 = vrot.slane %v1042, %v1057
        %1059 = vrot.lane.b32.xlu0 %v1051, 127
        %v1060 = vpop.permute.xlu0 %1059
        %1061 = vrot.lane.b32.xlu0 %v1058, 127
        %v1062 = vpop.permute.xlu0 %1061
        %v1063 = vrot.slane %v1060, 4
        %v1064 = vrot.slane %v1062, 4
        %v1065 = vsel %vm671, %v1063, %v1064
        %vm1066 = vcmask 1039360
        %v1067 = vsel %vm1066, %v1060, %v1065
        %v1068 = vsel %vm1066, %v1062, %v1064
        %1071 = vst [vmem:[#allocation5 + $0x48] sm:$0xcc] %v1067
        %1072 = vst [vmem:[#allocation5 + $0x50] sm:$0xc] %v1068
        %v1073 = vld [vmem:[%s562 + $0x2] sm:$0xff]
        %v1075 = vcombine.high %v1073, %v1073
        %v1077 = vunpack.c.l.s4 1983009808
        %v1078 = vunpack.c.0.s8 %v1077
        %v1079 = vlaneseq
        %v1080 = vshrl.u32 %v1079, 7
        %v1081 = vsub.s32 %v1078, %v1080
        %v1082 = vrot.slane %v1073, %v1081
        %v1084 = vunpack.c.l.s4 1983009808
        %v1085 = vunpack.c.0.s8 %v1084
        %v1086 = vlaneseq
        %v1087 = vshrl.u32 %v1086, 7
        %v1088 = vsub.s32 %v1085, %v1087
        %v1089 = vrot.slane %v1075, %v1088
        %1090 = vrot.lane.b32.xlu0 %v1082, 126
        %v1091 = vpop.permute.xlu0 %1090
        %1092 = vrot.lane.b32.xlu0 %v1089, 126
        %v1093 = vpop.permute.xlu0 %1092
        %v1094 = vrot.slane %v1091, 4
        %v1095 = vrot.slane %v1093, 4
        %v1096 = vsel %vm671, %v1094, %v1095
        %vm1097 = vcmask 1031168
        %v1098 = vsel %vm1097, %v1091, %v1096
        %v1099 = vsel %vm1097, %v1093, %v1095
        %1102 = vst [vmem:[#allocation5 + $0x54] sm:$0x33] %v1098
        %1103 = vst [vmem:[#allocation5 + $0x5c] sm:$0x3] %v1099
        %v1104 = vld [vmem:[%s562 + $0x2] sm:$0xff]
        %v1106 = vcombine.low %v1104, %v1104
        %v1108 = vunpack.c.l.s4 1983009808
        %v1109 = vunpack.c.0.s8 %v1108
        %v1110 = vlaneseq
        %v1111 = vshrl.u32 %v1110, 7
        %v1112 = vsub.s32 %v1109, %v1111
        %v1113 = vrot.slane %v1106, %v1112
        %v1115 = vunpack.c.l.s4 1983009808
        %v1116 = vunpack.c.0.s8 %v1115
        %v1117 = vlaneseq
        %v1118 = vshrl.u32 %v1117, 7
        %v1119 = vsub.s32 %v1116, %v1118
        %v1120 = vrot.slane %v1104, %v1119
        %1121 = vrot.lane.b32.xlu0 %v1113, 106
        %v1122 = vpop.permute.xlu0 %1121
        %1123 = vrot.lane.b32.xlu0 %v1120, 106
        %v1124 = vpop.permute.xlu0 %1123
        %v1125 = vrot.slane %v1122, 4
        %v1126 = vrot.slane %v1124, 4
        %v1127 = vsel %vm671, %v1125, %v1126
        %vm1128 = vcmask 867328
        %v1129 = vsel %vm1128, %v1122, %v1127
        %v1130 = vsel %vm1128, %v1124, %v1126
        %1133 = vst [vmem:[#allocation5 + $0x54] sm:$0xcc] %v1129
        %1134 = vst [vmem:[#allocation5 + $0x5c] sm:$0xc] %v1130
        %v1135 = vld [vmem:[%s562 + $0x2] sm:$0xff]
        %v1137 = vcombine.high %v1135, %v1135
        %v1139 = vunpack.c.l.s4 1983009808
        %v1140 = vunpack.c.0.s8 %v1139
        %v1141 = vlaneseq
        %v1142 = vshrl.u32 %v1141, 7
        %v1143 = vsub.s32 %v1140, %v1142
        %v1144 = vrot.slane %v1135, %v1143
        %v1146 = vunpack.c.l.s4 1983009808
        %v1147 = vunpack.c.0.s8 %v1146
        %v1148 = vlaneseq
        %v1149 = vshrl.u32 %v1148, 7
        %v1150 = vsub.s32 %v1147, %v1149
        %v1151 = vrot.slane %v1137, %v1150
        %1152 = vrot.lane.b32.xlu0 %v1144, 105
        %v1153 = vpop.permute.xlu0 %1152
        %1154 = vrot.lane.b32.xlu0 %v1151, 105
        %v1155 = vpop.permute.xlu0 %1154
        %v1156 = vrot.slane %v1153, 4
        %v1157 = vrot.slane %v1155, 4
        %v1158 = vsel %vm671, %v1156, %v1157
        %vm1159 = vcmask 859136
        %v1160 = vsel %vm1159, %v1153, %v1158
        %v1161 = vsel %vm1159, %v1155, %v1157
        %1164 = vst [vmem:[#allocation5 + $0x60] sm:$0x33] %v1160
        %1165 = vst [vmem:[#allocation5 + $0x68] sm:$0x3] %v1161
        %v1166 = vld [vmem:[%s562 + $0x2] sm:$0xff]
        %v1168 = vcombine.low %v1166, %v1166
        %v1170 = vunpack.c.l.s4 1983009808
        %v1171 = vunpack.c.0.s8 %v1170
        %v1172 = vlaneseq
        %v1173 = vshrl.u32 %v1172, 7
        %v1174 = vsub.s32 %v1171, %v1173
        %v1175 = vrot.slane %v1168, %v1174
        %v1177 = vunpack.c.l.s4 1983009808
        %v1178 = vunpack.c.0.s8 %v1177
        %v1179 = vlaneseq
        %v1180 = vshrl.u32 %v1179, 7
        %v1181 = vsub.s32 %v1178, %v1180
        %v1182 = vrot.slane %v1166, %v1181
        %1183 = vrot.lane.b32.xlu0 %v1175, 104
        %v1184 = vpop.permute.xlu0 %1183
        %1185 = vrot.lane.b32.xlu0 %v1182, 104
        %v1186 = vpop.permute.xlu0 %1185
        %v1187 = vrot.slane %v1184, 4
        %v1188 = vrot.slane %v1186, 4
        %v1189 = vsel %vm671, %v1187, %v1188
        %vm1190 = vcmask 850944
        %v1191 = vsel %vm1190, %v1184, %v1189
        %v1192 = vsel %vm1190, %v1186, %v1188
        %1195 = vst [vmem:[#allocation5 + $0x60] sm:$0xcc] %v1191
        %1196 = vst [vmem:[#allocation5 + $0x68] sm:$0xc] %v1192
        %v1197 = vld [vmem:[%s562 + $0x2] sm:$0xff]
        %v1199 = vcombine.high %v1197, %v1197
        %v1201 = vunpack.c.l.s4 1983009808
        %v1202 = vunpack.c.0.s8 %v1201
        %v1203 = vlaneseq
        %v1204 = vshrl.u32 %v1203, 7
        %v1205 = vsub.s32 %v1202, %v1204
        %v1206 = vrot.slane %v1197, %v1205
        %v1208 = vunpack.c.l.s4 1983009808
        %v1209 = vunpack.c.0.s8 %v1208
        %v1210 = vlaneseq
        %v1211 = vshrl.u32 %v1210, 7
        %v1212 = vsub.s32 %v1209, %v1211
        %v1213 = vrot.slane %v1199, %v1212
        %1214 = vrot.lane.b32.xlu0 %v1206, 103
        %v1215 = vpop.permute.xlu0 %1214
        %1216 = vrot.lane.b32.xlu0 %v1213, 103
        %v1217 = vpop.permute.xlu0 %1216
        %v1218 = vrot.slane %v1215, 4
        %v1219 = vrot.slane %v1217, 4
        %v1220 = vsel %vm671, %v1218, %v1219
        %vm1221 = vcmask 842752
        %v1222 = vsel %vm1221, %v1215, %v1220
        %v1223 = vsel %vm1221, %v1217, %v1219
        %1226 = vst [vmem:[#allocation5 + $0x6c] sm:$0x33] %v1222
        %1227 = vst [vmem:[#allocation5 + $0x74] sm:$0x3] %v1223
        %v1228 = vld [vmem:[%s562 + $0x2] sm:$0xff]
        %v1230 = vcombine.low %v1228, %v1228
        %v1232 = vunpack.c.l.s4 1983009808
        %v1233 = vunpack.c.0.s8 %v1232
        %v1234 = vlaneseq
        %v1235 = vshrl.u32 %v1234, 7
        %v1236 = vsub.s32 %v1233, %v1235
        %v1237 = vrot.slane %v1230, %v1236
        %v1239 = vunpack.c.l.s4 1983009808
        %v1240 = vunpack.c.0.s8 %v1239
        %v1241 = vlaneseq
        %v1242 = vshrl.u32 %v1241, 7
        %v1243 = vsub.s32 %v1240, %v1242
        %v1244 = vrot.slane %v1228, %v1243
        %1245 = vrot.lane.b32.xlu0 %v1237, 102
        %v1246 = vpop.permute.xlu0 %1245
        %1247 = vrot.lane.b32.xlu0 %v1244, 102
        %v1248 = vpop.permute.xlu0 %1247
        %v1249 = vrot.slane %v1246, 4
        %v1250 = vrot.slane %v1248, 4
        %v1251 = vsel %vm671, %v1249, %v1250
        %vm1252 = vcmask 834560
        %v1253 = vsel %vm1252, %v1246, %v1251
        %v1254 = vsel %vm1252, %v1248, %v1250
        %1257 = vst [vmem:[#allocation5 + $0x6c] sm:$0xcc] %v1253
        %1258 = vst [vmem:[#allocation5 + $0x74] sm:$0xc] %v1254
        %v1259 = vld [vmem:[%s562 + $0x2] sm:$0xff]
        %v1261 = vcombine.high %v1259, %v1259
        %v1263 = vunpack.c.l.s4 1983009808
        %v1264 = vunpack.c.0.s8 %v1263
        %v1265 = vlaneseq
        %v1266 = vshrl.u32 %v1265, 7
        %v1267 = vsub.s32 %v1264, %v1266
        %v1268 = vrot.slane %v1259, %v1267
        %v1270 = vunpack.c.l.s4 1983009808
        %v1271 = vunpack.c.0.s8 %v1270
        %v1272 = vlaneseq
        %v1273 = vshrl.u32 %v1272, 7
        %v1274 = vsub.s32 %v1271, %v1273
        %v1275 = vrot.slane %v1261, %v1274
        %1276 = vrot.lane.b32.xlu0 %v1268, 82
        %v1277 = vpop.permute.xlu0 %1276
        %1278 = vrot.lane.b32.xlu0 %v1275, 82
        %v1279 = vpop.permute.xlu0 %1278
        %v1280 = vrot.slane %v1277, 4
        %v1281 = vrot.slane %v1279, 4
        %v1282 = vsel %vm671, %v1280, %v1281
        %vm1283 = vcmask 670720
        %v1284 = vsel %vm1283, %v1277, %v1282
        %v1285 = vsel %vm1283, %v1279, %v1281
        %1288 = vst [vmem:[#allocation5 + $0x78] sm:$0x33] %v1284
        %1289 = vst [vmem:[#allocation5 + $0x80] sm:$0x3] %v1285
        %v1290 = vld [vmem:[%s562 + $0x2] sm:$0xff]
        %v1292 = vcombine.low %v1290, %v1290
        %v1294 = vunpack.c.l.s4 1983009808
        %v1295 = vunpack.c.0.s8 %v1294
        %v1296 = vlaneseq
        %v1297 = vshrl.u32 %v1296, 7
        %v1298 = vsub.s32 %v1295, %v1297
        %v1299 = vrot.slane %v1292, %v1298
        %v1301 = vunpack.c.l.s4 1983009808
        %v1302 = vunpack.c.0.s8 %v1301
        %v1303 = vlaneseq
        %v1304 = vshrl.u32 %v1303, 7
        %v1305 = vsub.s32 %v1302, %v1304
        %v1306 = vrot.slane %v1290, %v1305
        %1307 = vrot.lane.b32.xlu0 %v1299, 81
        %v1308 = vpop.permute.xlu0 %1307
        %1309 = vrot.lane.b32.xlu0 %v1306, 81
        %v1310 = vpop.permute.xlu0 %1309
        %v1311 = vrot.slane %v1308, 4
        %v1312 = vrot.slane %v1310, 4
        %v1313 = vsel %vm671, %v1311, %v1312
        %vm1314 = vcmask 662528
        %v1315 = vsel %vm1314, %v1308, %v1313
        %v1316 = vsel %vm1314, %v1310, %v1312
        %1319 = vst [vmem:[#allocation5 + $0x78] sm:$0xcc] %v1315
        %1320 = vst [vmem:[#allocation5 + $0x80] sm:$0xc] %v1316
        %v1321 = vld [vmem:[%s562 + $0x2] sm:$0xff]
        %v1323 = vcombine.high %v1321, %v1321
        %v1325 = vunpack.c.l.s4 1983009808
        %v1326 = vunpack.c.0.s8 %v1325
        %v1327 = vlaneseq
        %v1328 = vshrl.u32 %v1327, 7
        %v1329 = vsub.s32 %v1326, %v1328
        %v1330 = vrot.slane %v1321, %v1329
        %v1332 = vunpack.c.l.s4 1983009808
        %v1333 = vunpack.c.0.s8 %v1332
        %v1334 = vlaneseq
        %v1335 = vshrl.u32 %v1334, 7
        %v1336 = vsub.s32 %v1333, %v1335
        %v1337 = vrot.slane %v1323, %v1336
        %1338 = vrot.lane.b32.xlu0 %v1330, 80
        %v1339 = vpop.permute.xlu0 %1338
        %1340 = vrot.lane.b32.xlu0 %v1337, 80
        %v1341 = vpop.permute.xlu0 %1340
        %v1342 = vrot.slane %v1339, 4
        %v1343 = vrot.slane %v1341, 4
        %v1344 = vsel %vm671, %v1342, %v1343
        %vm1345 = vcmask 654336
        %v1346 = vsel %vm1345, %v1339, %v1344
        %v1347 = vsel %vm1345, %v1341, %v1343
        %1350 = vst [vmem:[#allocation5 + $0x84] sm:$0x33] %v1346
        %1351 = vst [vmem:[#allocation5 + $0x8c] sm:$0x3] %v1347
        %v1352 = vld [vmem:[%s562 + $0x2] sm:$0xff]
        %v1354 = vcombine.low %v1352, %v1352
        %v1356 = vunpack.c.l.s4 1983009808
        %v1357 = vunpack.c.0.s8 %v1356
        %v1358 = vlaneseq
        %v1359 = vshrl.u32 %v1358, 7
        %v1360 = vsub.s32 %v1357, %v1359
        %v1361 = vrot.slane %v1354, %v1360
        %v1363 = vunpack.c.l.s4 1983009808
        %v1364 = vunpack.c.0.s8 %v1363
        %v1365 = vlaneseq
        %v1366 = vshrl.u32 %v1365, 7
        %v1367 = vsub.s32 %v1364, %v1366
        %v1368 = vrot.slane %v1352, %v1367
        %1369 = vrot.lane.b32.xlu0 %v1361, 79
        %v1370 = vpop.permute.xlu0 %1369
        %1371 = vrot.lane.b32.xlu0 %v1368, 79
        %v1372 = vpop.permute.xlu0 %1371
        %v1373 = vrot.slane %v1370, 4
        %v1374 = vrot.slane %v1372, 4
        %v1375 = vsel %vm671, %v1373, %v1374
        %vm1376 = vcmask 646144
        %v1377 = vsel %vm1376, %v1370, %v1375
        %v1378 = vsel %vm1376, %v1372, %v1374
        %1381 = vst [vmem:[#allocation5 + $0x84] sm:$0xcc] %v1377
        %1382 = vst [vmem:[#allocation5 + $0x8c] sm:$0xc] %v1378
        %v1383 = vld [vmem:[%s562 + $0x2] sm:$0xff]
        %v1385 = vcombine.high %v1383, %v1383
        %v1387 = vunpack.c.l.s4 1983009808
        %v1388 = vunpack.c.0.s8 %v1387
        %v1389 = vlaneseq
        %v1390 = vshrl.u32 %v1389, 7
        %v1391 = vsub.s32 %v1388, %v1390
        %v1392 = vrot.slane %v1383, %v1391
        %v1394 = vunpack.c.l.s4 1983009808
        %v1395 = vunpack.c.0.s8 %v1394
        %v1396 = vlaneseq
        %v1397 = vshrl.u32 %v1396, 7
        %v1398 = vsub.s32 %v1395, %v1397
        %v1399 = vrot.slane %v1385, %v1398
        %1400 = vrot.lane.b32.xlu0 %v1392, 78
        %v1401 = vpop.permute.xlu0 %1400
        %1402 = vrot.lane.b32.xlu0 %v1399, 78
        %v1403 = vpop.permute.xlu0 %1402
        %v1404 = vrot.slane %v1401, 4
        %v1405 = vrot.slane %v1403, 4
        %v1406 = vsel %vm671, %v1404, %v1405
        %vm1407 = vcmask 637952
        %v1408 = vsel %vm1407, %v1401, %v1406
        %v1409 = vsel %vm1407, %v1403, %v1405
        %1412 = vst [vmem:[#allocation5 + $0x90] sm:$0x33] %v1408
        %1413 = vst [vmem:[#allocation5 + $0x98] sm:$0x3] %v1409
        %v1414 = vld [vmem:[#allocation6] sm:$0xf]
        %v1415 = vld [vmem:[#allocation6 + $0x4] sm:$0xf]
        %v1416 = vld [vmem:[#allocation6 + $0x8] sm:$0xf]
        %v1417 = vld [vmem:[#allocation6 + $0xc] sm:$0xf]
        %v1418 = vld [vmem:[#allocation6 + $0x10] sm:$0xf]
        %v1419 = vld [vmem:[#allocation6 + $0x14] sm:$0xf]
        %v1420 = vld [vmem:[#allocation6 + $0x18] sm:$0xf]
        %v1421 = vld [vmem:[#allocation5] sm:$0xff]
        %v1422 = vld [vmem:[#allocation5 + $0x8] sm:$0xf]
        %v1423 = vld [vmem:[#allocation5 + $0xc] sm:$0xff]
        %v1424 = vld [vmem:[#allocation5 + $0x14] sm:$0xf]
        %v1425 = vld [vmem:[#allocation5 + $0x18] sm:$0xff]
        %v1426 = vld [vmem:[#allocation5 + $0x20] sm:$0xf]
        %v1427 = vld [vmem:[#allocation5 + $0x24] sm:$0xff]
        %v1428 = vld [vmem:[#allocation5 + $0x2c] sm:$0xf]
        %v1429 = vld [vmem:[#allocation5 + $0x30] sm:$0xff]
        %v1430 = vld [vmem:[#allocation5 + $0x38] sm:$0xf]
        %v1431 = vld [vmem:[#allocation5 + $0x3c] sm:$0xff]
        %v1432 = vld [vmem:[#allocation5 + $0x44] sm:$0xf]
        %v1433 = vld [vmem:[#allocation5 + $0x48] sm:$0xff]
        %v1434 = vld [vmem:[#allocation5 + $0x50] sm:$0xf]
        %v1435 = vld [vmem:[#allocation5 + $0x54] sm:$0xff]
        %v1436 = vld [vmem:[#allocation5 + $0x5c] sm:$0xf]
        %v1437 = vld [vmem:[#allocation5 + $0x60] sm:$0xff]
        %v1438 = vld [vmem:[#allocation5 + $0x68] sm:$0xf]
        %v1439 = vld [vmem:[#allocation5 + $0x6c] sm:$0xff]
        %v1440 = vld [vmem:[#allocation5 + $0x74] sm:$0xf]
        %v1441 = vld [vmem:[#allocation5 + $0x78] sm:$0xff]
        %v1442 = vld [vmem:[#allocation5 + $0x80] sm:$0xf]
        %v1443 = vld [vmem:[#allocation5 + $0x84] sm:$0xff]
        %v1444 = vld [vmem:[#allocation5 + $0x8c] sm:$0xf]
        %v1445 = vld [vmem:[#allocation5 + $0x90] sm:$0x33]
        %v1446 = vld [vmem:[#allocation5 + $0x98] sm:$0x3]
        %v1447 = vld [vmem:[%s2] sm:$0xff]
        %v1448 = vld [vmem:[%s2 + $0x8] sm:$0xff]
        %v1449 = vld [vmem:[%s2 + $0x10] sm:$0xff]
        %v1450 = vld [vmem:[%s2 + $0x18] sm:$0xff]
        %v1451 = vld [vmem:[%s2 + $0x20] sm:$0xff]
        %v1452 = vld [vmem:[%s2 + $0x28] sm:$0xff]
        %v1453 = vld [vmem:[%s2 + $0x30] sm:$0xff]
        %1455 = vset.pattern.permute.xlu0 0
        %1456 = vperm.xlu0 %1455, %v1447
        %v1457 = vpop.permute.xlu0 %1456
        %1460 = vset.pattern.permute.xlu0 0
        %1461 = vperm.xlu0 %1460, %v1448
        %v1462 = vpop.permute.xlu0 %1461
        %1465 = vset.pattern.permute.xlu0 0
        %1466 = vperm.xlu0 %1465, %v1449
        %v1467 = vpop.permute.xlu0 %1466
        %1470 = vset.pattern.permute.xlu0 0
        %1471 = vperm.xlu0 %1470, %v1450
        %v1472 = vpop.permute.xlu0 %1471
        %1475 = vset.pattern.permute.xlu0 0
        %1476 = vperm.xlu0 %1475, %v1451
        %v1477 = vpop.permute.xlu0 %1476
        %1480 = vset.pattern.permute.xlu0 0
        %1481 = vperm.xlu0 %1480, %v1452
        %v1482 = vpop.permute.xlu0 %1481
        %1485 = vset.pattern.permute.xlu0 0
        %1486 = vperm.xlu0 %1485, %v1453
        %v1487 = vpop.permute.xlu0 %1486
        %v1496 = vunpack.c.l.b16 %v1414
        %v1497 = vunpack.c.l.b16 %v1415
        %v1498 = vunpack.c.l.b16 %v1416
        %v1499 = vunpack.c.l.b16 %v1417
        %v1500 = vunpack.c.l.b16 %v1418
        %v1501 = vunpack.c.l.b16 %v1419
        %v1502 = vunpack.c.l.b16 %v1420
        %v1503 = vpack.c.b16 %v1497, %v1496
        %v1504 = vpack.c.b16 %v1499, %v1498
        %v1505 = vpack.c.b16 %v1501, %v1500
        %v1506 = vpack.c.b16 %v1502, %v1502
        %v1533 = vunpack.c.l.b16 %v1421
        %v1534 = vunpack.c.h.b16 %v1421
        %v1535 = vunpack.c.l.b16 %v1422
        %v1536 = vunpack.c.l.b16 %v1423
        %v1537 = vunpack.c.h.b16 %v1423
        %v1538 = vunpack.c.l.b16 %v1424
        %v1539 = vunpack.c.l.b16 %v1425
        %v1540 = vunpack.c.h.b16 %v1425
        %v1541 = vunpack.c.l.b16 %v1426
        %v1542 = vunpack.c.l.b16 %v1427
        %v1543 = vunpack.c.h.b16 %v1427
        %v1544 = vunpack.c.l.b16 %v1428
        %v1545 = vunpack.c.l.b16 %v1429
        %v1546 = vunpack.c.h.b16 %v1429
        %v1547 = vunpack.c.l.b16 %v1430
        %v1548 = vunpack.c.l.b16 %v1431
        %v1549 = vunpack.c.h.b16 %v1431
        %v1550 = vunpack.c.l.b16 %v1432
        %v1551 = vunpack.c.l.b16 %v1433
        %v1552 = vunpack.c.h.b16 %v1433
        %v1553 = vunpack.c.l.b16 %v1434
        %v1554 = vunpack.c.l.b16 %v1435
        %v1555 = vunpack.c.h.b16 %v1435
        %v1556 = vunpack.c.l.b16 %v1436
        %v1557 = vunpack.c.l.b16 %v1437
        %v1558 = vunpack.c.h.b16 %v1437
        %v1559 = vunpack.c.l.b16 %v1438
        %v1560 = vunpack.c.l.b16 %v1439
        %v1561 = vunpack.c.h.b16 %v1439
        %v1562 = vunpack.c.l.b16 %v1440
        %v1563 = vunpack.c.l.b16 %v1441
        %v1564 = vunpack.c.h.b16 %v1441
        %v1565 = vunpack.c.l.b16 %v1442
        %v1566 = vunpack.c.l.b16 %v1443
        %v1567 = vunpack.c.h.b16 %v1443
        %v1568 = vunpack.c.l.b16 %v1444
        %v1569 = vunpack.c.l.b16 %v1445
        %v1570 = vunpack.c.h.b16 %v1445
        %v1571 = vunpack.c.l.b16 %v1446
        %v1572 = vpack.c.b16 %v1536, %v1533
        %v1573 = vpack.c.b16 %v1537, %v1534
        %v1574 = vpack.c.b16 %v1538, %v1535
        %v1575 = vpack.c.b16 %v1542, %v1539
        %v1576 = vpack.c.b16 %v1543, %v1540
        %v1577 = vpack.c.b16 %v1544, %v1541
        %v1578 = vpack.c.b16 %v1548, %v1545
        %v1579 = vpack.c.b16 %v1549, %v1546
        %v1580 = vpack.c.b16 %v1550, %v1547
        %v1581 = vpack.c.b16 %v1554, %v1551
        %v1582 = vpack.c.b16 %v1555, %v1552
        %v1583 = vpack.c.b16 %v1556, %v1553
        %v1584 = vpack.c.b16 %v1560, %v1557
        %v1585 = vpack.c.b16 %v1561, %v1558
        %v1586 = vpack.c.b16 %v1562, %v1559
        %v1587 = vpack.c.b16 %v1566, %v1563
        %v1588 = vpack.c.b16 %v1567, %v1564
        %v1589 = vpack.c.b16 %v1568, %v1565
        %v1590 = vpack.c.b16 %v1569, %v1569
        %v1591 = vpack.c.b16 %v1570, %v1570
        %v1592 = vpack.c.b16 %v1571, %v1571
        %vm1611 = vcmask 818176
        %v1613 = vsel %vm1611, %v1503, 0
        %v1616 = vsel %vm1611, %v1504, 0
        %v1619 = vsel %vm1611, %v1505, 0
        %v1622 = vsel %vm1611, %v1506, 0
        %vm1624 = vcmask 1041408
        %v1626 = vsel %vm1624, %v1590, 0
        %v1629 = vsel %vm1624, %v1591, 0
        %v1632 = vsel %vm1624, %v1592, 0
        %1634 = vmatprep.subr.bf16.mxu0 %v1573
        %1635 = vmatpush1.bf16.msra.mxu0 %v1572
        %1636 = vmatprep.subr.bf16.mxu0 %v1576
        %1637 = vmatpush1.bf16.msra.mxu0 %v1575
        %1638 = vmatprep.subr.bf16.mxu0 %v1579
        %1639 = vmatpush1.bf16.msra.mxu0 %v1578
        %1640 = vmatprep.subr.bf16.mxu0 %v1582
        %1641 = vmatpush1.bf16.msra.mxu0 %v1581
        %1642 = vmatprep.subr.bf16.mxu0 %v1585
        %1643 = vmatpush1.bf16.msra.mxu0 %v1584
        %1644 = vmatprep.subr.bf16.mxu0 %v1588
        %1645 = vmatpush1.bf16.msra.mxu0 %v1587
        %1646 = vmatprep.subr.bf16.mxu0 %v1629
        %1647 = vmatpush1.bf16.msra.mxu0 %v1626
        %1648 = vmatprep.subr.bf16.mxu0 0
        %1649 = vmatpush1.bf16.msra.mxu0 0
        %1650 = vmatprep.subr.bf16.mxu0 0
        %1651 = vmatpush1.bf16.msra.mxu0 0
        %1652 = vmatprep.subr.bf16.mxu0 0
        %1653 = vmatpush1.bf16.msra.mxu0 0
        %1654 = vmatprep.subr.bf16.mxu0 0
        %1655 = vmatpush1.bf16.msra.mxu0 0
        %1656 = vmatprep.subr.bf16.mxu0 0
        %1657 = vmatpush1.bf16.msra.mxu0 0
        %1658 = vmatprep.subr.bf16.mxu0 0
        %1659 = vmatpush1.bf16.msra.mxu0 0
        %1660 = vmatprep.subr.bf16.mxu0 0
        %1661 = vmatpush1.bf16.msra.mxu0 0
        %1662 = vmatprep.subr.bf16.mxu0 0
        %1663 = vmatpush1.bf16.msra.mxu0 0
        %1664 = vmatprep.subr.bf16.mxu0 0
        %1665 = vmatpush1.bf16.msra.mxu0 0
        %1666 = vmatprep.mubr.bf16.mxu0 0
        %1667 = vmatmul.mubr.bf16.gmra.mrb[0].mxu0 %v1613
        %v1668 = vpop.f32.mrb[0].mxu0
        %v1669 = vadd.f32 %v1457, %v1668
        %v1670 = vpop.f32.mrb[0].mxu0
        %v1671 = vadd.f32 %v1457, %v1670
        %v1672 = vpop.f32.mrb[0].mxu0
        %v1673 = vadd.f32 %v1462, %v1672
        %v1674 = vpop.f32.mrb[0].mxu0
        %v1675 = vadd.f32 %v1462, %v1674
        %1676 = vmatprep.mubr.bf16.mxu0 0
        %1677 = vmatmul.mubr.bf16.gmra.mrb[0].mxu0 %v1616
        %v1678 = vpop.f32.mrb[0].mxu0
        %v1679 = vadd.f32 %v1467, %v1678
        %v1680 = vpop.f32.mrb[0].mxu0
        %v1681 = vadd.f32 %v1467, %v1680
        %v1682 = vpop.f32.mrb[0].mxu0
        %v1683 = vadd.f32 %v1472, %v1682
        %v1684 = vpop.f32.mrb[0].mxu0
        %v1685 = vadd.f32 %v1472, %v1684
        %1686 = vmatprep.mubr.bf16.mxu0 0
        %1687 = vmatmul.mubr.bf16.gmra.mrb[0].mxu0 %v1619
        %v1688 = vpop.f32.mrb[0].mxu0
        %v1689 = vadd.f32 %v1477, %v1688
        %v1690 = vpop.f32.mrb[0].mxu0
        %v1691 = vadd.f32 %v1477, %v1690
        %v1692 = vpop.f32.mrb[0].mxu0
        %v1693 = vadd.f32 %v1482, %v1692
        %v1694 = vpop.f32.mrb[0].mxu0
        %v1695 = vadd.f32 %v1482, %v1694
        %1696 = vmatprep.mubr.bf16.mxu0 0
        %1697 = vmatmul.mubr.bf16.gmra.mrb[0].mxu0 %v1622
        %v1698 = vpop.f32.mrb[0].mxu0
        %v1699 = vadd.f32 %v1487, %v1698
        %v1700 = vpop.f32.mrb[0].mxu0
        %v1701 = vadd.f32 %v1487, %v1700
        %v1702 = vpop.f32.mrb[0].mxu0
        %v1703 = vpop.f32.mrb[0].mxu0
        %1704 = vdwg.mxu0
        %1705 = vmatprep.subr.bf16.mxu0 0
        %1706 = vmatpush1.bf16.msra.mxu0 %v1574
        %1707 = vmatprep.subr.bf16.mxu0 0
        %1708 = vmatpush1.bf16.msra.mxu0 %v1577
        %1709 = vmatprep.subr.bf16.mxu0 0
        %1710 = vmatpush1.bf16.msra.mxu0 %v1580
        %1711 = vmatprep.subr.bf16.mxu0 0
        %1712 = vmatpush1.bf16.msra.mxu0 %v1583
        %1713 = vmatprep.subr.bf16.mxu0 0
        %1714 = vmatpush1.bf16.msra.mxu0 %v1586
        %1715 = vmatprep.subr.bf16.mxu0 0
        %1716 = vmatpush1.bf16.msra.mxu0 %v1589
        %1717 = vmatprep.subr.bf16.mxu0 0
        %1718 = vmatpush1.bf16.msra.mxu0 %v1632
        %1719 = vmatprep.subr.bf16.mxu0 0
        %1720 = vmatpush1.bf16.msra.mxu0 0
        %1721 = vmatprep.subr.bf16.mxu0 0
        %1722 = vmatpush1.bf16.msra.mxu0 0
        %1723 = vmatprep.subr.bf16.mxu0 0
        %1724 = vmatpush1.bf16.msra.mxu0 0
        %1725 = vmatprep.subr.bf16.mxu0 0
        %1726 = vmatpush1.bf16.msra.mxu0 0
        %1727 = vmatprep.subr.bf16.mxu0 0
        %1728 = vmatpush1.bf16.msra.mxu0 0
        %1729 = vmatprep.subr.bf16.mxu0 0
        %1730 = vmatpush1.bf16.msra.mxu0 0
        %1731 = vmatprep.subr.bf16.mxu0 0
        %1732 = vmatpush1.bf16.msra.mxu0 0
        %1733 = vmatprep.subr.bf16.mxu0 0
        %1734 = vmatpush1.bf16.msra.mxu0 0
        %1735 = vmatprep.subr.bf16.mxu0 0
        %1736 = vmatpush1.bf16.msra.mxu0 0
        %1737 = vmatprep.mubr.bf16.mxu0 0
        %1738 = vmatmul.mubr.bf16.gmra.mrb[0].mxu0 %v1613
        %v1739 = vpop.f32.mrb[0].mxu0
        %v1740 = vadd.f32 %v1457, %v1739
        %v1741 = vpop.f32.mrb[0].mxu0
        %v1742 = vpop.f32.mrb[0].mxu0
        %v1743 = vadd.f32 %v1462, %v1742
        %v1744 = vpop.f32.mrb[0].mxu0
        %1745 = vmatprep.mubr.bf16.mxu0 0
        %1746 = vmatmul.mubr.bf16.gmra.mrb[0].mxu0 %v1616
        %v1747 = vpop.f32.mrb[0].mxu0
        %v1748 = vadd.f32 %v1467, %v1747
        %v1749 = vpop.f32.mrb[0].mxu0
        %v1750 = vpop.f32.mrb[0].mxu0
        %v1751 = vadd.f32 %v1472, %v1750
        %v1752 = vpop.f32.mrb[0].mxu0
        %1753 = vmatprep.mubr.bf16.mxu0 0
        %1754 = vmatmul.mubr.bf16.gmra.mrb[0].mxu0 %v1619
        %v1755 = vpop.f32.mrb[0].mxu0
        %v1756 = vadd.f32 %v1477, %v1755
        %v1757 = vpop.f32.mrb[0].mxu0
        %v1758 = vpop.f32.mrb[0].mxu0
        %v1759 = vadd.f32 %v1482, %v1758
        %v1760 = vpop.f32.mrb[0].mxu0
        %1761 = vmatprep.mubr.bf16.mxu0 0
        %1762 = vmatmul.mubr.bf16.gmra.mrb[0].mxu0 %v1622
        %v1763 = vpop.f32.mrb[0].mxu0
        %v1764 = vadd.f32 %v1487, %v1763
        %v1765 = vpop.f32.mrb[0].mxu0
        %v1766 = vpop.f32.mrb[0].mxu0
        %v1767 = vpop.f32.mrb[0].mxu0
        %1768 = vdwg.mxu0
        %vm1769 = vcmp.gt.f32.partialorder %v1669, 0.0
        %vm1770 = vcmp.gt.f32.partialorder %v1671, 0.0
        %vm1771 = vcmp.gt.f32.partialorder %v1740, 0.0
        %vm1772 = vcmp.gt.f32.partialorder %v1673, 0.0
        %vm1773 = vcmp.gt.f32.partialorder %v1675, 0.0
        %vm1774 = vcmp.gt.f32.partialorder %v1743, 0.0
        %vm1775 = vcmp.gt.f32.partialorder %v1679, 0.0
        %vm1776 = vcmp.gt.f32.partialorder %v1681, 0.0
        %vm1777 = vcmp.gt.f32.partialorder %v1748, 0.0
        %vm1778 = vcmp.gt.f32.partialorder %v1683, 0.0
        %vm1779 = vcmp.gt.f32.partialorder %v1685, 0.0
        %vm1780 = vcmp.gt.f32.partialorder %v1751, 0.0
        %vm1781 = vcmp.gt.f32.partialorder %v1689, 0.0
        %vm1782 = vcmp.gt.f32.partialorder %v1691, 0.0
        %vm1783 = vcmp.gt.f32.partialorder %v1756, 0.0
        %vm1784 = vcmp.gt.f32.partialorder %v1693, 0.0
        %vm1785 = vcmp.gt.f32.partialorder %v1695, 0.0
        %vm1786 = vcmp.gt.f32.partialorder %v1759, 0.0
        %vm1787 = vcmp.gt.f32.partialorder %v1699, 0.0
        %vm1788 = vcmp.gt.f32.partialorder %v1701, 0.0
        %vm1789 = vcmp.gt.f32.partialorder %v1764, 0.0
        %v1790 = vsel %vm645, 1, 0
        %v1791 = vsel %vm646, 1, 0
        %v1792 = vsel %vm647, 1, 0
        %vm1793 = vcmp.eq.s32.totalorder %v1790, 1
        %vm1794 = vcmp.eq.s32.totalorder %v1791, 1
        %vm1795 = vcmp.eq.s32.totalorder %v1792, 1
        %vm1796 = vmand %vm1793, %vm1769
        %vm1797 = vmand %vm1794, %vm1770
        %vm1798 = vmand %vm1795, %vm1771
        %vm1799 = vmand %vm1793, %vm1772
        %vm1800 = vmand %vm1794, %vm1773
        %vm1801 = vmand %vm1795, %vm1774
        %vm1802 = vmand %vm1793, %vm1775
        %vm1803 = vmand %vm1794, %vm1776
        %vm1804 = vmand %vm1795, %vm1777
        %vm1805 = vmand %vm1793, %vm1778
        %vm1806 = vmand %vm1794, %vm1779
        %vm1807 = vmand %vm1795, %vm1780
        %vm1808 = vmand %vm1793, %vm1781
        %vm1809 = vmand %vm1794, %vm1782
        %vm1810 = vmand %vm1795, %vm1783
        %vm1811 = vmand %vm1793, %vm1784
        %vm1812 = vmand %vm1794, %vm1785
        %vm1813 = vmand %vm1795, %vm1786
        %vm1814 = vmand %vm1793, %vm1787
        %vm1815 = vmand %vm1794, %vm1788
        %vm1816 = vmand %vm1795, %vm1789
        %v1817 = vsel %vm1796, %v1669, 0.0
        %v1818 = vsel %vm1797, %v1671, 0.0
        %v1819 = vsel %vm1798, %v1740, 0.0
        %v1820 = vsel %vm1799, %v1673, 0.0
        %v1821 = vsel %vm1800, %v1675, 0.0
        %v1822 = vsel %vm1801, %v1743, 0.0
        %v1823 = vsel %vm1802, %v1679, 0.0
        %v1824 = vsel %vm1803, %v1681, 0.0
        %v1825 = vsel %vm1804, %v1748, 0.0
        %v1826 = vsel %vm1805, %v1683, 0.0
        %v1827 = vsel %vm1806, %v1685, 0.0
        %v1828 = vsel %vm1807, %v1751, 0.0
        %v1829 = vsel %vm1808, %v1689, 0.0
        %v1830 = vsel %vm1809, %v1691, 0.0
        %v1831 = vsel %vm1810, %v1756, 0.0
        %v1832 = vsel %vm1811, %v1693, 0.0
        %v1833 = vsel %vm1812, %v1695, 0.0
        %v1834 = vsel %vm1813, %v1759, 0.0
        %v1835 = vsel %vm1814, %v1699, 0.0
        %v1836 = vsel %vm1815, %v1701, 0.0
        %v1837 = vsel %vm1816, %v1764, 0.0
        %v1838 = vpack.c.bf16 %v1820, %v1817
        %v1839 = vpack.c.bf16 %v1821, %v1818
        %v1840 = vpack.c.bf16 %v1822, %v1819
        %v1841 = vpack.c.bf16 %v1826, %v1823
        %v1842 = vpack.c.bf16 %v1827, %v1824
        %v1843 = vpack.c.bf16 %v1828, %v1825
        %v1844 = vpack.c.bf16 %v1832, %v1829
        %v1845 = vpack.c.bf16 %v1833, %v1830
        %v1846 = vpack.c.bf16 %v1834, %v1831
        %v1847 = vpack.c.bf16 %v1835, %v1835
        %v1848 = vpack.c.bf16 %v1836, %v1836
        %v1849 = vpack.c.bf16 %v1837, %v1837
        %v1862 = vunpack.c.l.b16 %v1838
        %v1863 = vunpack.c.l.b16 %v1839
        %v1864 = vunpack.c.l.b16 %v1840
        %v1865 = vunpack.c.h.b16 %v1838
        %v1866 = vunpack.c.h.b16 %v1839
        %v1867 = vunpack.c.h.b16 %v1840
        %v1868 = vunpack.c.l.b16 %v1841
        %v1869 = vunpack.c.l.b16 %v1842
        %v1870 = vunpack.c.l.b16 %v1843
        %v1871 = vunpack.c.h.b16 %v1841
        %v1872 = vunpack.c.h.b16 %v1842
        %v1873 = vunpack.c.h.b16 %v1843
        %v1874 = vunpack.c.l.b16 %v1844
        %v1875 = vunpack.c.l.b16 %v1845
        %v1876 = vunpack.c.l.b16 %v1846
        %v1877 = vunpack.c.h.b16 %v1844
        %v1878 = vunpack.c.h.b16 %v1845
        %v1879 = vunpack.c.h.b16 %v1846
        %v1880 = vunpack.c.l.b16 %v1847
        %v1881 = vunpack.c.l.b16 %v1848
        %v1882 = vunpack.c.l.b16 %v1849
        %v1883 = vpack.c.b16 %v1863, %v1862
        %v1884 = vpack.c.b16 %v1864, %v1864
        %v1885 = vpack.c.b16 %v1866, %v1865
        %v1886 = vpack.c.b16 %v1867, %v1867
        %v1887 = vpack.c.b16 %v1869, %v1868
        %v1888 = vpack.c.b16 %v1870, %v1870
        %v1889 = vpack.c.b16 %v1872, %v1871
        %v1890 = vpack.c.b16 %v1873, %v1873
        %v1891 = vpack.c.b16 %v1875, %v1874
        %v1892 = vpack.c.b16 %v1876, %v1876
        %v1893 = vpack.c.b16 %v1878, %v1877
        %v1894 = vpack.c.b16 %v1879, %v1879
        %v1895 = vpack.c.b16 %v1881, %v1880
        %v1896 = vpack.c.b16 %v1882, %v1882
        %1911 = vst [vmem:[#allocation2 + $0x4] sm:$0xff] %v1883
        %1912 = vst [vmem:[#allocation2 + $0xc] sm:$0xf] %v1884
        %1913 = vst [vmem:[#allocation2 + $0x18] sm:$0xff] %v1885
        %1914 = vst [vmem:[#allocation2 + $0x20] sm:$0xf] %v1886
        %1915 = vst [vmem:[#allocation2 + $0x2c] sm:$0xff] %v1887
        %1916 = vst [vmem:[#allocation2 + $0x34] sm:$0xf] %v1888
        %1917 = vst [vmem:[#allocation2 + $0x40] sm:$0xff] %v1889
        %1918 = vst [vmem:[#allocation2 + $0x48] sm:$0xf] %v1890
        %1919 = vst [vmem:[#allocation2 + $0x54] sm:$0xff] %v1891
        %1920 = vst [vmem:[#allocation2 + $0x5c] sm:$0xf] %v1892
        %1921 = vst [vmem:[#allocation2 + $0x68] sm:$0xff] %v1893
        %1922 = vst [vmem:[#allocation2 + $0x70] sm:$0xf] %v1894
        %1923 = vst [vmem:[#allocation2 + $0x7c] sm:$0xff] %v1895
        %1924 = vst [vmem:[#allocation2 + $0x84] sm:$0xf] %v1896
        %v1925 = vld [vmem:[#allocation8] sm:$0xf]
        %v1926 = vld [vmem:[#allocation8 + $0x4] sm:$0x3]
        %v1927 = vld [vmem:[#allocation2 + $0x4] sm:$0xff]
        %v1928 = vld [vmem:[#allocation2 + $0xc] sm:$0xf]
        %v1929 = vld [vmem:[#allocation2 + $0x18] sm:$0xff]
        %v1930 = vld [vmem:[#allocation2 + $0x20] sm:$0xf]
        %v1931 = vld [vmem:[#allocation2 + $0x2c] sm:$0xff]
        %v1932 = vld [vmem:[#allocation2 + $0x34] sm:$0xf]
        %v1933 = vld [vmem:[#allocation2 + $0x40] sm:$0xff]
        %v1934 = vld [vmem:[#allocation2 + $0x48] sm:$0xf]
        %v1935 = vld [vmem:[#allocation2 + $0x54] sm:$0xff]
        %v1936 = vld [vmem:[#allocation2 + $0x5c] sm:$0xf]
        %v1937 = vld [vmem:[#allocation2 + $0x68] sm:$0xff]
        %v1938 = vld [vmem:[#allocation2 + $0x70] sm:$0xf]
        %v1939 = vld [vmem:[#allocation2 + $0x7c] sm:$0xff]
        %v1940 = vld [vmem:[#allocation2 + $0x84] sm:$0xf]
        %v1941 = vld [vmem:[%s4] sm:$0xff]
        %v1942 = vld [vmem:[%s4 + $0x8] sm:$0xf]
        %1944 = vset.pattern.permute.xlu0 0
        %1945 = vperm.xlu0 %1944, %v1941
        %v1946 = vpop.permute.xlu0 %1945
        %1949 = vset.pattern.permute.xlu0 0
        %1950 = vperm.xlu0 %1949, %v1942
        %v1951 = vpop.permute.xlu0 %1950
        %v1955 = vunpack.c.l.b16 %v1925
        %v1956 = vunpack.c.l.b16 %v1926
        %v1957 = vpack.c.b16 %v1956, %v1955
        %v1972 = vunpack.c.l.b16 %v1927
        %v1973 = vunpack.c.h.b16 %v1927
        %v1974 = vunpack.c.l.b16 %v1928
        %v1975 = vunpack.c.l.b16 %v1929
        %v1976 = vunpack.c.h.b16 %v1929
        %v1977 = vunpack.c.l.b16 %v1930
        %v1978 = vunpack.c.l.b16 %v1931
        %v1979 = vunpack.c.h.b16 %v1931
        %v1980 = vunpack.c.l.b16 %v1932
        %v1981 = vunpack.c.l.b16 %v1933
        %v1982 = vunpack.c.h.b16 %v1933
        %v1983 = vunpack.c.l.b16 %v1934
        %v1984 = vunpack.c.l.b16 %v1935
        %v1985 = vunpack.c.h.b16 %v1935
        %v1986 = vunpack.c.l.b16 %v1936
        %v1987 = vunpack.c.l.b16 %v1937
        %v1988 = vunpack.c.h.b16 %v1937
        %v1989 = vunpack.c.l.b16 %v1938
        %v1990 = vunpack.c.l.b16 %v1939
        %v1991 = vunpack.c.h.b16 %v1939
        %v1992 = vunpack.c.l.b16 %v1940
        %v1993 = vpack.c.b16 %v1975, %v1972
        %v1994 = vpack.c.b16 %v1976, %v1973
        %v1995 = vpack.c.b16 %v1977, %v1974
        %v1996 = vpack.c.b16 %v1981, %v1978
        %v1997 = vpack.c.b16 %v1982, %v1979
        %v1998 = vpack.c.b16 %v1983, %v1980
        %v1999 = vpack.c.b16 %v1987, %v1984
        %v2000 = vpack.c.b16 %v1988, %v1985
        %v2001 = vpack.c.b16 %v1989, %v1986
        %v2002 = vpack.c.b16 %v1990, %v1990
        %v2003 = vpack.c.b16 %v1991, %v1991
        %v2004 = vpack.c.b16 %v1992, %v1992
        %vm2014 = vcmask 457728
        %v2016 = vsel %vm2014, %v1957, 0
        %vm2018 = vcmask 1043456
        %v2020 = vsel %vm2018, %v2002, 0
        %v2023 = vsel %vm2018, %v2003, 0
        %v2026 = vsel %vm2018, %v2004, 0
        %2028 = vmatprep.subr.bf16.mxu0 %v1994
        %2029 = vmatpush1.bf16.msra.mxu0 %v1993
        %2030 = vmatprep.subr.bf16.mxu0 %v1997
        %2031 = vmatpush1.bf16.msra.mxu0 %v1996
        %2032 = vmatprep.subr.bf16.mxu0 %v2000
        %2033 = vmatpush1.bf16.msra.mxu0 %v1999
        %2034 = vmatprep.subr.bf16.mxu0 %v2023
        %2035 = vmatpush1.bf16.msra.mxu0 %v2020
        %2036 = vmatprep.subr.bf16.mxu0 0
        %2037 = vmatpush1.bf16.msra.mxu0 0
        %2038 = vmatprep.subr.bf16.mxu0 0
        %2039 = vmatpush1.bf16.msra.mxu0 0
        %2040 = vmatprep.subr.bf16.mxu0 0
        %2041 = vmatpush1.bf16.msra.mxu0 0
        %2042 = vmatprep.subr.bf16.mxu0 0
        %2043 = vmatpush1.bf16.msra.mxu0 0
        %2044 = vmatprep.subr.bf16.mxu0 0
        %2045 = vmatpush1.bf16.msra.mxu0 0
        %2046 = vmatprep.subr.bf16.mxu0 0
        %2047 = vmatpush1.bf16.msra.mxu0 0
        %2048 = vmatprep.subr.bf16.mxu0 0
        %2049 = vmatpush1.bf16.msra.mxu0 0
        %2050 = vmatprep.subr.bf16.mxu0 0
        %2051 = vmatpush1.bf16.msra.mxu0 0
        %2052 = vmatprep.subr.bf16.mxu0 0
        %2053 = vmatpush1.bf16.msra.mxu0 0
        %2054 = vmatprep.subr.bf16.mxu0 0
        %2055 = vmatpush1.bf16.msra.mxu0 0
        %2056 = vmatprep.subr.bf16.mxu0 0
        %2057 = vmatpush1.bf16.msra.mxu0 0
        %2058 = vmatprep.subr.bf16.mxu0 0
        %2059 = vmatpush1.bf16.msra.mxu0 0
        %2060 = vmatprep.mubr.bf16.mxu0 0
        %2061 = vmatmul.mubr.bf16.gmra.mrb[0].mxu0 %v2016
        %v2062 = vpop.f32.mrb[0].mxu0
        %v2063 = vadd.f32 %v1946, %v2062
        %v2064 = vpop.f32.mrb[0].mxu0
        %v2065 = vadd.f32 %v1946, %v2064
        %v2066 = vpop.f32.mrb[0].mxu0
        %v2067 = vadd.f32 %v1951, %v2066
        %v2068 = vpop.f32.mrb[0].mxu0
        %v2069 = vadd.f32 %v1951, %v2068
        %2070 = vdwg.mxu0
        %2071 = vmatprep.subr.bf16.mxu0 0
        %2072 = vmatpush1.bf16.msra.mxu0 %v1995
        %2073 = vmatprep.subr.bf16.mxu0 0
        %2074 = vmatpush1.bf16.msra.mxu0 %v1998
        %2075 = vmatprep.subr.bf16.mxu0 0
        %2076 = vmatpush1.bf16.msra.mxu0 %v2001
        %2077 = vmatprep.subr.bf16.mxu0 0
        %2078 = vmatpush1.bf16.msra.mxu0 %v2026
        %2079 = vmatprep.subr.bf16.mxu0 0
        %2080 = vmatpush1.bf16.msra.mxu0 0
        %2081 = vmatprep.subr.bf16.mxu0 0
        %2082 = vmatpush1.bf16.msra.mxu0 0
        %2083 = vmatprep.subr.bf16.mxu0 0
        %2084 = vmatpush1.bf16.msra.mxu0 0
        %2085 = vmatprep.subr.bf16.mxu0 0
        %2086 = vmatpush1.bf16.msra.mxu0 0
        %2087 = vmatprep.subr.bf16.mxu0 0
        %2088 = vmatpush1.bf16.msra.mxu0 0
        %2089 = vmatprep.subr.bf16.mxu0 0
        %2090 = vmatpush1.bf16.msra.mxu0 0
        %2091 = vmatprep.subr.bf16.mxu0 0
        %2092 = vmatpush1.bf16.msra.mxu0 0
        %2093 = vmatprep.subr.bf16.mxu0 0
        %2094 = vmatpush1.bf16.msra.mxu0 0
        %2095 = vmatprep.subr.bf16.mxu0 0
        %2096 = vmatpush1.bf16.msra.mxu0 0
        %2097 = vmatprep.subr.bf16.mxu0 0
        %2098 = vmatpush1.bf16.msra.mxu0 0
        %2099 = vmatprep.subr.bf16.mxu0 0
        %2100 = vmatpush1.bf16.msra.mxu0 0
        %2101 = vmatprep.subr.bf16.mxu0 0
        %2102 = vmatpush1.bf16.msra.mxu0 0
        %2103 = vmatprep.mubr.bf16.mxu0 0
        %2104 = vmatmul.mubr.bf16.gmra.mrb[0].mxu0 %v2016
        %v2105 = vpop.f32.mrb[0].mxu0
        %v2106 = vadd.f32 %v1946, %v2105
        %v2107 = vpop.f32.mrb[0].mxu0
        %v2108 = vpop.f32.mrb[0].mxu0
        %v2109 = vadd.f32 %v1951, %v2108
        %v2110 = vpop.f32.mrb[0].mxu0
        %2111 = vdwg.mxu0
        %vm2112 = vcmp.gt.f32.partialorder %v2063, 0.0
        %vm2113 = vcmp.gt.f32.partialorder %v2065, 0.0
        %vm2114 = vcmp.gt.f32.partialorder %v2106, 0.0
        %vm2115 = vcmp.gt.f32.partialorder %v2067, 0.0
        %vm2116 = vcmp.gt.f32.partialorder %v2069, 0.0
        %vm2117 = vcmp.gt.f32.partialorder %v2109, 0.0
        %vm2118 = vmand %vm1793, %vm2112
        %vm2119 = vmand %vm1794, %vm2113
        %vm2120 = vmand %vm1795, %vm2114
        %vm2121 = vmand %vm1793, %vm2115
        %vm2122 = vmand %vm1794, %vm2116
        %vm2123 = vmand %vm1795, %vm2117
        %v2124 = vsel %vm2118, %v2063, 0.0
        %v2125 = vsel %vm2119, %v2065, 0.0
        %v2126 = vsel %vm2120, %v2106, 0.0
        %v2127 = vsel %vm2121, %v2067, 0.0
        %v2128 = vsel %vm2122, %v2069, 0.0
        %v2129 = vsel %vm2123, %v2109, 0.0
        %v2130 = vpack.c.bf16 %v2127, %v2124
        %v2131 = vpack.c.bf16 %v2128, %v2125
        %v2132 = vpack.c.bf16 %v2129, %v2126
        %v2136 = vunpack.c.l.b16 %v2130
        %v2137 = vunpack.c.l.b16 %v2131
        %v2138 = vunpack.c.l.b16 %v2132
        %v2139 = vunpack.c.h.b16 %v2130
        %v2140 = vunpack.c.h.b16 %v2131
        %v2141 = vunpack.c.h.b16 %v2132
        %v2142 = vpack.c.b16 %v2137, %v2136
        %v2143 = vpack.c.b16 %v2138, %v2138
        %v2144 = vpack.c.b16 %v2140, %v2139
        %v2145 = vpack.c.b16 %v2141, %v2141
        %2150 = vst [vmem:[#allocation3 + $0x4] sm:$0xff] %v2142
        %2151 = vst [vmem:[#allocation3 + $0xc] sm:$0xf] %v2143
        %2152 = vst [vmem:[#allocation3 + $0x18] sm:$0x33] %v2144
        %2153 = vst [vmem:[#allocation3 + $0x20] sm:$0x3] %v2145
        %v2154 = vld [vmem:[#allocation3] sm:$0xff]
        %v2155 = vld [vmem:[#allocation3 + $0x8] sm:$0xff]
        %v2156 = vld [vmem:[#allocation3 + $0x14] sm:$0x33]
        %v2157 = vld [vmem:[#allocation3 + $0x1c] sm:$0x33]
        %2162 = vrot.lane.b32.xlu0 %v2154, 25
        %v2163 = vpop.permute.xlu0 %2162
        %2164 = vrot.lane.b32.xlu0 %v2155, 25
        %v2165 = vpop.permute.xlu0 %2164
        %2166 = vrot.lane.b32.xlu0 %v2156, 25
        %v2167 = vpop.permute.xlu0 %2166
        %2168 = vrot.lane.b32.xlu0 %v2157, 25
        %v2169 = vpop.permute.xlu0 %2168
        %v2170 = vrot.slane %v2163, 4
        %v2171 = vrot.slane %v2165, 4
        %v2172 = vrot.slane %v2167, 4
        %v2173 = vrot.slane %v2169, 4
        %v2174 = vsel %vm671, %v2170, %v2171
        %v2175 = vsel %vm859, %v2163, %v2174
        %v2176 = vsel %vm859, %v2165, %v2171
        %v2177 = vsel %vm671, %v2172, %v2173
        %v2178 = vsel %vm859, %v2167, %v2177
        %v2179 = vsel %vm859, %v2169, %v2173
        %2184 = vst [vmem:[#allocation5] sm:$0xff] %v2175
        %2185 = vst [vmem:[#allocation5 + $0x8] sm:$0xf] %v2176
        %2186 = vst [vmem:[#allocation5 + $0xc] sm:$0x33] %v2178
        %2187 = vst [vmem:[#allocation5 + $0x14] sm:$0x3] %v2179
        %v2188 = vld [vmem:[#allocation3] sm:$0xff]
        %v2189 = vld [vmem:[#allocation3 + $0x8] sm:$0xff]
        %v2190 = vld [vmem:[#allocation3 + $0x14] sm:$0x33]
        %v2191 = vld [vmem:[#allocation3 + $0x1c] sm:$0x33]
        %vm2196 = vcmask 1041408
        %vm2197 = vcmask 1045508
        %vm2198 = vmor %vm2196, %vm2197
        %v2199 = vrot.slane %v2188, 6
        %v2200 = vrot.slane %v2189, 6
        %v2201 = vrot.slane %v2199, 4
        %v2202 = vrot.slane %v2190, 6
        %v2203 = vsel %vm2198, %v2201, %v2202
        %v2204 = vrot.slane %v2200, 4
        %v2205 = vrot.slane %v2191, 6
        %v2206 = vsel %vm2198, %v2204, %v2205
        %2207 = vrot.lane.b32.xlu0 %v2199, 24
        %v2208 = vpop.permute.xlu0 %2207
        %2209 = vrot.lane.b32.xlu0 %v2200, 24
        %v2210 = vpop.permute.xlu0 %2209
        %2211 = vrot.lane.b32.xlu0 %v2203, 24
        %v2212 = vpop.permute.xlu0 %2211
        %2213 = vrot.lane.b32.xlu0 %v2206, 24
        %v2214 = vpop.permute.xlu0 %2213
        %v2215 = vrot.slane %v2208, 4
        %v2216 = vrot.slane %v2210, 4
        %v2217 = vrot.slane %v2212, 4
        %v2218 = vrot.slane %v2214, 4
        %v2219 = vsel %vm671, %v2215, %v2216
        %v2220 = vsel %vm890, %v2208, %v2219
        %v2221 = vsel %vm890, %v2210, %v2216
        %v2222 = vsel %vm671, %v2217, %v2218
        %v2223 = vsel %vm890, %v2212, %v2222
        %v2224 = vsel %vm890, %v2214, %v2218
        %2229 = vst [vmem:[#allocation5 + $0xc] sm:$0xcc] %v2220
        %2230 = vst [vmem:[#allocation5 + $0x14] sm:$0xc] %v2221
        %2231 = vst [vmem:[#allocation5 + $0x18] sm:$0xff] %v2223
        %2232 = vst [vmem:[#allocation5 + $0x20] sm:$0xf] %v2224
        %v2233 = vld [vmem:[#allocation3] sm:$0xff]
        %v2234 = vld [vmem:[#allocation3 + $0x8] sm:$0xff]
        %v2235 = vld [vmem:[#allocation3 + $0x14] sm:$0x33]
        %v2236 = vld [vmem:[#allocation3 + $0x1c] sm:$0x33]
        %2241 = vrot.lane.b32.xlu0 %v2233, 23
        %v2242 = vpop.permute.xlu0 %2241
        %2243 = vrot.lane.b32.xlu0 %v2234, 23
        %v2244 = vpop.permute.xlu0 %2243
        %2245 = vrot.lane.b32.xlu0 %v2235, 23
        %v2246 = vpop.permute.xlu0 %2245
        %2247 = vrot.lane.b32.xlu0 %v2236, 23
        %v2248 = vpop.permute.xlu0 %2247
        %v2249 = vrot.slane %v2242, 4
        %v2250 = vrot.slane %v2244, 4
        %v2251 = vrot.slane %v2246, 4
        %v2252 = vrot.slane %v2248, 4
        %v2253 = vsel %vm671, %v2249, %v2250
        %v2254 = vsel %vm921, %v2242, %v2253
        %v2255 = vsel %vm921, %v2244, %v2250
        %v2256 = vsel %vm671, %v2251, %v2252
        %v2257 = vsel %vm921, %v2246, %v2256
        %v2258 = vsel %vm921, %v2248, %v2252
        %2263 = vst [vmem:[#allocation5 + $0x24] sm:$0xff] %v2254
        %2264 = vst [vmem:[#allocation5 + $0x2c] sm:$0xf] %v2255
        %2265 = vst [vmem:[#allocation5 + $0x30] sm:$0x33] %v2257
        %2266 = vst [vmem:[#allocation5 + $0x38] sm:$0x3] %v2258
        %v2267 = vld [vmem:[#allocation3] sm:$0xff]
        %v2268 = vld [vmem:[#allocation3 + $0x8] sm:$0xff]
        %v2269 = vld [vmem:[#allocation3 + $0x14] sm:$0x33]
        %v2270 = vld [vmem:[#allocation3 + $0x1c] sm:$0x33]
        %v2275 = vrot.slane %v2267, 6
        %v2276 = vrot.slane %v2268, 6
        %v2277 = vrot.slane %v2275, 4
        %v2278 = vrot.slane %v2269, 6
        %v2279 = vsel %vm2198, %v2277, %v2278
        %v2280 = vrot.slane %v2276, 4
        %v2281 = vrot.slane %v2270, 6
        %v2282 = vsel %vm2198, %v2280, %v2281
        %2283 = vrot.lane.b32.xlu0 %v2275, 1
        %v2284 = vpop.permute.xlu0 %2283
        %2285 = vrot.lane.b32.xlu0 %v2276, 1
        %v2286 = vpop.permute.xlu0 %2285
        %2287 = vrot.lane.b32.xlu0 %v2279, 1
        %v2288 = vpop.permute.xlu0 %2287
        %2289 = vrot.lane.b32.xlu0 %v2282, 1
        %v2290 = vpop.permute.xlu0 %2289
        %v2291 = vrot.slane %v2284, 4
        %v2292 = vrot.slane %v2286, 4
        %v2293 = vrot.slane %v2288, 4
        %v2294 = vrot.slane %v2290, 4
        %v2295 = vsel %vm671, %v2291, %v2292
        %v2296 = vsel %vm1014, %v2284, %v2295
        %v2297 = vsel %vm1014, %v2286, %v2292
        %v2298 = vsel %vm671, %v2293, %v2294
        %v2299 = vsel %vm1014, %v2288, %v2298
        %v2300 = vsel %vm1014, %v2290, %v2294
        %2305 = vst [vmem:[#allocation5 + $0x30] sm:$0xcc] %v2296
        %2306 = vst [vmem:[#allocation5 + $0x38] sm:$0xc] %v2297
        %2307 = vst [vmem:[#allocation5 + $0x3c] sm:$0xff] %v2299
        %2308 = vst [vmem:[#allocation5 + $0x44] sm:$0xf] %v2300
        %v2309 = vld [vmem:[#allocation3 + $0x4] sm:$0xff]
        %v2310 = vld [vmem:[#allocation3 + $0xc] sm:$0xf]
        %v2311 = vld [vmem:[#allocation3 + $0x18] sm:$0x33]
        %v2312 = vld [vmem:[#allocation3 + $0x20] sm:$0x3]
        %2313 = vst [vmem:[#allocation5 + $0x48] sm:$0xff] %v2309
        %2314 = vst [vmem:[#allocation5 + $0x50] sm:$0xf] %v2310
        %2315 = vst [vmem:[#allocation5 + $0x54] sm:$0x33] %v2311
        %2316 = vst [vmem:[#allocation5 + $0x5c] sm:$0x3] %v2312
        %v2317 = vld [vmem:[#allocation3 + $0x4] sm:$0xff]
        %v2318 = vld [vmem:[#allocation3 + $0xc] sm:$0xff]
        %v2319 = vld [vmem:[#allocation3 + $0x18] sm:$0x33]
        %v2320 = vld [vmem:[#allocation3 + $0x20] sm:$0x33]
        %v2325 = vrot.slane %v2317, 6
        %v2326 = vrot.slane %v2318, 6
        %v2327 = vrot.slane %v2325, 4
        %v2328 = vrot.slane %v2319, 6
        %v2329 = vsel %vm2198, %v2327, %v2328
        %v2330 = vrot.slane %v2326, 4
        %v2331 = vrot.slane %v2320, 6
        %v2332 = vsel %vm2198, %v2330, %v2331
        %2333 = vrot.lane.b32.xlu0 %v2325, 127
        %v2334 = vpop.permute.xlu0 %2333
        %2335 = vrot.lane.b32.xlu0 %v2326, 127
        %v2336 = vpop.permute.xlu0 %2335
        %2337 = vrot.lane.b32.xlu0 %v2329, 127
        %v2338 = vpop.permute.xlu0 %2337
        %2339 = vrot.lane.b32.xlu0 %v2332, 127
        %v2340 = vpop.permute.xlu0 %2339
        %v2341 = vrot.slane %v2334, 4
        %v2342 = vrot.slane %v2336, 4
        %v2343 = vrot.slane %v2338, 4
        %v2344 = vrot.slane %v2340, 4
        %v2345 = vsel %vm671, %v2341, %v2342
        %v2346 = vsel %vm1066, %v2334, %v2345
        %v2347 = vsel %vm1066, %v2336, %v2342
        %v2348 = vsel %vm671, %v2343, %v2344
        %v2349 = vsel %vm1066, %v2338, %v2348
        %v2350 = vsel %vm1066, %v2340, %v2344
        %2355 = vst [vmem:[#allocation5 + $0x54] sm:$0xcc] %v2346
        %2356 = vst [vmem:[#allocation5 + $0x5c] sm:$0xc] %v2347
        %2357 = vst [vmem:[#allocation5 + $0x60] sm:$0xff] %v2349
        %2358 = vst [vmem:[#allocation5 + $0x68] sm:$0xf] %v2350
        %v2359 = vld [vmem:[#allocation3 + $0x4] sm:$0xff]
        %v2360 = vld [vmem:[#allocation3 + $0xc] sm:$0xff]
        %v2361 = vld [vmem:[#allocation3 + $0x18] sm:$0x33]
        %v2362 = vld [vmem:[#allocation3 + $0x20] sm:$0x33]
        %2367 = vrot.lane.b32.xlu0 %v2359, 105
        %v2368 = vpop.permute.xlu0 %2367
        %2369 = vrot.lane.b32.xlu0 %v2360, 105
        %v2370 = vpop.permute.xlu0 %2369
        %2371 = vrot.lane.b32.xlu0 %v2361, 105
        %v2372 = vpop.permute.xlu0 %2371
        %2373 = vrot.lane.b32.xlu0 %v2362, 105
        %v2374 = vpop.permute.xlu0 %2373
        %v2375 = vrot.slane %v2368, 4
        %v2376 = vrot.slane %v2370, 4
        %v2377 = vrot.slane %v2372, 4
        %v2378 = vrot.slane %v2374, 4
        %v2379 = vsel %vm671, %v2375, %v2376
        %v2380 = vsel %vm1159, %v2368, %v2379
        %v2381 = vsel %vm1159, %v2370, %v2376
        %v2382 = vsel %vm671, %v2377, %v2378
        %v2383 = vsel %vm1159, %v2372, %v2382
        %v2384 = vsel %vm1159, %v2374, %v2378
        %2389 = vst [vmem:[#allocation5 + $0x6c] sm:$0xff] %v2380
        %2390 = vst [vmem:[#allocation5 + $0x74] sm:$0xf] %v2381
        %2391 = vst [vmem:[#allocation5 + $0x78] sm:$0x33] %v2383
        %2392 = vst [vmem:[#allocation5 + $0x80] sm:$0x3] %v2384
        %v2393 = vld [vmem:[#allocation3 + $0x4] sm:$0xff]
        %v2394 = vld [vmem:[#allocation3 + $0xc] sm:$0xff]
        %v2395 = vld [vmem:[#allocation3 + $0x18] sm:$0x33]
        %v2396 = vld [vmem:[#allocation3 + $0x20] sm:$0x33]
        %v2401 = vrot.slane %v2393, 6
        %v2402 = vrot.slane %v2394, 6
        %v2403 = vrot.slane %v2401, 4
        %v2404 = vrot.slane %v2395, 6
        %v2405 = vsel %vm2198, %v2403, %v2404
        %v2406 = vrot.slane %v2402, 4
        %v2407 = vrot.slane %v2396, 6
        %v2408 = vsel %vm2198, %v2406, %v2407
        %2409 = vrot.lane.b32.xlu0 %v2401, 104
        %v2410 = vpop.permute.xlu0 %2409
        %2411 = vrot.lane.b32.xlu0 %v2402, 104
        %v2412 = vpop.permute.xlu0 %2411
        %2413 = vrot.lane.b32.xlu0 %v2405, 104
        %v2414 = vpop.permute.xlu0 %2413
        %2415 = vrot.lane.b32.xlu0 %v2408, 104
        %v2416 = vpop.permute.xlu0 %2415
        %v2417 = vrot.slane %v2410, 4
        %v2418 = vrot.slane %v2412, 4
        %v2419 = vrot.slane %v2414, 4
        %v2420 = vrot.slane %v2416, 4
        %v2421 = vsel %vm671, %v2417, %v2418
        %v2422 = vsel %vm1190, %v2410, %v2421
        %v2423 = vsel %vm1190, %v2412, %v2418
        %v2424 = vsel %vm671, %v2419, %v2420
        %v2425 = vsel %vm1190, %v2414, %v2424
        %v2426 = vsel %vm1190, %v2416, %v2420
        %2431 = vst [vmem:[#allocation5 + $0x78] sm:$0xcc] %v2422
        %2432 = vst [vmem:[#allocation5 + $0x80] sm:$0xc] %v2423
        %2433 = vst [vmem:[#allocation5 + $0x84] sm:$0xff] %v2425
        %2434 = vst [vmem:[#allocation5 + $0x8c] sm:$0xf] %v2426
        %v2435 = vld [vmem:[#allocation3 + $0x4] sm:$0xff]
        %v2436 = vld [vmem:[#allocation3 + $0xc] sm:$0xff]
        %v2437 = vld [vmem:[#allocation3 + $0x18] sm:$0x33]
        %v2438 = vld [vmem:[#allocation3 + $0x20] sm:$0x33]
        %2443 = vrot.lane.b32.xlu0 %v2435, 103
        %v2444 = vpop.permute.xlu0 %2443
        %2445 = vrot.lane.b32.xlu0 %v2436, 103
        %v2446 = vpop.permute.xlu0 %2445
        %2447 = vrot.lane.b32.xlu0 %v2437, 103
        %v2448 = vpop.permute.xlu0 %2447
        %2449 = vrot.lane.b32.xlu0 %v2438, 103
        %v2450 = vpop.permute.xlu0 %2449
        %v2451 = vrot.slane %v2444, 4
        %v2452 = vrot.slane %v2446, 4
        %v2453 = vrot.slane %v2448, 4
        %v2454 = vrot.slane %v2450, 4
        %v2455 = vsel %vm671, %v2451, %v2452
        %v2456 = vsel %vm1221, %v2444, %v2455
        %v2457 = vsel %vm1221, %v2446, %v2452
        %v2458 = vsel %vm671, %v2453, %v2454
        %v2459 = vsel %vm1221, %v2448, %v2458
        %v2460 = vsel %vm1221, %v2450, %v2454
        %2465 = vst [vmem:[#allocation5 + $0x90] sm:$0xff] %v2456
        %2466 = vst [vmem:[#allocation5 + $0x98] sm:$0xf] %v2457
        %2467 = vst [vmem:[#allocation5 + $0x9c] sm:$0x33] %v2459
        %2468 = vst [vmem:[#allocation5 + $0xa4] sm:$0x3] %v2460
        %v2469 = vld [vmem:[#allocation10] sm:$0xf]
        %v2470 = vld [vmem:[#allocation10 + $0x4] sm:$0x3]
        %v2471 = vld [vmem:[#allocation5] sm:$0xff]
        %v2472 = vld [vmem:[#allocation5 + $0x8] sm:$0xf]
        %v2473 = vld [vmem:[#allocation5 + $0xc] sm:$0xff]
        %v2474 = vld [vmem:[#allocation5 + $0x14] sm:$0xf]
        %v2475 = vld [vmem:[#allocation5 + $0x18] sm:$0xff]
        %v2476 = vld [vmem:[#allocation5 + $0x20] sm:$0xf]
        %v2477 = vld [vmem:[#allocation5 + $0x24] sm:$0xff]
        %v2478 = vld [vmem:[#allocation5 + $0x2c] sm:$0xf]
        %v2479 = vld [vmem:[#allocation5 + $0x30] sm:$0xff]
        %v2480 = vld [vmem:[#allocation5 + $0x38] sm:$0xf]
        %v2481 = vld [vmem:[#allocation5 + $0x3c] sm:$0xff]
        %v2482 = vld [vmem:[#allocation5 + $0x44] sm:$0xf]
        %v2483 = vld [vmem:[#allocation5 + $0x48] sm:$0xff]
        %v2484 = vld [vmem:[#allocation5 + $0x50] sm:$0xf]
        %v2485 = vld [vmem:[#allocation5 + $0x54] sm:$0xff]
        %v2486 = vld [vmem:[#allocation5 + $0x5c] sm:$0xf]
        %v2487 = vld [vmem:[#allocation5 + $0x60] sm:$0xff]
        %v2488 = vld [vmem:[#allocation5 + $0x68] sm:$0xf]
        %v2489 = vld [vmem:[#allocation5 + $0x6c] sm:$0xff]
        %v2490 = vld [vmem:[#allocation5 + $0x74] sm:$0xf]
        %v2491 = vld [vmem:[#allocation5 + $0x78] sm:$0xff]
        %v2492 = vld [vmem:[#allocation5 + $0x80] sm:$0xf]
        %v2493 = vld [vmem:[#allocation5 + $0x84] sm:$0xff]
        %v2494 = vld [vmem:[#allocation5 + $0x8c] sm:$0xf]
        %v2495 = vld [vmem:[#allocation5 + $0x90] sm:$0xff]
        %v2496 = vld [vmem:[#allocation5 + $0x98] sm:$0xf]
        %v2497 = vld [vmem:[#allocation5 + $0x9c] sm:$0x33]
        %v2498 = vld [vmem:[#allocation5 + $0xa4] sm:$0x3]
        %v2499 = vld [vmem:[%s6] sm:$0xff]
        %v2500 = vld [vmem:[%s6 + $0x8] sm:$0xf]
        %2502 = vset.pattern.permute.xlu0 0
        %2503 = vperm.xlu0 %2502, %v2499
        %v2504 = vpop.permute.xlu0 %2503
        %2507 = vset.pattern.permute.xlu0 0
        %2508 = vperm.xlu0 %2507, %v2500
        %v2509 = vpop.permute.xlu0 %2508
        %v2513 = vunpack.c.l.b16 %v2469
        %v2514 = vunpack.c.l.b16 %v2470
        %v2515 = vpack.c.b16 %v2514, %v2513
        %v2544 = vunpack.c.l.b16 %v2471
        %v2545 = vunpack.c.h.b16 %v2471
        %v2546 = vunpack.c.l.b16 %v2472
        %v2547 = vunpack.c.l.b16 %v2473
        %v2548 = vunpack.c.h.b16 %v2473
        %v2549 = vunpack.c.l.b16 %v2474
        %v2550 = vunpack.c.l.b16 %v2475
        %v2551 = vunpack.c.h.b16 %v2475
        %v2552 = vunpack.c.l.b16 %v2476
        %v2553 = vunpack.c.l.b16 %v2477
        %v2554 = vunpack.c.h.b16 %v2477
        %v2555 = vunpack.c.l.b16 %v2478
        %v2556 = vunpack.c.l.b16 %v2479
        %v2557 = vunpack.c.h.b16 %v2479
        %v2558 = vunpack.c.l.b16 %v2480
        %v2559 = vunpack.c.l.b16 %v2481
        %v2560 = vunpack.c.h.b16 %v2481
        %v2561 = vunpack.c.l.b16 %v2482
        %v2562 = vunpack.c.l.b16 %v2483
        %v2563 = vunpack.c.h.b16 %v2483
        %v2564 = vunpack.c.l.b16 %v2484
        %v2565 = vunpack.c.l.b16 %v2485
        %v2566 = vunpack.c.h.b16 %v2485
        %v2567 = vunpack.c.l.b16 %v2486
        %v2568 = vunpack.c.l.b16 %v2487
        %v2569 = vunpack.c.h.b16 %v2487
        %v2570 = vunpack.c.l.b16 %v2488
        %v2571 = vunpack.c.l.b16 %v2489
        %v2572 = vunpack.c.h.b16 %v2489
        %v2573 = vunpack.c.l.b16 %v2490
        %v2574 = vunpack.c.l.b16 %v2491
        %v2575 = vunpack.c.h.b16 %v2491
        %v2576 = vunpack.c.l.b16 %v2492
        %v2577 = vunpack.c.l.b16 %v2493
        %v2578 = vunpack.c.h.b16 %v2493
        %v2579 = vunpack.c.l.b16 %v2494
        %v2580 = vunpack.c.l.b16 %v2495
        %v2581 = vunpack.c.h.b16 %v2495
        %v2582 = vunpack.c.l.b16 %v2496
        %v2583 = vunpack.c.l.b16 %v2497
        %v2584 = vunpack.c.h.b16 %v2497
        %v2585 = vunpack.c.l.b16 %v2498
        %v2586 = vpack.c.b16 %v2547, %v2544
        %v2587 = vpack.c.b16 %v2548, %v2545
        %v2588 = vpack.c.b16 %v2549, %v2546
        %v2589 = vpack.c.b16 %v2553, %v2550
        %v2590 = vpack.c.b16 %v2554, %v2551
        %v2591 = vpack.c.b16 %v2555, %v2552
        %v2592 = vpack.c.b16 %v2559, %v2556
        %v2593 = vpack.c.b16 %v2560, %v2557
        %v2594 = vpack.c.b16 %v2561, %v2558
        %v2595 = vpack.c.b16 %v2565, %v2562
        %v2596 = vpack.c.b16 %v2566, %v2563
        %v2597 = vpack.c.b16 %v2567, %v2564
        %v2598 = vpack.c.b16 %v2571, %v2568
        %v2599 = vpack.c.b16 %v2572, %v2569
        %v2600 = vpack.c.b16 %v2573, %v2570
        %v2601 = vpack.c.b16 %v2577, %v2574
        %v2602 = vpack.c.b16 %v2578, %v2575
        %v2603 = vpack.c.b16 %v2579, %v2576
        %v2604 = vpack.c.b16 %v2583, %v2580
        %v2605 = vpack.c.b16 %v2584, %v2581
        %v2606 = vpack.c.b16 %v2585, %v2582
        %vm2625 = vcmask 883712
        %v2627 = vsel %vm2625, %v2515, 0
        %vm2629 = vcmask 1045504
        %v2631 = vsel %vm2629, %v2604, 0
        %v2634 = vsel %vm2629, %v2605, 0
        %v2637 = vsel %vm2629, %v2606, 0
        %2639 = vmatprep.subr.bf16.mxu0 %v2587
        %2640 = vmatpush1.bf16.msra.mxu0 %v2586
        %2641 = vmatprep.subr.bf16.mxu0 %v2590
        %2642 = vmatpush1.bf16.msra.mxu0 %v2589
        %2643 = vmatprep.subr.bf16.mxu0 %v2593
        %2644 = vmatpush1.bf16.msra.mxu0 %v2592
        %2645 = vmatprep.subr.bf16.mxu0 %v2596
        %2646 = vmatpush1.bf16.msra.mxu0 %v2595
        %2647 = vmatprep.subr.bf16.mxu0 %v2599
        %2648 = vmatpush1.bf16.msra.mxu0 %v2598
        %2649 = vmatprep.subr.bf16.mxu0 %v2602
        %2650 = vmatpush1.bf16.msra.mxu0 %v2601
        %2651 = vmatprep.subr.bf16.mxu0 %v2634
        %2652 = vmatpush1.bf16.msra.mxu0 %v2631
        %2653 = vmatprep.subr.bf16.mxu0 0
        %2654 = vmatpush1.bf16.msra.mxu0 0
        %2655 = vmatprep.subr.bf16.mxu0 0
        %2656 = vmatpush1.bf16.msra.mxu0 0
        %2657 = vmatprep.subr.bf16.mxu0 0
        %2658 = vmatpush1.bf16.msra.mxu0 0
        %2659 = vmatprep.subr.bf16.mxu0 0
        %2660 = vmatpush1.bf16.msra.mxu0 0
        %2661 = vmatprep.subr.bf16.mxu0 0
        %2662 = vmatpush1.bf16.msra.mxu0 0
        %2663 = vmatprep.subr.bf16.mxu0 0
        %2664 = vmatpush1.bf16.msra.mxu0 0
        %2665 = vmatprep.subr.bf16.mxu0 0
        %2666 = vmatpush1.bf16.msra.mxu0 0
        %2667 = vmatprep.subr.bf16.mxu0 0
        %2668 = vmatpush1.bf16.msra.mxu0 0
        %2669 = vmatprep.subr.bf16.mxu0 0
        %2670 = vmatpush1.bf16.msra.mxu0 0
        %2671 = vmatprep.mubr.bf16.mxu0 0
        %2672 = vmatmul.mubr.bf16.gmra.mrb[0].mxu0 %v2627
        %v2673 = vpop.f32.mrb[0].mxu0
        %v2674 = vadd.f32 %v2504, %v2673
        %v2675 = vpop.f32.mrb[0].mxu0
        %v2676 = vadd.f32 %v2504, %v2675
        %v2677 = vpop.f32.mrb[0].mxu0
        %v2678 = vadd.f32 %v2509, %v2677
        %v2679 = vpop.f32.mrb[0].mxu0
        %v2680 = vadd.f32 %v2509, %v2679
        %2681 = vdwg.mxu0
        %2682 = vmatprep.subr.bf16.mxu0 0
        %2683 = vmatpush1.bf16.msra.mxu0 %v2588
        %2684 = vmatprep.subr.bf16.mxu0 0
        %2685 = vmatpush1.bf16.msra.mxu0 %v2591
        %2686 = vmatprep.subr.bf16.mxu0 0
        %2687 = vmatpush1.bf16.msra.mxu0 %v2594
        %2688 = vmatprep.subr.bf16.mxu0 0
        %2689 = vmatpush1.bf16.msra.mxu0 %v2597
        %2690 = vmatprep.subr.bf16.mxu0 0
        %2691 = vmatpush1.bf16.msra.mxu0 %v2600
        %2692 = vmatprep.subr.bf16.mxu0 0
        %2693 = vmatpush1.bf16.msra.mxu0 %v2603
        %2694 = vmatprep.subr.bf16.mxu0 0
        %2695 = vmatpush1.bf16.msra.mxu0 %v2637
        %2696 = vmatprep.subr.bf16.mxu0 0
        %2697 = vmatpush1.bf16.msra.mxu0 0
        %2698 = vmatprep.subr.bf16.mxu0 0
        %2699 = vmatpush1.bf16.msra.mxu0 0
        %2700 = vmatprep.subr.bf16.mxu0 0
        %2701 = vmatpush1.bf16.msra.mxu0 0
        %2702 = vmatprep.subr.bf16.mxu0 0
        %2703 = vmatpush1.bf16.msra.mxu0 0
        %2704 = vmatprep.subr.bf16.mxu0 0
        %2705 = vmatpush1.bf16.msra.mxu0 0
        %2706 = vmatprep.subr.bf16.mxu0 0
        %2707 = vmatpush1.bf16.msra.mxu0 0
        %2708 = vmatprep.subr.bf16.mxu0 0
        %2709 = vmatpush1.bf16.msra.mxu0 0
        %2710 = vmatprep.subr.bf16.mxu0 0
        %2711 = vmatpush1.bf16.msra.mxu0 0
        %2712 = vmatprep.subr.bf16.mxu0 0
        %2713 = vmatpush1.bf16.msra.mxu0 0
        %2714 = vmatprep.mubr.bf16.mxu0 0
        %2715 = vmatmul.mubr.bf16.gmra.mrb[0].mxu0 %v2627
        %v2716 = vpop.f32.mrb[0].mxu0
        %v2717 = vadd.f32 %v2504, %v2716
        %v2718 = vpop.f32.mrb[0].mxu0
        %v2719 = vpop.f32.mrb[0].mxu0
        %v2720 = vadd.f32 %v2509, %v2719
        %v2721 = vpop.f32.mrb[0].mxu0
        %2722 = vdwg.mxu0
        %vm2723 = vcmp.gt.f32.partialorder %v2674, 0.0
        %vm2724 = vcmp.gt.f32.partialorder %v2676, 0.0
        %vm2725 = vcmp.gt.f32.partialorder %v2717, 0.0
        %vm2726 = vcmp.gt.f32.partialorder %v2678, 0.0
        %vm2727 = vcmp.gt.f32.partialorder %v2680, 0.0
        %vm2728 = vcmp.gt.f32.partialorder %v2720, 0.0
        %vm2729 = vmand %vm1793, %vm2723
        %vm2730 = vmand %vm1794, %vm2724
        %vm2731 = vmand %vm1795, %vm2725
        %vm2732 = vmand %vm1793, %vm2726
        %vm2733 = vmand %vm1794, %vm2727
        %vm2734 = vmand %vm1795, %vm2728
        %v2735 = vsel %vm2729, %v2674, 0.0
        %v2736 = vsel %vm2730, %v2676, 0.0
        %v2737 = vsel %vm2731, %v2717, 0.0
        %v2738 = vsel %vm2732, %v2678, 0.0
        %v2739 = vsel %vm2733, %v2680, 0.0
        %v2740 = vsel %vm2734, %v2720, 0.0
        %v2741 = vpack.c.bf16 %v2738, %v2735
        %v2742 = vpack.c.bf16 %v2739, %v2736
        %v2743 = vpack.c.bf16 %v2740, %v2737
        %v2747 = vunpack.c.l.b16 %v2741
        %v2748 = vunpack.c.l.b16 %v2742
        %v2749 = vunpack.c.l.b16 %v2743
        %v2750 = vunpack.c.h.b16 %v2741
        %v2751 = vunpack.c.h.b16 %v2742
        %v2752 = vunpack.c.h.b16 %v2743
        %v2753 = vpack.c.b16 %v2748, %v2747
        %v2754 = vpack.c.b16 %v2749, %v2749
        %v2755 = vpack.c.b16 %v2751, %v2750
        %v2756 = vpack.c.b16 %v2752, %v2752
        %2761 = vst [vmem:[#allocation4 + $0x4] sm:$0xff] %v2753
        %2762 = vst [vmem:[#allocation4 + $0xc] sm:$0xf] %v2754
        %2763 = vst [vmem:[#allocation4 + $0x18] sm:$0x33] %v2755
        %2764 = vst [vmem:[#allocation4 + $0x20] sm:$0x3] %v2756
        %v2765 = vld [vmem:[#allocation4] sm:$0xff]
        %v2766 = vld [vmem:[#allocation4 + $0x8] sm:$0xff]
        %v2767 = vld [vmem:[#allocation4 + $0x14] sm:$0x33]
        %v2768 = vld [vmem:[#allocation4 + $0x1c] sm:$0x33]
        %2773 = vrot.lane.b32.xlu0 %v2765, 25
        %v2774 = vpop.permute.xlu0 %2773
        %2775 = vrot.lane.b32.xlu0 %v2766, 25
        %v2776 = vpop.permute.xlu0 %2775
        %2777 = vrot.lane.b32.xlu0 %v2767, 25
        %v2778 = vpop.permute.xlu0 %2777
        %2779 = vrot.lane.b32.xlu0 %v2768, 25
        %v2780 = vpop.permute.xlu0 %2779
        %v2781 = vrot.slane %v2774, 4
        %v2782 = vrot.slane %v2776, 4
        %v2783 = vrot.slane %v2778, 4
        %v2784 = vrot.slane %v2780, 4
        %v2785 = vsel %vm671, %v2781, %v2782
        %v2786 = vsel %vm859, %v2774, %v2785
        %v2787 = vsel %vm859, %v2776, %v2782
        %v2788 = vsel %vm671, %v2783, %v2784
        %v2789 = vsel %vm859, %v2778, %v2788
        %v2790 = vsel %vm859, %v2780, %v2784
        %2795 = vst [vmem:[#allocation5] sm:$0xff] %v2786
        %2796 = vst [vmem:[#allocation5 + $0x8] sm:$0xf] %v2787
        %2797 = vst [vmem:[#allocation5 + $0xc] sm:$0x33] %v2789
        %2798 = vst [vmem:[#allocation5 + $0x14] sm:$0x3] %v2790
        %v2799 = vld [vmem:[#allocation4] sm:$0xff]
        %v2800 = vld [vmem:[#allocation4 + $0x8] sm:$0xff]
        %v2801 = vld [vmem:[#allocation4 + $0x14] sm:$0x33]
        %v2802 = vld [vmem:[#allocation4 + $0x1c] sm:$0x33]
        %v2807 = vrot.slane %v2799, 6
        %v2808 = vrot.slane %v2800, 6
        %v2809 = vrot.slane %v2807, 4
        %v2810 = vrot.slane %v2801, 6
        %v2811 = vsel %vm2198, %v2809, %v2810
        %v2812 = vrot.slane %v2808, 4
        %v2813 = vrot.slane %v2802, 6
        %v2814 = vsel %vm2198, %v2812, %v2813
        %2815 = vrot.lane.b32.xlu0 %v2807, 24
        %v2816 = vpop.permute.xlu0 %2815
        %2817 = vrot.lane.b32.xlu0 %v2808, 24
        %v2818 = vpop.permute.xlu0 %2817
        %2819 = vrot.lane.b32.xlu0 %v2811, 24
        %v2820 = vpop.permute.xlu0 %2819
        %2821 = vrot.lane.b32.xlu0 %v2814, 24
        %v2822 = vpop.permute.xlu0 %2821
        %v2823 = vrot.slane %v2816, 4
        %v2824 = vrot.slane %v2818, 4
        %v2825 = vrot.slane %v2820, 4
        %v2826 = vrot.slane %v2822, 4
        %v2827 = vsel %vm671, %v2823, %v2824
        %v2828 = vsel %vm890, %v2816, %v2827
        %v2829 = vsel %vm890, %v2818, %v2824
        %v2830 = vsel %vm671, %v2825, %v2826
        %v2831 = vsel %vm890, %v2820, %v2830
        %v2832 = vsel %vm890, %v2822, %v2826
        %2837 = vst [vmem:[#allocation5 + $0xc] sm:$0xcc] %v2828
        %2838 = vst [vmem:[#allocation5 + $0x14] sm:$0xc] %v2829
        %2839 = vst [vmem:[#allocation5 + $0x18] sm:$0xff] %v2831
        %2840 = vst [vmem:[#allocation5 + $0x20] sm:$0xf] %v2832
        %v2841 = vld [vmem:[#allocation4] sm:$0xff]
        %v2842 = vld [vmem:[#allocation4 + $0x8] sm:$0xff]
        %v2843 = vld [vmem:[#allocation4 + $0x14] sm:$0x33]
        %v2844 = vld [vmem:[#allocation4 + $0x1c] sm:$0x33]
        %2849 = vrot.lane.b32.xlu0 %v2841, 23
        %v2850 = vpop.permute.xlu0 %2849
        %2851 = vrot.lane.b32.xlu0 %v2842, 23
        %v2852 = vpop.permute.xlu0 %2851
        %2853 = vrot.lane.b32.xlu0 %v2843, 23
        %v2854 = vpop.permute.xlu0 %2853
        %2855 = vrot.lane.b32.xlu0 %v2844, 23
        %v2856 = vpop.permute.xlu0 %2855
        %v2857 = vrot.slane %v2850, 4
        %v2858 = vrot.slane %v2852, 4
        %v2859 = vrot.slane %v2854, 4
        %v2860 = vrot.slane %v2856, 4
        %v2861 = vsel %vm671, %v2857, %v2858
        %v2862 = vsel %vm921, %v2850, %v2861
        %v2863 = vsel %vm921, %v2852, %v2858
        %v2864 = vsel %vm671, %v2859, %v2860
        %v2865 = vsel %vm921, %v2854, %v2864
        %v2866 = vsel %vm921, %v2856, %v2860
        %2871 = vst [vmem:[#allocation5 + $0x24] sm:$0xff] %v2862
        %2872 = vst [vmem:[#allocation5 + $0x2c] sm:$0xf] %v2863
        %2873 = vst [vmem:[#allocation5 + $0x30] sm:$0x33] %v2865
        %2874 = vst [vmem:[#allocation5 + $0x38] sm:$0x3] %v2866
        %v2875 = vld [vmem:[#allocation4] sm:$0xff]
        %v2876 = vld [vmem:[#allocation4 + $0x8] sm:$0xff]
        %v2877 = vld [vmem:[#allocation4 + $0x14] sm:$0x33]
        %v2878 = vld [vmem:[#allocation4 + $0x1c] sm:$0x33]
        %v2883 = vrot.slane %v2875, 6
        %v2884 = vrot.slane %v2876, 6
        %v2885 = vrot.slane %v2883, 4
        %v2886 = vrot.slane %v2877, 6
        %v2887 = vsel %vm2198, %v2885, %v2886
        %v2888 = vrot.slane %v2884, 4
        %v2889 = vrot.slane %v2878, 6
        %v2890 = vsel %vm2198, %v2888, %v2889
        %2891 = vrot.lane.b32.xlu0 %v2883, 1
        %v2892 = vpop.permute.xlu0 %2891
        %2893 = vrot.lane.b32.xlu0 %v2884, 1
        %v2894 = vpop.permute.xlu0 %2893
        %2895 = vrot.lane.b32.xlu0 %v2887, 1
        %v2896 = vpop.permute.xlu0 %2895
        %2897 = vrot.lane.b32.xlu0 %v2890, 1
        %v2898 = vpop.permute.xlu0 %2897
        %v2899 = vrot.slane %v2892, 4
        %v2900 = vrot.slane %v2894, 4
        %v2901 = vrot.slane %v2896, 4
        %v2902 = vrot.slane %v2898, 4
        %v2903 = vsel %vm671, %v2899, %v2900
        %v2904 = vsel %vm1014, %v2892, %v2903
        %v2905 = vsel %vm1014, %v2894, %v2900
        %v2906 = vsel %vm671, %v2901, %v2902
        %v2907 = vsel %vm1014, %v2896, %v2906
        %v2908 = vsel %vm1014, %v2898, %v2902
        %2913 = vst [vmem:[#allocation5 + $0x30] sm:$0xcc] %v2904
        %2914 = vst [vmem:[#allocation5 + $0x38] sm:$0xc] %v2905
        %2915 = vst [vmem:[#allocation5 + $0x3c] sm:$0xff] %v2907
        %2916 = vst [vmem:[#allocation5 + $0x44] sm:$0xf] %v2908
        %v2917 = vld [vmem:[#allocation4 + $0x4] sm:$0xff]
        %v2918 = vld [vmem:[#allocation4 + $0xc] sm:$0xf]
        %v2919 = vld [vmem:[#allocation4 + $0x18] sm:$0x33]
        %v2920 = vld [vmem:[#allocation4 + $0x20] sm:$0x3]
        %2921 = vst [vmem:[#allocation5 + $0x48] sm:$0xff] %v2917
        %2922 = vst [vmem:[#allocation5 + $0x50] sm:$0xf] %v2918
        %2923 = vst [vmem:[#allocation5 + $0x54] sm:$0x33] %v2919
        %2924 = vst [vmem:[#allocation5 + $0x5c] sm:$0x3] %v2920
        %v2925 = vld [vmem:[#allocation4 + $0x4] sm:$0xff]
        %v2926 = vld [vmem:[#allocation4 + $0xc] sm:$0xff]
        %v2927 = vld [vmem:[#allocation4 + $0x18] sm:$0x33]
        %v2928 = vld [vmem:[#allocation4 + $0x20] sm:$0x33]
        %v2933 = vrot.slane %v2925, 6
        %v2934 = vrot.slane %v2926, 6
        %v2935 = vrot.slane %v2933, 4
        %v2936 = vrot.slane %v2927, 6
        %v2937 = vsel %vm2198, %v2935, %v2936
        %v2938 = vrot.slane %v2934, 4
        %v2939 = vrot.slane %v2928, 6
        %v2940 = vsel %vm2198, %v2938, %v2939
        %2941 = vrot.lane.b32.xlu0 %v2933, 127
        %v2942 = vpop.permute.xlu0 %2941
        %2943 = vrot.lane.b32.xlu0 %v2934, 127
        %v2944 = vpop.permute.xlu0 %2943
        %2945 = vrot.lane.b32.xlu0 %v2937, 127
        %v2946 = vpop.permute.xlu0 %2945
        %2947 = vrot.lane.b32.xlu0 %v2940, 127
        %v2948 = vpop.permute.xlu0 %2947
        %v2949 = vrot.slane %v2942, 4
        %v2950 = vrot.slane %v2944, 4
        %v2951 = vrot.slane %v2946, 4
        %v2952 = vrot.slane %v2948, 4
        %v2953 = vsel %vm671, %v2949, %v2950
        %v2954 = vsel %vm1066, %v2942, %v2953
        %v2955 = vsel %vm1066, %v2944, %v2950
        %v2956 = vsel %vm671, %v2951, %v2952
        %v2957 = vsel %vm1066, %v2946, %v2956
        %v2958 = vsel %vm1066, %v2948, %v2952
        %2963 = vst [vmem:[#allocation5 + $0x54] sm:$0xcc] %v2954
        %2964 = vst [vmem:[#allocation5 + $0x5c] sm:$0xc] %v2955
        %2965 = vst [vmem:[#allocation5 + $0x60] sm:$0xff] %v2957
        %2966 = vst [vmem:[#allocation5 + $0x68] sm:$0xf] %v2958
        %v2967 = vld [vmem:[#allocation4 + $0x4] sm:$0xff]
        %v2968 = vld [vmem:[#allocation4 + $0xc] sm:$0xff]
        %v2969 = vld [vmem:[#allocation4 + $0x18] sm:$0x33]
        %v2970 = vld [vmem:[#allocation4 + $0x20] sm:$0x33]
        %2975 = vrot.lane.b32.xlu0 %v2967, 105
        %v2976 = vpop.permute.xlu0 %2975
        %2977 = vrot.lane.b32.xlu0 %v2968, 105
        %v2978 = vpop.permute.xlu0 %2977
        %2979 = vrot.lane.b32.xlu0 %v2969, 105
        %v2980 = vpop.permute.xlu0 %2979
        %2981 = vrot.lane.b32.xlu0 %v2970, 105
        %v2982 = vpop.permute.xlu0 %2981
        %v2983 = vrot.slane %v2976, 4
        %v2984 = vrot.slane %v2978, 4
        %v2985 = vrot.slane %v2980, 4
        %v2986 = vrot.slane %v2982, 4
        %v2987 = vsel %vm671, %v2983, %v2984
        %v2988 = vsel %vm1159, %v2976, %v2987
        %v2989 = vsel %vm1159, %v2978, %v2984
        %v2990 = vsel %vm671, %v2985, %v2986
        %v2991 = vsel %vm1159, %v2980, %v2990
        %v2992 = vsel %vm1159, %v2982, %v2986
        %2997 = vst [vmem:[#allocation5 + $0x6c] sm:$0xff] %v2988
        %2998 = vst [vmem:[#allocation5 + $0x74] sm:$0xf] %v2989
        %2999 = vst [vmem:[#allocation5 + $0x78] sm:$0x33] %v2991
        %3000 = vst [vmem:[#allocation5 + $0x80] sm:$0x3] %v2992
        %v3001 = vld [vmem:[#allocation4 + $0x4] sm:$0xff]
        %v3002 = vld [vmem:[#allocation4 + $0xc] sm:$0xff]
        %v3003 = vld [vmem:[#allocation4 + $0x18] sm:$0x33]
        %v3004 = vld [vmem:[#allocation4 + $0x20] sm:$0x33]
        %v3009 = vrot.slane %v3001, 6
        %v3010 = vrot.slane %v3002, 6
        %v3011 = vrot.slane %v3009, 4
        %v3012 = vrot.slane %v3003, 6
        %v3013 = vsel %vm2198, %v3011, %v3012
        %v3014 = vrot.slane %v3010, 4
        %v3015 = vrot.slane %v3004, 6
        %v3016 = vsel %vm2198, %v3014, %v3015
        %3017 = vrot.lane.b32.xlu0 %v3009, 104
        %v3018 = vpop.permute.xlu0 %3017
        %3019 = vrot.lane.b32.xlu0 %v3010, 104
        %v3020 = vpop.permute.xlu0 %3019
        %3021 = vrot.lane.b32.xlu0 %v3013, 104
        %v3022 = vpop.permute.xlu0 %3021
        %3023 = vrot.lane.b32.xlu0 %v3016, 104
        %v3024 = vpop.permute.xlu0 %3023
        %v3025 = vrot.slane %v3018, 4
        %v3026 = vrot.slane %v3020, 4
        %v3027 = vrot.slane %v3022, 4
        %v3028 = vrot.slane %v3024, 4
        %v3029 = vsel %vm671, %v3025, %v3026
        %v3030 = vsel %vm1190, %v3018, %v3029
        %v3031 = vsel %vm1190, %v3020, %v3026
        %v3032 = vsel %vm671, %v3027, %v3028
        %v3033 = vsel %vm1190, %v3022, %v3032
        %v3034 = vsel %vm1190, %v3024, %v3028
        %3039 = vst [vmem:[#allocation5 + $0x78] sm:$0xcc] %v3030
        %3040 = vst [vmem:[#allocation5 + $0x80] sm:$0xc] %v3031
        %3041 = vst [vmem:[#allocation5 + $0x84] sm:$0xff] %v3033
        %3042 = vst [vmem:[#allocation5 + $0x8c] sm:$0xf] %v3034
        %v3043 = vld [vmem:[#allocation4 + $0x4] sm:$0xff]
        %v3044 = vld [vmem:[#allocation4 + $0xc] sm:$0xff]
        %v3045 = vld [vmem:[#allocation4 + $0x18] sm:$0x33]
        %v3046 = vld [vmem:[#allocation4 + $0x20] sm:$0x33]
        %3051 = vrot.lane.b32.xlu0 %v3043, 103
        %v3052 = vpop.permute.xlu0 %3051
        %3053 = vrot.lane.b32.xlu0 %v3044, 103
        %v3054 = vpop.permute.xlu0 %3053
        %3055 = vrot.lane.b32.xlu0 %v3045, 103
        %v3056 = vpop.permute.xlu0 %3055
        %3057 = vrot.lane.b32.xlu0 %v3046, 103
        %v3058 = vpop.permute.xlu0 %3057
        %v3059 = vrot.slane %v3052, 4
        %v3060 = vrot.slane %v3054, 4
        %v3061 = vrot.slane %v3056, 4
        %v3062 = vrot.slane %v3058, 4
        %v3063 = vsel %vm671, %v3059, %v3060
        %v3064 = vsel %vm1221, %v3052, %v3063
        %v3065 = vsel %vm1221, %v3054, %v3060
        %v3066 = vsel %vm671, %v3061, %v3062
        %v3067 = vsel %vm1221, %v3056, %v3066
        %v3068 = vsel %vm1221, %v3058, %v3062
        %3073 = vst [vmem:[#allocation5 + $0x90] sm:$0xff] %v3064
        %3074 = vst [vmem:[#allocation5 + $0x98] sm:$0xf] %v3065
        %3075 = vst [vmem:[#allocation5 + $0x9c] sm:$0x33] %v3067
        %3076 = vst [vmem:[#allocation5 + $0xa4] sm:$0x3] %v3068
        %v3077 = vld [vmem:[#allocation11] sm:$0xf]
        %v3078 = vld [vmem:[#allocation11 + $0x4] sm:$0x3]
        %v3079 = vld [vmem:[#allocation5] sm:$0xff]
        %v3080 = vld [vmem:[#allocation5 + $0x8] sm:$0xf]
        %v3081 = vld [vmem:[#allocation5 + $0xc] sm:$0xff]
        %v3082 = vld [vmem:[#allocation5 + $0x14] sm:$0xf]
        %v3083 = vld [vmem:[#allocation5 + $0x18] sm:$0xff]
        %v3084 = vld [vmem:[#allocation5 + $0x20] sm:$0xf]
        %v3085 = vld [vmem:[#allocation5 + $0x24] sm:$0xff]
        %v3086 = vld [vmem:[#allocation5 + $0x2c] sm:$0xf]
        %v3087 = vld [vmem:[#allocation5 + $0x30] sm:$0xff]
        %v3088 = vld [vmem:[#allocation5 + $0x38] sm:$0xf]
        %v3089 = vld [vmem:[#allocation5 + $0x3c] sm:$0xff]
        %v3090 = vld [vmem:[#allocation5 + $0x44] sm:$0xf]
        %v3091 = vld [vmem:[#allocation5 + $0x48] sm:$0xff]
        %v3092 = vld [vmem:[#allocation5 + $0x50] sm:$0xf]
        %v3093 = vld [vmem:[#allocation5 + $0x54] sm:$0xff]
        %v3094 = vld [vmem:[#allocation5 + $0x5c] sm:$0xf]
        %v3095 = vld [vmem:[#allocation5 + $0x60] sm:$0xff]
        %v3096 = vld [vmem:[#allocation5 + $0x68] sm:$0xf]
        %v3097 = vld [vmem:[#allocation5 + $0x6c] sm:$0xff]
        %v3098 = vld [vmem:[#allocation5 + $0x74] sm:$0xf]
        %v3099 = vld [vmem:[#allocation5 + $0x78] sm:$0xff]
        %v3100 = vld [vmem:[#allocation5 + $0x80] sm:$0xf]
        %v3101 = vld [vmem:[#allocation5 + $0x84] sm:$0xff]
        %v3102 = vld [vmem:[#allocation5 + $0x8c] sm:$0xf]
        %v3103 = vld [vmem:[#allocation5 + $0x90] sm:$0xff]
        %v3104 = vld [vmem:[#allocation5 + $0x98] sm:$0xf]
        %v3105 = vld [vmem:[#allocation5 + $0x9c] sm:$0x33]
        %v3106 = vld [vmem:[#allocation5 + $0xa4] sm:$0x3]
        %v3107 = vld [vmem:[%s8] sm:$0xff]
        %v3108 = vld [vmem:[%s8 + $0x8] sm:$0xf]
        %3110 = vset.pattern.permute.xlu0 0
        %3111 = vperm.xlu0 %3110, %v3107
        %v3112 = vpop.permute.xlu0 %3111
        %3115 = vset.pattern.permute.xlu0 0
        %3116 = vperm.xlu0 %3115, %v3108
        %v3117 = vpop.permute.xlu0 %3116
        %v3121 = vunpack.c.l.b16 %v3077
        %v3122 = vunpack.c.l.b16 %v3078
        %v3123 = vpack.c.b16 %v3122, %v3121
        %v3152 = vunpack.c.l.b16 %v3079
        %v3153 = vunpack.c.h.b16 %v3079
        %v3154 = vunpack.c.l.b16 %v3080
        %v3155 = vunpack.c.l.b16 %v3081
        %v3156 = vunpack.c.h.b16 %v3081
        %v3157 = vunpack.c.l.b16 %v3082
        %v3158 = vunpack.c.l.b16 %v3083
        %v3159 = vunpack.c.h.b16 %v3083
        %v3160 = vunpack.c.l.b16 %v3084
        %v3161 = vunpack.c.l.b16 %v3085
        %v3162 = vunpack.c.h.b16 %v3085
        %v3163 = vunpack.c.l.b16 %v3086
        %v3164 = vunpack.c.l.b16 %v3087
        %v3165 = vunpack.c.h.b16 %v3087
        %v3166 = vunpack.c.l.b16 %v3088
        %v3167 = vunpack.c.l.b16 %v3089
        %v3168 = vunpack.c.h.b16 %v3089
        %v3169 = vunpack.c.l.b16 %v3090
        %v3170 = vunpack.c.l.b16 %v3091
        %v3171 = vunpack.c.h.b16 %v3091
        %v3172 = vunpack.c.l.b16 %v3092
        %v3173 = vunpack.c.l.b16 %v3093
        %v3174 = vunpack.c.h.b16 %v3093
        %v3175 = vunpack.c.l.b16 %v3094
        %v3176 = vunpack.c.l.b16 %v3095
        %v3177 = vunpack.c.h.b16 %v3095
        %v3178 = vunpack.c.l.b16 %v3096
        %v3179 = vunpack.c.l.b16 %v3097
        %v3180 = vunpack.c.h.b16 %v3097
        %v3181 = vunpack.c.l.b16 %v3098
        %v3182 = vunpack.c.l.b16 %v3099
        %v3183 = vunpack.c.h.b16 %v3099
        %v3184 = vunpack.c.l.b16 %v3100
        %v3185 = vunpack.c.l.b16 %v3101
        %v3186 = vunpack.c.h.b16 %v3101
        %v3187 = vunpack.c.l.b16 %v3102
        %v3188 = vunpack.c.l.b16 %v3103
        %v3189 = vunpack.c.h.b16 %v3103
        %v3190 = vunpack.c.l.b16 %v3104
        %v3191 = vunpack.c.l.b16 %v3105
        %v3192 = vunpack.c.h.b16 %v3105
        %v3193 = vunpack.c.l.b16 %v3106
        %v3194 = vpack.c.b16 %v3155, %v3152
        %v3195 = vpack.c.b16 %v3156, %v3153
        %v3196 = vpack.c.b16 %v3157, %v3154
        %v3197 = vpack.c.b16 %v3161, %v3158
        %v3198 = vpack.c.b16 %v3162, %v3159
        %v3199 = vpack.c.b16 %v3163, %v3160
        %v3200 = vpack.c.b16 %v3167, %v3164
        %v3201 = vpack.c.b16 %v3168, %v3165
        %v3202 = vpack.c.b16 %v3169, %v3166
        %v3203 = vpack.c.b16 %v3173, %v3170
        %v3204 = vpack.c.b16 %v3174, %v3171
        %v3205 = vpack.c.b16 %v3175, %v3172
        %v3206 = vpack.c.b16 %v3179, %v3176
        %v3207 = vpack.c.b16 %v3180, %v3177
        %v3208 = vpack.c.b16 %v3181, %v3178
        %v3209 = vpack.c.b16 %v3185, %v3182
        %v3210 = vpack.c.b16 %v3186, %v3183
        %v3211 = vpack.c.b16 %v3187, %v3184
        %v3212 = vpack.c.b16 %v3191, %v3188
        %v3213 = vpack.c.b16 %v3192, %v3189
        %v3214 = vpack.c.b16 %v3193, %v3190
        %v3234 = vsel %vm2625, %v3123, 0
        %v3237 = vsel %vm2629, %v3212, 0
        %v3240 = vsel %vm2629, %v3213, 0
        %v3243 = vsel %vm2629, %v3214, 0
        %3245 = vmatprep.subr.bf16.mxu0 %v3195
        %3246 = vmatpush1.bf16.msra.mxu0 %v3194
        %3247 = vmatprep.subr.bf16.mxu0 %v3198
        %3248 = vmatpush1.bf16.msra.mxu0 %v3197
        %3249 = vmatprep.subr.bf16.mxu0 %v3201
        %3250 = vmatpush1.bf16.msra.mxu0 %v3200
        %3251 = vmatprep.subr.bf16.mxu0 %v3204
        %3252 = vmatpush1.bf16.msra.mxu0 %v3203
        %3253 = vmatprep.subr.bf16.mxu0 %v3207
        %3254 = vmatpush1.bf16.msra.mxu0 %v3206
        %3255 = vmatprep.subr.bf16.mxu0 %v3210
        %3256 = vmatpush1.bf16.msra.mxu0 %v3209
        %3257 = vmatprep.subr.bf16.mxu0 %v3240
        %3258 = vmatpush1.bf16.msra.mxu0 %v3237
        %3259 = vmatprep.subr.bf16.mxu0 0
        %3260 = vmatpush1.bf16.msra.mxu0 0
        %3261 = vmatprep.subr.bf16.mxu0 0
        %3262 = vmatpush1.bf16.msra.mxu0 0
        %3263 = vmatprep.subr.bf16.mxu0 0
        %3264 = vmatpush1.bf16.msra.mxu0 0
        %3265 = vmatprep.subr.bf16.mxu0 0
        %3266 = vmatpush1.bf16.msra.mxu0 0
        %3267 = vmatprep.subr.bf16.mxu0 0
        %3268 = vmatpush1.bf16.msra.mxu0 0
        %3269 = vmatprep.subr.bf16.mxu0 0
        %3270 = vmatpush1.bf16.msra.mxu0 0
        %3271 = vmatprep.subr.bf16.mxu0 0
        %3272 = vmatpush1.bf16.msra.mxu0 0
        %3273 = vmatprep.subr.bf16.mxu0 0
        %3274 = vmatpush1.bf16.msra.mxu0 0
        %3275 = vmatprep.subr.bf16.mxu0 0
        %3276 = vmatpush1.bf16.msra.mxu0 0
        %3277 = vmatprep.mubr.bf16.mxu0 0
        %3278 = vmatmul.mubr.bf16.gmra.mrb[0].mxu0 %v3234
        %v3279 = vpop.f32.mrb[0].mxu0
        %v3280 = vadd.f32 %v3112, %v3279
        %v3281 = vpop.f32.mrb[0].mxu0
        %v3282 = vadd.f32 %v3112, %v3281
        %v3283 = vpop.f32.mrb[0].mxu0
        %v3284 = vadd.f32 %v3117, %v3283
        %v3285 = vpop.f32.mrb[0].mxu0
        %v3286 = vadd.f32 %v3117, %v3285
        %3287 = vdwg.mxu0
        %3288 = vmatprep.subr.bf16.mxu0 0
        %3289 = vmatpush1.bf16.msra.mxu0 %v3196
        %3290 = vmatprep.subr.bf16.mxu0 0
        %3291 = vmatpush1.bf16.msra.mxu0 %v3199
        %3292 = vmatprep.subr.bf16.mxu0 0
        %3293 = vmatpush1.bf16.msra.mxu0 %v3202
        %3294 = vmatprep.subr.bf16.mxu0 0
        %3295 = vmatpush1.bf16.msra.mxu0 %v3205
        %3296 = vmatprep.subr.bf16.mxu0 0
        %3297 = vmatpush1.bf16.msra.mxu0 %v3208
        %3298 = vmatprep.subr.bf16.mxu0 0
        %3299 = vmatpush1.bf16.msra.mxu0 %v3211
        %3300 = vmatprep.subr.bf16.mxu0 0
        %3301 = vmatpush1.bf16.msra.mxu0 %v3243
        %3302 = vmatprep.subr.bf16.mxu0 0
        %3303 = vmatpush1.bf16.msra.mxu0 0
        %3304 = vmatprep.subr.bf16.mxu0 0
        %3305 = vmatpush1.bf16.msra.mxu0 0
        %3306 = vmatprep.subr.bf16.mxu0 0
        %3307 = vmatpush1.bf16.msra.mxu0 0
        %3308 = vmatprep.subr.bf16.mxu0 0
        %3309 = vmatpush1.bf16.msra.mxu0 0
        %3310 = vmatprep.subr.bf16.mxu0 0
        %3311 = vmatpush1.bf16.msra.mxu0 0
        %3312 = vmatprep.subr.bf16.mxu0 0
        %3313 = vmatpush1.bf16.msra.mxu0 0
        %3314 = vmatprep.subr.bf16.mxu0 0
        %3315 = vmatpush1.bf16.msra.mxu0 0
        %3316 = vmatprep.subr.bf16.mxu0 0
        %3317 = vmatpush1.bf16.msra.mxu0 0
        %3318 = vmatprep.subr.bf16.mxu0 0
        %3319 = vmatpush1.bf16.msra.mxu0 0
        %3320 = vmatprep.mubr.bf16.mxu0 0
        %3321 = vmatmul.mubr.bf16.gmra.mrb[0].mxu0 %v3234
        %v3322 = vpop.f32.mrb[0].mxu0
        %v3323 = vadd.f32 %v3112, %v3322
        %v3324 = vpop.f32.mrb[0].mxu0
        %v3325 = vpop.f32.mrb[0].mxu0
        %v3326 = vadd.f32 %v3117, %v3325
        %v3327 = vpop.f32.mrb[0].mxu0
        %3328 = vdwg.mxu0
        %vm3329 = vcmp.gt.f32.partialorder %v3280, 0.0
        %vm3330 = vcmp.gt.f32.partialorder %v3282, 0.0
        %vm3331 = vcmp.gt.f32.partialorder %v3323, 0.0
        %vm3332 = vcmp.gt.f32.partialorder %v3284, 0.0
        %vm3333 = vcmp.gt.f32.partialorder %v3286, 0.0
        %vm3334 = vcmp.gt.f32.partialorder %v3326, 0.0
        %vm3335 = vmand %vm1793, %vm3329
        %vm3336 = vmand %vm1794, %vm3330
        %vm3337 = vmand %vm1795, %vm3331
        %vm3338 = vmand %vm1793, %vm3332
        %vm3339 = vmand %vm1794, %vm3333
        %vm3340 = vmand %vm1795, %vm3334
        %v3341 = vsel %vm3335, %v3280, 0.0
        %v3342 = vsel %vm3336, %v3282, 0.0
        %v3343 = vsel %vm3337, %v3323, 0.0
        %v3344 = vsel %vm3338, %v3284, 0.0
        %v3345 = vsel %vm3339, %v3286, 0.0
        %v3346 = vsel %vm3340, %v3326, 0.0
        %v3347 = vpack.c.bf16 %v3344, %v3341
        %v3348 = vpack.c.bf16 %v3345, %v3342
        %v3349 = vpack.c.bf16 %v3346, %v3343
        %v3353 = vunpack.c.l.b16 %v3347
        %v3354 = vunpack.c.l.b16 %v3348
        %v3355 = vunpack.c.l.b16 %v3349
        %v3356 = vunpack.c.h.b16 %v3347
        %v3357 = vunpack.c.h.b16 %v3348
        %v3358 = vunpack.c.h.b16 %v3349
        %v3359 = vpack.c.b16 %v3354, %v3353
        %v3360 = vpack.c.b16 %v3355, %v3355
        %v3361 = vpack.c.b16 %v3357, %v3356
        %v3362 = vpack.c.b16 %v3358, %v3358
        %3367 = vst [vmem:[#allocation3 + $0x4] sm:$0xff] %v3359
        %3368 = vst [vmem:[#allocation3 + $0xc] sm:$0xf] %v3360
        %3369 = vst [vmem:[#allocation3 + $0x18] sm:$0x33] %v3361
        %3370 = vst [vmem:[#allocation3 + $0x20] sm:$0x3] %v3362
        %v3371 = vld [vmem:[#allocation3] sm:$0xff]
        %v3372 = vld [vmem:[#allocation3 + $0x8] sm:$0xff]
        %v3373 = vld [vmem:[#allocation3 + $0x14] sm:$0x33]
        %v3374 = vld [vmem:[#allocation3 + $0x1c] sm:$0x33]
        %3379 = vrot.lane.b32.xlu0 %v3371, 25
        %v3380 = vpop.permute.xlu0 %3379
        %3381 = vrot.lane.b32.xlu0 %v3372, 25
        %v3382 = vpop.permute.xlu0 %3381
        %3383 = vrot.lane.b32.xlu0 %v3373, 25
        %v3384 = vpop.permute.xlu0 %3383
        %3385 = vrot.lane.b32.xlu0 %v3374, 25
        %v3386 = vpop.permute.xlu0 %3385
        %v3387 = vrot.slane %v3380, 4
        %v3388 = vrot.slane %v3382, 4
        %v3389 = vrot.slane %v3384, 4
        %v3390 = vrot.slane %v3386, 4
        %v3391 = vsel %vm671, %v3387, %v3388
        %v3392 = vsel %vm859, %v3380, %v3391
        %v3393 = vsel %vm859, %v3382, %v3388
        %v3394 = vsel %vm671, %v3389, %v3390
        %v3395 = vsel %vm859, %v3384, %v3394
        %v3396 = vsel %vm859, %v3386, %v3390
        %3401 = vst [vmem:[#allocation5] sm:$0xff] %v3392
        %3402 = vst [vmem:[#allocation5 + $0x8] sm:$0xf] %v3393
        %3403 = vst [vmem:[#allocation5 + $0xc] sm:$0x33] %v3395
        %3404 = vst [vmem:[#allocation5 + $0x14] sm:$0x3] %v3396
        %v3405 = vld [vmem:[#allocation3] sm:$0xff]
        %v3406 = vld [vmem:[#allocation3 + $0x8] sm:$0xff]
        %v3407 = vld [vmem:[#allocation3 + $0x14] sm:$0x33]
        %v3408 = vld [vmem:[#allocation3 + $0x1c] sm:$0x33]
        %v3413 = vrot.slane %v3405, 6
        %v3414 = vrot.slane %v3406, 6
        %v3415 = vrot.slane %v3413, 4
        %v3416 = vrot.slane %v3407, 6
        %v3417 = vsel %vm2198, %v3415, %v3416
        %v3418 = vrot.slane %v3414, 4
        %v3419 = vrot.slane %v3408, 6
        %v3420 = vsel %vm2198, %v3418, %v3419
        %3421 = vrot.lane.b32.xlu0 %v3413, 24
        %v3422 = vpop.permute.xlu0 %3421
        %3423 = vrot.lane.b32.xlu0 %v3414, 24
        %v3424 = vpop.permute.xlu0 %3423
        %3425 = vrot.lane.b32.xlu0 %v3417, 24
        %v3426 = vpop.permute.xlu0 %3425
        %3427 = vrot.lane.b32.xlu0 %v3420, 24
        %v3428 = vpop.permute.xlu0 %3427
        %v3429 = vrot.slane %v3422, 4
        %v3430 = vrot.slane %v3424, 4
        %v3431 = vrot.slane %v3426, 4
        %v3432 = vrot.slane %v3428, 4
        %v3433 = vsel %vm671, %v3429, %v3430
        %v3434 = vsel %vm890, %v3422, %v3433
        %v3435 = vsel %vm890, %v3424, %v3430
        %v3436 = vsel %vm671, %v3431, %v3432
        %v3437 = vsel %vm890, %v3426, %v3436
        %v3438 = vsel %vm890, %v3428, %v3432
        %3443 = vst [vmem:[#allocation5 + $0xc] sm:$0xcc] %v3434
        %3444 = vst [vmem:[#allocation5 + $0x14] sm:$0xc] %v3435
        %3445 = vst [vmem:[#allocation5 + $0x18] sm:$0xff] %v3437
        %3446 = vst [vmem:[#allocation5 + $0x20] sm:$0xf] %v3438
        %v3447 = vld [vmem:[#allocation3] sm:$0xff]
        %v3448 = vld [vmem:[#allocation3 + $0x8] sm:$0xff]
        %v3449 = vld [vmem:[#allocation3 + $0x14] sm:$0x33]
        %v3450 = vld [vmem:[#allocation3 + $0x1c] sm:$0x33]
        %3455 = vrot.lane.b32.xlu0 %v3447, 23
        %v3456 = vpop.permute.xlu0 %3455
        %3457 = vrot.lane.b32.xlu0 %v3448, 23
        %v3458 = vpop.permute.xlu0 %3457
        %3459 = vrot.lane.b32.xlu0 %v3449, 23
        %v3460 = vpop.permute.xlu0 %3459
        %3461 = vrot.lane.b32.xlu0 %v3450, 23
        %v3462 = vpop.permute.xlu0 %3461
        %v3463 = vrot.slane %v3456, 4
        %v3464 = vrot.slane %v3458, 4
        %v3465 = vrot.slane %v3460, 4
        %v3466 = vrot.slane %v3462, 4
        %v3467 = vsel %vm671, %v3463, %v3464
        %v3468 = vsel %vm921, %v3456, %v3467
        %v3469 = vsel %vm921, %v3458, %v3464
        %v3470 = vsel %vm671, %v3465, %v3466
        %v3471 = vsel %vm921, %v3460, %v3470
        %v3472 = vsel %vm921, %v3462, %v3466
        %3477 = vst [vmem:[#allocation5 + $0x24] sm:$0xff] %v3468
        %3478 = vst [vmem:[#allocation5 + $0x2c] sm:$0xf] %v3469
        %3479 = vst [vmem:[#allocation5 + $0x30] sm:$0x33] %v3471
        %3480 = vst [vmem:[#allocation5 + $0x38] sm:$0x3] %v3472
        %v3481 = vld [vmem:[#allocation3] sm:$0xff]
        %v3482 = vld [vmem:[#allocation3 + $0x8] sm:$0xff]
        %v3483 = vld [vmem:[#allocation3 + $0x14] sm:$0x33]
        %v3484 = vld [vmem:[#allocation3 + $0x1c] sm:$0x33]
        %v3489 = vrot.slane %v3481, 6
        %v3490 = vrot.slane %v3482, 6
        %v3491 = vrot.slane %v3489, 4
        %v3492 = vrot.slane %v3483, 6
        %v3493 = vsel %vm2198, %v3491, %v3492
        %v3494 = vrot.slane %v3490, 4
        %v3495 = vrot.slane %v3484, 6
        %v3496 = vsel %vm2198, %v3494, %v3495
        %3497 = vrot.lane.b32.xlu0 %v3489, 1
        %v3498 = vpop.permute.xlu0 %3497
        %3499 = vrot.lane.b32.xlu0 %v3490, 1
        %v3500 = vpop.permute.xlu0 %3499
        %3501 = vrot.lane.b32.xlu0 %v3493, 1
        %v3502 = vpop.permute.xlu0 %3501
        %3503 = vrot.lane.b32.xlu0 %v3496, 1
        %v3504 = vpop.permute.xlu0 %3503
        %v3505 = vrot.slane %v3498, 4
        %v3506 = vrot.slane %v3500, 4
        %v3507 = vrot.slane %v3502, 4
        %v3508 = vrot.slane %v3504, 4
        %v3509 = vsel %vm671, %v3505, %v3506
        %v3510 = vsel %vm1014, %v3498, %v3509
        %v3511 = vsel %vm1014, %v3500, %v3506
        %v3512 = vsel %vm671, %v3507, %v3508
        %v3513 = vsel %vm1014, %v3502, %v3512
        %v3514 = vsel %vm1014, %v3504, %v3508
        %3519 = vst [vmem:[#allocation5 + $0x30] sm:$0xcc] %v3510
        %3520 = vst [vmem:[#allocation5 + $0x38] sm:$0xc] %v3511
        %3521 = vst [vmem:[#allocation5 + $0x3c] sm:$0xff] %v3513
        %3522 = vst [vmem:[#allocation5 + $0x44] sm:$0xf] %v3514
        %v3523 = vld [vmem:[#allocation3 + $0x4] sm:$0xff]
        %v3524 = vld [vmem:[#allocation3 + $0xc] sm:$0xf]
        %v3525 = vld [vmem:[#allocation3 + $0x18] sm:$0x33]
        %v3526 = vld [vmem:[#allocation3 + $0x20] sm:$0x3]
        %3527 = vst [vmem:[#allocation5 + $0x48] sm:$0xff] %v3523
        %3528 = vst [vmem:[#allocation5 + $0x50] sm:$0xf] %v3524
        %3529 = vst [vmem:[#allocation5 + $0x54] sm:$0x33] %v3525
        %3530 = vst [vmem:[#allocation5 + $0x5c] sm:$0x3] %v3526
        %v3531 = vld [vmem:[#allocation3 + $0x4] sm:$0xff]
        %v3532 = vld [vmem:[#allocation3 + $0xc] sm:$0xff]
        %v3533 = vld [vmem:[#allocation3 + $0x18] sm:$0x33]
        %v3534 = vld [vmem:[#allocation3 + $0x20] sm:$0x33]
        %v3539 = vrot.slane %v3531, 6
        %v3540 = vrot.slane %v3532, 6
        %v3541 = vrot.slane %v3539, 4
        %v3542 = vrot.slane %v3533, 6
        %v3543 = vsel %vm2198, %v3541, %v3542
        %v3544 = vrot.slane %v3540, 4
        %v3545 = vrot.slane %v3534, 6
        %v3546 = vsel %vm2198, %v3544, %v3545
        %3547 = vrot.lane.b32.xlu0 %v3539, 127
        %v3548 = vpop.permute.xlu0 %3547
        %3549 = vrot.lane.b32.xlu0 %v3540, 127
        %v3550 = vpop.permute.xlu0 %3549
        %3551 = vrot.lane.b32.xlu0 %v3543, 127
        %v3552 = vpop.permute.xlu0 %3551
        %3553 = vrot.lane.b32.xlu0 %v3546, 127
        %v3554 = vpop.permute.xlu0 %3553
        %v3555 = vrot.slane %v3548, 4
        %v3556 = vrot.slane %v3550, 4
        %v3557 = vrot.slane %v3552, 4
        %v3558 = vrot.slane %v3554, 4
        %v3559 = vsel %vm671, %v3555, %v3556
        %v3560 = vsel %vm1066, %v3548, %v3559
        %v3561 = vsel %vm1066, %v3550, %v3556
        %v3562 = vsel %vm671, %v3557, %v3558
        %v3563 = vsel %vm1066, %v3552, %v3562
        %v3564 = vsel %vm1066, %v3554, %v3558
        %3569 = vst [vmem:[#allocation5 + $0x54] sm:$0xcc] %v3560
        %3570 = vst [vmem:[#allocation5 + $0x5c] sm:$0xc] %v3561
        %3571 = vst [vmem:[#allocation5 + $0x60] sm:$0xff] %v3563
        %3572 = vst [vmem:[#allocation5 + $0x68] sm:$0xf] %v3564
        %v3573 = vld [vmem:[#allocation3 + $0x4] sm:$0xff]
        %v3574 = vld [vmem:[#allocation3 + $0xc] sm:$0xff]
        %v3575 = vld [vmem:[#allocation3 + $0x18] sm:$0x33]
        %v3576 = vld [vmem:[#allocation3 + $0x20] sm:$0x33]
        %3581 = vrot.lane.b32.xlu0 %v3573, 105
        %v3582 = vpop.permute.xlu0 %3581
        %3583 = vrot.lane.b32.xlu0 %v3574, 105
        %v3584 = vpop.permute.xlu0 %3583
        %3585 = vrot.lane.b32.xlu0 %v3575, 105
        %v3586 = vpop.permute.xlu0 %3585
        %3587 = vrot.lane.b32.xlu0 %v3576, 105
        %v3588 = vpop.permute.xlu0 %3587
        %v3589 = vrot.slane %v3582, 4
        %v3590 = vrot.slane %v3584, 4
        %v3591 = vrot.slane %v3586, 4
        %v3592 = vrot.slane %v3588, 4
        %v3593 = vsel %vm671, %v3589, %v3590
        %v3594 = vsel %vm1159, %v3582, %v3593
        %v3595 = vsel %vm1159, %v3584, %v3590
        %v3596 = vsel %vm671, %v3591, %v3592
        %v3597 = vsel %vm1159, %v3586, %v3596
        %v3598 = vsel %vm1159, %v3588, %v3592
        %3603 = vst [vmem:[#allocation5 + $0x6c] sm:$0xff] %v3594
        %3604 = vst [vmem:[#allocation5 + $0x74] sm:$0xf] %v3595
        %3605 = vst [vmem:[#allocation5 + $0x78] sm:$0x33] %v3597
        %3606 = vst [vmem:[#allocation5 + $0x80] sm:$0x3] %v3598
        %v3607 = vld [vmem:[#allocation3 + $0x4] sm:$0xff]
        %v3608 = vld [vmem:[#allocation3 + $0xc] sm:$0xff]
        %v3609 = vld [vmem:[#allocation3 + $0x18] sm:$0x33]
        %v3610 = vld [vmem:[#allocation3 + $0x20] sm:$0x33]
        %v3615 = vrot.slane %v3607, 6
        %v3616 = vrot.slane %v3608, 6
        %v3617 = vrot.slane %v3615, 4
        %v3618 = vrot.slane %v3609, 6
        %v3619 = vsel %vm2198, %v3617, %v3618
        %v3620 = vrot.slane %v3616, 4
        %v3621 = vrot.slane %v3610, 6
        %v3622 = vsel %vm2198, %v3620, %v3621
        %3623 = vrot.lane.b32.xlu0 %v3615, 104
        %v3624 = vpop.permute.xlu0 %3623
        %3625 = vrot.lane.b32.xlu0 %v3616, 104
        %v3626 = vpop.permute.xlu0 %3625
        %3627 = vrot.lane.b32.xlu0 %v3619, 104
        %v3628 = vpop.permute.xlu0 %3627
        %3629 = vrot.lane.b32.xlu0 %v3622, 104
        %v3630 = vpop.permute.xlu0 %3629
        %v3631 = vrot.slane %v3624, 4
        %v3632 = vrot.slane %v3626, 4
        %v3633 = vrot.slane %v3628, 4
        %v3634 = vrot.slane %v3630, 4
        %v3635 = vsel %vm671, %v3631, %v3632
        %v3636 = vsel %vm1190, %v3624, %v3635
        %v3637 = vsel %vm1190, %v3626, %v3632
        %v3638 = vsel %vm671, %v3633, %v3634
        %v3639 = vsel %vm1190, %v3628, %v3638
        %v3640 = vsel %vm1190, %v3630, %v3634
        %3645 = vst [vmem:[#allocation5 + $0x78] sm:$0xcc] %v3636
        %3646 = vst [vmem:[#allocation5 + $0x80] sm:$0xc] %v3637
        %3647 = vst [vmem:[#allocation5 + $0x84] sm:$0xff] %v3639
        %3648 = vst [vmem:[#allocation5 + $0x8c] sm:$0xf] %v3640
        %v3649 = vld [vmem:[#allocation3 + $0x4] sm:$0xff]
        %v3650 = vld [vmem:[#allocation3 + $0xc] sm:$0xff]
        %v3651 = vld [vmem:[#allocation3 + $0x18] sm:$0x33]
        %v3652 = vld [vmem:[#allocation3 + $0x20] sm:$0x33]
        %3657 = vrot.lane.b32.xlu0 %v3649, 103
        %v3658 = vpop.permute.xlu0 %3657
        %3659 = vrot.lane.b32.xlu0 %v3650, 103
        %v3660 = vpop.permute.xlu0 %3659
        %3661 = vrot.lane.b32.xlu0 %v3651, 103
        %v3662 = vpop.permute.xlu0 %3661
        %3663 = vrot.lane.b32.xlu0 %v3652, 103
        %v3664 = vpop.permute.xlu0 %3663
        %v3665 = vrot.slane %v3658, 4
        %v3666 = vrot.slane %v3660, 4
        %v3667 = vrot.slane %v3662, 4
        %v3668 = vrot.slane %v3664, 4
        %v3669 = vsel %vm671, %v3665, %v3666
        %v3670 = vsel %vm1221, %v3658, %v3669
        %v3671 = vsel %vm1221, %v3660, %v3666
        %v3672 = vsel %vm671, %v3667, %v3668
        %v3673 = vsel %vm1221, %v3662, %v3672
        %v3674 = vsel %vm1221, %v3664, %v3668
        %3679 = vst [vmem:[#allocation5 + $0x90] sm:$0xff] %v3670
        %3680 = vst [vmem:[#allocation5 + $0x98] sm:$0xf] %v3671
        %3681 = vst [vmem:[#allocation5 + $0x9c] sm:$0x33] %v3673
        %3682 = vst [vmem:[#allocation5 + $0xa4] sm:$0x3] %v3674
        %v3683 = vld [vmem:[#allocation13] sm:$0xf]
        %v3684 = vld [vmem:[#allocation13 + $0x4] sm:$0x3]
        %v3685 = vld [vmem:[#allocation5] sm:$0xff]
        %v3686 = vld [vmem:[#allocation5 + $0x8] sm:$0xf]
        %v3687 = vld [vmem:[#allocation5 + $0xc] sm:$0xff]
        %v3688 = vld [vmem:[#allocation5 + $0x14] sm:$0xf]
        %v3689 = vld [vmem:[#allocation5 + $0x18] sm:$0xff]
        %v3690 = vld [vmem:[#allocation5 + $0x20] sm:$0xf]
        %v3691 = vld [vmem:[#allocation5 + $0x24] sm:$0xff]
        %v3692 = vld [vmem:[#allocation5 + $0x2c] sm:$0xf]
        %v3693 = vld [vmem:[#allocation5 + $0x30] sm:$0xff]
        %v3694 = vld [vmem:[#allocation5 + $0x38] sm:$0xf]
        %v3695 = vld [vmem:[#allocation5 + $0x3c] sm:$0xff]
        %v3696 = vld [vmem:[#allocation5 + $0x44] sm:$0xf]
        %v3697 = vld [vmem:[#allocation5 + $0x48] sm:$0xff]
        %v3698 = vld [vmem:[#allocation5 + $0x50] sm:$0xf]
        %v3699 = vld [vmem:[#allocation5 + $0x54] sm:$0xff]
        %v3700 = vld [vmem:[#allocation5 + $0x5c] sm:$0xf]
        %v3701 = vld [vmem:[#allocation5 + $0x60] sm:$0xff]
        %v3702 = vld [vmem:[#allocation5 + $0x68] sm:$0xf]
        %v3703 = vld [vmem:[#allocation5 + $0x6c] sm:$0xff]
        %v3704 = vld [vmem:[#allocation5 + $0x74] sm:$0xf]
        %v3705 = vld [vmem:[#allocation5 + $0x78] sm:$0xff]
        %v3706 = vld [vmem:[#allocation5 + $0x80] sm:$0xf]
        %v3707 = vld [vmem:[#allocation5 + $0x84] sm:$0xff]
        %v3708 = vld [vmem:[#allocation5 + $0x8c] sm:$0xf]
        %v3709 = vld [vmem:[#allocation5 + $0x90] sm:$0xff]
        %v3710 = vld [vmem:[#allocation5 + $0x98] sm:$0xf]
        %v3711 = vld [vmem:[#allocation5 + $0x9c] sm:$0x33]
        %v3712 = vld [vmem:[#allocation5 + $0xa4] sm:$0x3]
        %v3713 = vld [vmem:[%s10] sm:$0xff]
        %v3714 = vld [vmem:[%s10 + $0x8] sm:$0xf]
        %3716 = vset.pattern.permute.xlu0 0
        %3717 = vperm.xlu0 %3716, %v3713
        %v3718 = vpop.permute.xlu0 %3717
        %3721 = vset.pattern.permute.xlu0 0
        %3722 = vperm.xlu0 %3721, %v3714
        %v3723 = vpop.permute.xlu0 %3722
        %v3727 = vunpack.c.l.b16 %v3683
        %v3728 = vunpack.c.l.b16 %v3684
        %v3729 = vpack.c.b16 %v3728, %v3727
        %v3758 = vunpack.c.l.b16 %v3685
        %v3759 = vunpack.c.h.b16 %v3685
        %v3760 = vunpack.c.l.b16 %v3686
        %v3761 = vunpack.c.l.b16 %v3687
        %v3762 = vunpack.c.h.b16 %v3687
        %v3763 = vunpack.c.l.b16 %v3688
        %v3764 = vunpack.c.l.b16 %v3689
        %v3765 = vunpack.c.h.b16 %v3689
        %v3766 = vunpack.c.l.b16 %v3690
        %v3767 = vunpack.c.l.b16 %v3691
        %v3768 = vunpack.c.h.b16 %v3691
        %v3769 = vunpack.c.l.b16 %v3692
        %v3770 = vunpack.c.l.b16 %v3693
        %v3771 = vunpack.c.h.b16 %v3693
        %v3772 = vunpack.c.l.b16 %v3694
        %v3773 = vunpack.c.l.b16 %v3695
        %v3774 = vunpack.c.h.b16 %v3695
        %v3775 = vunpack.c.l.b16 %v3696
        %v3776 = vunpack.c.l.b16 %v3697
        %v3777 = vunpack.c.h.b16 %v3697
        %v3778 = vunpack.c.l.b16 %v3698
        %v3779 = vunpack.c.l.b16 %v3699
        %v3780 = vunpack.c.h.b16 %v3699
        %v3781 = vunpack.c.l.b16 %v3700
        %v3782 = vunpack.c.l.b16 %v3701
        %v3783 = vunpack.c.h.b16 %v3701
        %v3784 = vunpack.c.l.b16 %v3702
        %v3785 = vunpack.c.l.b16 %v3703
        %v3786 = vunpack.c.h.b16 %v3703
        %v3787 = vunpack.c.l.b16 %v3704
        %v3788 = vunpack.c.l.b16 %v3705
        %v3789 = vunpack.c.h.b16 %v3705
        %v3790 = vunpack.c.l.b16 %v3706
        %v3791 = vunpack.c.l.b16 %v3707
        %v3792 = vunpack.c.h.b16 %v3707
        %v3793 = vunpack.c.l.b16 %v3708
        %v3794 = vunpack.c.l.b16 %v3709
        %v3795 = vunpack.c.h.b16 %v3709
        %v3796 = vunpack.c.l.b16 %v3710
        %v3797 = vunpack.c.l.b16 %v3711
        %v3798 = vunpack.c.h.b16 %v3711
        %v3799 = vunpack.c.l.b16 %v3712
        %v3800 = vpack.c.b16 %v3761, %v3758
        %v3801 = vpack.c.b16 %v3762, %v3759
        %v3802 = vpack.c.b16 %v3763, %v3760
        %v3803 = vpack.c.b16 %v3767, %v3764
        %v3804 = vpack.c.b16 %v3768, %v3765
        %v3805 = vpack.c.b16 %v3769, %v3766
        %v3806 = vpack.c.b16 %v3773, %v3770
        %v3807 = vpack.c.b16 %v3774, %v3771
        %v3808 = vpack.c.b16 %v3775, %v3772
        %v3809 = vpack.c.b16 %v3779, %v3776
        %v3810 = vpack.c.b16 %v3780, %v3777
        %v3811 = vpack.c.b16 %v3781, %v3778
        %v3812 = vpack.c.b16 %v3785, %v3782
        %v3813 = vpack.c.b16 %v3786, %v3783
        %v3814 = vpack.c.b16 %v3787, %v3784
        %v3815 = vpack.c.b16 %v3791, %v3788
        %v3816 = vpack.c.b16 %v3792, %v3789
        %v3817 = vpack.c.b16 %v3793, %v3790
        %v3818 = vpack.c.b16 %v3797, %v3794
        %v3819 = vpack.c.b16 %v3798, %v3795
        %v3820 = vpack.c.b16 %v3799, %v3796
        %v3840 = vsel %vm2625, %v3729, 0
        %v3843 = vsel %vm2629, %v3818, 0
        %v3846 = vsel %vm2629, %v3819, 0
        %v3849 = vsel %vm2629, %v3820, 0
        %3851 = vmatprep.subr.bf16.mxu0 %v3801
        %3852 = vmatpush1.bf16.msra.mxu0 %v3800
        %3853 = vmatprep.subr.bf16.mxu0 %v3804
        %3854 = vmatpush1.bf16.msra.mxu0 %v3803
        %3855 = vmatprep.subr.bf16.mxu0 %v3807
        %3856 = vmatpush1.bf16.msra.mxu0 %v3806
        %3857 = vmatprep.subr.bf16.mxu0 %v3810
        %3858 = vmatpush1.bf16.msra.mxu0 %v3809
        %3859 = vmatprep.subr.bf16.mxu0 %v3813
        %3860 = vmatpush1.bf16.msra.mxu0 %v3812
        %3861 = vmatprep.subr.bf16.mxu0 %v3816
        %3862 = vmatpush1.bf16.msra.mxu0 %v3815
        %3863 = vmatprep.subr.bf16.mxu0 %v3846
        %3864 = vmatpush1.bf16.msra.mxu0 %v3843
        %3865 = vmatprep.subr.bf16.mxu0 0
        %3866 = vmatpush1.bf16.msra.mxu0 0
        %3867 = vmatprep.subr.bf16.mxu0 0
        %3868 = vmatpush1.bf16.msra.mxu0 0
        %3869 = vmatprep.subr.bf16.mxu0 0
        %3870 = vmatpush1.bf16.msra.mxu0 0
        %3871 = vmatprep.subr.bf16.mxu0 0
        %3872 = vmatpush1.bf16.msra.mxu0 0
        %3873 = vmatprep.subr.bf16.mxu0 0
        %3874 = vmatpush1.bf16.msra.mxu0 0
        %3875 = vmatprep.subr.bf16.mxu0 0
        %3876 = vmatpush1.bf16.msra.mxu0 0
        %3877 = vmatprep.subr.bf16.mxu0 0
        %3878 = vmatpush1.bf16.msra.mxu0 0
        %3879 = vmatprep.subr.bf16.mxu0 0
        %3880 = vmatpush1.bf16.msra.mxu0 0
        %3881 = vmatprep.subr.bf16.mxu0 0
        %3882 = vmatpush1.bf16.msra.mxu0 0
        %3883 = vmatprep.mubr.bf16.mxu0 0
        %3884 = vmatmul.mubr.bf16.gmra.mrb[0].mxu0 %v3840
        %v3885 = vpop.f32.mrb[0].mxu0
        %v3886 = vadd.f32 %v3718, %v3885
        %v3887 = vpop.f32.mrb[0].mxu0
        %v3888 = vadd.f32 %v3718, %v3887
        %v3889 = vpop.f32.mrb[0].mxu0
        %v3890 = vadd.f32 %v3723, %v3889
        %v3891 = vpop.f32.mrb[0].mxu0
        %v3892 = vadd.f32 %v3723, %v3891
        %3893 = vdwg.mxu0
        %3894 = vmatprep.subr.bf16.mxu0 0
        %3895 = vmatpush1.bf16.msra.mxu0 %v3802
        %3896 = vmatprep.subr.bf16.mxu0 0
        %3897 = vmatpush1.bf16.msra.mxu0 %v3805
        %3898 = vmatprep.subr.bf16.mxu0 0
        %3899 = vmatpush1.bf16.msra.mxu0 %v3808
        %3900 = vmatprep.subr.bf16.mxu0 0
        %3901 = vmatpush1.bf16.msra.mxu0 %v3811
        %3902 = vmatprep.subr.bf16.mxu0 0
        %3903 = vmatpush1.bf16.msra.mxu0 %v3814
        %3904 = vmatprep.subr.bf16.mxu0 0
        %3905 = vmatpush1.bf16.msra.mxu0 %v3817
        %3906 = vmatprep.subr.bf16.mxu0 0
        %3907 = vmatpush1.bf16.msra.mxu0 %v3849
        %3908 = vmatprep.subr.bf16.mxu0 0
        %3909 = vmatpush1.bf16.msra.mxu0 0
        %3910 = vmatprep.subr.bf16.mxu0 0
        %3911 = vmatpush1.bf16.msra.mxu0 0
        %3912 = vmatprep.subr.bf16.mxu0 0
        %3913 = vmatpush1.bf16.msra.mxu0 0
        %3914 = vmatprep.subr.bf16.mxu0 0
        %3915 = vmatpush1.bf16.msra.mxu0 0
        %3916 = vmatprep.subr.bf16.mxu0 0
        %3917 = vmatpush1.bf16.msra.mxu0 0
        %3918 = vmatprep.subr.bf16.mxu0 0
        %3919 = vmatpush1.bf16.msra.mxu0 0
        %3920 = vmatprep.subr.bf16.mxu0 0
        %3921 = vmatpush1.bf16.msra.mxu0 0
        %3922 = vmatprep.subr.bf16.mxu0 0
        %3923 = vmatpush1.bf16.msra.mxu0 0
        %3924 = vmatprep.subr.bf16.mxu0 0
        %3925 = vmatpush1.bf16.msra.mxu0 0
        %3926 = vmatprep.mubr.bf16.mxu0 0
        %3927 = vmatmul.mubr.bf16.gmra.mrb[0].mxu0 %v3840
        %v3928 = vpop.f32.mrb[0].mxu0
        %v3929 = vadd.f32 %v3718, %v3928
        %v3930 = vpop.f32.mrb[0].mxu0
        %v3931 = vpop.f32.mrb[0].mxu0
        %v3932 = vadd.f32 %v3723, %v3931
        %v3933 = vpop.f32.mrb[0].mxu0
        %3934 = vdwg.mxu0
        %v3935 = vsel %vm1793, %v3886, 0.0
        %v3936 = vsel %vm1794, %v3888, 0.0
        %v3937 = vsel %vm1795, %v3929, 0.0
        %v3938 = vsel %vm1793, %v3890, 0.0
        %v3939 = vsel %vm1794, %v3892, 0.0
        %v3940 = vsel %vm1795, %v3932, 0.0
        %v3941 = vpack.c.bf16 %v3938, %v3935
        %v3942 = vpack.c.bf16 %v3939, %v3936
        %v3943 = vpack.c.bf16 %v3940, %v3937
        %v3947 = vunpack.c.l.b16 %v3941
        %v3948 = vunpack.c.l.b16 %v3942
        %v3949 = vunpack.c.l.b16 %v3943
        %v3950 = vunpack.c.h.b16 %v3941
        %v3951 = vunpack.c.h.b16 %v3942
        %v3952 = vunpack.c.h.b16 %v3943
        %v3953 = vpack.c.b16 %v3948, %v3947
        %v3954 = vpack.c.b16 %v3949, %v3949
        %v3955 = vpack.c.b16 %v3951, %v3950
        %v3956 = vpack.c.b16 %v3952, %v3952
        %3961 = vst [vmem:[#allocation4 + $0x4] sm:$0xff] %v3953
        %3962 = vst [vmem:[#allocation4 + $0xc] sm:$0xf] %v3954
        %3963 = vst [vmem:[#allocation4 + $0x18] sm:$0x33] %v3955
        %3964 = vst [vmem:[#allocation4 + $0x20] sm:$0x3] %v3956
        %v3965 = vld [vmem:[%s11] sm:$0xf]
        %v3966 = vld [vmem:[%s11 + $0x4] sm:$0xf]
        %v3967 = vld [vmem:[%s11 + $0x8] sm:$0xf]
        %v3968 = vld [vmem:[%s11 + $0xc] sm:$0xf]
        %v3969 = vld [vmem:[%s11 + $0x10] sm:$0xf]
        %v3970 = vld [vmem:[%s11 + $0x14] sm:$0xf]
        %v3971 = vld [vmem:[%s11 + $0x18] sm:$0xf]
        %v3972 = vld [vmem:[#allocation4 + $0x4] sm:$0xff]
        %v3973 = vld [vmem:[#allocation4 + $0xc] sm:$0xf]
        %v3974 = vld [vmem:[#allocation4 + $0x18] sm:$0x33]
        %v3975 = vld [vmem:[#allocation4 + $0x20] sm:$0x3]
        %v3976 = vld [vmem:[%s12] sm:$0xff]
        %v3977 = vld [vmem:[%s12 + $0x8] sm:$0xff]
        %v3978 = vld [vmem:[%s12 + $0x10] sm:$0xff]
        %v3979 = vld [vmem:[%s12 + $0x18] sm:$0xff]
        %v3980 = vld [vmem:[%s12 + $0x20] sm:$0xff]
        %v3981 = vld [vmem:[%s12 + $0x28] sm:$0xff]
        %v3982 = vld [vmem:[%s12 + $0x30] sm:$0xff]
        %3984 = vset.pattern.permute.xlu0 0
        %3985 = vperm.xlu0 %3984, %v3976
        %v3986 = vpop.permute.xlu0 %3985
        %3989 = vset.pattern.permute.xlu0 0
        %3990 = vperm.xlu0 %3989, %v3977
        %v3991 = vpop.permute.xlu0 %3990
        %3994 = vset.pattern.permute.xlu0 0
        %3995 = vperm.xlu0 %3994, %v3978
        %v3996 = vpop.permute.xlu0 %3995
        %3999 = vset.pattern.permute.xlu0 0
        %4000 = vperm.xlu0 %3999, %v3979
        %v4001 = vpop.permute.xlu0 %4000
        %4004 = vset.pattern.permute.xlu0 0
        %4005 = vperm.xlu0 %4004, %v3980
        %v4006 = vpop.permute.xlu0 %4005
        %4009 = vset.pattern.permute.xlu0 0
        %4010 = vperm.xlu0 %4009, %v3981
        %v4011 = vpop.permute.xlu0 %4010
        %4014 = vset.pattern.permute.xlu0 0
        %4015 = vperm.xlu0 %4014, %v3982
        %v4016 = vpop.permute.xlu0 %4015
        %v4025 = vunpack.c.l.b16 %v3965
        %v4026 = vunpack.c.l.b16 %v3966
        %v4027 = vunpack.c.l.b16 %v3967
        %v4028 = vunpack.c.l.b16 %v3968
        %v4029 = vunpack.c.l.b16 %v3969
        %v4030 = vunpack.c.l.b16 %v3970
        %v4031 = vunpack.c.l.b16 %v3971
        %v4032 = vpack.c.b16 %v4026, %v4025
        %v4033 = vpack.c.b16 %v4028, %v4027
        %v4034 = vpack.c.b16 %v4030, %v4029
        %v4035 = vpack.c.b16 %v4031, %v4031
        %v4040 = vunpack.c.l.b16 %v3972
        %v4041 = vunpack.c.h.b16 %v3972
        %v4042 = vunpack.c.l.b16 %v3973
        %v4043 = vunpack.c.l.b16 %v3974
        %v4044 = vunpack.c.h.b16 %v3974
        %v4045 = vunpack.c.l.b16 %v3975
        %v4046 = vpack.c.b16 %v4043, %v4040
        %v4047 = vpack.c.b16 %v4044, %v4041
        %v4048 = vpack.c.b16 %v4045, %v4042
        %vm4049 = vcmask 97280
        %v4051 = vsel %vm4049, %v4032, 0
        %v4054 = vsel %vm4049, %v4033, 0
        %v4057 = vsel %vm4049, %v4034, 0
        %v4060 = vsel %vm4049, %v4035, 0
        %v4063 = vsel %vm2629, %v4046, 0
        %v4066 = vsel %vm2629, %v4047, 0
        %v4069 = vsel %vm2629, %v4048, 0
        %4071 = vmatprep.subr.bf16.mxu0 %v4066
        %4072 = vmatpush1.bf16.msra.mxu0 %v4063
        %4073 = vmatprep.subr.bf16.mxu0 0
        %4074 = vmatpush1.bf16.msra.mxu0 0
        %4075 = vmatprep.subr.bf16.mxu0 0
        %4076 = vmatpush1.bf16.msra.mxu0 0
        %4077 = vmatprep.subr.bf16.mxu0 0
        %4078 = vmatpush1.bf16.msra.mxu0 0
        %4079 = vmatprep.subr.bf16.mxu0 0
        %4080 = vmatpush1.bf16.msra.mxu0 0
        %4081 = vmatprep.subr.bf16.mxu0 0
        %4082 = vmatpush1.bf16.msra.mxu0 0
        %4083 = vmatprep.subr.bf16.mxu0 0
        %4084 = vmatpush1.bf16.msra.mxu0 0
        %4085 = vmatprep.subr.bf16.mxu0 0
        %4086 = vmatpush1.bf16.msra.mxu0 0
        %4087 = vmatprep.subr.bf16.mxu0 0
        %4088 = vmatpush1.bf16.msra.mxu0 0
        %4089 = vmatprep.subr.bf16.mxu0 0
        %4090 = vmatpush1.bf16.msra.mxu0 0
        %4091 = vmatprep.subr.bf16.mxu0 0
        %4092 = vmatpush1.bf16.msra.mxu0 0
        %4093 = vmatprep.subr.bf16.mxu0 0
        %4094 = vmatpush1.bf16.msra.mxu0 0
        %4095 = vmatprep.subr.bf16.mxu0 0
        %4096 = vmatpush1.bf16.msra.mxu0 0
        %4097 = vmatprep.subr.bf16.mxu0 0
        %4098 = vmatpush1.bf16.msra.mxu0 0
        %4099 = vmatprep.subr.bf16.mxu0 0
        %4100 = vmatpush1.bf16.msra.mxu0 0
        %4101 = vmatprep.subr.bf16.mxu0 0
        %4102 = vmatpush1.bf16.msra.mxu0 0
        %4103 = vmatprep.mubr.bf16.mxu0 0
        %4104 = vmatmul.mubr.bf16.gmra.mrb[0].mxu0 %v4051
        %v4105 = vpop.f32.mrb[0].mxu0
        %v4106 = vadd.f32 %v3986, %v4105
        %v4107 = vpop.f32.mrb[0].mxu0
        %v4108 = vadd.f32 %v3986, %v4107
        %v4109 = vpop.f32.mrb[0].mxu0
        %v4110 = vadd.f32 %v3991, %v4109
        %v4111 = vpop.f32.mrb[0].mxu0
        %v4112 = vadd.f32 %v3991, %v4111
        %4113 = vmatprep.mubr.bf16.mxu0 0
        %4114 = vmatmul.mubr.bf16.gmra.mrb[0].mxu0 %v4054
        %v4115 = vpop.f32.mrb[0].mxu0
        %v4116 = vadd.f32 %v3996, %v4115
        %v4117 = vpop.f32.mrb[0].mxu0
        %v4118 = vadd.f32 %v3996, %v4117
        %v4119 = vpop.f32.mrb[0].mxu0
        %v4120 = vadd.f32 %v4001, %v4119
        %v4121 = vpop.f32.mrb[0].mxu0
        %v4122 = vadd.f32 %v4001, %v4121
        %4123 = vmatprep.mubr.bf16.mxu0 0
        %4124 = vmatmul.mubr.bf16.gmra.mrb[0].mxu0 %v4057
        %v4125 = vpop.f32.mrb[0].mxu0
        %v4126 = vadd.f32 %v4006, %v4125
        %v4127 = vpop.f32.mrb[0].mxu0
        %v4128 = vadd.f32 %v4006, %v4127
        %v4129 = vpop.f32.mrb[0].mxu0
        %v4130 = vadd.f32 %v4011, %v4129
        %v4131 = vpop.f32.mrb[0].mxu0
        %v4132 = vadd.f32 %v4011, %v4131
        %4133 = vmatprep.mubr.bf16.mxu0 0
        %4134 = vmatmul.mubr.bf16.gmra.mrb[0].mxu0 %v4060
        %v4135 = vpop.f32.mrb[0].mxu0
        %v4136 = vadd.f32 %v4016, %v4135
        %v4137 = vpop.f32.mrb[0].mxu0
        %v4138 = vadd.f32 %v4016, %v4137
        %v4139 = vpop.f32.mrb[0].mxu0
        %v4140 = vpop.f32.mrb[0].mxu0
        %4141 = vdwg.mxu0
        %4142 = vmatprep.subr.bf16.mxu0 0
        %4143 = vmatpush1.bf16.msra.mxu0 %v4069
        %4144 = vmatprep.subr.bf16.mxu0 0
        %4145 = vmatpush1.bf16.msra.mxu0 0
        %4146 = vmatprep.subr.bf16.mxu0 0
        %4147 = vmatpush1.bf16.msra.mxu0 0
        %4148 = vmatprep.subr.bf16.mxu0 0
        %4149 = vmatpush1.bf16.msra.mxu0 0
        %4150 = vmatprep.subr.bf16.mxu0 0
        %4151 = vmatpush1.bf16.msra.mxu0 0
        %4152 = vmatprep.subr.bf16.mxu0 0
        %4153 = vmatpush1.bf16.msra.mxu0 0
        %4154 = vmatprep.subr.bf16.mxu0 0
        %4155 = vmatpush1.bf16.msra.mxu0 0
        %4156 = vmatprep.subr.bf16.mxu0 0
        %4157 = vmatpush1.bf16.msra.mxu0 0
        %4158 = vmatprep.subr.bf16.mxu0 0
        %4159 = vmatpush1.bf16.msra.mxu0 0
        %4160 = vmatprep.subr.bf16.mxu0 0
        %4161 = vmatpush1.bf16.msra.mxu0 0
        %4162 = vmatprep.subr.bf16.mxu0 0
        %4163 = vmatpush1.bf16.msra.mxu0 0
        %4164 = vmatprep.subr.bf16.mxu0 0
        %4165 = vmatpush1.bf16.msra.mxu0 0
        %4166 = vmatprep.subr.bf16.mxu0 0
        %4167 = vmatpush1.bf16.msra.mxu0 0
        %4168 = vmatprep.subr.bf16.mxu0 0
        %4169 = vmatpush1.bf16.msra.mxu0 0
        %4170 = vmatprep.subr.bf16.mxu0 0
        %4171 = vmatpush1.bf16.msra.mxu0 0
        %4172 = vmatprep.subr.bf16.mxu0 0
        %4173 = vmatpush1.bf16.msra.mxu0 0
        %4174 = vmatprep.mubr.bf16.mxu0 0
        %4175 = vmatmul.mubr.bf16.gmra.mrb[0].mxu0 %v4051
        %v4176 = vpop.f32.mrb[0].mxu0
        %v4177 = vadd.f32 %v3986, %v4176
        %v4178 = vpop.f32.mrb[0].mxu0
        %v4179 = vpop.f32.mrb[0].mxu0
        %v4180 = vadd.f32 %v3991, %v4179
        %v4181 = vpop.f32.mrb[0].mxu0
        %4182 = vmatprep.mubr.bf16.mxu0 0
        %4183 = vmatmul.mubr.bf16.gmra.mrb[0].mxu0 %v4054
        %v4184 = vpop.f32.mrb[0].mxu0
        %v4185 = vadd.f32 %v3996, %v4184
        %v4186 = vpop.f32.mrb[0].mxu0
        %v4187 = vpop.f32.mrb[0].mxu0
        %v4188 = vadd.f32 %v4001, %v4187
        %v4189 = vpop.f32.mrb[0].mxu0
        %4190 = vmatprep.mubr.bf16.mxu0 0
        %4191 = vmatmul.mubr.bf16.gmra.mrb[0].mxu0 %v4057
        %v4192 = vpop.f32.mrb[0].mxu0
        %v4193 = vadd.f32 %v4006, %v4192
        %v4194 = vpop.f32.mrb[0].mxu0
        %v4195 = vpop.f32.mrb[0].mxu0
        %v4196 = vadd.f32 %v4011, %v4195
        %v4197 = vpop.f32.mrb[0].mxu0
        %4198 = vmatprep.mubr.bf16.mxu0 0
        %4199 = vmatmul.mubr.bf16.gmra.mrb[0].mxu0 %v4060
        %v4200 = vpop.f32.mrb[0].mxu0
        %v4201 = vadd.f32 %v4016, %v4200
        %v4202 = vpop.f32.mrb[0].mxu0
        %v4203 = vpop.f32.mrb[0].mxu0
        %v4204 = vpop.f32.mrb[0].mxu0
        %4205 = vdwg.mxu0
        %vm4206 = vcmp.gt.f32.partialorder %v4106, 0.0
        %vm4207 = vcmp.gt.f32.partialorder %v4108, 0.0
        %vm4208 = vcmp.gt.f32.partialorder %v4177, 0.0
        %vm4209 = vcmp.gt.f32.partialorder %v4110, 0.0
        %vm4210 = vcmp.gt.f32.partialorder %v4112, 0.0
        %vm4211 = vcmp.gt.f32.partialorder %v4180, 0.0
        %vm4212 = vcmp.gt.f32.partialorder %v4116, 0.0
        %vm4213 = vcmp.gt.f32.partialorder %v4118, 0.0
        %vm4214 = vcmp.gt.f32.partialorder %v4185, 0.0
        %vm4215 = vcmp.gt.f32.partialorder %v4120, 0.0
        %vm4216 = vcmp.gt.f32.partialorder %v4122, 0.0
        %vm4217 = vcmp.gt.f32.partialorder %v4188, 0.0
        %vm4218 = vcmp.gt.f32.partialorder %v4126, 0.0
        %vm4219 = vcmp.gt.f32.partialorder %v4128, 0.0
        %vm4220 = vcmp.gt.f32.partialorder %v4193, 0.0
        %vm4221 = vcmp.gt.f32.partialorder %v4130, 0.0
        %vm4222 = vcmp.gt.f32.partialorder %v4132, 0.0
        %vm4223 = vcmp.gt.f32.partialorder %v4196, 0.0
        %vm4224 = vcmp.gt.f32.partialorder %v4136, 0.0
        %vm4225 = vcmp.gt.f32.partialorder %v4138, 0.0
        %vm4226 = vcmp.gt.f32.partialorder %v4201, 0.0
        %vm4227 = vmand %vm1793, %vm4206
        %vm4228 = vmand %vm1794, %vm4207
        %vm4229 = vmand %vm1795, %vm4208
        %vm4230 = vmand %vm1793, %vm4209
        %vm4231 = vmand %vm1794, %vm4210
        %vm4232 = vmand %vm1795, %vm4211
        %vm4233 = vmand %vm1793, %vm4212
        %vm4234 = vmand %vm1794, %vm4213
        %vm4235 = vmand %vm1795, %vm4214
        %vm4236 = vmand %vm1793, %vm4215
        %vm4237 = vmand %vm1794, %vm4216
        %vm4238 = vmand %vm1795, %vm4217
        %vm4239 = vmand %vm1793, %vm4218
        %vm4240 = vmand %vm1794, %vm4219
        %vm4241 = vmand %vm1795, %vm4220
        %vm4242 = vmand %vm1793, %vm4221
        %vm4243 = vmand %vm1794, %vm4222
        %vm4244 = vmand %vm1795, %vm4223
        %vm4245 = vmand %vm1793, %vm4224
        %vm4246 = vmand %vm1794, %vm4225
        %vm4247 = vmand %vm1795, %vm4226
        %v4248 = vsel %vm4227, %v4106, 0.0
        %v4249 = vsel %vm4228, %v4108, 0.0
        %v4250 = vsel %vm4229, %v4177, 0.0
        %v4251 = vsel %vm4230, %v4110, 0.0
        %v4252 = vsel %vm4231, %v4112, 0.0
        %v4253 = vsel %vm4232, %v4180, 0.0
        %v4254 = vsel %vm4233, %v4116, 0.0
        %v4255 = vsel %vm4234, %v4118, 0.0
        %v4256 = vsel %vm4235, %v4185, 0.0
        %v4257 = vsel %vm4236, %v4120, 0.0
        %v4258 = vsel %vm4237, %v4122, 0.0
        %v4259 = vsel %vm4238, %v4188, 0.0
        %v4260 = vsel %vm4239, %v4126, 0.0
        %v4261 = vsel %vm4240, %v4128, 0.0
        %v4262 = vsel %vm4241, %v4193, 0.0
        %v4263 = vsel %vm4242, %v4130, 0.0
        %v4264 = vsel %vm4243, %v4132, 0.0
        %v4265 = vsel %vm4244, %v4196, 0.0
        %v4266 = vsel %vm4245, %v4136, 0.0
        %v4267 = vsel %vm4246, %v4138, 0.0
        %v4268 = vsel %vm4247, %v4201, 0.0
        %v4269 = vpack.c.bf16 %v4251, %v4248
        %v4270 = vpack.c.bf16 %v4252, %v4249
        %v4271 = vpack.c.bf16 %v4253, %v4250
        %v4272 = vpack.c.bf16 %v4257, %v4254
        %v4273 = vpack.c.bf16 %v4258, %v4255
        %v4274 = vpack.c.bf16 %v4259, %v4256
        %v4275 = vpack.c.bf16 %v4263, %v4260
        %v4276 = vpack.c.bf16 %v4264, %v4261
        %v4277 = vpack.c.bf16 %v4265, %v4262
        %v4278 = vpack.c.bf16 %v4266, %v4266
        %v4279 = vpack.c.bf16 %v4267, %v4267
        %v4280 = vpack.c.bf16 %v4268, %v4268
        %v4293 = vunpack.c.l.b16 %v4269
        %v4294 = vunpack.c.l.b16 %v4270
        %v4295 = vunpack.c.l.b16 %v4271
        %v4296 = vunpack.c.h.b16 %v4269
        %v4297 = vunpack.c.h.b16 %v4270
        %v4298 = vunpack.c.h.b16 %v4271
        %v4299 = vunpack.c.l.b16 %v4272
        %v4300 = vunpack.c.l.b16 %v4273
        %v4301 = vunpack.c.l.b16 %v4274
        %v4302 = vunpack.c.h.b16 %v4272
        %v4303 = vunpack.c.h.b16 %v4273
        %v4304 = vunpack.c.h.b16 %v4274
        %v4305 = vunpack.c.l.b16 %v4275
        %v4306 = vunpack.c.l.b16 %v4276
        %v4307 = vunpack.c.l.b16 %v4277
        %v4308 = vunpack.c.h.b16 %v4275
        %v4309 = vunpack.c.h.b16 %v4276
        %v4310 = vunpack.c.h.b16 %v4277
        %v4311 = vunpack.c.l.b16 %v4278
        %v4312 = vunpack.c.l.b16 %v4279
        %v4313 = vunpack.c.l.b16 %v4280
        %v4314 = vpack.c.b16 %v4294, %v4293
        %v4315 = vpack.c.b16 %v4295, %v4295
        %v4316 = vpack.c.b16 %v4297, %v4296
        %v4317 = vpack.c.b16 %v4298, %v4298
        %v4318 = vpack.c.b16 %v4300, %v4299
        %v4319 = vpack.c.b16 %v4301, %v4301
        %v4320 = vpack.c.b16 %v4303, %v4302
        %v4321 = vpack.c.b16 %v4304, %v4304
        %v4322 = vpack.c.b16 %v4306, %v4305
        %v4323 = vpack.c.b16 %v4307, %v4307
        %v4324 = vpack.c.b16 %v4309, %v4308
        %v4325 = vpack.c.b16 %v4310, %v4310
        %v4326 = vpack.c.b16 %v4312, %v4311
        %v4327 = vpack.c.b16 %v4313, %v4313
        %4342 = vst [vmem:[#allocation2 + $0x4] sm:$0xff] %v4314
        %4343 = vst [vmem:[#allocation2 + $0xc] sm:$0xf] %v4315
        %4344 = vst [vmem:[#allocation2 + $0x18] sm:$0xff] %v4316
        %4345 = vst [vmem:[#allocation2 + $0x20] sm:$0xf] %v4317
        %4346 = vst [vmem:[#allocation2 + $0x2c] sm:$0xff] %v4318
        %4347 = vst [vmem:[#allocation2 + $0x34] sm:$0xf] %v4319
        %4348 = vst [vmem:[#allocation2 + $0x40] sm:$0xff] %v4320
        %4349 = vst [vmem:[#allocation2 + $0x48] sm:$0xf] %v4321
        %4350 = vst [vmem:[#allocation2 + $0x54] sm:$0xff] %v4322
        %4351 = vst [vmem:[#allocation2 + $0x5c] sm:$0xf] %v4323
        %4352 = vst [vmem:[#allocation2 + $0x68] sm:$0xff] %v4324
        %4353 = vst [vmem:[#allocation2 + $0x70] sm:$0xf] %v4325
        %4354 = vst [vmem:[#allocation2 + $0x7c] sm:$0xff] %v4326
        %4355 = vst [vmem:[#allocation2 + $0x84] sm:$0xf] %v4327
        %v4356 = vld [vmem:[%s13] sm:$0xf]
        %v4357 = vld [vmem:[%s13 + $0x4] sm:$0x3]
        %v4358 = vld [vmem:[#allocation2] sm:$0xff]
        %v4359 = vld [vmem:[#allocation2 + $0x8] sm:$0xff]
        %v4360 = vld [vmem:[#allocation2 + $0x14] sm:$0xff]
        %v4361 = vld [vmem:[#allocation2 + $0x1c] sm:$0xff]
        %v4362 = vld [vmem:[#allocation2 + $0x28] sm:$0xff]
        %v4363 = vld [vmem:[#allocation2 + $0x30] sm:$0xff]
        %v4364 = vld [vmem:[#allocation2 + $0x3c] sm:$0xff]
        %v4365 = vld [vmem:[#allocation2 + $0x44] sm:$0xff]
        %v4366 = vld [vmem:[#allocation2 + $0x50] sm:$0xff]
        %v4367 = vld [vmem:[#allocation2 + $0x58] sm:$0xff]
        %v4368 = vld [vmem:[#allocation2 + $0x64] sm:$0xff]
        %v4369 = vld [vmem:[#allocation2 + $0x6c] sm:$0xff]
        %v4370 = vld [vmem:[#allocation2 + $0x78] sm:$0xff]
        %v4371 = vld [vmem:[#allocation2 + $0x80] sm:$0xff]
        %s4372 = scalar_lea.vmem %s13, 8
        %v4373 = vld [vmem:[%s4372] sm:$0xf]
        %v4374 = vld [vmem:[%s4372 + $0x4] sm:$0x3]
        %v4377 = vunpack.c.l.b16 %v4373
        %v4378 = vunpack.c.l.b16 %v4374
        %v4379 = vpack.c.b16 %v4378, %v4377
        %v4394 = vunpack.c.l.b16 %v4358
        %v4395 = vunpack.c.h.b16 %v4358
        %v4396 = vunpack.c.l.b16 %v4359
        %v4397 = vunpack.c.h.b16 %v4359
        %v4398 = vunpack.c.l.b16 %v4360
        %v4399 = vunpack.c.h.b16 %v4360
        %v4400 = vunpack.c.l.b16 %v4361
        %v4401 = vunpack.c.h.b16 %v4361
        %v4402 = vunpack.c.l.b16 %v4362
        %v4403 = vunpack.c.h.b16 %v4362
        %v4404 = vunpack.c.l.b16 %v4363
        %v4405 = vunpack.c.h.b16 %v4363
        %v4406 = vunpack.c.l.b16 %v4364
        %v4407 = vunpack.c.h.b16 %v4364
        %v4408 = vunpack.c.l.b16 %v4365
        %v4409 = vunpack.c.h.b16 %v4365
        %v4410 = vunpack.c.l.b16 %v4366
        %v4411 = vunpack.c.h.b16 %v4366
        %v4412 = vunpack.c.l.b16 %v4367
        %v4413 = vunpack.c.h.b16 %v4367
        %v4414 = vunpack.c.l.b16 %v4368
        %v4415 = vunpack.c.h.b16 %v4368
        %v4416 = vunpack.c.l.b16 %v4369
        %v4417 = vunpack.c.h.b16 %v4369
        %v4418 = vunpack.c.l.b16 %v4370
        %v4419 = vunpack.c.h.b16 %v4370
        %v4420 = vunpack.c.l.b16 %v4371
        %v4421 = vunpack.c.h.b16 %v4371
        %v4422 = vpack.c.b16 %v4398, %v4394
        %v4423 = vpack.c.b16 %v4399, %v4395
        %v4424 = vpack.c.b16 %v4400, %v4396
        %v4425 = vpack.c.b16 %v4401, %v4397
        %v4426 = vpack.c.b16 %v4406, %v4402
        %v4427 = vpack.c.b16 %v4407, %v4403
        %v4428 = vpack.c.b16 %v4408, %v4404
        %v4429 = vpack.c.b16 %v4409, %v4405
        %v4430 = vpack.c.b16 %v4414, %v4410
        %v4431 = vpack.c.b16 %v4415, %v4411
        %v4432 = vpack.c.b16 %v4416, %v4412
        %v4433 = vpack.c.b16 %v4417, %v4413
        %v4434 = vpack.c.b16 %v4418, %v4418
        %v4435 = vpack.c.b16 %v4419, %v4419
        %v4436 = vpack.c.b16 %v4420, %v4420
        %v4437 = vpack.c.b16 %v4421, %v4421
        %4438 = vrot.lane.b32.xlu0 %v4422, 49
        %v4439 = vpop.permute.xlu0 %4438
        %4440 = vrot.lane.b32.xlu0 %v4423, 49
        %v4441 = vpop.permute.xlu0 %4440
        %4442 = vrot.lane.b32.xlu0 %v4424, 49
        %v4443 = vpop.permute.xlu0 %4442
        %4444 = vrot.lane.b32.xlu0 %v4425, 49
        %v4445 = vpop.permute.xlu0 %4444
        %4446 = vrot.lane.b32.xlu0 %v4426, 49
        %v4447 = vpop.permute.xlu0 %4446
        %4448 = vrot.lane.b32.xlu0 %v4427, 49
        %v4449 = vpop.permute.xlu0 %4448
        %4450 = vrot.lane.b32.xlu0 %v4428, 49
        %v4451 = vpop.permute.xlu0 %4450
        %4452 = vrot.lane.b32.xlu0 %v4429, 49
        %v4453 = vpop.permute.xlu0 %4452
        %4454 = vrot.lane.b32.xlu0 %v4430, 49
        %v4455 = vpop.permute.xlu0 %4454
        %4456 = vrot.lane.b32.xlu0 %v4431, 49
        %v4457 = vpop.permute.xlu0 %4456
        %4458 = vrot.lane.b32.xlu0 %v4432, 49
        %v4459 = vpop.permute.xlu0 %4458
        %4460 = vrot.lane.b32.xlu0 %v4433, 49
        %v4461 = vpop.permute.xlu0 %4460
        %4462 = vrot.lane.b32.xlu0 %v4434, 49
        %v4463 = vpop.permute.xlu0 %4462
        %4464 = vrot.lane.b32.xlu0 %v4435, 49
        %v4465 = vpop.permute.xlu0 %4464
        %4466 = vrot.lane.b32.xlu0 %v4436, 49
        %v4467 = vpop.permute.xlu0 %4466
        %4468 = vrot.lane.b32.xlu0 %v4437, 49
        %v4469 = vpop.permute.xlu0 %4468
        %v4470 = vsel %vm704, %v4439, %v4441
        %v4471 = vsel %vm704, %v4441, %v4443
        %v4472 = vsel %vm704, %v4443, %v4445
        %v4473 = vsel %vm704, %v4447, %v4449
        %v4474 = vsel %vm704, %v4449, %v4451
        %v4475 = vsel %vm704, %v4451, %v4453
        %v4476 = vsel %vm704, %v4455, %v4457
        %v4477 = vsel %vm704, %v4457, %v4459
        %v4478 = vsel %vm704, %v4459, %v4461
        %v4479 = vsel %vm704, %v4463, %v4465
        %v4480 = vsel %vm704, %v4465, %v4467
        %v4481 = vsel %vm704, %v4467, %v4469
        %v4492 = vsel %vm2014, %v4379, 0
        %v4495 = vsel %vm2018, %v4479, 0
        %v4498 = vsel %vm2018, %v4480, 0
        %v4501 = vsel %vm2018, %v4481, 0
        %4503 = vmatprep.subr.bf16.mxu0 %v4471
        %4504 = vmatpush1.bf16.msra.mxu0 %v4470
        %4505 = vmatprep.subr.bf16.mxu0 %v4474
        %4506 = vmatpush1.bf16.msra.mxu0 %v4473
        %4507 = vmatprep.subr.bf16.mxu0 %v4477
        %4508 = vmatpush1.bf16.msra.mxu0 %v4476
        %4509 = vmatprep.subr.bf16.mxu0 %v4498
        %4510 = vmatpush1.bf16.msra.mxu0 %v4495
        %4511 = vmatprep.subr.bf16.mxu0 0
        %4512 = vmatpush1.bf16.msra.mxu0 0
        %4513 = vmatprep.subr.bf16.mxu0 0
        %4514 = vmatpush1.bf16.msra.mxu0 0
        %4515 = vmatprep.subr.bf16.mxu0 0
        %4516 = vmatpush1.bf16.msra.mxu0 0
        %4517 = vmatprep.subr.bf16.mxu0 0
        %4518 = vmatpush1.bf16.msra.mxu0 0
        %4519 = vmatprep.subr.bf16.mxu0 0
        %4520 = vmatpush1.bf16.msra.mxu0 0
        %4521 = vmatprep.subr.bf16.mxu0 0
        %4522 = vmatpush1.bf16.msra.mxu0 0
        %4523 = vmatprep.subr.bf16.mxu0 0
        %4524 = vmatpush1.bf16.msra.mxu0 0
        %4525 = vmatprep.subr.bf16.mxu0 0
        %4526 = vmatpush1.bf16.msra.mxu0 0
        %4527 = vmatprep.subr.bf16.mxu0 0
        %4528 = vmatpush1.bf16.msra.mxu0 0
        %4529 = vmatprep.subr.bf16.mxu0 0
        %4530 = vmatpush1.bf16.msra.mxu0 0
        %4531 = vmatprep.subr.bf16.mxu0 0
        %4532 = vmatpush1.bf16.msra.mxu0 0
        %4533 = vmatprep.subr.bf16.mxu0 0
        %4534 = vmatpush1.bf16.msra.mxu0 0
        %4535 = vmatprep.mubr.bf16.mxu0 0
        %4536 = vmatmul.mubr.bf16.gmra.mrb[0].mxu0 %v4492
        %v4537 = vpop.f32.mrb[0].mxu0
        %v4538 = vadd.f32 0.0, %v4537
        %v4539 = vpop.f32.mrb[0].mxu0
        %v4540 = vadd.f32 0.0, %v4539
        %v4541 = vpop.f32.mrb[0].mxu0
        %v4542 = vadd.f32 0.0, %v4541
        %v4543 = vpop.f32.mrb[0].mxu0
        %v4544 = vadd.f32 0.0, %v4543
        %4545 = vdwg.mxu0
        %4546 = vmatprep.subr.bf16.mxu0 0
        %4547 = vmatpush1.bf16.msra.mxu0 %v4472
        %4548 = vmatprep.subr.bf16.mxu0 0
        %4549 = vmatpush1.bf16.msra.mxu0 %v4475
        %4550 = vmatprep.subr.bf16.mxu0 0
        %4551 = vmatpush1.bf16.msra.mxu0 %v4478
        %4552 = vmatprep.subr.bf16.mxu0 0
        %4553 = vmatpush1.bf16.msra.mxu0 %v4501
        %4554 = vmatprep.subr.bf16.mxu0 0
        %4555 = vmatpush1.bf16.msra.mxu0 0
        %4556 = vmatprep.subr.bf16.mxu0 0
        %4557 = vmatpush1.bf16.msra.mxu0 0
        %4558 = vmatprep.subr.bf16.mxu0 0
        %4559 = vmatpush1.bf16.msra.mxu0 0
        %4560 = vmatprep.subr.bf16.mxu0 0
        %4561 = vmatpush1.bf16.msra.mxu0 0
        %4562 = vmatprep.subr.bf16.mxu0 0
        %4563 = vmatpush1.bf16.msra.mxu0 0
        %4564 = vmatprep.subr.bf16.mxu0 0
        %4565 = vmatpush1.bf16.msra.mxu0 0
        %4566 = vmatprep.subr.bf16.mxu0 0
        %4567 = vmatpush1.bf16.msra.mxu0 0
        %4568 = vmatprep.subr.bf16.mxu0 0
        %4569 = vmatpush1.bf16.msra.mxu0 0
        %4570 = vmatprep.subr.bf16.mxu0 0
        %4571 = vmatpush1.bf16.msra.mxu0 0
        %4572 = vmatprep.subr.bf16.mxu0 0
        %4573 = vmatpush1.bf16.msra.mxu0 0
        %4574 = vmatprep.subr.bf16.mxu0 0
        %4575 = vmatpush1.bf16.msra.mxu0 0
        %4576 = vmatprep.subr.bf16.mxu0 0
        %4577 = vmatpush1.bf16.msra.mxu0 0
        %4578 = vmatprep.mubr.bf16.mxu0 0
        %4579 = vmatmul.mubr.bf16.gmra.mrb[0].mxu0 %v4492
        %v4580 = vpop.f32.mrb[0].mxu0
        %v4581 = vadd.f32 0.0, %v4580
        %v4582 = vpop.f32.mrb[0].mxu0
        %v4583 = vpop.f32.mrb[0].mxu0
        %v4584 = vadd.f32 0.0, %v4583
        %v4585 = vpop.f32.mrb[0].mxu0
        %4586 = vdwg.mxu0
        %v4589 = vunpack.c.l.b16 %v4356
        %v4590 = vunpack.c.l.b16 %v4357
        %v4591 = vpack.c.b16 %v4590, %v4589
        %4592 = vrot.lane.b32.xlu0 %v4422, 50
        %v4593 = vpop.permute.xlu0 %4592
        %4594 = vrot.lane.b32.xlu0 %v4423, 50
        %v4595 = vpop.permute.xlu0 %4594
        %4596 = vrot.lane.b32.xlu0 %v4424, 50
        %v4597 = vpop.permute.xlu0 %4596
        %4598 = vrot.lane.b32.xlu0 %v4425, 50
        %v4599 = vpop.permute.xlu0 %4598
        %4600 = vrot.lane.b32.xlu0 %v4426, 50
        %v4601 = vpop.permute.xlu0 %4600
        %4602 = vrot.lane.b32.xlu0 %v4427, 50
        %v4603 = vpop.permute.xlu0 %4602
        %4604 = vrot.lane.b32.xlu0 %v4428, 50
        %v4605 = vpop.permute.xlu0 %4604
        %4606 = vrot.lane.b32.xlu0 %v4429, 50
        %v4607 = vpop.permute.xlu0 %4606
        %4608 = vrot.lane.b32.xlu0 %v4430, 50
        %v4609 = vpop.permute.xlu0 %4608
        %4610 = vrot.lane.b32.xlu0 %v4431, 50
        %v4611 = vpop.permute.xlu0 %4610
        %4612 = vrot.lane.b32.xlu0 %v4432, 50
        %v4613 = vpop.permute.xlu0 %4612
        %4614 = vrot.lane.b32.xlu0 %v4433, 50
        %v4615 = vpop.permute.xlu0 %4614
        %4616 = vrot.lane.b32.xlu0 %v4434, 50
        %v4617 = vpop.permute.xlu0 %4616
        %4618 = vrot.lane.b32.xlu0 %v4435, 50
        %v4619 = vpop.permute.xlu0 %4618
        %4620 = vrot.lane.b32.xlu0 %v4436, 50
        %v4621 = vpop.permute.xlu0 %4620
        %4622 = vrot.lane.b32.xlu0 %v4437, 50
        %v4623 = vpop.permute.xlu0 %4622
        %v4624 = vsel %vm673, %v4593, %v4595
        %v4625 = vsel %vm673, %v4595, %v4597
        %v4626 = vsel %vm673, %v4597, %v4599
        %v4627 = vsel %vm673, %v4601, %v4603
        %v4628 = vsel %vm673, %v4603, %v4605
        %v4629 = vsel %vm673, %v4605, %v4607
        %v4630 = vsel %vm673, %v4609, %v4611
        %v4631 = vsel %vm673, %v4611, %v4613
        %v4632 = vsel %vm673, %v4613, %v4615
        %v4633 = vsel %vm673, %v4617, %v4619
        %v4634 = vsel %vm673, %v4619, %v4621
        %v4635 = vsel %vm673, %v4621, %v4623
        %v4646 = vsel %vm2014, %v4591, 0
        %v4649 = vsel %vm2018, %v4633, 0
        %v4652 = vsel %vm2018, %v4634, 0
        %v4655 = vsel %vm2018, %v4635, 0
        %4657 = vmatprep.subr.bf16.mxu0 %v4625
        %4658 = vmatpush1.bf16.msra.mxu0 %v4624
        %4659 = vmatprep.subr.bf16.mxu0 %v4628
        %4660 = vmatpush1.bf16.msra.mxu0 %v4627
        %4661 = vmatprep.subr.bf16.mxu0 %v4631
        %4662 = vmatpush1.bf16.msra.mxu0 %v4630
        %4663 = vmatprep.subr.bf16.mxu0 %v4652
        %4664 = vmatpush1.bf16.msra.mxu0 %v4649
        %4665 = vmatprep.subr.bf16.mxu0 0
        %4666 = vmatpush1.bf16.msra.mxu0 0
        %4667 = vmatprep.subr.bf16.mxu0 0
        %4668 = vmatpush1.bf16.msra.mxu0 0
        %4669 = vmatprep.subr.bf16.mxu0 0
        %4670 = vmatpush1.bf16.msra.mxu0 0
        %4671 = vmatprep.subr.bf16.mxu0 0
        %4672 = vmatpush1.bf16.msra.mxu0 0
        %4673 = vmatprep.subr.bf16.mxu0 0
        %4674 = vmatpush1.bf16.msra.mxu0 0
        %4675 = vmatprep.subr.bf16.mxu0 0
        %4676 = vmatpush1.bf16.msra.mxu0 0
        %4677 = vmatprep.subr.bf16.mxu0 0
        %4678 = vmatpush1.bf16.msra.mxu0 0
        %4679 = vmatprep.subr.bf16.mxu0 0
        %4680 = vmatpush1.bf16.msra.mxu0 0
        %4681 = vmatprep.subr.bf16.mxu0 0
        %4682 = vmatpush1.bf16.msra.mxu0 0
        %4683 = vmatprep.subr.bf16.mxu0 0
        %4684 = vmatpush1.bf16.msra.mxu0 0
        %4685 = vmatprep.subr.bf16.mxu0 0
        %4686 = vmatpush1.bf16.msra.mxu0 0
        %4687 = vmatprep.subr.bf16.mxu0 0
        %4688 = vmatpush1.bf16.msra.mxu0 0
        %4689 = vmatprep.mubr.bf16.mxu0 0
        %4690 = vmatmul.mubr.bf16.gmra.mrb[0].mxu0 %v4646
        %v4691 = vpop.f32.mrb[0].mxu0
        %v4692 = vadd.f32 %v4538, %v4691
        %v4693 = vpop.f32.mrb[0].mxu0
        %v4694 = vadd.f32 %v4540, %v4693
        %v4695 = vpop.f32.mrb[0].mxu0
        %v4696 = vadd.f32 %v4542, %v4695
        %v4697 = vpop.f32.mrb[0].mxu0
        %v4698 = vadd.f32 %v4544, %v4697
        %4699 = vdwg.mxu0
        %4700 = vmatprep.subr.bf16.mxu0 0
        %4701 = vmatpush1.bf16.msra.mxu0 %v4626
        %4702 = vmatprep.subr.bf16.mxu0 0
        %4703 = vmatpush1.bf16.msra.mxu0 %v4629
        %4704 = vmatprep.subr.bf16.mxu0 0
        %4705 = vmatpush1.bf16.msra.mxu0 %v4632
        %4706 = vmatprep.subr.bf16.mxu0 0
        %4707 = vmatpush1.bf16.msra.mxu0 %v4655
        %4708 = vmatprep.subr.bf16.mxu0 0
        %4709 = vmatpush1.bf16.msra.mxu0 0
        %4710 = vmatprep.subr.bf16.mxu0 0
        %4711 = vmatpush1.bf16.msra.mxu0 0
        %4712 = vmatprep.subr.bf16.mxu0 0
        %4713 = vmatpush1.bf16.msra.mxu0 0
        %4714 = vmatprep.subr.bf16.mxu0 0
        %4715 = vmatpush1.bf16.msra.mxu0 0
        %4716 = vmatprep.subr.bf16.mxu0 0
        %4717 = vmatpush1.bf16.msra.mxu0 0
        %4718 = vmatprep.subr.bf16.mxu0 0
        %4719 = vmatpush1.bf16.msra.mxu0 0
        %4720 = vmatprep.subr.bf16.mxu0 0
        %4721 = vmatpush1.bf16.msra.mxu0 0
        %4722 = vmatprep.subr.bf16.mxu0 0
        %4723 = vmatpush1.bf16.msra.mxu0 0
        %4724 = vmatprep.subr.bf16.mxu0 0
        %4725 = vmatpush1.bf16.msra.mxu0 0
        %4726 = vmatprep.subr.bf16.mxu0 0
        %4727 = vmatpush1.bf16.msra.mxu0 0
        %4728 = vmatprep.subr.bf16.mxu0 0
        %4729 = vmatpush1.bf16.msra.mxu0 0
        %4730 = vmatprep.subr.bf16.mxu0 0
        %4731 = vmatpush1.bf16.msra.mxu0 0
        %4732 = vmatprep.mubr.bf16.mxu0 0
        %4733 = vmatmul.mubr.bf16.gmra.mrb[0].mxu0 %v4646
        %v4734 = vpop.f32.mrb[0].mxu0
        %v4735 = vadd.f32 %v4581, %v4734
        %v4736 = vpop.f32.mrb[0].mxu0
        %v4737 = vpop.f32.mrb[0].mxu0
        %v4738 = vadd.f32 %v4584, %v4737
        %v4739 = vpop.f32.mrb[0].mxu0
        %4740 = vdwg.mxu0
        %s4741 = scalar_lea.vmem %s13, 16
        %v4742 = vld [vmem:[%s4741] sm:$0xf]
        %v4743 = vld [vmem:[%s4741 + $0x4] sm:$0x3]
        %v4746 = vunpack.c.l.b16 %v4742
        %v4747 = vunpack.c.l.b16 %v4743
        %v4748 = vpack.c.b16 %v4747, %v4746
        %4749 = vrot.lane.b32.xlu0 %v4422, 48
        %v4750 = vpop.permute.xlu0 %4749
        %4751 = vrot.lane.b32.xlu0 %v4423, 48
        %v4752 = vpop.permute.xlu0 %4751
        %4753 = vrot.lane.b32.xlu0 %v4424, 48
        %v4754 = vpop.permute.xlu0 %4753
        %4755 = vrot.lane.b32.xlu0 %v4425, 48
        %v4756 = vpop.permute.xlu0 %4755
        %4757 = vrot.lane.b32.xlu0 %v4426, 48
        %v4758 = vpop.permute.xlu0 %4757
        %4759 = vrot.lane.b32.xlu0 %v4427, 48
        %v4760 = vpop.permute.xlu0 %4759
        %4761 = vrot.lane.b32.xlu0 %v4428, 48
        %v4762 = vpop.permute.xlu0 %4761
        %4763 = vrot.lane.b32.xlu0 %v4429, 48
        %v4764 = vpop.permute.xlu0 %4763
        %4765 = vrot.lane.b32.xlu0 %v4430, 48
        %v4766 = vpop.permute.xlu0 %4765
        %4767 = vrot.lane.b32.xlu0 %v4431, 48
        %v4768 = vpop.permute.xlu0 %4767
        %4769 = vrot.lane.b32.xlu0 %v4432, 48
        %v4770 = vpop.permute.xlu0 %4769
        %4771 = vrot.lane.b32.xlu0 %v4433, 48
        %v4772 = vpop.permute.xlu0 %4771
        %4773 = vrot.lane.b32.xlu0 %v4434, 48
        %v4774 = vpop.permute.xlu0 %4773
        %4775 = vrot.lane.b32.xlu0 %v4435, 48
        %v4776 = vpop.permute.xlu0 %4775
        %4777 = vrot.lane.b32.xlu0 %v4436, 48
        %v4778 = vpop.permute.xlu0 %4777
        %4779 = vrot.lane.b32.xlu0 %v4437, 48
        %v4780 = vpop.permute.xlu0 %4779
        %v4781 = vsel %vm735, %v4750, %v4752
        %v4782 = vsel %vm735, %v4752, %v4754
        %v4783 = vsel %vm735, %v4754, %v4756
        %v4784 = vsel %vm735, %v4758, %v4760
        %v4785 = vsel %vm735, %v4760, %v4762
        %v4786 = vsel %vm735, %v4762, %v4764
        %v4787 = vsel %vm735, %v4766, %v4768
        %v4788 = vsel %vm735, %v4768, %v4770
        %v4789 = vsel %vm735, %v4770, %v4772
        %v4790 = vsel %vm735, %v4774, %v4776
        %v4791 = vsel %vm735, %v4776, %v4778
        %v4792 = vsel %vm735, %v4778, %v4780
        %v4803 = vsel %vm2014, %v4748, 0
        %v4806 = vsel %vm2018, %v4790, 0
        %v4809 = vsel %vm2018, %v4791, 0
        %v4812 = vsel %vm2018, %v4792, 0
        %4814 = vmatprep.subr.bf16.mxu0 %v4782
        %4815 = vmatpush1.bf16.msra.mxu0 %v4781
        %4816 = vmatprep.subr.bf16.mxu0 %v4785
        %4817 = vmatpush1.bf16.msra.mxu0 %v4784
        %4818 = vmatprep.subr.bf16.mxu0 %v4788
        %4819 = vmatpush1.bf16.msra.mxu0 %v4787
        %4820 = vmatprep.subr.bf16.mxu0 %v4809
        %4821 = vmatpush1.bf16.msra.mxu0 %v4806
        %4822 = vmatprep.subr.bf16.mxu0 0
        %4823 = vmatpush1.bf16.msra.mxu0 0
        %4824 = vmatprep.subr.bf16.mxu0 0
        %4825 = vmatpush1.bf16.msra.mxu0 0
        %4826 = vmatprep.subr.bf16.mxu0 0
        %4827 = vmatpush1.bf16.msra.mxu0 0
        %4828 = vmatprep.subr.bf16.mxu0 0
        %4829 = vmatpush1.bf16.msra.mxu0 0
        %4830 = vmatprep.subr.bf16.mxu0 0
        %4831 = vmatpush1.bf16.msra.mxu0 0
        %4832 = vmatprep.subr.bf16.mxu0 0
        %4833 = vmatpush1.bf16.msra.mxu0 0
        %4834 = vmatprep.subr.bf16.mxu0 0
        %4835 = vmatpush1.bf16.msra.mxu0 0
        %4836 = vmatprep.subr.bf16.mxu0 0
        %4837 = vmatpush1.bf16.msra.mxu0 0
        %4838 = vmatprep.subr.bf16.mxu0 0
        %4839 = vmatpush1.bf16.msra.mxu0 0
        %4840 = vmatprep.subr.bf16.mxu0 0
        %4841 = vmatpush1.bf16.msra.mxu0 0
        %4842 = vmatprep.subr.bf16.mxu0 0
        %4843 = vmatpush1.bf16.msra.mxu0 0
        %4844 = vmatprep.subr.bf16.mxu0 0
        %4845 = vmatpush1.bf16.msra.mxu0 0
        %4846 = vmatprep.mubr.bf16.mxu0 0
        %4847 = vmatmul.mubr.bf16.gmra.mrb[0].mxu0 %v4803
        %v4848 = vpop.f32.mrb[0].mxu0
        %v4849 = vadd.f32 0.0, %v4848
        %v4850 = vpop.f32.mrb[0].mxu0
        %v4851 = vadd.f32 0.0, %v4850
        %v4852 = vpop.f32.mrb[0].mxu0
        %v4853 = vadd.f32 0.0, %v4852
        %v4854 = vpop.f32.mrb[0].mxu0
        %v4855 = vadd.f32 0.0, %v4854
        %4856 = vdwg.mxu0
        %4857 = vmatprep.subr.bf16.mxu0 0
        %4858 = vmatpush1.bf16.msra.mxu0 %v4783
        %4859 = vmatprep.subr.bf16.mxu0 0
        %4860 = vmatpush1.bf16.msra.mxu0 %v4786
        %4861 = vmatprep.subr.bf16.mxu0 0
        %4862 = vmatpush1.bf16.msra.mxu0 %v4789
        %4863 = vmatprep.subr.bf16.mxu0 0
        %4864 = vmatpush1.bf16.msra.mxu0 %v4812
        %4865 = vmatprep.subr.bf16.mxu0 0
        %4866 = vmatpush1.bf16.msra.mxu0 0
        %4867 = vmatprep.subr.bf16.mxu0 0
        %4868 = vmatpush1.bf16.msra.mxu0 0
        %4869 = vmatprep.subr.bf16.mxu0 0
        %4870 = vmatpush1.bf16.msra.mxu0 0
        %4871 = vmatprep.subr.bf16.mxu0 0
        %4872 = vmatpush1.bf16.msra.mxu0 0
        %4873 = vmatprep.subr.bf16.mxu0 0
        %4874 = vmatpush1.bf16.msra.mxu0 0
        %4875 = vmatprep.subr.bf16.mxu0 0
        %4876 = vmatpush1.bf16.msra.mxu0 0
        %4877 = vmatprep.subr.bf16.mxu0 0
        %4878 = vmatpush1.bf16.msra.mxu0 0
        %4879 = vmatprep.subr.bf16.mxu0 0
        %4880 = vmatpush1.bf16.msra.mxu0 0
        %4881 = vmatprep.subr.bf16.mxu0 0
        %4882 = vmatpush1.bf16.msra.mxu0 0
        %4883 = vmatprep.subr.bf16.mxu0 0
        %4884 = vmatpush1.bf16.msra.mxu0 0
        %4885 = vmatprep.subr.bf16.mxu0 0
        %4886 = vmatpush1.bf16.msra.mxu0 0
        %4887 = vmatprep.subr.bf16.mxu0 0
        %4888 = vmatpush1.bf16.msra.mxu0 0
        %4889 = vmatprep.mubr.bf16.mxu0 0
        %4890 = vmatmul.mubr.bf16.gmra.mrb[0].mxu0 %v4803
        %v4891 = vpop.f32.mrb[0].mxu0
        %v4892 = vadd.f32 0.0, %v4891
        %v4893 = vpop.f32.mrb[0].mxu0
        %v4894 = vpop.f32.mrb[0].mxu0
        %v4895 = vadd.f32 0.0, %v4894
        %v4896 = vpop.f32.mrb[0].mxu0
        %4897 = vdwg.mxu0
        %v4898 = vadd.f32 %v4692, %v4849
        %v4899 = vadd.f32 %v4694, %v4851
        %v4900 = vadd.f32 %v4735, %v4892
        %v4901 = vadd.f32 %v4696, %v4853
        %v4902 = vadd.f32 %v4698, %v4855
        %v4903 = vadd.f32 %v4738, %v4895
        %s4904 = scalar_lea.vmem %s13, 24
        %v4905 = vld [vmem:[%s4904] sm:$0xf]
        %v4906 = vld [vmem:[%s4904 + $0x4] sm:$0x3]
        %v4909 = vunpack.c.l.b16 %v4905
        %v4910 = vunpack.c.l.b16 %v4906
        %v4911 = vpack.c.b16 %v4910, %v4909
        %4912 = vrot.lane.b32.xlu0 %v4422, 47
        %v4913 = vpop.permute.xlu0 %4912
        %4914 = vrot.lane.b32.xlu0 %v4423, 47
        %v4915 = vpop.permute.xlu0 %4914
        %4916 = vrot.lane.b32.xlu0 %v4424, 47
        %v4917 = vpop.permute.xlu0 %4916
        %4918 = vrot.lane.b32.xlu0 %v4425, 47
        %v4919 = vpop.permute.xlu0 %4918
        %4920 = vrot.lane.b32.xlu0 %v4426, 47
        %v4921 = vpop.permute.xlu0 %4920
        %4922 = vrot.lane.b32.xlu0 %v4427, 47
        %v4923 = vpop.permute.xlu0 %4922
        %4924 = vrot.lane.b32.xlu0 %v4428, 47
        %v4925 = vpop.permute.xlu0 %4924
        %4926 = vrot.lane.b32.xlu0 %v4429, 47
        %v4927 = vpop.permute.xlu0 %4926
        %4928 = vrot.lane.b32.xlu0 %v4430, 47
        %v4929 = vpop.permute.xlu0 %4928
        %4930 = vrot.lane.b32.xlu0 %v4431, 47
        %v4931 = vpop.permute.xlu0 %4930
        %4932 = vrot.lane.b32.xlu0 %v4432, 47
        %v4933 = vpop.permute.xlu0 %4932
        %4934 = vrot.lane.b32.xlu0 %v4433, 47
        %v4935 = vpop.permute.xlu0 %4934
        %4936 = vrot.lane.b32.xlu0 %v4434, 47
        %v4937 = vpop.permute.xlu0 %4936
        %4938 = vrot.lane.b32.xlu0 %v4435, 47
        %v4939 = vpop.permute.xlu0 %4938
        %4940 = vrot.lane.b32.xlu0 %v4436, 47
        %v4941 = vpop.permute.xlu0 %4940
        %4942 = vrot.lane.b32.xlu0 %v4437, 47
        %v4943 = vpop.permute.xlu0 %4942
        %v4944 = vsel %vm766, %v4913, %v4915
        %v4945 = vsel %vm766, %v4915, %v4917
        %v4946 = vsel %vm766, %v4917, %v4919
        %v4947 = vsel %vm766, %v4921, %v4923
        %v4948 = vsel %vm766, %v4923, %v4925
        %v4949 = vsel %vm766, %v4925, %v4927
        %v4950 = vsel %vm766, %v4929, %v4931
        %v4951 = vsel %vm766, %v4931, %v4933
        %v4952 = vsel %vm766, %v4933, %v4935
        %v4953 = vsel %vm766, %v4937, %v4939
        %v4954 = vsel %vm766, %v4939, %v4941
        %v4955 = vsel %vm766, %v4941, %v4943
        %v4966 = vsel %vm2014, %v4911, 0
        %v4969 = vsel %vm2018, %v4953, 0
        %v4972 = vsel %vm2018, %v4954, 0
        %v4975 = vsel %vm2018, %v4955, 0
        %4977 = vmatprep.subr.bf16.mxu0 %v4945
        %4978 = vmatpush1.bf16.msra.mxu0 %v4944
        %4979 = vmatprep.subr.bf16.mxu0 %v4948
        %4980 = vmatpush1.bf16.msra.mxu0 %v4947
        %4981 = vmatprep.subr.bf16.mxu0 %v4951
        %4982 = vmatpush1.bf16.msra.mxu0 %v4950
        %4983 = vmatprep.subr.bf16.mxu0 %v4972
        %4984 = vmatpush1.bf16.msra.mxu0 %v4969
        %4985 = vmatprep.subr.bf16.mxu0 0
        %4986 = vmatpush1.bf16.msra.mxu0 0
        %4987 = vmatprep.subr.bf16.mxu0 0
        %4988 = vmatpush1.bf16.msra.mxu0 0
        %4989 = vmatprep.subr.bf16.mxu0 0
        %4990 = vmatpush1.bf16.msra.mxu0 0
        %4991 = vmatprep.subr.bf16.mxu0 0
        %4992 = vmatpush1.bf16.msra.mxu0 0
        %4993 = vmatprep.subr.bf16.mxu0 0
        %4994 = vmatpush1.bf16.msra.mxu0 0
        %4995 = vmatprep.subr.bf16.mxu0 0
        %4996 = vmatpush1.bf16.msra.mxu0 0
        %4997 = vmatprep.subr.bf16.mxu0 0
        %4998 = vmatpush1.bf16.msra.mxu0 0
        %4999 = vmatprep.subr.bf16.mxu0 0
        %5000 = vmatpush1.bf16.msra.mxu0 0
        %5001 = vmatprep.subr.bf16.mxu0 0
        %5002 = vmatpush1.bf16.msra.mxu0 0
        %5003 = vmatprep.subr.bf16.mxu0 0
        %5004 = vmatpush1.bf16.msra.mxu0 0
        %5005 = vmatprep.subr.bf16.mxu0 0
        %5006 = vmatpush1.bf16.msra.mxu0 0
        %5007 = vmatprep.subr.bf16.mxu0 0
        %5008 = vmatpush1.bf16.msra.mxu0 0
        %5009 = vmatprep.mubr.bf16.mxu0 0
        %5010 = vmatmul.mubr.bf16.gmra.mrb[0].mxu0 %v4966
        %v5011 = vpop.f32.mrb[0].mxu0
        %v5012 = vadd.f32 0.0, %v5011
        %v5013 = vpop.f32.mrb[0].mxu0
        %v5014 = vadd.f32 0.0, %v5013
        %v5015 = vpop.f32.mrb[0].mxu0
        %v5016 = vadd.f32 0.0, %v5015
        %v5017 = vpop.f32.mrb[0].mxu0
        %v5018 = vadd.f32 0.0, %v5017
        %5019 = vdwg.mxu0
        %5020 = vmatprep.subr.bf16.mxu0 0
        %5021 = vmatpush1.bf16.msra.mxu0 %v4946
        %5022 = vmatprep.subr.bf16.mxu0 0
        %5023 = vmatpush1.bf16.msra.mxu0 %v4949
        %5024 = vmatprep.subr.bf16.mxu0 0
        %5025 = vmatpush1.bf16.msra.mxu0 %v4952
        %5026 = vmatprep.subr.bf16.mxu0 0
        %5027 = vmatpush1.bf16.msra.mxu0 %v4975
        %5028 = vmatprep.subr.bf16.mxu0 0
        %5029 = vmatpush1.bf16.msra.mxu0 0
        %5030 = vmatprep.subr.bf16.mxu0 0
        %5031 = vmatpush1.bf16.msra.mxu0 0
        %5032 = vmatprep.subr.bf16.mxu0 0
        %5033 = vmatpush1.bf16.msra.mxu0 0
        %5034 = vmatprep.subr.bf16.mxu0 0
        %5035 = vmatpush1.bf16.msra.mxu0 0
        %5036 = vmatprep.subr.bf16.mxu0 0
        %5037 = vmatpush1.bf16.msra.mxu0 0
        %5038 = vmatprep.subr.bf16.mxu0 0
        %5039 = vmatpush1.bf16.msra.mxu0 0
        %5040 = vmatprep.subr.bf16.mxu0 0
        %5041 = vmatpush1.bf16.msra.mxu0 0
        %5042 = vmatprep.subr.bf16.mxu0 0
        %5043 = vmatpush1.bf16.msra.mxu0 0
        %5044 = vmatprep.subr.bf16.mxu0 0
        %5045 = vmatpush1.bf16.msra.mxu0 0
        %5046 = vmatprep.subr.bf16.mxu0 0
        %5047 = vmatpush1.bf16.msra.mxu0 0
        %5048 = vmatprep.subr.bf16.mxu0 0
        %5049 = vmatpush1.bf16.msra.mxu0 0
        %5050 = vmatprep.subr.bf16.mxu0 0
        %5051 = vmatpush1.bf16.msra.mxu0 0
        %5052 = vmatprep.mubr.bf16.mxu0 0
        %5053 = vmatmul.mubr.bf16.gmra.mrb[0].mxu0 %v4966
        %v5054 = vpop.f32.mrb[0].mxu0
        %v5055 = vadd.f32 0.0, %v5054
        %v5056 = vpop.f32.mrb[0].mxu0
        %v5057 = vpop.f32.mrb[0].mxu0
        %v5058 = vadd.f32 0.0, %v5057
        %v5059 = vpop.f32.mrb[0].mxu0
        %5060 = vdwg.mxu0
        %v5061 = vadd.f32 %v4898, %v5012
        %v5062 = vadd.f32 %v4899, %v5014
        %v5063 = vadd.f32 %v4900, %v5055
        %v5064 = vadd.f32 %v4901, %v5016
        %v5065 = vadd.f32 %v4902, %v5018
        %v5066 = vadd.f32 %v4903, %v5058
        %s5067 = scalar_lea.vmem %s13, 32
        %v5068 = vld [vmem:[%s5067] sm:$0xf]
        %v5069 = vld [vmem:[%s5067 + $0x4] sm:$0x3]
        %v5072 = vunpack.c.l.b16 %v5068
        %v5073 = vunpack.c.l.b16 %v5069
        %v5074 = vpack.c.b16 %v5073, %v5072
        %5075 = vrot.lane.b32.xlu0 %v4422, 46
        %v5076 = vpop.permute.xlu0 %5075
        %5077 = vrot.lane.b32.xlu0 %v4423, 46
        %v5078 = vpop.permute.xlu0 %5077
        %5079 = vrot.lane.b32.xlu0 %v4424, 46
        %v5080 = vpop.permute.xlu0 %5079
        %5081 = vrot.lane.b32.xlu0 %v4425, 46
        %v5082 = vpop.permute.xlu0 %5081
        %5083 = vrot.lane.b32.xlu0 %v4426, 46
        %v5084 = vpop.permute.xlu0 %5083
        %5085 = vrot.lane.b32.xlu0 %v4427, 46
        %v5086 = vpop.permute.xlu0 %5085
        %5087 = vrot.lane.b32.xlu0 %v4428, 46
        %v5088 = vpop.permute.xlu0 %5087
        %5089 = vrot.lane.b32.xlu0 %v4429, 46
        %v5090 = vpop.permute.xlu0 %5089
        %5091 = vrot.lane.b32.xlu0 %v4430, 46
        %v5092 = vpop.permute.xlu0 %5091
        %5093 = vrot.lane.b32.xlu0 %v4431, 46
        %v5094 = vpop.permute.xlu0 %5093
        %5095 = vrot.lane.b32.xlu0 %v4432, 46
        %v5096 = vpop.permute.xlu0 %5095
        %5097 = vrot.lane.b32.xlu0 %v4433, 46
        %v5098 = vpop.permute.xlu0 %5097
        %5099 = vrot.lane.b32.xlu0 %v4434, 46
        %v5100 = vpop.permute.xlu0 %5099
        %5101 = vrot.lane.b32.xlu0 %v4435, 46
        %v5102 = vpop.permute.xlu0 %5101
        %5103 = vrot.lane.b32.xlu0 %v4436, 46
        %v5104 = vpop.permute.xlu0 %5103
        %5105 = vrot.lane.b32.xlu0 %v4437, 46
        %v5106 = vpop.permute.xlu0 %5105
        %v5107 = vsel %vm797, %v5076, %v5078
        %v5108 = vsel %vm797, %v5078, %v5080
        %v5109 = vsel %vm797, %v5080, %v5082
        %v5110 = vsel %vm797, %v5084, %v5086
        %v5111 = vsel %vm797, %v5086, %v5088
        %v5112 = vsel %vm797, %v5088, %v5090
        %v5113 = vsel %vm797, %v5092, %v5094
        %v5114 = vsel %vm797, %v5094, %v5096
        %v5115 = vsel %vm797, %v5096, %v5098
        %v5116 = vsel %vm797, %v5100, %v5102
        %v5117 = vsel %vm797, %v5102, %v5104
        %v5118 = vsel %vm797, %v5104, %v5106
        %v5129 = vsel %vm2014, %v5074, 0
        %v5132 = vsel %vm2018, %v5116, 0
        %v5135 = vsel %vm2018, %v5117, 0
        %v5138 = vsel %vm2018, %v5118, 0
        %5140 = vmatprep.subr.bf16.mxu0 %v5108
        %5141 = vmatpush1.bf16.msra.mxu0 %v5107
        %5142 = vmatprep.subr.bf16.mxu0 %v5111
        %5143 = vmatpush1.bf16.msra.mxu0 %v5110
        %5144 = vmatprep.subr.bf16.mxu0 %v5114
        %5145 = vmatpush1.bf16.msra.mxu0 %v5113
        %5146 = vmatprep.subr.bf16.mxu0 %v5135
        %5147 = vmatpush1.bf16.msra.mxu0 %v5132
        %5148 = vmatprep.subr.bf16.mxu0 0
        %5149 = vmatpush1.bf16.msra.mxu0 0
        %5150 = vmatprep.subr.bf16.mxu0 0
        %5151 = vmatpush1.bf16.msra.mxu0 0
        %5152 = vmatprep.subr.bf16.mxu0 0
        %5153 = vmatpush1.bf16.msra.mxu0 0
        %5154 = vmatprep.subr.bf16.mxu0 0
        %5155 = vmatpush1.bf16.msra.mxu0 0
        %5156 = vmatprep.subr.bf16.mxu0 0
        %5157 = vmatpush1.bf16.msra.mxu0 0
        %5158 = vmatprep.subr.bf16.mxu0 0
        %5159 = vmatpush1.bf16.msra.mxu0 0
        %5160 = vmatprep.subr.bf16.mxu0 0
        %5161 = vmatpush1.bf16.msra.mxu0 0
        %5162 = vmatprep.subr.bf16.mxu0 0
        %5163 = vmatpush1.bf16.msra.mxu0 0
        %5164 = vmatprep.subr.bf16.mxu0 0
        %5165 = vmatpush1.bf16.msra.mxu0 0
        %5166 = vmatprep.subr.bf16.mxu0 0
        %5167 = vmatpush1.bf16.msra.mxu0 0
        %5168 = vmatprep.subr.bf16.mxu0 0
        %5169 = vmatpush1.bf16.msra.mxu0 0
        %5170 = vmatprep.subr.bf16.mxu0 0
        %5171 = vmatpush1.bf16.msra.mxu0 0
        %5172 = vmatprep.mubr.bf16.mxu0 0
        %5173 = vmatmul.mubr.bf16.gmra.mrb[0].mxu0 %v5129
        %v5174 = vpop.f32.mrb[0].mxu0
        %v5175 = vadd.f32 0.0, %v5174
        %v5176 = vpop.f32.mrb[0].mxu0
        %v5177 = vadd.f32 0.0, %v5176
        %v5178 = vpop.f32.mrb[0].mxu0
        %v5179 = vadd.f32 0.0, %v5178
        %v5180 = vpop.f32.mrb[0].mxu0
        %v5181 = vadd.f32 0.0, %v5180
        %5182 = vdwg.mxu0
        %5183 = vmatprep.subr.bf16.mxu0 0
        %5184 = vmatpush1.bf16.msra.mxu0 %v5109
        %5185 = vmatprep.subr.bf16.mxu0 0
        %5186 = vmatpush1.bf16.msra.mxu0 %v5112
        %5187 = vmatprep.subr.bf16.mxu0 0
        %5188 = vmatpush1.bf16.msra.mxu0 %v5115
        %5189 = vmatprep.subr.bf16.mxu0 0
        %5190 = vmatpush1.bf16.msra.mxu0 %v5138
        %5191 = vmatprep.subr.bf16.mxu0 0
        %5192 = vmatpush1.bf16.msra.mxu0 0
        %5193 = vmatprep.subr.bf16.mxu0 0
        %5194 = vmatpush1.bf16.msra.mxu0 0
        %5195 = vmatprep.subr.bf16.mxu0 0
        %5196 = vmatpush1.bf16.msra.mxu0 0
        %5197 = vmatprep.subr.bf16.mxu0 0
        %5198 = vmatpush1.bf16.msra.mxu0 0
        %5199 = vmatprep.subr.bf16.mxu0 0
        %5200 = vmatpush1.bf16.msra.mxu0 0
        %5201 = vmatprep.subr.bf16.mxu0 0
        %5202 = vmatpush1.bf16.msra.mxu0 0
        %5203 = vmatprep.subr.bf16.mxu0 0
        %5204 = vmatpush1.bf16.msra.mxu0 0
        %5205 = vmatprep.subr.bf16.mxu0 0
        %5206 = vmatpush1.bf16.msra.mxu0 0
        %5207 = vmatprep.subr.bf16.mxu0 0
        %5208 = vmatpush1.bf16.msra.mxu0 0
        %5209 = vmatprep.subr.bf16.mxu0 0
        %5210 = vmatpush1.bf16.msra.mxu0 0
        %5211 = vmatprep.subr.bf16.mxu0 0
        %5212 = vmatpush1.bf16.msra.mxu0 0
        %5213 = vmatprep.subr.bf16.mxu0 0
        %5214 = vmatpush1.bf16.msra.mxu0 0
        %5215 = vmatprep.mubr.bf16.mxu0 0
        %5216 = vmatmul.mubr.bf16.gmra.mrb[0].mxu0 %v5129
        %v5217 = vpop.f32.mrb[0].mxu0
        %v5218 = vadd.f32 0.0, %v5217
        %v5219 = vpop.f32.mrb[0].mxu0
        %v5220 = vpop.f32.mrb[0].mxu0
        %v5221 = vadd.f32 0.0, %v5220
        %v5222 = vpop.f32.mrb[0].mxu0
        %5223 = vdwg.mxu0
        %v5224 = vadd.f32 %v5061, %v5175
        %v5225 = vadd.f32 %v5062, %v5177
        %v5226 = vadd.f32 %v5063, %v5218
        %v5227 = vadd.f32 %v5064, %v5179
        %v5228 = vadd.f32 %v5065, %v5181
        %v5229 = vadd.f32 %v5066, %v5221
        %s5230 = scalar_lea.vmem %s13, 40
        %v5231 = vld [vmem:[%s5230] sm:$0xf]
        %v5232 = vld [vmem:[%s5230 + $0x4] sm:$0x3]
        %v5235 = vunpack.c.l.b16 %v5231
        %v5236 = vunpack.c.l.b16 %v5232
        %v5237 = vpack.c.b16 %v5236, %v5235
        %5238 = vrot.lane.b32.xlu0 %v4422, 26
        %v5239 = vpop.permute.xlu0 %5238
        %5240 = vrot.lane.b32.xlu0 %v4423, 26
        %v5241 = vpop.permute.xlu0 %5240
        %5242 = vrot.lane.b32.xlu0 %v4424, 26
        %v5243 = vpop.permute.xlu0 %5242
        %5244 = vrot.lane.b32.xlu0 %v4425, 26
        %v5245 = vpop.permute.xlu0 %5244
        %5246 = vrot.lane.b32.xlu0 %v4426, 26
        %v5247 = vpop.permute.xlu0 %5246
        %5248 = vrot.lane.b32.xlu0 %v4427, 26
        %v5249 = vpop.permute.xlu0 %5248
        %5250 = vrot.lane.b32.xlu0 %v4428, 26
        %v5251 = vpop.permute.xlu0 %5250
        %5252 = vrot.lane.b32.xlu0 %v4429, 26
        %v5253 = vpop.permute.xlu0 %5252
        %5254 = vrot.lane.b32.xlu0 %v4430, 26
        %v5255 = vpop.permute.xlu0 %5254
        %5256 = vrot.lane.b32.xlu0 %v4431, 26
        %v5257 = vpop.permute.xlu0 %5256
        %5258 = vrot.lane.b32.xlu0 %v4432, 26
        %v5259 = vpop.permute.xlu0 %5258
        %5260 = vrot.lane.b32.xlu0 %v4433, 26
        %v5261 = vpop.permute.xlu0 %5260
        %5262 = vrot.lane.b32.xlu0 %v4434, 26
        %v5263 = vpop.permute.xlu0 %5262
        %5264 = vrot.lane.b32.xlu0 %v4435, 26
        %v5265 = vpop.permute.xlu0 %5264
        %5266 = vrot.lane.b32.xlu0 %v4436, 26
        %v5267 = vpop.permute.xlu0 %5266
        %5268 = vrot.lane.b32.xlu0 %v4437, 26
        %v5269 = vpop.permute.xlu0 %5268
        %v5270 = vsel %vm828, %v5239, %v5241
        %v5271 = vsel %vm828, %v5241, %v5243
        %v5272 = vsel %vm828, %v5243, %v5245
        %v5273 = vsel %vm828, %v5247, %v5249
        %v5274 = vsel %vm828, %v5249, %v5251
        %v5275 = vsel %vm828, %v5251, %v5253
        %v5276 = vsel %vm828, %v5255, %v5257
        %v5277 = vsel %vm828, %v5257, %v5259
        %v5278 = vsel %vm828, %v5259, %v5261
        %v5279 = vsel %vm828, %v5263, %v5265
        %v5280 = vsel %vm828, %v5265, %v5267
        %v5281 = vsel %vm828, %v5267, %v5269
        %v5292 = vsel %vm2014, %v5237, 0
        %v5295 = vsel %vm2018, %v5279, 0
        %v5298 = vsel %vm2018, %v5280, 0
        %v5301 = vsel %vm2018, %v5281, 0
        %5303 = vmatprep.subr.bf16.mxu0 %v5271
        %5304 = vmatpush1.bf16.msra.mxu0 %v5270
        %5305 = vmatprep.subr.bf16.mxu0 %v5274
        %5306 = vmatpush1.bf16.msra.mxu0 %v5273
        %5307 = vmatprep.subr.bf16.mxu0 %v5277
        %5308 = vmatpush1.bf16.msra.mxu0 %v5276
        %5309 = vmatprep.subr.bf16.mxu0 %v5298
        %5310 = vmatpush1.bf16.msra.mxu0 %v5295
        %5311 = vmatprep.subr.bf16.mxu0 0
        %5312 = vmatpush1.bf16.msra.mxu0 0
        %5313 = vmatprep.subr.bf16.mxu0 0
        %5314 = vmatpush1.bf16.msra.mxu0 0
        %5315 = vmatprep.subr.bf16.mxu0 0
        %5316 = vmatpush1.bf16.msra.mxu0 0
        %5317 = vmatprep.subr.bf16.mxu0 0
        %5318 = vmatpush1.bf16.msra.mxu0 0
        %5319 = vmatprep.subr.bf16.mxu0 0
        %5320 = vmatpush1.bf16.msra.mxu0 0
        %5321 = vmatprep.subr.bf16.mxu0 0
        %5322 = vmatpush1.bf16.msra.mxu0 0
        %5323 = vmatprep.subr.bf16.mxu0 0
        %5324 = vmatpush1.bf16.msra.mxu0 0
        %5325 = vmatprep.subr.bf16.mxu0 0
        %5326 = vmatpush1.bf16.msra.mxu0 0
        %5327 = vmatprep.subr.bf16.mxu0 0
        %5328 = vmatpush1.bf16.msra.mxu0 0
        %5329 = vmatprep.subr.bf16.mxu0 0
        %5330 = vmatpush1.bf16.msra.mxu0 0
        %5331 = vmatprep.subr.bf16.mxu0 0
        %5332 = vmatpush1.bf16.msra.mxu0 0
        %5333 = vmatprep.subr.bf16.mxu0 0
        %5334 = vmatpush1.bf16.msra.mxu0 0
        %5335 = vmatprep.mubr.bf16.mxu0 0
        %5336 = vmatmul.mubr.bf16.gmra.mrb[0].mxu0 %v5292
        %v5337 = vpop.f32.mrb[0].mxu0
        %v5338 = vadd.f32 0.0, %v5337
        %v5339 = vpop.f32.mrb[0].mxu0
        %v5340 = vadd.f32 0.0, %v5339
        %v5341 = vpop.f32.mrb[0].mxu0
        %v5342 = vadd.f32 0.0, %v5341
        %v5343 = vpop.f32.mrb[0].mxu0
        %v5344 = vadd.f32 0.0, %v5343
        %5345 = vdwg.mxu0
        %5346 = vmatprep.subr.bf16.mxu0 0
        %5347 = vmatpush1.bf16.msra.mxu0 %v5272
        %5348 = vmatprep.subr.bf16.mxu0 0
        %5349 = vmatpush1.bf16.msra.mxu0 %v5275
        %5350 = vmatprep.subr.bf16.mxu0 0
        %5351 = vmatpush1.bf16.msra.mxu0 %v5278
        %5352 = vmatprep.subr.bf16.mxu0 0
        %5353 = vmatpush1.bf16.msra.mxu0 %v5301
        %5354 = vmatprep.subr.bf16.mxu0 0
        %5355 = vmatpush1.bf16.msra.mxu0 0
        %5356 = vmatprep.subr.bf16.mxu0 0
        %5357 = vmatpush1.bf16.msra.mxu0 0
        %5358 = vmatprep.subr.bf16.mxu0 0
        %5359 = vmatpush1.bf16.msra.mxu0 0
        %5360 = vmatprep.subr.bf16.mxu0 0
        %5361 = vmatpush1.bf16.msra.mxu0 0
        %5362 = vmatprep.subr.bf16.mxu0 0
        %5363 = vmatpush1.bf16.msra.mxu0 0
        %5364 = vmatprep.subr.bf16.mxu0 0
        %5365 = vmatpush1.bf16.msra.mxu0 0
        %5366 = vmatprep.subr.bf16.mxu0 0
        %5367 = vmatpush1.bf16.msra.mxu0 0
        %5368 = vmatprep.subr.bf16.mxu0 0
        %5369 = vmatpush1.bf16.msra.mxu0 0
        %5370 = vmatprep.subr.bf16.mxu0 0
        %5371 = vmatpush1.bf16.msra.mxu0 0
        %5372 = vmatprep.subr.bf16.mxu0 0
        %5373 = vmatpush1.bf16.msra.mxu0 0
        %5374 = vmatprep.subr.bf16.mxu0 0
        %5375 = vmatpush1.bf16.msra.mxu0 0
        %5376 = vmatprep.subr.bf16.mxu0 0
        %5377 = vmatpush1.bf16.msra.mxu0 0
        %5378 = vmatprep.mubr.bf16.mxu0 0
        %5379 = vmatmul.mubr.bf16.gmra.mrb[0].mxu0 %v5292
        %v5380 = vpop.f32.mrb[0].mxu0
        %v5381 = vadd.f32 0.0, %v5380
        %v5382 = vpop.f32.mrb[0].mxu0
        %v5383 = vpop.f32.mrb[0].mxu0
        %v5384 = vadd.f32 0.0, %v5383
        %v5385 = vpop.f32.mrb[0].mxu0
        %5386 = vdwg.mxu0
        %v5387 = vadd.f32 %v5224, %v5338
        %v5388 = vadd.f32 %v5225, %v5340
        %v5389 = vadd.f32 %v5226, %v5381
        %v5390 = vadd.f32 %v5227, %v5342
        %v5391 = vadd.f32 %v5228, %v5344
        %v5392 = vadd.f32 %v5229, %v5384
        %s5393 = scalar_lea.vmem %s13, 48
        %v5394 = vld [vmem:[%s5393] sm:$0xf]
        %v5395 = vld [vmem:[%s5393 + $0x4] sm:$0x3]
        %v5398 = vunpack.c.l.b16 %v5394
        %v5399 = vunpack.c.l.b16 %v5395
        %v5400 = vpack.c.b16 %v5399, %v5398
        %5401 = vrot.lane.b32.xlu0 %v4422, 25
        %v5402 = vpop.permute.xlu0 %5401
        %5403 = vrot.lane.b32.xlu0 %v4423, 25
        %v5404 = vpop.permute.xlu0 %5403
        %5405 = vrot.lane.b32.xlu0 %v4424, 25
        %v5406 = vpop.permute.xlu0 %5405
        %5407 = vrot.lane.b32.xlu0 %v4425, 25
        %v5408 = vpop.permute.xlu0 %5407
        %5409 = vrot.lane.b32.xlu0 %v4426, 25
        %v5410 = vpop.permute.xlu0 %5409
        %5411 = vrot.lane.b32.xlu0 %v4427, 25
        %v5412 = vpop.permute.xlu0 %5411
        %5413 = vrot.lane.b32.xlu0 %v4428, 25
        %v5414 = vpop.permute.xlu0 %5413
        %5415 = vrot.lane.b32.xlu0 %v4429, 25
        %v5416 = vpop.permute.xlu0 %5415
        %5417 = vrot.lane.b32.xlu0 %v4430, 25
        %v5418 = vpop.permute.xlu0 %5417
        %5419 = vrot.lane.b32.xlu0 %v4431, 25
        %v5420 = vpop.permute.xlu0 %5419
        %5421 = vrot.lane.b32.xlu0 %v4432, 25
        %v5422 = vpop.permute.xlu0 %5421
        %5423 = vrot.lane.b32.xlu0 %v4433, 25
        %v5424 = vpop.permute.xlu0 %5423
        %5425 = vrot.lane.b32.xlu0 %v4434, 25
        %v5426 = vpop.permute.xlu0 %5425
        %5427 = vrot.lane.b32.xlu0 %v4435, 25
        %v5428 = vpop.permute.xlu0 %5427
        %5429 = vrot.lane.b32.xlu0 %v4436, 25
        %v5430 = vpop.permute.xlu0 %5429
        %5431 = vrot.lane.b32.xlu0 %v4437, 25
        %v5432 = vpop.permute.xlu0 %5431
        %v5433 = vsel %vm859, %v5402, %v5404
        %v5434 = vsel %vm859, %v5404, %v5406
        %v5435 = vsel %vm859, %v5406, %v5408
        %v5436 = vsel %vm859, %v5410, %v5412
        %v5437 = vsel %vm859, %v5412, %v5414
        %v5438 = vsel %vm859, %v5414, %v5416
        %v5439 = vsel %vm859, %v5418, %v5420
        %v5440 = vsel %vm859, %v5420, %v5422
        %v5441 = vsel %vm859, %v5422, %v5424
        %v5442 = vsel %vm859, %v5426, %v5428
        %v5443 = vsel %vm859, %v5428, %v5430
        %v5444 = vsel %vm859, %v5430, %v5432
        %v5455 = vsel %vm2014, %v5400, 0
        %v5458 = vsel %vm2018, %v5442, 0
        %v5461 = vsel %vm2018, %v5443, 0
        %v5464 = vsel %vm2018, %v5444, 0
        %5466 = vmatprep.subr.bf16.mxu0 %v5434
        %5467 = vmatpush1.bf16.msra.mxu0 %v5433
        %5468 = vmatprep.subr.bf16.mxu0 %v5437
        %5469 = vmatpush1.bf16.msra.mxu0 %v5436
        %5470 = vmatprep.subr.bf16.mxu0 %v5440
        %5471 = vmatpush1.bf16.msra.mxu0 %v5439
        %5472 = vmatprep.subr.bf16.mxu0 %v5461
        %5473 = vmatpush1.bf16.msra.mxu0 %v5458
        %5474 = vmatprep.subr.bf16.mxu0 0
        %5475 = vmatpush1.bf16.msra.mxu0 0
        %5476 = vmatprep.subr.bf16.mxu0 0
        %5477 = vmatpush1.bf16.msra.mxu0 0
        %5478 = vmatprep.subr.bf16.mxu0 0
        %5479 = vmatpush1.bf16.msra.mxu0 0
        %5480 = vmatprep.subr.bf16.mxu0 0
        %5481 = vmatpush1.bf16.msra.mxu0 0
        %5482 = vmatprep.subr.bf16.mxu0 0
        %5483 = vmatpush1.bf16.msra.mxu0 0
        %5484 = vmatprep.subr.bf16.mxu0 0
        %5485 = vmatpush1.bf16.msra.mxu0 0
        %5486 = vmatprep.subr.bf16.mxu0 0
        %5487 = vmatpush1.bf16.msra.mxu0 0
        %5488 = vmatprep.subr.bf16.mxu0 0
        %5489 = vmatpush1.bf16.msra.mxu0 0
        %5490 = vmatprep.subr.bf16.mxu0 0
        %5491 = vmatpush1.bf16.msra.mxu0 0
        %5492 = vmatprep.subr.bf16.mxu0 0
        %5493 = vmatpush1.bf16.msra.mxu0 0
        %5494 = vmatprep.subr.bf16.mxu0 0
        %5495 = vmatpush1.bf16.msra.mxu0 0
        %5496 = vmatprep.subr.bf16.mxu0 0
        %5497 = vmatpush1.bf16.msra.mxu0 0
        %5498 = vmatprep.mubr.bf16.mxu0 0
        %5499 = vmatmul.mubr.bf16.gmra.mrb[0].mxu0 %v5455
        %v5500 = vpop.f32.mrb[0].mxu0
        %v5501 = vadd.f32 0.0, %v5500
        %v5502 = vpop.f32.mrb[0].mxu0
        %v5503 = vadd.f32 0.0, %v5502
        %v5504 = vpop.f32.mrb[0].mxu0
        %v5505 = vadd.f32 0.0, %v5504
        %v5506 = vpop.f32.mrb[0].mxu0
        %v5507 = vadd.f32 0.0, %v5506
        %5508 = vdwg.mxu0
        %5509 = vmatprep.subr.bf16.mxu0 0
        %5510 = vmatpush1.bf16.msra.mxu0 %v5435
        %5511 = vmatprep.subr.bf16.mxu0 0
        %5512 = vmatpush1.bf16.msra.mxu0 %v5438
        %5513 = vmatprep.subr.bf16.mxu0 0
        %5514 = vmatpush1.bf16.msra.mxu0 %v5441
        %5515 = vmatprep.subr.bf16.mxu0 0
        %5516 = vmatpush1.bf16.msra.mxu0 %v5464
        %5517 = vmatprep.subr.bf16.mxu0 0
        %5518 = vmatpush1.bf16.msra.mxu0 0
        %5519 = vmatprep.subr.bf16.mxu0 0
        %5520 = vmatpush1.bf16.msra.mxu0 0
        %5521 = vmatprep.subr.bf16.mxu0 0
        %5522 = vmatpush1.bf16.msra.mxu0 0
        %5523 = vmatprep.subr.bf16.mxu0 0
        %5524 = vmatpush1.bf16.msra.mxu0 0
        %5525 = vmatprep.subr.bf16.mxu0 0
        %5526 = vmatpush1.bf16.msra.mxu0 0
        %5527 = vmatprep.subr.bf16.mxu0 0
        %5528 = vmatpush1.bf16.msra.mxu0 0
        %5529 = vmatprep.subr.bf16.mxu0 0
        %5530 = vmatpush1.bf16.msra.mxu0 0
        %5531 = vmatprep.subr.bf16.mxu0 0
        %5532 = vmatpush1.bf16.msra.mxu0 0
        %5533 = vmatprep.subr.bf16.mxu0 0
        %5534 = vmatpush1.bf16.msra.mxu0 0
        %5535 = vmatprep.subr.bf16.mxu0 0
        %5536 = vmatpush1.bf16.msra.mxu0 0
        %5537 = vmatprep.subr.bf16.mxu0 0
        %5538 = vmatpush1.bf16.msra.mxu0 0
        %5539 = vmatprep.subr.bf16.mxu0 0
        %5540 = vmatpush1.bf16.msra.mxu0 0
        %5541 = vmatprep.mubr.bf16.mxu0 0
        %5542 = vmatmul.mubr.bf16.gmra.mrb[0].mxu0 %v5455
        %v5543 = vpop.f32.mrb[0].mxu0
        %v5544 = vadd.f32 0.0, %v5543
        %v5545 = vpop.f32.mrb[0].mxu0
        %v5546 = vpop.f32.mrb[0].mxu0
        %v5547 = vadd.f32 0.0, %v5546
        %v5548 = vpop.f32.mrb[0].mxu0
        %5549 = vdwg.mxu0
        %v5550 = vadd.f32 %v5387, %v5501
        %v5551 = vadd.f32 %v5388, %v5503
        %v5552 = vadd.f32 %v5389, %v5544
        %v5553 = vadd.f32 %v5390, %v5505
        %v5554 = vadd.f32 %v5391, %v5507
        %v5555 = vadd.f32 %v5392, %v5547
        %s5556 = scalar_lea.vmem %s13, 56
        %v5557 = vld [vmem:[%s5556] sm:$0xf]
        %v5558 = vld [vmem:[%s5556 + $0x4] sm:$0x3]
        %v5561 = vunpack.c.l.b16 %v5557
        %v5562 = vunpack.c.l.b16 %v5558
        %v5563 = vpack.c.b16 %v5562, %v5561
        %5564 = vrot.lane.b32.xlu0 %v4422, 24
        %v5565 = vpop.permute.xlu0 %5564
        %5566 = vrot.lane.b32.xlu0 %v4423, 24
        %v5567 = vpop.permute.xlu0 %5566
        %5568 = vrot.lane.b32.xlu0 %v4424, 24
        %v5569 = vpop.permute.xlu0 %5568
        %5570 = vrot.lane.b32.xlu0 %v4425, 24
        %v5571 = vpop.permute.xlu0 %5570
        %5572 = vrot.lane.b32.xlu0 %v4426, 24
        %v5573 = vpop.permute.xlu0 %5572
        %5574 = vrot.lane.b32.xlu0 %v4427, 24
        %v5575 = vpop.permute.xlu0 %5574
        %5576 = vrot.lane.b32.xlu0 %v4428, 24
        %v5577 = vpop.permute.xlu0 %5576
        %5578 = vrot.lane.b32.xlu0 %v4429, 24
        %v5579 = vpop.permute.xlu0 %5578
        %5580 = vrot.lane.b32.xlu0 %v4430, 24
        %v5581 = vpop.permute.xlu0 %5580
        %5582 = vrot.lane.b32.xlu0 %v4431, 24
        %v5583 = vpop.permute.xlu0 %5582
        %5584 = vrot.lane.b32.xlu0 %v4432, 24
        %v5585 = vpop.permute.xlu0 %5584
        %5586 = vrot.lane.b32.xlu0 %v4433, 24
        %v5587 = vpop.permute.xlu0 %5586
        %5588 = vrot.lane.b32.xlu0 %v4434, 24
        %v5589 = vpop.permute.xlu0 %5588
        %5590 = vrot.lane.b32.xlu0 %v4435, 24
        %v5591 = vpop.permute.xlu0 %5590
        %5592 = vrot.lane.b32.xlu0 %v4436, 24
        %v5593 = vpop.permute.xlu0 %5592
        %5594 = vrot.lane.b32.xlu0 %v4437, 24
        %v5595 = vpop.permute.xlu0 %5594
        %v5596 = vsel %vm890, %v5565, %v5567
        %v5597 = vsel %vm890, %v5567, %v5569
        %v5598 = vsel %vm890, %v5569, %v5571
        %v5599 = vsel %vm890, %v5573, %v5575
        %v5600 = vsel %vm890, %v5575, %v5577
        %v5601 = vsel %vm890, %v5577, %v5579
        %v5602 = vsel %vm890, %v5581, %v5583
        %v5603 = vsel %vm890, %v5583, %v5585
        %v5604 = vsel %vm890, %v5585, %v5587
        %v5605 = vsel %vm890, %v5589, %v5591
        %v5606 = vsel %vm890, %v5591, %v5593
        %v5607 = vsel %vm890, %v5593, %v5595
        %v5618 = vsel %vm2014, %v5563, 0
        %v5621 = vsel %vm2018, %v5605, 0
        %v5624 = vsel %vm2018, %v5606, 0
        %v5627 = vsel %vm2018, %v5607, 0
        %5629 = vmatprep.subr.bf16.mxu0 %v5597
        %5630 = vmatpush1.bf16.msra.mxu0 %v5596
        %5631 = vmatprep.subr.bf16.mxu0 %v5600
        %5632 = vmatpush1.bf16.msra.mxu0 %v5599
        %5633 = vmatprep.subr.bf16.mxu0 %v5603
        %5634 = vmatpush1.bf16.msra.mxu0 %v5602
        %5635 = vmatprep.subr.bf16.mxu0 %v5624
        %5636 = vmatpush1.bf16.msra.mxu0 %v5621
        %5637 = vmatprep.subr.bf16.mxu0 0
        %5638 = vmatpush1.bf16.msra.mxu0 0
        %5639 = vmatprep.subr.bf16.mxu0 0
        %5640 = vmatpush1.bf16.msra.mxu0 0
        %5641 = vmatprep.subr.bf16.mxu0 0
        %5642 = vmatpush1.bf16.msra.mxu0 0
        %5643 = vmatprep.subr.bf16.mxu0 0
        %5644 = vmatpush1.bf16.msra.mxu0 0
        %5645 = vmatprep.subr.bf16.mxu0 0
        %5646 = vmatpush1.bf16.msra.mxu0 0
        %5647 = vmatprep.subr.bf16.mxu0 0
        %5648 = vmatpush1.bf16.msra.mxu0 0
        %5649 = vmatprep.subr.bf16.mxu0 0
        %5650 = vmatpush1.bf16.msra.mxu0 0
        %5651 = vmatprep.subr.bf16.mxu0 0
        %5652 = vmatpush1.bf16.msra.mxu0 0
        %5653 = vmatprep.subr.bf16.mxu0 0
        %5654 = vmatpush1.bf16.msra.mxu0 0
        %5655 = vmatprep.subr.bf16.mxu0 0
        %5656 = vmatpush1.bf16.msra.mxu0 0
        %5657 = vmatprep.subr.bf16.mxu0 0
        %5658 = vmatpush1.bf16.msra.mxu0 0
        %5659 = vmatprep.subr.bf16.mxu0 0
        %5660 = vmatpush1.bf16.msra.mxu0 0
        %5661 = vmatprep.mubr.bf16.mxu0 0
        %5662 = vmatmul.mubr.bf16.gmra.mrb[0].mxu0 %v5618
        %v5663 = vpop.f32.mrb[0].mxu0
        %v5664 = vadd.f32 0.0, %v5663
        %v5665 = vpop.f32.mrb[0].mxu0
        %v5666 = vadd.f32 0.0, %v5665
        %v5667 = vpop.f32.mrb[0].mxu0
        %v5668 = vadd.f32 0.0, %v5667
        %v5669 = vpop.f32.mrb[0].mxu0
        %v5670 = vadd.f32 0.0, %v5669
        %5671 = vdwg.mxu0
        %5672 = vmatprep.subr.bf16.mxu0 0
        %5673 = vmatpush1.bf16.msra.mxu0 %v5598
        %5674 = vmatprep.subr.bf16.mxu0 0
        %5675 = vmatpush1.bf16.msra.mxu0 %v5601
        %5676 = vmatprep.subr.bf16.mxu0 0
        %5677 = vmatpush1.bf16.msra.mxu0 %v5604
        %5678 = vmatprep.subr.bf16.mxu0 0
        %5679 = vmatpush1.bf16.msra.mxu0 %v5627
        %5680 = vmatprep.subr.bf16.mxu0 0
        %5681 = vmatpush1.bf16.msra.mxu0 0
        %5682 = vmatprep.subr.bf16.mxu0 0
        %5683 = vmatpush1.bf16.msra.mxu0 0
        %5684 = vmatprep.subr.bf16.mxu0 0
        %5685 = vmatpush1.bf16.msra.mxu0 0
        %5686 = vmatprep.subr.bf16.mxu0 0
        %5687 = vmatpush1.bf16.msra.mxu0 0
        %5688 = vmatprep.subr.bf16.mxu0 0
        %5689 = vmatpush1.bf16.msra.mxu0 0
        %5690 = vmatprep.subr.bf16.mxu0 0
        %5691 = vmatpush1.bf16.msra.mxu0 0
        %5692 = vmatprep.subr.bf16.mxu0 0
        %5693 = vmatpush1.bf16.msra.mxu0 0
        %5694 = vmatprep.subr.bf16.mxu0 0
        %5695 = vmatpush1.bf16.msra.mxu0 0
        %5696 = vmatprep.subr.bf16.mxu0 0
        %5697 = vmatpush1.bf16.msra.mxu0 0
        %5698 = vmatprep.subr.bf16.mxu0 0
        %5699 = vmatpush1.bf16.msra.mxu0 0
        %5700 = vmatprep.subr.bf16.mxu0 0
        %5701 = vmatpush1.bf16.msra.mxu0 0
        %5702 = vmatprep.subr.bf16.mxu0 0
        %5703 = vmatpush1.bf16.msra.mxu0 0
        %5704 = vmatprep.mubr.bf16.mxu0 0
        %5705 = vmatmul.mubr.bf16.gmra.mrb[0].mxu0 %v5618
        %v5706 = vpop.f32.mrb[0].mxu0
        %v5707 = vadd.f32 0.0, %v5706
        %v5708 = vpop.f32.mrb[0].mxu0
        %v5709 = vpop.f32.mrb[0].mxu0
        %v5710 = vadd.f32 0.0, %v5709
        %v5711 = vpop.f32.mrb[0].mxu0
        %5712 = vdwg.mxu0
        %v5713 = vadd.f32 %v5550, %v5664
        %v5714 = vadd.f32 %v5551, %v5666
        %v5715 = vadd.f32 %v5552, %v5707
        %v5716 = vadd.f32 %v5553, %v5668
        %v5717 = vadd.f32 %v5554, %v5670
        %v5718 = vadd.f32 %v5555, %v5710
        %s5719 = scalar_lea.vmem %s13, 64
        %v5720 = vld [vmem:[%s5719] sm:$0xf]
        %v5721 = vld [vmem:[%s5719 + $0x4] sm:$0x3]
        %v5724 = vunpack.c.l.b16 %v5720
        %v5725 = vunpack.c.l.b16 %v5721
        %v5726 = vpack.c.b16 %v5725, %v5724
        %5727 = vrot.lane.b32.xlu0 %v4422, 23
        %v5728 = vpop.permute.xlu0 %5727
        %5729 = vrot.lane.b32.xlu0 %v4423, 23
        %v5730 = vpop.permute.xlu0 %5729
        %5731 = vrot.lane.b32.xlu0 %v4424, 23
        %v5732 = vpop.permute.xlu0 %5731
        %5733 = vrot.lane.b32.xlu0 %v4425, 23
        %v5734 = vpop.permute.xlu0 %5733
        %5735 = vrot.lane.b32.xlu0 %v4426, 23
        %v5736 = vpop.permute.xlu0 %5735
        %5737 = vrot.lane.b32.xlu0 %v4427, 23
        %v5738 = vpop.permute.xlu0 %5737
        %5739 = vrot.lane.b32.xlu0 %v4428, 23
        %v5740 = vpop.permute.xlu0 %5739
        %5741 = vrot.lane.b32.xlu0 %v4429, 23
        %v5742 = vpop.permute.xlu0 %5741
        %5743 = vrot.lane.b32.xlu0 %v4430, 23
        %v5744 = vpop.permute.xlu0 %5743
        %5745 = vrot.lane.b32.xlu0 %v4431, 23
        %v5746 = vpop.permute.xlu0 %5745
        %5747 = vrot.lane.b32.xlu0 %v4432, 23
        %v5748 = vpop.permute.xlu0 %5747
        %5749 = vrot.lane.b32.xlu0 %v4433, 23
        %v5750 = vpop.permute.xlu0 %5749
        %5751 = vrot.lane.b32.xlu0 %v4434, 23
        %v5752 = vpop.permute.xlu0 %5751
        %5753 = vrot.lane.b32.xlu0 %v4435, 23
        %v5754 = vpop.permute.xlu0 %5753
        %5755 = vrot.lane.b32.xlu0 %v4436, 23
        %v5756 = vpop.permute.xlu0 %5755
        %5757 = vrot.lane.b32.xlu0 %v4437, 23
        %v5758 = vpop.permute.xlu0 %5757
        %v5759 = vsel %vm921, %v5728, %v5730
        %v5760 = vsel %vm921, %v5730, %v5732
        %v5761 = vsel %vm921, %v5732, %v5734
        %v5762 = vsel %vm921, %v5736, %v5738
        %v5763 = vsel %vm921, %v5738, %v5740
        %v5764 = vsel %vm921, %v5740, %v5742
        %v5765 = vsel %vm921, %v5744, %v5746
        %v5766 = vsel %vm921, %v5746, %v5748
        %v5767 = vsel %vm921, %v5748, %v5750
        %v5768 = vsel %vm921, %v5752, %v5754
        %v5769 = vsel %vm921, %v5754, %v5756
        %v5770 = vsel %vm921, %v5756, %v5758
        %v5781 = vsel %vm2014, %v5726, 0
        %v5784 = vsel %vm2018, %v5768, 0
        %v5787 = vsel %vm2018, %v5769, 0
        %v5790 = vsel %vm2018, %v5770, 0
        %5792 = vmatprep.subr.bf16.mxu0 %v5760
        %5793 = vmatpush1.bf16.msra.mxu0 %v5759
        %5794 = vmatprep.subr.bf16.mxu0 %v5763
        %5795 = vmatpush1.bf16.msra.mxu0 %v5762
        %5796 = vmatprep.subr.bf16.mxu0 %v5766
        %5797 = vmatpush1.bf16.msra.mxu0 %v5765
        %5798 = vmatprep.subr.bf16.mxu0 %v5787
        %5799 = vmatpush1.bf16.msra.mxu0 %v5784
        %5800 = vmatprep.subr.bf16.mxu0 0
        %5801 = vmatpush1.bf16.msra.mxu0 0
        %5802 = vmatprep.subr.bf16.mxu0 0
        %5803 = vmatpush1.bf16.msra.mxu0 0
        %5804 = vmatprep.subr.bf16.mxu0 0
        %5805 = vmatpush1.bf16.msra.mxu0 0
        %5806 = vmatprep.subr.bf16.mxu0 0
        %5807 = vmatpush1.bf16.msra.mxu0 0
        %5808 = vmatprep.subr.bf16.mxu0 0
        %5809 = vmatpush1.bf16.msra.mxu0 0
        %5810 = vmatprep.subr.bf16.mxu0 0
        %5811 = vmatpush1.bf16.msra.mxu0 0
        %5812 = vmatprep.subr.bf16.mxu0 0
        %5813 = vmatpush1.bf16.msra.mxu0 0
        %5814 = vmatprep.subr.bf16.mxu0 0
        %5815 = vmatpush1.bf16.msra.mxu0 0
        %5816 = vmatprep.subr.bf16.mxu0 0
        %5817 = vmatpush1.bf16.msra.mxu0 0
        %5818 = vmatprep.subr.bf16.mxu0 0
        %5819 = vmatpush1.bf16.msra.mxu0 0
        %5820 = vmatprep.subr.bf16.mxu0 0
        %5821 = vmatpush1.bf16.msra.mxu0 0
        %5822 = vmatprep.subr.bf16.mxu0 0
        %5823 = vmatpush1.bf16.msra.mxu0 0
        %5824 = vmatprep.mubr.bf16.mxu0 0
        %5825 = vmatmul.mubr.bf16.gmra.mrb[0].mxu0 %v5781
        %v5826 = vpop.f32.mrb[0].mxu0
        %v5827 = vadd.f32 0.0, %v5826
        %v5828 = vpop.f32.mrb[0].mxu0
        %v5829 = vadd.f32 0.0, %v5828
        %v5830 = vpop.f32.mrb[0].mxu0
        %v5831 = vadd.f32 0.0, %v5830
        %v5832 = vpop.f32.mrb[0].mxu0
        %v5833 = vadd.f32 0.0, %v5832
        %5834 = vdwg.mxu0
        %5835 = vmatprep.subr.bf16.mxu0 0
        %5836 = vmatpush1.bf16.msra.mxu0 %v5761
        %5837 = vmatprep.subr.bf16.mxu0 0
        %5838 = vmatpush1.bf16.msra.mxu0 %v5764
        %5839 = vmatprep.subr.bf16.mxu0 0
        %5840 = vmatpush1.bf16.msra.mxu0 %v5767
        %5841 = vmatprep.subr.bf16.mxu0 0
        %5842 = vmatpush1.bf16.msra.mxu0 %v5790
        %5843 = vmatprep.subr.bf16.mxu0 0
        %5844 = vmatpush1.bf16.msra.mxu0 0
        %5845 = vmatprep.subr.bf16.mxu0 0
        %5846 = vmatpush1.bf16.msra.mxu0 0
        %5847 = vmatprep.subr.bf16.mxu0 0
        %5848 = vmatpush1.bf16.msra.mxu0 0
        %5849 = vmatprep.subr.bf16.mxu0 0
        %5850 = vmatpush1.bf16.msra.mxu0 0
        %5851 = vmatprep.subr.bf16.mxu0 0
        %5852 = vmatpush1.bf16.msra.mxu0 0
        %5853 = vmatprep.subr.bf16.mxu0 0
        %5854 = vmatpush1.bf16.msra.mxu0 0
        %5855 = vmatprep.subr.bf16.mxu0 0
        %5856 = vmatpush1.bf16.msra.mxu0 0
        %5857 = vmatprep.subr.bf16.mxu0 0
        %5858 = vmatpush1.bf16.msra.mxu0 0
        %5859 = vmatprep.subr.bf16.mxu0 0
        %5860 = vmatpush1.bf16.msra.mxu0 0
        %5861 = vmatprep.subr.bf16.mxu0 0
        %5862 = vmatpush1.bf16.msra.mxu0 0
        %5863 = vmatprep.subr.bf16.mxu0 0
        %5864 = vmatpush1.bf16.msra.mxu0 0
        %5865 = vmatprep.subr.bf16.mxu0 0
        %5866 = vmatpush1.bf16.msra.mxu0 0
        %5867 = vmatprep.mubr.bf16.mxu0 0
        %5868 = vmatmul.mubr.bf16.gmra.mrb[0].mxu0 %v5781
        %v5869 = vpop.f32.mrb[0].mxu0
        %v5870 = vadd.f32 0.0, %v5869
        %v5871 = vpop.f32.mrb[0].mxu0
        %v5872 = vpop.f32.mrb[0].mxu0
        %v5873 = vadd.f32 0.0, %v5872
        %v5874 = vpop.f32.mrb[0].mxu0
        %5875 = vdwg.mxu0
        %v5876 = vadd.f32 %v5713, %v5827
        %v5877 = vadd.f32 %v5714, %v5829
        %v5878 = vadd.f32 %v5715, %v5870
        %v5879 = vadd.f32 %v5716, %v5831
        %v5880 = vadd.f32 %v5717, %v5833
        %v5881 = vadd.f32 %v5718, %v5873
        %s5882 = scalar_lea.vmem %s13, 72
        %v5883 = vld [vmem:[%s5882] sm:$0xf]
        %v5884 = vld [vmem:[%s5882 + $0x4] sm:$0x3]
        %v5887 = vunpack.c.l.b16 %v5883
        %v5888 = vunpack.c.l.b16 %v5884
        %v5889 = vpack.c.b16 %v5888, %v5887
        %5890 = vrot.lane.b32.xlu0 %v4422, 22
        %v5891 = vpop.permute.xlu0 %5890
        %5892 = vrot.lane.b32.xlu0 %v4423, 22
        %v5893 = vpop.permute.xlu0 %5892
        %5894 = vrot.lane.b32.xlu0 %v4424, 22
        %v5895 = vpop.permute.xlu0 %5894
        %5896 = vrot.lane.b32.xlu0 %v4425, 22
        %v5897 = vpop.permute.xlu0 %5896
        %5898 = vrot.lane.b32.xlu0 %v4426, 22
        %v5899 = vpop.permute.xlu0 %5898
        %5900 = vrot.lane.b32.xlu0 %v4427, 22
        %v5901 = vpop.permute.xlu0 %5900
        %5902 = vrot.lane.b32.xlu0 %v4428, 22
        %v5903 = vpop.permute.xlu0 %5902
        %5904 = vrot.lane.b32.xlu0 %v4429, 22
        %v5905 = vpop.permute.xlu0 %5904
        %5906 = vrot.lane.b32.xlu0 %v4430, 22
        %v5907 = vpop.permute.xlu0 %5906
        %5908 = vrot.lane.b32.xlu0 %v4431, 22
        %v5909 = vpop.permute.xlu0 %5908
        %5910 = vrot.lane.b32.xlu0 %v4432, 22
        %v5911 = vpop.permute.xlu0 %5910
        %5912 = vrot.lane.b32.xlu0 %v4433, 22
        %v5913 = vpop.permute.xlu0 %5912
        %5914 = vrot.lane.b32.xlu0 %v4434, 22
        %v5915 = vpop.permute.xlu0 %5914
        %5916 = vrot.lane.b32.xlu0 %v4435, 22
        %v5917 = vpop.permute.xlu0 %5916
        %5918 = vrot.lane.b32.xlu0 %v4436, 22
        %v5919 = vpop.permute.xlu0 %5918
        %5920 = vrot.lane.b32.xlu0 %v4437, 22
        %v5921 = vpop.permute.xlu0 %5920
        %v5922 = vsel %vm952, %v5891, %v5893
        %v5923 = vsel %vm952, %v5893, %v5895
        %v5924 = vsel %vm952, %v5895, %v5897
        %v5925 = vsel %vm952, %v5899, %v5901
        %v5926 = vsel %vm952, %v5901, %v5903
        %v5927 = vsel %vm952, %v5903, %v5905
        %v5928 = vsel %vm952, %v5907, %v5909
        %v5929 = vsel %vm952, %v5909, %v5911
        %v5930 = vsel %vm952, %v5911, %v5913
        %v5931 = vsel %vm952, %v5915, %v5917
        %v5932 = vsel %vm952, %v5917, %v5919
        %v5933 = vsel %vm952, %v5919, %v5921
        %v5944 = vsel %vm2014, %v5889, 0
        %v5947 = vsel %vm2018, %v5931, 0
        %v5950 = vsel %vm2018, %v5932, 0
        %v5953 = vsel %vm2018, %v5933, 0
        %5955 = vmatprep.subr.bf16.mxu0 %v5923
        %5956 = vmatpush1.bf16.msra.mxu0 %v5922
        %5957 = vmatprep.subr.bf16.mxu0 %v5926
        %5958 = vmatpush1.bf16.msra.mxu0 %v5925
        %5959 = vmatprep.subr.bf16.mxu0 %v5929
        %5960 = vmatpush1.bf16.msra.mxu0 %v5928
        %5961 = vmatprep.subr.bf16.mxu0 %v5950
        %5962 = vmatpush1.bf16.msra.mxu0 %v5947
        %5963 = vmatprep.subr.bf16.mxu0 0
        %5964 = vmatpush1.bf16.msra.mxu0 0
        %5965 = vmatprep.subr.bf16.mxu0 0
        %5966 = vmatpush1.bf16.msra.mxu0 0
        %5967 = vmatprep.subr.bf16.mxu0 0
        %5968 = vmatpush1.bf16.msra.mxu0 0
        %5969 = vmatprep.subr.bf16.mxu0 0
        %5970 = vmatpush1.bf16.msra.mxu0 0
        %5971 = vmatprep.subr.bf16.mxu0 0
        %5972 = vmatpush1.bf16.msra.mxu0 0
        %5973 = vmatprep.subr.bf16.mxu0 0
        %5974 = vmatpush1.bf16.msra.mxu0 0
        %5975 = vmatprep.subr.bf16.mxu0 0
        %5976 = vmatpush1.bf16.msra.mxu0 0
        %5977 = vmatprep.subr.bf16.mxu0 0
        %5978 = vmatpush1.bf16.msra.mxu0 0
        %5979 = vmatprep.subr.bf16.mxu0 0
        %5980 = vmatpush1.bf16.msra.mxu0 0
        %5981 = vmatprep.subr.bf16.mxu0 0
        %5982 = vmatpush1.bf16.msra.mxu0 0
        %5983 = vmatprep.subr.bf16.mxu0 0
        %5984 = vmatpush1.bf16.msra.mxu0 0
        %5985 = vmatprep.subr.bf16.mxu0 0
        %5986 = vmatpush1.bf16.msra.mxu0 0
        %5987 = vmatprep.mubr.bf16.mxu0 0
        %5988 = vmatmul.mubr.bf16.gmra.mrb[0].mxu0 %v5944
        %v5989 = vpop.f32.mrb[0].mxu0
        %v5990 = vadd.f32 0.0, %v5989
        %v5991 = vpop.f32.mrb[0].mxu0
        %v5992 = vadd.f32 0.0, %v5991
        %v5993 = vpop.f32.mrb[0].mxu0
        %v5994 = vadd.f32 0.0, %v5993
        %v5995 = vpop.f32.mrb[0].mxu0
        %v5996 = vadd.f32 0.0, %v5995
        %5997 = vdwg.mxu0
        %5998 = vmatprep.subr.bf16.mxu0 0
        %5999 = vmatpush1.bf16.msra.mxu0 %v5924
        %6000 = vmatprep.subr.bf16.mxu0 0
        %6001 = vmatpush1.bf16.msra.mxu0 %v5927
        %6002 = vmatprep.subr.bf16.mxu0 0
        %6003 = vmatpush1.bf16.msra.mxu0 %v5930
        %6004 = vmatprep.subr.bf16.mxu0 0
        %6005 = vmatpush1.bf16.msra.mxu0 %v5953
        %6006 = vmatprep.subr.bf16.mxu0 0
        %6007 = vmatpush1.bf16.msra.mxu0 0
        %6008 = vmatprep.subr.bf16.mxu0 0
        %6009 = vmatpush1.bf16.msra.mxu0 0
        %6010 = vmatprep.subr.bf16.mxu0 0
        %6011 = vmatpush1.bf16.msra.mxu0 0
        %6012 = vmatprep.subr.bf16.mxu0 0
        %6013 = vmatpush1.bf16.msra.mxu0 0
        %6014 = vmatprep.subr.bf16.mxu0 0
        %6015 = vmatpush1.bf16.msra.mxu0 0
        %6016 = vmatprep.subr.bf16.mxu0 0
        %6017 = vmatpush1.bf16.msra.mxu0 0
        %6018 = vmatprep.subr.bf16.mxu0 0
        %6019 = vmatpush1.bf16.msra.mxu0 0
        %6020 = vmatprep.subr.bf16.mxu0 0
        %6021 = vmatpush1.bf16.msra.mxu0 0
        %6022 = vmatprep.subr.bf16.mxu0 0
        %6023 = vmatpush1.bf16.msra.mxu0 0
        %6024 = vmatprep.subr.bf16.mxu0 0
        %6025 = vmatpush1.bf16.msra.mxu0 0
        %6026 = vmatprep.subr.bf16.mxu0 0
        %6027 = vmatpush1.bf16.msra.mxu0 0
        %6028 = vmatprep.subr.bf16.mxu0 0
        %6029 = vmatpush1.bf16.msra.mxu0 0
        %6030 = vmatprep.mubr.bf16.mxu0 0
        %6031 = vmatmul.mubr.bf16.gmra.mrb[0].mxu0 %v5944
        %v6032 = vpop.f32.mrb[0].mxu0
        %v6033 = vadd.f32 0.0, %v6032
        %v6034 = vpop.f32.mrb[0].mxu0
        %v6035 = vpop.f32.mrb[0].mxu0
        %v6036 = vadd.f32 0.0, %v6035
        %v6037 = vpop.f32.mrb[0].mxu0
        %6038 = vdwg.mxu0
        %v6039 = vadd.f32 %v5876, %v5990
        %v6040 = vadd.f32 %v5877, %v5992
        %v6041 = vadd.f32 %v5878, %v6033
        %v6042 = vadd.f32 %v5879, %v5994
        %v6043 = vadd.f32 %v5880, %v5996
        %v6044 = vadd.f32 %v5881, %v6036
        %s6045 = scalar_lea.vmem %s13, 80
        %v6046 = vld [vmem:[%s6045] sm:$0xf]
        %v6047 = vld [vmem:[%s6045 + $0x4] sm:$0x3]
        %v6050 = vunpack.c.l.b16 %v6046
        %v6051 = vunpack.c.l.b16 %v6047
        %v6052 = vpack.c.b16 %v6051, %v6050
        %6053 = vrot.lane.b32.xlu0 %v4422, 2
        %v6054 = vpop.permute.xlu0 %6053
        %6055 = vrot.lane.b32.xlu0 %v4423, 2
        %v6056 = vpop.permute.xlu0 %6055
        %6057 = vrot.lane.b32.xlu0 %v4424, 2
        %v6058 = vpop.permute.xlu0 %6057
        %6059 = vrot.lane.b32.xlu0 %v4425, 2
        %v6060 = vpop.permute.xlu0 %6059
        %6061 = vrot.lane.b32.xlu0 %v4426, 2
        %v6062 = vpop.permute.xlu0 %6061
        %6063 = vrot.lane.b32.xlu0 %v4427, 2
        %v6064 = vpop.permute.xlu0 %6063
        %6065 = vrot.lane.b32.xlu0 %v4428, 2
        %v6066 = vpop.permute.xlu0 %6065
        %6067 = vrot.lane.b32.xlu0 %v4429, 2
        %v6068 = vpop.permute.xlu0 %6067
        %6069 = vrot.lane.b32.xlu0 %v4430, 2
        %v6070 = vpop.permute.xlu0 %6069
        %6071 = vrot.lane.b32.xlu0 %v4431, 2
        %v6072 = vpop.permute.xlu0 %6071
        %6073 = vrot.lane.b32.xlu0 %v4432, 2
        %v6074 = vpop.permute.xlu0 %6073
        %6075 = vrot.lane.b32.xlu0 %v4433, 2
        %v6076 = vpop.permute.xlu0 %6075
        %6077 = vrot.lane.b32.xlu0 %v4434, 2
        %v6078 = vpop.permute.xlu0 %6077
        %6079 = vrot.lane.b32.xlu0 %v4435, 2
        %v6080 = vpop.permute.xlu0 %6079
        %6081 = vrot.lane.b32.xlu0 %v4436, 2
        %v6082 = vpop.permute.xlu0 %6081
        %6083 = vrot.lane.b32.xlu0 %v4437, 2
        %v6084 = vpop.permute.xlu0 %6083
        %v6085 = vsel %vm983, %v6054, %v6056
        %v6086 = vsel %vm983, %v6056, %v6058
        %v6087 = vsel %vm983, %v6058, %v6060
        %v6088 = vsel %vm983, %v6062, %v6064
        %v6089 = vsel %vm983, %v6064, %v6066
        %v6090 = vsel %vm983, %v6066, %v6068
        %v6091 = vsel %vm983, %v6070, %v6072
        %v6092 = vsel %vm983, %v6072, %v6074
        %v6093 = vsel %vm983, %v6074, %v6076
        %v6094 = vsel %vm983, %v6078, %v6080
        %v6095 = vsel %vm983, %v6080, %v6082
        %v6096 = vsel %vm983, %v6082, %v6084
        %v6107 = vsel %vm2014, %v6052, 0
        %v6110 = vsel %vm2018, %v6094, 0
        %v6113 = vsel %vm2018, %v6095, 0
        %v6116 = vsel %vm2018, %v6096, 0
        %6118 = vmatprep.subr.bf16.mxu0 %v6086
        %6119 = vmatpush1.bf16.msra.mxu0 %v6085
        %6120 = vmatprep.subr.bf16.mxu0 %v6089
        %6121 = vmatpush1.bf16.msra.mxu0 %v6088
        %6122 = vmatprep.subr.bf16.mxu0 %v6092
        %6123 = vmatpush1.bf16.msra.mxu0 %v6091
        %6124 = vmatprep.subr.bf16.mxu0 %v6113
        %6125 = vmatpush1.bf16.msra.mxu0 %v6110
        %6126 = vmatprep.subr.bf16.mxu0 0
        %6127 = vmatpush1.bf16.msra.mxu0 0
        %6128 = vmatprep.subr.bf16.mxu0 0
        %6129 = vmatpush1.bf16.msra.mxu0 0
        %6130 = vmatprep.subr.bf16.mxu0 0
        %6131 = vmatpush1.bf16.msra.mxu0 0
        %6132 = vmatprep.subr.bf16.mxu0 0
        %6133 = vmatpush1.bf16.msra.mxu0 0
        %6134 = vmatprep.subr.bf16.mxu0 0
        %6135 = vmatpush1.bf16.msra.mxu0 0
        %6136 = vmatprep.subr.bf16.mxu0 0
        %6137 = vmatpush1.bf16.msra.mxu0 0
        %6138 = vmatprep.subr.bf16.mxu0 0
        %6139 = vmatpush1.bf16.msra.mxu0 0
        %6140 = vmatprep.subr.bf16.mxu0 0
        %6141 = vmatpush1.bf16.msra.mxu0 0
        %6142 = vmatprep.subr.bf16.mxu0 0
        %6143 = vmatpush1.bf16.msra.mxu0 0
        %6144 = vmatprep.subr.bf16.mxu0 0
        %6145 = vmatpush1.bf16.msra.mxu0 0
        %6146 = vmatprep.subr.bf16.mxu0 0
        %6147 = vmatpush1.bf16.msra.mxu0 0
        %6148 = vmatprep.subr.bf16.mxu0 0
        %6149 = vmatpush1.bf16.msra.mxu0 0
        %6150 = vmatprep.mubr.bf16.mxu0 0
        %6151 = vmatmul.mubr.bf16.gmra.mrb[0].mxu0 %v6107
        %v6152 = vpop.f32.mrb[0].mxu0
        %v6153 = vadd.f32 0.0, %v6152
        %v6154 = vpop.f32.mrb[0].mxu0
        %v6155 = vadd.f32 0.0, %v6154
        %v6156 = vpop.f32.mrb[0].mxu0
        %v6157 = vadd.f32 0.0, %v6156
        %v6158 = vpop.f32.mrb[0].mxu0
        %v6159 = vadd.f32 0.0, %v6158
        %6160 = vdwg.mxu0
        %6161 = vmatprep.subr.bf16.mxu0 0
        %6162 = vmatpush1.bf16.msra.mxu0 %v6087
        %6163 = vmatprep.subr.bf16.mxu0 0
        %6164 = vmatpush1.bf16.msra.mxu0 %v6090
        %6165 = vmatprep.subr.bf16.mxu0 0
        %6166 = vmatpush1.bf16.msra.mxu0 %v6093
        %6167 = vmatprep.subr.bf16.mxu0 0
        %6168 = vmatpush1.bf16.msra.mxu0 %v6116
        %6169 = vmatprep.subr.bf16.mxu0 0
        %6170 = vmatpush1.bf16.msra.mxu0 0
        %6171 = vmatprep.subr.bf16.mxu0 0
        %6172 = vmatpush1.bf16.msra.mxu0 0
        %6173 = vmatprep.subr.bf16.mxu0 0
        %6174 = vmatpush1.bf16.msra.mxu0 0
        %6175 = vmatprep.subr.bf16.mxu0 0
        %6176 = vmatpush1.bf16.msra.mxu0 0
        %6177 = vmatprep.subr.bf16.mxu0 0
        %6178 = vmatpush1.bf16.msra.mxu0 0
        %6179 = vmatprep.subr.bf16.mxu0 0
        %6180 = vmatpush1.bf16.msra.mxu0 0
        %6181 = vmatprep.subr.bf16.mxu0 0
        %6182 = vmatpush1.bf16.msra.mxu0 0
        %6183 = vmatprep.subr.bf16.mxu0 0
        %6184 = vmatpush1.bf16.msra.mxu0 0
        %6185 = vmatprep.subr.bf16.mxu0 0
        %6186 = vmatpush1.bf16.msra.mxu0 0
        %6187 = vmatprep.subr.bf16.mxu0 0
        %6188 = vmatpush1.bf16.msra.mxu0 0
        %6189 = vmatprep.subr.bf16.mxu0 0
        %6190 = vmatpush1.bf16.msra.mxu0 0
        %6191 = vmatprep.subr.bf16.mxu0 0
        %6192 = vmatpush1.bf16.msra.mxu0 0
        %6193 = vmatprep.mubr.bf16.mxu0 0
        %6194 = vmatmul.mubr.bf16.gmra.mrb[0].mxu0 %v6107
        %v6195 = vpop.f32.mrb[0].mxu0
        %v6196 = vadd.f32 0.0, %v6195
        %v6197 = vpop.f32.mrb[0].mxu0
        %v6198 = vpop.f32.mrb[0].mxu0
        %v6199 = vadd.f32 0.0, %v6198
        %v6200 = vpop.f32.mrb[0].mxu0
        %6201 = vdwg.mxu0
        %v6202 = vadd.f32 %v6039, %v6153
        %v6203 = vadd.f32 %v6040, %v6155
        %v6204 = vadd.f32 %v6041, %v6196
        %v6205 = vadd.f32 %v6042, %v6157
        %v6206 = vadd.f32 %v6043, %v6159
        %v6207 = vadd.f32 %v6044, %v6199
        %s6208 = scalar_lea.vmem %s13, 88
        %v6209 = vld [vmem:[%s6208] sm:$0xf]
        %v6210 = vld [vmem:[%s6208 + $0x4] sm:$0x3]
        %v6213 = vunpack.c.l.b16 %v6209
        %v6214 = vunpack.c.l.b16 %v6210
        %v6215 = vpack.c.b16 %v6214, %v6213
        %6216 = vrot.lane.b32.xlu0 %v4422, 1
        %v6217 = vpop.permute.xlu0 %6216
        %6218 = vrot.lane.b32.xlu0 %v4423, 1
        %v6219 = vpop.permute.xlu0 %6218
        %6220 = vrot.lane.b32.xlu0 %v4424, 1
        %v6221 = vpop.permute.xlu0 %6220
        %6222 = vrot.lane.b32.xlu0 %v4425, 1
        %v6223 = vpop.permute.xlu0 %6222
        %6224 = vrot.lane.b32.xlu0 %v4426, 1
        %v6225 = vpop.permute.xlu0 %6224
        %6226 = vrot.lane.b32.xlu0 %v4427, 1
        %v6227 = vpop.permute.xlu0 %6226
        %6228 = vrot.lane.b32.xlu0 %v4428, 1
        %v6229 = vpop.permute.xlu0 %6228
        %6230 = vrot.lane.b32.xlu0 %v4429, 1
        %v6231 = vpop.permute.xlu0 %6230
        %6232 = vrot.lane.b32.xlu0 %v4430, 1
        %v6233 = vpop.permute.xlu0 %6232
        %6234 = vrot.lane.b32.xlu0 %v4431, 1
        %v6235 = vpop.permute.xlu0 %6234
        %6236 = vrot.lane.b32.xlu0 %v4432, 1
        %v6237 = vpop.permute.xlu0 %6236
        %6238 = vrot.lane.b32.xlu0 %v4433, 1
        %v6239 = vpop.permute.xlu0 %6238
        %6240 = vrot.lane.b32.xlu0 %v4434, 1
        %v6241 = vpop.permute.xlu0 %6240
        %6242 = vrot.lane.b32.xlu0 %v4435, 1
        %v6243 = vpop.permute.xlu0 %6242
        %6244 = vrot.lane.b32.xlu0 %v4436, 1
        %v6245 = vpop.permute.xlu0 %6244
        %6246 = vrot.lane.b32.xlu0 %v4437, 1
        %v6247 = vpop.permute.xlu0 %6246
        %v6248 = vsel %vm1014, %v6217, %v6219
        %v6249 = vsel %vm1014, %v6219, %v6221
        %v6250 = vsel %vm1014, %v6221, %v6223
        %v6251 = vsel %vm1014, %v6225, %v6227
        %v6252 = vsel %vm1014, %v6227, %v6229
        %v6253 = vsel %vm1014, %v6229, %v6231
        %v6254 = vsel %vm1014, %v6233, %v6235
        %v6255 = vsel %vm1014, %v6235, %v6237
        %v6256 = vsel %vm1014, %v6237, %v6239
        %v6257 = vsel %vm1014, %v6241, %v6243
        %v6258 = vsel %vm1014, %v6243, %v6245
        %v6259 = vsel %vm1014, %v6245, %v6247
        %v6270 = vsel %vm2014, %v6215, 0
        %v6273 = vsel %vm2018, %v6257, 0
        %v6276 = vsel %vm2018, %v6258, 0
        %v6279 = vsel %vm2018, %v6259, 0
        %6281 = vmatprep.subr.bf16.mxu0 %v6249
        %6282 = vmatpush1.bf16.msra.mxu0 %v6248
        %6283 = vmatprep.subr.bf16.mxu0 %v6252
        %6284 = vmatpush1.bf16.msra.mxu0 %v6251
        %6285 = vmatprep.subr.bf16.mxu0 %v6255
        %6286 = vmatpush1.bf16.msra.mxu0 %v6254
        %6287 = vmatprep.subr.bf16.mxu0 %v6276
        %6288 = vmatpush1.bf16.msra.mxu0 %v6273
        %6289 = vmatprep.subr.bf16.mxu0 0
        %6290 = vmatpush1.bf16.msra.mxu0 0
        %6291 = vmatprep.subr.bf16.mxu0 0
        %6292 = vmatpush1.bf16.msra.mxu0 0
        %6293 = vmatprep.subr.bf16.mxu0 0
        %6294 = vmatpush1.bf16.msra.mxu0 0
        %6295 = vmatprep.subr.bf16.mxu0 0
        %6296 = vmatpush1.bf16.msra.mxu0 0
        %6297 = vmatprep.subr.bf16.mxu0 0
        %6298 = vmatpush1.bf16.msra.mxu0 0
        %6299 = vmatprep.subr.bf16.mxu0 0
        %6300 = vmatpush1.bf16.msra.mxu0 0
        %6301 = vmatprep.subr.bf16.mxu0 0
        %6302 = vmatpush1.bf16.msra.mxu0 0
        %6303 = vmatprep.subr.bf16.mxu0 0
        %6304 = vmatpush1.bf16.msra.mxu0 0
        %6305 = vmatprep.subr.bf16.mxu0 0
        %6306 = vmatpush1.bf16.msra.mxu0 0
        %6307 = vmatprep.subr.bf16.mxu0 0
        %6308 = vmatpush1.bf16.msra.mxu0 0
        %6309 = vmatprep.subr.bf16.mxu0 0
        %6310 = vmatpush1.bf16.msra.mxu0 0
        %6311 = vmatprep.subr.bf16.mxu0 0
        %6312 = vmatpush1.bf16.msra.mxu0 0
        %6313 = vmatprep.mubr.bf16.mxu0 0
        %6314 = vmatmul.mubr.bf16.gmra.mrb[0].mxu0 %v6270
        %v6315 = vpop.f32.mrb[0].mxu0
        %v6316 = vadd.f32 0.0, %v6315
        %v6317 = vpop.f32.mrb[0].mxu0
        %v6318 = vadd.f32 0.0, %v6317
        %v6319 = vpop.f32.mrb[0].mxu0
        %v6320 = vadd.f32 0.0, %v6319
        %v6321 = vpop.f32.mrb[0].mxu0
        %v6322 = vadd.f32 0.0, %v6321
        %6323 = vdwg.mxu0
        %6324 = vmatprep.subr.bf16.mxu0 0
        %6325 = vmatpush1.bf16.msra.mxu0 %v6250
        %6326 = vmatprep.subr.bf16.mxu0 0
        %6327 = vmatpush1.bf16.msra.mxu0 %v6253
        %6328 = vmatprep.subr.bf16.mxu0 0
        %6329 = vmatpush1.bf16.msra.mxu0 %v6256
        %6330 = vmatprep.subr.bf16.mxu0 0
        %6331 = vmatpush1.bf16.msra.mxu0 %v6279
        %6332 = vmatprep.subr.bf16.mxu0 0
        %6333 = vmatpush1.bf16.msra.mxu0 0
        %6334 = vmatprep.subr.bf16.mxu0 0
        %6335 = vmatpush1.bf16.msra.mxu0 0
        %6336 = vmatprep.subr.bf16.mxu0 0
        %6337 = vmatpush1.bf16.msra.mxu0 0
        %6338 = vmatprep.subr.bf16.mxu0 0
        %6339 = vmatpush1.bf16.msra.mxu0 0
        %6340 = vmatprep.subr.bf16.mxu0 0
        %6341 = vmatpush1.bf16.msra.mxu0 0
        %6342 = vmatprep.subr.bf16.mxu0 0
        %6343 = vmatpush1.bf16.msra.mxu0 0
        %6344 = vmatprep.subr.bf16.mxu0 0
        %6345 = vmatpush1.bf16.msra.mxu0 0
        %6346 = vmatprep.subr.bf16.mxu0 0
        %6347 = vmatpush1.bf16.msra.mxu0 0
        %6348 = vmatprep.subr.bf16.mxu0 0
        %6349 = vmatpush1.bf16.msra.mxu0 0
        %6350 = vmatprep.subr.bf16.mxu0 0
        %6351 = vmatpush1.bf16.msra.mxu0 0
        %6352 = vmatprep.subr.bf16.mxu0 0
        %6353 = vmatpush1.bf16.msra.mxu0 0
        %6354 = vmatprep.subr.bf16.mxu0 0
        %6355 = vmatpush1.bf16.msra.mxu0 0
        %6356 = vmatprep.mubr.bf16.mxu0 0
        %6357 = vmatmul.mubr.bf16.gmra.mrb[0].mxu0 %v6270
        %v6358 = vpop.f32.mrb[0].mxu0
        %v6359 = vadd.f32 0.0, %v6358
        %v6360 = vpop.f32.mrb[0].mxu0
        %v6361 = vpop.f32.mrb[0].mxu0
        %v6362 = vadd.f32 0.0, %v6361
        %v6363 = vpop.f32.mrb[0].mxu0
        %6364 = vdwg.mxu0
        %v6365 = vadd.f32 %v6202, %v6316
        %v6366 = vadd.f32 %v6203, %v6318
        %v6367 = vadd.f32 %v6204, %v6359
        %v6368 = vadd.f32 %v6205, %v6320
        %v6369 = vadd.f32 %v6206, %v6322
        %v6370 = vadd.f32 %v6207, %v6362
        %s6371 = scalar_lea.vmem %s13, 96
        %v6372 = vld [vmem:[%s6371] sm:$0xf]
        %v6373 = vld [vmem:[%s6371 + $0x4] sm:$0x3]
        %v6374 = vld [vmem:[#allocation2 + $0x4] sm:$0xff]
        %v6375 = vld [vmem:[#allocation2 + $0xc] sm:$0xf]
        %v6376 = vld [vmem:[#allocation2 + $0x18] sm:$0xff]
        %v6377 = vld [vmem:[#allocation2 + $0x20] sm:$0xf]
        %v6378 = vld [vmem:[#allocation2 + $0x2c] sm:$0xff]
        %v6379 = vld [vmem:[#allocation2 + $0x34] sm:$0xf]
        %v6380 = vld [vmem:[#allocation2 + $0x40] sm:$0xff]
        %v6381 = vld [vmem:[#allocation2 + $0x48] sm:$0xf]
        %v6382 = vld [vmem:[#allocation2 + $0x54] sm:$0xff]
        %v6383 = vld [vmem:[#allocation2 + $0x5c] sm:$0xf]
        %v6384 = vld [vmem:[#allocation2 + $0x68] sm:$0xff]
        %v6385 = vld [vmem:[#allocation2 + $0x70] sm:$0xf]
        %v6386 = vld [vmem:[#allocation2 + $0x7c] sm:$0xff]
        %v6387 = vld [vmem:[#allocation2 + $0x84] sm:$0xf]
        %v6390 = vunpack.c.l.b16 %v6372
        %v6391 = vunpack.c.l.b16 %v6373
        %v6392 = vpack.c.b16 %v6391, %v6390
        %v6407 = vunpack.c.l.b16 %v6374
        %v6408 = vunpack.c.h.b16 %v6374
        %v6409 = vunpack.c.l.b16 %v6375
        %v6410 = vunpack.c.l.b16 %v6376
        %v6411 = vunpack.c.h.b16 %v6376
        %v6412 = vunpack.c.l.b16 %v6377
        %v6413 = vunpack.c.l.b16 %v6378
        %v6414 = vunpack.c.h.b16 %v6378
        %v6415 = vunpack.c.l.b16 %v6379
        %v6416 = vunpack.c.l.b16 %v6380
        %v6417 = vunpack.c.h.b16 %v6380
        %v6418 = vunpack.c.l.b16 %v6381
        %v6419 = vunpack.c.l.b16 %v6382
        %v6420 = vunpack.c.h.b16 %v6382
        %v6421 = vunpack.c.l.b16 %v6383
        %v6422 = vunpack.c.l.b16 %v6384
        %v6423 = vunpack.c.h.b16 %v6384
        %v6424 = vunpack.c.l.b16 %v6385
        %v6425 = vunpack.c.l.b16 %v6386
        %v6426 = vunpack.c.h.b16 %v6386
        %v6427 = vunpack.c.l.b16 %v6387
        %v6428 = vpack.c.b16 %v6410, %v6407
        %v6429 = vpack.c.b16 %v6411, %v6408
        %v6430 = vpack.c.b16 %v6412, %v6409
        %v6431 = vpack.c.b16 %v6416, %v6413
        %v6432 = vpack.c.b16 %v6417, %v6414
        %v6433 = vpack.c.b16 %v6418, %v6415
        %v6434 = vpack.c.b16 %v6422, %v6419
        %v6435 = vpack.c.b16 %v6423, %v6420
        %v6436 = vpack.c.b16 %v6424, %v6421
        %v6437 = vpack.c.b16 %v6425, %v6425
        %v6438 = vpack.c.b16 %v6426, %v6426
        %v6439 = vpack.c.b16 %v6427, %v6427
        %v6450 = vsel %vm2014, %v6392, 0
        %v6453 = vsel %vm2018, %v6437, 0
        %v6456 = vsel %vm2018, %v6438, 0
        %v6459 = vsel %vm2018, %v6439, 0
        %6461 = vmatprep.subr.bf16.mxu0 %v6429
        %6462 = vmatpush1.bf16.msra.mxu0 %v6428
        %6463 = vmatprep.subr.bf16.mxu0 %v6432
        %6464 = vmatpush1.bf16.msra.mxu0 %v6431
        %6465 = vmatprep.subr.bf16.mxu0 %v6435
        %6466 = vmatpush1.bf16.msra.mxu0 %v6434
        %6467 = vmatprep.subr.bf16.mxu0 %v6456
        %6468 = vmatpush1.bf16.msra.mxu0 %v6453
        %6469 = vmatprep.subr.bf16.mxu0 0
        %6470 = vmatpush1.bf16.msra.mxu0 0
        %6471 = vmatprep.subr.bf16.mxu0 0
        %6472 = vmatpush1.bf16.msra.mxu0 0
        %6473 = vmatprep.subr.bf16.mxu0 0
        %6474 = vmatpush1.bf16.msra.mxu0 0
        %6475 = vmatprep.subr.bf16.mxu0 0
        %6476 = vmatpush1.bf16.msra.mxu0 0
        %6477 = vmatprep.subr.bf16.mxu0 0
        %6478 = vmatpush1.bf16.msra.mxu0 0
        %6479 = vmatprep.subr.bf16.mxu0 0
        %6480 = vmatpush1.bf16.msra.mxu0 0
        %6481 = vmatprep.subr.bf16.mxu0 0
        %6482 = vmatpush1.bf16.msra.mxu0 0
        %6483 = vmatprep.subr.bf16.mxu0 0
        %6484 = vmatpush1.bf16.msra.mxu0 0
        %6485 = vmatprep.subr.bf16.mxu0 0
        %6486 = vmatpush1.bf16.msra.mxu0 0
        %6487 = vmatprep.subr.bf16.mxu0 0
        %6488 = vmatpush1.bf16.msra.mxu0 0
        %6489 = vmatprep.subr.bf16.mxu0 0
        %6490 = vmatpush1.bf16.msra.mxu0 0
        %6491 = vmatprep.subr.bf16.mxu0 0
        %6492 = vmatpush1.bf16.msra.mxu0 0
        %6493 = vmatprep.mubr.bf16.mxu0 0
        %6494 = vmatmul.mubr.bf16.gmra.mrb[0].mxu0 %v6450
        %v6495 = vpop.f32.mrb[0].mxu0
        %v6496 = vadd.f32 0.0, %v6495
        %v6497 = vpop.f32.mrb[0].mxu0
        %v6498 = vadd.f32 0.0, %v6497
        %v6499 = vpop.f32.mrb[0].mxu0
        %v6500 = vadd.f32 0.0, %v6499
        %v6501 = vpop.f32.mrb[0].mxu0
        %v6502 = vadd.f32 0.0, %v6501
        %6503 = vdwg.mxu0
        %6504 = vmatprep.subr.bf16.mxu0 0
        %6505 = vmatpush1.bf16.msra.mxu0 %v6430
        %6506 = vmatprep.subr.bf16.mxu0 0
        %6507 = vmatpush1.bf16.msra.mxu0 %v6433
        %6508 = vmatprep.subr.bf16.mxu0 0
        %6509 = vmatpush1.bf16.msra.mxu0 %v6436
        %6510 = vmatprep.subr.bf16.mxu0 0
        %6511 = vmatpush1.bf16.msra.mxu0 %v6459
        %6512 = vmatprep.subr.bf16.mxu0 0
        %6513 = vmatpush1.bf16.msra.mxu0 0
        %6514 = vmatprep.subr.bf16.mxu0 0
        %6515 = vmatpush1.bf16.msra.mxu0 0
        %6516 = vmatprep.subr.bf16.mxu0 0
        %6517 = vmatpush1.bf16.msra.mxu0 0
        %6518 = vmatprep.subr.bf16.mxu0 0
        %6519 = vmatpush1.bf16.msra.mxu0 0
        %6520 = vmatprep.subr.bf16.mxu0 0
        %6521 = vmatpush1.bf16.msra.mxu0 0
        %6522 = vmatprep.subr.bf16.mxu0 0
        %6523 = vmatpush1.bf16.msra.mxu0 0
        %6524 = vmatprep.subr.bf16.mxu0 0
        %6525 = vmatpush1.bf16.msra.mxu0 0
        %6526 = vmatprep.subr.bf16.mxu0 0
        %6527 = vmatpush1.bf16.msra.mxu0 0
        %6528 = vmatprep.subr.bf16.mxu0 0
        %6529 = vmatpush1.bf16.msra.mxu0 0
        %6530 = vmatprep.subr.bf16.mxu0 0
        %6531 = vmatpush1.bf16.msra.mxu0 0
        %6532 = vmatprep.subr.bf16.mxu0 0
        %6533 = vmatpush1.bf16.msra.mxu0 0
        %6534 = vmatprep.subr.bf16.mxu0 0
        %6535 = vmatpush1.bf16.msra.mxu0 0
        %6536 = vmatprep.mubr.bf16.mxu0 0
        %6537 = vmatmul.mubr.bf16.gmra.mrb[0].mxu0 %v6450
        %v6538 = vpop.f32.mrb[0].mxu0
        %v6539 = vadd.f32 0.0, %v6538
        %v6540 = vpop.f32.mrb[0].mxu0
        %v6541 = vpop.f32.mrb[0].mxu0
        %v6542 = vadd.f32 0.0, %v6541
        %v6543 = vpop.f32.mrb[0].mxu0
        %6544 = vdwg.mxu0
        %v6545 = vadd.f32 %v6365, %v6496
        %v6546 = vadd.f32 %v6366, %v6498
        %v6547 = vadd.f32 %v6367, %v6539
        %v6548 = vadd.f32 %v6368, %v6500
        %v6549 = vadd.f32 %v6369, %v6502
        %v6550 = vadd.f32 %v6370, %v6542
        %s6551 = scalar_lea.vmem %s13, 104
        %v6552 = vld [vmem:[%s6551] sm:$0xf]
        %v6553 = vld [vmem:[%s6551 + $0x4] sm:$0x3]
        %v6554 = vld [vmem:[#allocation2 + $0x4] sm:$0xff]
        %v6555 = vld [vmem:[#allocation2 + $0xc] sm:$0xff]
        %v6556 = vld [vmem:[#allocation2 + $0x18] sm:$0xff]
        %v6557 = vld [vmem:[#allocation2 + $0x20] sm:$0xff]
        %v6558 = vld [vmem:[#allocation2 + $0x2c] sm:$0xff]
        %v6559 = vld [vmem:[#allocation2 + $0x34] sm:$0xff]
        %v6560 = vld [vmem:[#allocation2 + $0x40] sm:$0xff]
        %v6561 = vld [vmem:[#allocation2 + $0x48] sm:$0xff]
        %v6562 = vld [vmem:[#allocation2 + $0x54] sm:$0xff]
        %v6563 = vld [vmem:[#allocation2 + $0x5c] sm:$0xff]
        %v6564 = vld [vmem:[#allocation2 + $0x68] sm:$0xff]
        %v6565 = vld [vmem:[#allocation2 + $0x70] sm:$0xff]
        %v6566 = vld [vmem:[#allocation2 + $0x7c] sm:$0xff]
        %v6567 = vld [vmem:[#allocation2 + $0x84] sm:$0xff]
        %v6570 = vunpack.c.l.b16 %v6552
        %v6571 = vunpack.c.l.b16 %v6553
        %v6572 = vpack.c.b16 %v6571, %v6570
        %v6587 = vunpack.c.l.b16 %v6554
        %v6588 = vunpack.c.h.b16 %v6554
        %v6589 = vunpack.c.l.b16 %v6555
        %v6590 = vunpack.c.h.b16 %v6555
        %v6591 = vunpack.c.l.b16 %v6556
        %v6592 = vunpack.c.h.b16 %v6556
        %v6593 = vunpack.c.l.b16 %v6557
        %v6594 = vunpack.c.h.b16 %v6557
        %v6595 = vunpack.c.l.b16 %v6558
        %v6596 = vunpack.c.h.b16 %v6558
        %v6597 = vunpack.c.l.b16 %v6559
        %v6598 = vunpack.c.h.b16 %v6559
        %v6599 = vunpack.c.l.b16 %v6560
        %v6600 = vunpack.c.h.b16 %v6560
        %v6601 = vunpack.c.l.b16 %v6561
        %v6602 = vunpack.c.h.b16 %v6561
        %v6603 = vunpack.c.l.b16 %v6562
        %v6604 = vunpack.c.h.b16 %v6562
        %v6605 = vunpack.c.l.b16 %v6563
        %v6606 = vunpack.c.h.b16 %v6563
        %v6607 = vunpack.c.l.b16 %v6564
        %v6608 = vunpack.c.h.b16 %v6564
        %v6609 = vunpack.c.l.b16 %v6565
        %v6610 = vunpack.c.h.b16 %v6565
        %v6611 = vunpack.c.l.b16 %v6566
        %v6612 = vunpack.c.h.b16 %v6566
        %v6613 = vunpack.c.l.b16 %v6567
        %v6614 = vunpack.c.h.b16 %v6567
        %v6615 = vpack.c.b16 %v6591, %v6587
        %v6616 = vpack.c.b16 %v6592, %v6588
        %v6617 = vpack.c.b16 %v6593, %v6589
        %v6618 = vpack.c.b16 %v6594, %v6590
        %v6619 = vpack.c.b16 %v6599, %v6595
        %v6620 = vpack.c.b16 %v6600, %v6596
        %v6621 = vpack.c.b16 %v6601, %v6597
        %v6622 = vpack.c.b16 %v6602, %v6598
        %v6623 = vpack.c.b16 %v6607, %v6603
        %v6624 = vpack.c.b16 %v6608, %v6604
        %v6625 = vpack.c.b16 %v6609, %v6605
        %v6626 = vpack.c.b16 %v6610, %v6606
        %v6627 = vpack.c.b16 %v6611, %v6611
        %v6628 = vpack.c.b16 %v6612, %v6612
        %v6629 = vpack.c.b16 %v6613, %v6613
        %v6630 = vpack.c.b16 %v6614, %v6614
        %6631 = vrot.lane.b32.xlu0 %v6615, 127
        %v6632 = vpop.permute.xlu0 %6631
        %6633 = vrot.lane.b32.xlu0 %v6616, 127
        %v6634 = vpop.permute.xlu0 %6633
        %6635 = vrot.lane.b32.xlu0 %v6617, 127
        %v6636 = vpop.permute.xlu0 %6635
        %6637 = vrot.lane.b32.xlu0 %v6618, 127
        %v6638 = vpop.permute.xlu0 %6637
        %6639 = vrot.lane.b32.xlu0 %v6619, 127
        %v6640 = vpop.permute.xlu0 %6639
        %6641 = vrot.lane.b32.xlu0 %v6620, 127
        %v6642 = vpop.permute.xlu0 %6641
        %6643 = vrot.lane.b32.xlu0 %v6621, 127
        %v6644 = vpop.permute.xlu0 %6643
        %6645 = vrot.lane.b32.xlu0 %v6622, 127
        %v6646 = vpop.permute.xlu0 %6645
        %6647 = vrot.lane.b32.xlu0 %v6623, 127
        %v6648 = vpop.permute.xlu0 %6647
        %6649 = vrot.lane.b32.xlu0 %v6624, 127
        %v6650 = vpop.permute.xlu0 %6649
        %6651 = vrot.lane.b32.xlu0 %v6625, 127
        %v6652 = vpop.permute.xlu0 %6651
        %6653 = vrot.lane.b32.xlu0 %v6626, 127
        %v6654 = vpop.permute.xlu0 %6653
        %6655 = vrot.lane.b32.xlu0 %v6627, 127
        %v6656 = vpop.permute.xlu0 %6655
        %6657 = vrot.lane.b32.xlu0 %v6628, 127
        %v6658 = vpop.permute.xlu0 %6657
        %6659 = vrot.lane.b32.xlu0 %v6629, 127
        %v6660 = vpop.permute.xlu0 %6659
        %6661 = vrot.lane.b32.xlu0 %v6630, 127
        %v6662 = vpop.permute.xlu0 %6661
        %v6663 = vsel %vm1066, %v6632, %v6634
        %v6664 = vsel %vm1066, %v6634, %v6636
        %v6665 = vsel %vm1066, %v6636, %v6638
        %v6666 = vsel %vm1066, %v6640, %v6642
        %v6667 = vsel %vm1066, %v6642, %v6644
        %v6668 = vsel %vm1066, %v6644, %v6646
        %v6669 = vsel %vm1066, %v6648, %v6650
        %v6670 = vsel %vm1066, %v6650, %v6652
        %v6671 = vsel %vm1066, %v6652, %v6654
        %v6672 = vsel %vm1066, %v6656, %v6658
        %v6673 = vsel %vm1066, %v6658, %v6660
        %v6674 = vsel %vm1066, %v6660, %v6662
        %v6685 = vsel %vm2014, %v6572, 0
        %v6688 = vsel %vm2018, %v6672, 0
        %v6691 = vsel %vm2018, %v6673, 0
        %v6694 = vsel %vm2018, %v6674, 0
        %6696 = vmatprep.subr.bf16.mxu0 %v6664
        %6697 = vmatpush1.bf16.msra.mxu0 %v6663
        %6698 = vmatprep.subr.bf16.mxu0 %v6667
        %6699 = vmatpush1.bf16.msra.mxu0 %v6666
        %6700 = vmatprep.subr.bf16.mxu0 %v6670
        %6701 = vmatpush1.bf16.msra.mxu0 %v6669
        %6702 = vmatprep.subr.bf16.mxu0 %v6691
        %6703 = vmatpush1.bf16.msra.mxu0 %v6688
        %6704 = vmatprep.subr.bf16.mxu0 0
        %6705 = vmatpush1.bf16.msra.mxu0 0
        %6706 = vmatprep.subr.bf16.mxu0 0
        %6707 = vmatpush1.bf16.msra.mxu0 0
        %6708 = vmatprep.subr.bf16.mxu0 0
        %6709 = vmatpush1.bf16.msra.mxu0 0
        %6710 = vmatprep.subr.bf16.mxu0 0
        %6711 = vmatpush1.bf16.msra.mxu0 0
        %6712 = vmatprep.subr.bf16.mxu0 0
        %6713 = vmatpush1.bf16.msra.mxu0 0
        %6714 = vmatprep.subr.bf16.mxu0 0
        %6715 = vmatpush1.bf16.msra.mxu0 0
        %6716 = vmatprep.subr.bf16.mxu0 0
        %6717 = vmatpush1.bf16.msra.mxu0 0
        %6718 = vmatprep.subr.bf16.mxu0 0
        %6719 = vmatpush1.bf16.msra.mxu0 0
        %6720 = vmatprep.subr.bf16.mxu0 0
        %6721 = vmatpush1.bf16.msra.mxu0 0
        %6722 = vmatprep.subr.bf16.mxu0 0
        %6723 = vmatpush1.bf16.msra.mxu0 0
        %6724 = vmatprep.subr.bf16.mxu0 0
        %6725 = vmatpush1.bf16.msra.mxu0 0
        %6726 = vmatprep.subr.bf16.mxu0 0
        %6727 = vmatpush1.bf16.msra.mxu0 0
        %6728 = vmatprep.mubr.bf16.mxu0 0
        %6729 = vmatmul.mubr.bf16.gmra.mrb[0].mxu0 %v6685
        %v6730 = vpop.f32.mrb[0].mxu0
        %v6731 = vadd.f32 0.0, %v6730
        %v6732 = vpop.f32.mrb[0].mxu0
        %v6733 = vadd.f32 0.0, %v6732
        %v6734 = vpop.f32.mrb[0].mxu0
        %v6735 = vadd.f32 0.0, %v6734
        %v6736 = vpop.f32.mrb[0].mxu0
        %v6737 = vadd.f32 0.0, %v6736
        %6738 = vdwg.mxu0
        %6739 = vmatprep.subr.bf16.mxu0 0
        %6740 = vmatpush1.bf16.msra.mxu0 %v6665
        %6741 = vmatprep.subr.bf16.mxu0 0
        %6742 = vmatpush1.bf16.msra.mxu0 %v6668
        %6743 = vmatprep.subr.bf16.mxu0 0
        %6744 = vmatpush1.bf16.msra.mxu0 %v6671
        %6745 = vmatprep.subr.bf16.mxu0 0
        %6746 = vmatpush1.bf16.msra.mxu0 %v6694
        %6747 = vmatprep.subr.bf16.mxu0 0
        %6748 = vmatpush1.bf16.msra.mxu0 0
        %6749 = vmatprep.subr.bf16.mxu0 0
        %6750 = vmatpush1.bf16.msra.mxu0 0
        %6751 = vmatprep.subr.bf16.mxu0 0
        %6752 = vmatpush1.bf16.msra.mxu0 0
        %6753 = vmatprep.subr.bf16.mxu0 0
        %6754 = vmatpush1.bf16.msra.mxu0 0
        %6755 = vmatprep.subr.bf16.mxu0 0
        %6756 = vmatpush1.bf16.msra.mxu0 0
        %6757 = vmatprep.subr.bf16.mxu0 0
        %6758 = vmatpush1.bf16.msra.mxu0 0
        %6759 = vmatprep.subr.bf16.mxu0 0
        %6760 = vmatpush1.bf16.msra.mxu0 0
        %6761 = vmatprep.subr.bf16.mxu0 0
        %6762 = vmatpush1.bf16.msra.mxu0 0
        %6763 = vmatprep.subr.bf16.mxu0 0
        %6764 = vmatpush1.bf16.msra.mxu0 0
        %6765 = vmatprep.subr.bf16.mxu0 0
        %6766 = vmatpush1.bf16.msra.mxu0 0
        %6767 = vmatprep.subr.bf16.mxu0 0
        %6768 = vmatpush1.bf16.msra.mxu0 0
        %6769 = vmatprep.subr.bf16.mxu0 0
        %6770 = vmatpush1.bf16.msra.mxu0 0
        %6771 = vmatprep.mubr.bf16.mxu0 0
        %6772 = vmatmul.mubr.bf16.gmra.mrb[0].mxu0 %v6685
        %v6773 = vpop.f32.mrb[0].mxu0
        %v6774 = vadd.f32 0.0, %v6773
        %v6775 = vpop.f32.mrb[0].mxu0
        %v6776 = vpop.f32.mrb[0].mxu0
        %v6777 = vadd.f32 0.0, %v6776
        %v6778 = vpop.f32.mrb[0].mxu0
        %6779 = vdwg.mxu0
        %v6780 = vadd.f32 %v6545, %v6731
        %v6781 = vadd.f32 %v6546, %v6733
        %v6782 = vadd.f32 %v6547, %v6774
        %v6783 = vadd.f32 %v6548, %v6735
        %v6784 = vadd.f32 %v6549, %v6737
        %v6785 = vadd.f32 %v6550, %v6777
        %s6786 = scalar_lea.vmem %s13, 112
        %v6787 = vld [vmem:[%s6786] sm:$0xf]
        %v6788 = vld [vmem:[%s6786 + $0x4] sm:$0x3]
        %v6791 = vunpack.c.l.b16 %v6787
        %v6792 = vunpack.c.l.b16 %v6788
        %v6793 = vpack.c.b16 %v6792, %v6791
        %6794 = vrot.lane.b32.xlu0 %v6615, 126
        %v6795 = vpop.permute.xlu0 %6794
        %6796 = vrot.lane.b32.xlu0 %v6616, 126
        %v6797 = vpop.permute.xlu0 %6796
        %6798 = vrot.lane.b32.xlu0 %v6617, 126
        %v6799 = vpop.permute.xlu0 %6798
        %6800 = vrot.lane.b32.xlu0 %v6618, 126
        %v6801 = vpop.permute.xlu0 %6800
        %6802 = vrot.lane.b32.xlu0 %v6619, 126
        %v6803 = vpop.permute.xlu0 %6802
        %6804 = vrot.lane.b32.xlu0 %v6620, 126
        %v6805 = vpop.permute.xlu0 %6804
        %6806 = vrot.lane.b32.xlu0 %v6621, 126
        %v6807 = vpop.permute.xlu0 %6806
        %6808 = vrot.lane.b32.xlu0 %v6622, 126
        %v6809 = vpop.permute.xlu0 %6808
        %6810 = vrot.lane.b32.xlu0 %v6623, 126
        %v6811 = vpop.permute.xlu0 %6810
        %6812 = vrot.lane.b32.xlu0 %v6624, 126
        %v6813 = vpop.permute.xlu0 %6812
        %6814 = vrot.lane.b32.xlu0 %v6625, 126
        %v6815 = vpop.permute.xlu0 %6814
        %6816 = vrot.lane.b32.xlu0 %v6626, 126
        %v6817 = vpop.permute.xlu0 %6816
        %6818 = vrot.lane.b32.xlu0 %v6627, 126
        %v6819 = vpop.permute.xlu0 %6818
        %6820 = vrot.lane.b32.xlu0 %v6628, 126
        %v6821 = vpop.permute.xlu0 %6820
        %6822 = vrot.lane.b32.xlu0 %v6629, 126
        %v6823 = vpop.permute.xlu0 %6822
        %6824 = vrot.lane.b32.xlu0 %v6630, 126
        %v6825 = vpop.permute.xlu0 %6824
        %v6826 = vsel %vm1097, %v6795, %v6797
        %v6827 = vsel %vm1097, %v6797, %v6799
        %v6828 = vsel %vm1097, %v6799, %v6801
        %v6829 = vsel %vm1097, %v6803, %v6805
        %v6830 = vsel %vm1097, %v6805, %v6807
        %v6831 = vsel %vm1097, %v6807, %v6809
        %v6832 = vsel %vm1097, %v6811, %v6813
        %v6833 = vsel %vm1097, %v6813, %v6815
        %v6834 = vsel %vm1097, %v6815, %v6817
        %v6835 = vsel %vm1097, %v6819, %v6821
        %v6836 = vsel %vm1097, %v6821, %v6823
        %v6837 = vsel %vm1097, %v6823, %v6825
        %v6848 = vsel %vm2014, %v6793, 0
        %v6851 = vsel %vm2018, %v6835, 0
        %v6854 = vsel %vm2018, %v6836, 0
        %v6857 = vsel %vm2018, %v6837, 0
        %6859 = vmatprep.subr.bf16.mxu0 %v6827
        %6860 = vmatpush1.bf16.msra.mxu0 %v6826
        %6861 = vmatprep.subr.bf16.mxu0 %v6830
        %6862 = vmatpush1.bf16.msra.mxu0 %v6829
        %6863 = vmatprep.subr.bf16.mxu0 %v6833
        %6864 = vmatpush1.bf16.msra.mxu0 %v6832
        %6865 = vmatprep.subr.bf16.mxu0 %v6854
        %6866 = vmatpush1.bf16.msra.mxu0 %v6851
        %6867 = vmatprep.subr.bf16.mxu0 0
        %6868 = vmatpush1.bf16.msra.mxu0 0
        %6869 = vmatprep.subr.bf16.mxu0 0
        %6870 = vmatpush1.bf16.msra.mxu0 0
        %6871 = vmatprep.subr.bf16.mxu0 0
        %6872 = vmatpush1.bf16.msra.mxu0 0
        %6873 = vmatprep.subr.bf16.mxu0 0
        %6874 = vmatpush1.bf16.msra.mxu0 0
        %6875 = vmatprep.subr.bf16.mxu0 0
        %6876 = vmatpush1.bf16.msra.mxu0 0
        %6877 = vmatprep.subr.bf16.mxu0 0
        %6878 = vmatpush1.bf16.msra.mxu0 0
        %6879 = vmatprep.subr.bf16.mxu0 0
        %6880 = vmatpush1.bf16.msra.mxu0 0
        %6881 = vmatprep.subr.bf16.mxu0 0
        %6882 = vmatpush1.bf16.msra.mxu0 0
        %6883 = vmatprep.subr.bf16.mxu0 0
        %6884 = vmatpush1.bf16.msra.mxu0 0
        %6885 = vmatprep.subr.bf16.mxu0 0
        %6886 = vmatpush1.bf16.msra.mxu0 0
        %6887 = vmatprep.subr.bf16.mxu0 0
        %6888 = vmatpush1.bf16.msra.mxu0 0
        %6889 = vmatprep.subr.bf16.mxu0 0
        %6890 = vmatpush1.bf16.msra.mxu0 0
        %6891 = vmatprep.mubr.bf16.mxu0 0
        %6892 = vmatmul.mubr.bf16.gmra.mrb[0].mxu0 %v6848
        %v6893 = vpop.f32.mrb[0].mxu0
        %v6894 = vadd.f32 0.0, %v6893
        %v6895 = vpop.f32.mrb[0].mxu0
        %v6896 = vadd.f32 0.0, %v6895
        %v6897 = vpop.f32.mrb[0].mxu0
        %v6898 = vadd.f32 0.0, %v6897
        %v6899 = vpop.f32.mrb[0].mxu0
        %v6900 = vadd.f32 0.0, %v6899
        %6901 = vdwg.mxu0
        %6902 = vmatprep.subr.bf16.mxu0 0
        %6903 = vmatpush1.bf16.msra.mxu0 %v6828
        %6904 = vmatprep.subr.bf16.mxu0 0
        %6905 = vmatpush1.bf16.msra.mxu0 %v6831
        %6906 = vmatprep.subr.bf16.mxu0 0
        %6907 = vmatpush1.bf16.msra.mxu0 %v6834
        %6908 = vmatprep.subr.bf16.mxu0 0
        %6909 = vmatpush1.bf16.msra.mxu0 %v6857
        %6910 = vmatprep.subr.bf16.mxu0 0
        %6911 = vmatpush1.bf16.msra.mxu0 0
        %6912 = vmatprep.subr.bf16.mxu0 0
        %6913 = vmatpush1.bf16.msra.mxu0 0
        %6914 = vmatprep.subr.bf16.mxu0 0
        %6915 = vmatpush1.bf16.msra.mxu0 0
        %6916 = vmatprep.subr.bf16.mxu0 0
        %6917 = vmatpush1.bf16.msra.mxu0 0
        %6918 = vmatprep.subr.bf16.mxu0 0
        %6919 = vmatpush1.bf16.msra.mxu0 0
        %6920 = vmatprep.subr.bf16.mxu0 0
        %6921 = vmatpush1.bf16.msra.mxu0 0
        %6922 = vmatprep.subr.bf16.mxu0 0
        %6923 = vmatpush1.bf16.msra.mxu0 0
        %6924 = vmatprep.subr.bf16.mxu0 0
        %6925 = vmatpush1.bf16.msra.mxu0 0
        %6926 = vmatprep.subr.bf16.mxu0 0
        %6927 = vmatpush1.bf16.msra.mxu0 0
        %6928 = vmatprep.subr.bf16.mxu0 0
        %6929 = vmatpush1.bf16.msra.mxu0 0
        %6930 = vmatprep.subr.bf16.mxu0 0
        %6931 = vmatpush1.bf16.msra.mxu0 0
        %6932 = vmatprep.subr.bf16.mxu0 0
        %6933 = vmatpush1.bf16.msra.mxu0 0
        %6934 = vmatprep.mubr.bf16.mxu0 0
        %6935 = vmatmul.mubr.bf16.gmra.mrb[0].mxu0 %v6848
        %v6936 = vpop.f32.mrb[0].mxu0
        %v6937 = vadd.f32 0.0, %v6936
        %v6938 = vpop.f32.mrb[0].mxu0
        %v6939 = vpop.f32.mrb[0].mxu0
        %v6940 = vadd.f32 0.0, %v6939
        %v6941 = vpop.f32.mrb[0].mxu0
        %6942 = vdwg.mxu0
        %v6943 = vadd.f32 %v6780, %v6894
        %v6944 = vadd.f32 %v6781, %v6896
        %v6945 = vadd.f32 %v6782, %v6937
        %v6946 = vadd.f32 %v6783, %v6898
        %v6947 = vadd.f32 %v6784, %v6900
        %v6948 = vadd.f32 %v6785, %v6940
        %s6949 = scalar_lea.vmem %s13, 120
        %v6950 = vld [vmem:[%s6949] sm:$0xf]
        %v6951 = vld [vmem:[%s6949 + $0x4] sm:$0x3]
        %v6954 = vunpack.c.l.b16 %v6950
        %v6955 = vunpack.c.l.b16 %v6951
        %v6956 = vpack.c.b16 %v6955, %v6954
        %6957 = vrot.lane.b32.xlu0 %v6615, 106
        %v6958 = vpop.permute.xlu0 %6957
        %6959 = vrot.lane.b32.xlu0 %v6616, 106
        %v6960 = vpop.permute.xlu0 %6959
        %6961 = vrot.lane.b32.xlu0 %v6617, 106
        %v6962 = vpop.permute.xlu0 %6961
        %6963 = vrot.lane.b32.xlu0 %v6618, 106
        %v6964 = vpop.permute.xlu0 %6963
        %6965 = vrot.lane.b32.xlu0 %v6619, 106
        %v6966 = vpop.permute.xlu0 %6965
        %6967 = vrot.lane.b32.xlu0 %v6620, 106
        %v6968 = vpop.permute.xlu0 %6967
        %6969 = vrot.lane.b32.xlu0 %v6621, 106
        %v6970 = vpop.permute.xlu0 %6969
        %6971 = vrot.lane.b32.xlu0 %v6622, 106
        %v6972 = vpop.permute.xlu0 %6971
        %6973 = vrot.lane.b32.xlu0 %v6623, 106
        %v6974 = vpop.permute.xlu0 %6973
        %6975 = vrot.lane.b32.xlu0 %v6624, 106
        %v6976 = vpop.permute.xlu0 %6975
        %6977 = vrot.lane.b32.xlu0 %v6625, 106
        %v6978 = vpop.permute.xlu0 %6977
        %6979 = vrot.lane.b32.xlu0 %v6626, 106
        %v6980 = vpop.permute.xlu0 %6979
        %6981 = vrot.lane.b32.xlu0 %v6627, 106
        %v6982 = vpop.permute.xlu0 %6981
        %6983 = vrot.lane.b32.xlu0 %v6628, 106
        %v6984 = vpop.permute.xlu0 %6983
        %6985 = vrot.lane.b32.xlu0 %v6629, 106
        %v6986 = vpop.permute.xlu0 %6985
        %6987 = vrot.lane.b32.xlu0 %v6630, 106
        %v6988 = vpop.permute.xlu0 %6987
        %v6989 = vsel %vm1128, %v6958, %v6960
        %v6990 = vsel %vm1128, %v6960, %v6962
        %v6991 = vsel %vm1128, %v6962, %v6964
        %v6992 = vsel %vm1128, %v6966, %v6968
        %v6993 = vsel %vm1128, %v6968, %v6970
        %v6994 = vsel %vm1128, %v6970, %v6972
        %v6995 = vsel %vm1128, %v6974, %v6976
        %v6996 = vsel %vm1128, %v6976, %v6978
        %v6997 = vsel %vm1128, %v6978, %v6980
        %v6998 = vsel %vm1128, %v6982, %v6984
        %v6999 = vsel %vm1128, %v6984, %v6986
        %v7000 = vsel %vm1128, %v6986, %v6988
        %v7011 = vsel %vm2014, %v6956, 0
        %v7014 = vsel %vm2018, %v6998, 0
        %v7017 = vsel %vm2018, %v6999, 0
        %v7020 = vsel %vm2018, %v7000, 0
        %7022 = vmatprep.subr.bf16.mxu0 %v6990
        %7023 = vmatpush1.bf16.msra.mxu0 %v6989
        %7024 = vmatprep.subr.bf16.mxu0 %v6993
        %7025 = vmatpush1.bf16.msra.mxu0 %v6992
        %7026 = vmatprep.subr.bf16.mxu0 %v6996
        %7027 = vmatpush1.bf16.msra.mxu0 %v6995
        %7028 = vmatprep.subr.bf16.mxu0 %v7017
        %7029 = vmatpush1.bf16.msra.mxu0 %v7014
        %7030 = vmatprep.subr.bf16.mxu0 0
        %7031 = vmatpush1.bf16.msra.mxu0 0
        %7032 = vmatprep.subr.bf16.mxu0 0
        %7033 = vmatpush1.bf16.msra.mxu0 0
        %7034 = vmatprep.subr.bf16.mxu0 0
        %7035 = vmatpush1.bf16.msra.mxu0 0
        %7036 = vmatprep.subr.bf16.mxu0 0
        %7037 = vmatpush1.bf16.msra.mxu0 0
        %7038 = vmatprep.subr.bf16.mxu0 0
        %7039 = vmatpush1.bf16.msra.mxu0 0
        %7040 = vmatprep.subr.bf16.mxu0 0
        %7041 = vmatpush1.bf16.msra.mxu0 0
        %7042 = vmatprep.subr.bf16.mxu0 0
        %7043 = vmatpush1.bf16.msra.mxu0 0
        %7044 = vmatprep.subr.bf16.mxu0 0
        %7045 = vmatpush1.bf16.msra.mxu0 0
        %7046 = vmatprep.subr.bf16.mxu0 0
        %7047 = vmatpush1.bf16.msra.mxu0 0
        %7048 = vmatprep.subr.bf16.mxu0 0
        %7049 = vmatpush1.bf16.msra.mxu0 0
        %7050 = vmatprep.subr.bf16.mxu0 0
        %7051 = vmatpush1.bf16.msra.mxu0 0
        %7052 = vmatprep.subr.bf16.mxu0 0
        %7053 = vmatpush1.bf16.msra.mxu0 0
        %7054 = vmatprep.mubr.bf16.mxu0 0
        %7055 = vmatmul.mubr.bf16.gmra.mrb[0].mxu0 %v7011
        %v7056 = vpop.f32.mrb[0].mxu0
        %v7057 = vadd.f32 0.0, %v7056
        %v7058 = vpop.f32.mrb[0].mxu0
        %v7059 = vadd.f32 0.0, %v7058
        %v7060 = vpop.f32.mrb[0].mxu0
        %v7061 = vadd.f32 0.0, %v7060
        %v7062 = vpop.f32.mrb[0].mxu0
        %v7063 = vadd.f32 0.0, %v7062
        %7064 = vdwg.mxu0
        %7065 = vmatprep.subr.bf16.mxu0 0
        %7066 = vmatpush1.bf16.msra.mxu0 %v6991
        %7067 = vmatprep.subr.bf16.mxu0 0
        %7068 = vmatpush1.bf16.msra.mxu0 %v6994
        %7069 = vmatprep.subr.bf16.mxu0 0
        %7070 = vmatpush1.bf16.msra.mxu0 %v6997
        %7071 = vmatprep.subr.bf16.mxu0 0
        %7072 = vmatpush1.bf16.msra.mxu0 %v7020
        %7073 = vmatprep.subr.bf16.mxu0 0
        %7074 = vmatpush1.bf16.msra.mxu0 0
        %7075 = vmatprep.subr.bf16.mxu0 0
        %7076 = vmatpush1.bf16.msra.mxu0 0
        %7077 = vmatprep.subr.bf16.mxu0 0
        %7078 = vmatpush1.bf16.msra.mxu0 0
        %7079 = vmatprep.subr.bf16.mxu0 0
        %7080 = vmatpush1.bf16.msra.mxu0 0
        %7081 = vmatprep.subr.bf16.mxu0 0
        %7082 = vmatpush1.bf16.msra.mxu0 0
        %7083 = vmatprep.subr.bf16.mxu0 0
        %7084 = vmatpush1.bf16.msra.mxu0 0
        %7085 = vmatprep.subr.bf16.mxu0 0
        %7086 = vmatpush1.bf16.msra.mxu0 0
        %7087 = vmatprep.subr.bf16.mxu0 0
        %7088 = vmatpush1.bf16.msra.mxu0 0
        %7089 = vmatprep.subr.bf16.mxu0 0
        %7090 = vmatpush1.bf16.msra.mxu0 0
        %7091 = vmatprep.subr.bf16.mxu0 0
        %7092 = vmatpush1.bf16.msra.mxu0 0
        %7093 = vmatprep.subr.bf16.mxu0 0
        %7094 = vmatpush1.bf16.msra.mxu0 0
        %7095 = vmatprep.subr.bf16.mxu0 0
        %7096 = vmatpush1.bf16.msra.mxu0 0
        %7097 = vmatprep.mubr.bf16.mxu0 0
        %7098 = vmatmul.mubr.bf16.gmra.mrb[0].mxu0 %v7011
        %v7099 = vpop.f32.mrb[0].mxu0
        %v7100 = vadd.f32 0.0, %v7099
        %v7101 = vpop.f32.mrb[0].mxu0
        %v7102 = vpop.f32.mrb[0].mxu0
        %v7103 = vadd.f32 0.0, %v7102
        %v7104 = vpop.f32.mrb[0].mxu0
        %7105 = vdwg.mxu0
        %v7106 = vadd.f32 %v6943, %v7057
        %v7107 = vadd.f32 %v6944, %v7059
        %v7108 = vadd.f32 %v6945, %v7100
        %v7109 = vadd.f32 %v6946, %v7061
        %v7110 = vadd.f32 %v6947, %v7063
        %v7111 = vadd.f32 %v6948, %v7103
        %s7112 = scalar_lea.vmem %s13, 128
        %v7113 = vld [vmem:[%s7112] sm:$0xf]
        %v7114 = vld [vmem:[%s7112 + $0x4] sm:$0x3]
        %v7117 = vunpack.c.l.b16 %v7113
        %v7118 = vunpack.c.l.b16 %v7114
        %v7119 = vpack.c.b16 %v7118, %v7117
        %7120 = vrot.lane.b32.xlu0 %v6615, 105
        %v7121 = vpop.permute.xlu0 %7120
        %7122 = vrot.lane.b32.xlu0 %v6616, 105
        %v7123 = vpop.permute.xlu0 %7122
        %7124 = vrot.lane.b32.xlu0 %v6617, 105
        %v7125 = vpop.permute.xlu0 %7124
        %7126 = vrot.lane.b32.xlu0 %v6618, 105
        %v7127 = vpop.permute.xlu0 %7126
        %7128 = vrot.lane.b32.xlu0 %v6619, 105
        %v7129 = vpop.permute.xlu0 %7128
        %7130 = vrot.lane.b32.xlu0 %v6620, 105
        %v7131 = vpop.permute.xlu0 %7130
        %7132 = vrot.lane.b32.xlu0 %v6621, 105
        %v7133 = vpop.permute.xlu0 %7132
        %7134 = vrot.lane.b32.xlu0 %v6622, 105
        %v7135 = vpop.permute.xlu0 %7134
        %7136 = vrot.lane.b32.xlu0 %v6623, 105
        %v7137 = vpop.permute.xlu0 %7136
        %7138 = vrot.lane.b32.xlu0 %v6624, 105
        %v7139 = vpop.permute.xlu0 %7138
        %7140 = vrot.lane.b32.xlu0 %v6625, 105
        %v7141 = vpop.permute.xlu0 %7140
        %7142 = vrot.lane.b32.xlu0 %v6626, 105
        %v7143 = vpop.permute.xlu0 %7142
        %7144 = vrot.lane.b32.xlu0 %v6627, 105
        %v7145 = vpop.permute.xlu0 %7144
        %7146 = vrot.lane.b32.xlu0 %v6628, 105
        %v7147 = vpop.permute.xlu0 %7146
        %7148 = vrot.lane.b32.xlu0 %v6629, 105
        %v7149 = vpop.permute.xlu0 %7148
        %7150 = vrot.lane.b32.xlu0 %v6630, 105
        %v7151 = vpop.permute.xlu0 %7150
        %v7152 = vsel %vm1159, %v7121, %v7123
        %v7153 = vsel %vm1159, %v7123, %v7125
        %v7154 = vsel %vm1159, %v7125, %v7127
        %v7155 = vsel %vm1159, %v7129, %v7131
        %v7156 = vsel %vm1159, %v7131, %v7133
        %v7157 = vsel %vm1159, %v7133, %v7135
        %v7158 = vsel %vm1159, %v7137, %v7139
        %v7159 = vsel %vm1159, %v7139, %v7141
        %v7160 = vsel %vm1159, %v7141, %v7143
        %v7161 = vsel %vm1159, %v7145, %v7147
        %v7162 = vsel %vm1159, %v7147, %v7149
        %v7163 = vsel %vm1159, %v7149, %v7151
        %v7174 = vsel %vm2014, %v7119, 0
        %v7177 = vsel %vm2018, %v7161, 0
        %v7180 = vsel %vm2018, %v7162, 0
        %v7183 = vsel %vm2018, %v7163, 0
        %7185 = vmatprep.subr.bf16.mxu0 %v7153
        %7186 = vmatpush1.bf16.msra.mxu0 %v7152
        %7187 = vmatprep.subr.bf16.mxu0 %v7156
        %7188 = vmatpush1.bf16.msra.mxu0 %v7155
        %7189 = vmatprep.subr.bf16.mxu0 %v7159
        %7190 = vmatpush1.bf16.msra.mxu0 %v7158
        %7191 = vmatprep.subr.bf16.mxu0 %v7180
        %7192 = vmatpush1.bf16.msra.mxu0 %v7177
        %7193 = vmatprep.subr.bf16.mxu0 0
        %7194 = vmatpush1.bf16.msra.mxu0 0
        %7195 = vmatprep.subr.bf16.mxu0 0
        %7196 = vmatpush1.bf16.msra.mxu0 0
        %7197 = vmatprep.subr.bf16.mxu0 0
        %7198 = vmatpush1.bf16.msra.mxu0 0
        %7199 = vmatprep.subr.bf16.mxu0 0
        %7200 = vmatpush1.bf16.msra.mxu0 0
        %7201 = vmatprep.subr.bf16.mxu0 0
        %7202 = vmatpush1.bf16.msra.mxu0 0
        %7203 = vmatprep.subr.bf16.mxu0 0
        %7204 = vmatpush1.bf16.msra.mxu0 0
        %7205 = vmatprep.subr.bf16.mxu0 0
        %7206 = vmatpush1.bf16.msra.mxu0 0
        %7207 = vmatprep.subr.bf16.mxu0 0
        %7208 = vmatpush1.bf16.msra.mxu0 0
        %7209 = vmatprep.subr.bf16.mxu0 0
        %7210 = vmatpush1.bf16.msra.mxu0 0
        %7211 = vmatprep.subr.bf16.mxu0 0
        %7212 = vmatpush1.bf16.msra.mxu0 0
        %7213 = vmatprep.subr.bf16.mxu0 0
        %7214 = vmatpush1.bf16.msra.mxu0 0
        %7215 = vmatprep.subr.bf16.mxu0 0
        %7216 = vmatpush1.bf16.msra.mxu0 0
        %7217 = vmatprep.mubr.bf16.mxu0 0
        %7218 = vmatmul.mubr.bf16.gmra.mrb[0].mxu0 %v7174
        %v7219 = vpop.f32.mrb[0].mxu0
        %v7220 = vadd.f32 0.0, %v7219
        %v7221 = vpop.f32.mrb[0].mxu0
        %v7222 = vadd.f32 0.0, %v7221
        %v7223 = vpop.f32.mrb[0].mxu0
        %v7224 = vadd.f32 0.0, %v7223
        %v7225 = vpop.f32.mrb[0].mxu0
        %v7226 = vadd.f32 0.0, %v7225
        %7227 = vdwg.mxu0
        %7228 = vmatprep.subr.bf16.mxu0 0
        %7229 = vmatpush1.bf16.msra.mxu0 %v7154
        %7230 = vmatprep.subr.bf16.mxu0 0
        %7231 = vmatpush1.bf16.msra.mxu0 %v7157
        %7232 = vmatprep.subr.bf16.mxu0 0
        %7233 = vmatpush1.bf16.msra.mxu0 %v7160
        %7234 = vmatprep.subr.bf16.mxu0 0
        %7235 = vmatpush1.bf16.msra.mxu0 %v7183
        %7236 = vmatprep.subr.bf16.mxu0 0
        %7237 = vmatpush1.bf16.msra.mxu0 0
        %7238 = vmatprep.subr.bf16.mxu0 0
        %7239 = vmatpush1.bf16.msra.mxu0 0
        %7240 = vmatprep.subr.bf16.mxu0 0
        %7241 = vmatpush1.bf16.msra.mxu0 0
        %7242 = vmatprep.subr.bf16.mxu0 0
        %7243 = vmatpush1.bf16.msra.mxu0 0
        %7244 = vmatprep.subr.bf16.mxu0 0
        %7245 = vmatpush1.bf16.msra.mxu0 0
        %7246 = vmatprep.subr.bf16.mxu0 0
        %7247 = vmatpush1.bf16.msra.mxu0 0
        %7248 = vmatprep.subr.bf16.mxu0 0
        %7249 = vmatpush1.bf16.msra.mxu0 0
        %7250 = vmatprep.subr.bf16.mxu0 0
        %7251 = vmatpush1.bf16.msra.mxu0 0
        %7252 = vmatprep.subr.bf16.mxu0 0
        %7253 = vmatpush1.bf16.msra.mxu0 0
        %7254 = vmatprep.subr.bf16.mxu0 0
        %7255 = vmatpush1.bf16.msra.mxu0 0
        %7256 = vmatprep.subr.bf16.mxu0 0
        %7257 = vmatpush1.bf16.msra.mxu0 0
        %7258 = vmatprep.subr.bf16.mxu0 0
        %7259 = vmatpush1.bf16.msra.mxu0 0
        %7260 = vmatprep.mubr.bf16.mxu0 0
        %7261 = vmatmul.mubr.bf16.gmra.mrb[0].mxu0 %v7174
        %v7262 = vpop.f32.mrb[0].mxu0
        %v7263 = vadd.f32 0.0, %v7262
        %v7264 = vpop.f32.mrb[0].mxu0
        %v7265 = vpop.f32.mrb[0].mxu0
        %v7266 = vadd.f32 0.0, %v7265
        %v7267 = vpop.f32.mrb[0].mxu0
        %7268 = vdwg.mxu0
        %v7269 = vadd.f32 %v7106, %v7220
        %v7270 = vadd.f32 %v7107, %v7222
        %v7271 = vadd.f32 %v7108, %v7263
        %v7272 = vadd.f32 %v7109, %v7224
        %v7273 = vadd.f32 %v7110, %v7226
        %v7274 = vadd.f32 %v7111, %v7266
        %s7275 = scalar_lea.vmem %s13, 136
        %v7276 = vld [vmem:[%s7275] sm:$0xf]
        %v7277 = vld [vmem:[%s7275 + $0x4] sm:$0x3]
        %v7280 = vunpack.c.l.b16 %v7276
        %v7281 = vunpack.c.l.b16 %v7277
        %v7282 = vpack.c.b16 %v7281, %v7280
        %7283 = vrot.lane.b32.xlu0 %v6615, 104
        %v7284 = vpop.permute.xlu0 %7283
        %7285 = vrot.lane.b32.xlu0 %v6616, 104
        %v7286 = vpop.permute.xlu0 %7285
        %7287 = vrot.lane.b32.xlu0 %v6617, 104
        %v7288 = vpop.permute.xlu0 %7287
        %7289 = vrot.lane.b32.xlu0 %v6618, 104
        %v7290 = vpop.permute.xlu0 %7289
        %7291 = vrot.lane.b32.xlu0 %v6619, 104
        %v7292 = vpop.permute.xlu0 %7291
        %7293 = vrot.lane.b32.xlu0 %v6620, 104
        %v7294 = vpop.permute.xlu0 %7293
        %7295 = vrot.lane.b32.xlu0 %v6621, 104
        %v7296 = vpop.permute.xlu0 %7295
        %7297 = vrot.lane.b32.xlu0 %v6622, 104
        %v7298 = vpop.permute.xlu0 %7297
        %7299 = vrot.lane.b32.xlu0 %v6623, 104
        %v7300 = vpop.permute.xlu0 %7299
        %7301 = vrot.lane.b32.xlu0 %v6624, 104
        %v7302 = vpop.permute.xlu0 %7301
        %7303 = vrot.lane.b32.xlu0 %v6625, 104
        %v7304 = vpop.permute.xlu0 %7303
        %7305 = vrot.lane.b32.xlu0 %v6626, 104
        %v7306 = vpop.permute.xlu0 %7305
        %7307 = vrot.lane.b32.xlu0 %v6627, 104
        %v7308 = vpop.permute.xlu0 %7307
        %7309 = vrot.lane.b32.xlu0 %v6628, 104
        %v7310 = vpop.permute.xlu0 %7309
        %7311 = vrot.lane.b32.xlu0 %v6629, 104
        %v7312 = vpop.permute.xlu0 %7311
        %7313 = vrot.lane.b32.xlu0 %v6630, 104
        %v7314 = vpop.permute.xlu0 %7313
        %v7315 = vsel %vm1190, %v7284, %v7286
        %v7316 = vsel %vm1190, %v7286, %v7288
        %v7317 = vsel %vm1190, %v7288, %v7290
        %v7318 = vsel %vm1190, %v7292, %v7294
        %v7319 = vsel %vm1190, %v7294, %v7296
        %v7320 = vsel %vm1190, %v7296, %v7298
        %v7321 = vsel %vm1190, %v7300, %v7302
        %v7322 = vsel %vm1190, %v7302, %v7304
        %v7323 = vsel %vm1190, %v7304, %v7306
        %v7324 = vsel %vm1190, %v7308, %v7310
        %v7325 = vsel %vm1190, %v7310, %v7312
        %v7326 = vsel %vm1190, %v7312, %v7314
        %v7337 = vsel %vm2014, %v7282, 0
        %v7340 = vsel %vm2018, %v7324, 0
        %v7343 = vsel %vm2018, %v7325, 0
        %v7346 = vsel %vm2018, %v7326, 0
        %7348 = vmatprep.subr.bf16.mxu0 %v7316
        %7349 = vmatpush1.bf16.msra.mxu0 %v7315
        %7350 = vmatprep.subr.bf16.mxu0 %v7319
        %7351 = vmatpush1.bf16.msra.mxu0 %v7318
        %7352 = vmatprep.subr.bf16.mxu0 %v7322
        %7353 = vmatpush1.bf16.msra.mxu0 %v7321
        %7354 = vmatprep.subr.bf16.mxu0 %v7343
        %7355 = vmatpush1.bf16.msra.mxu0 %v7340
        %7356 = vmatprep.subr.bf16.mxu0 0
        %7357 = vmatpush1.bf16.msra.mxu0 0
        %7358 = vmatprep.subr.bf16.mxu0 0
        %7359 = vmatpush1.bf16.msra.mxu0 0
        %7360 = vmatprep.subr.bf16.mxu0 0
        %7361 = vmatpush1.bf16.msra.mxu0 0
        %7362 = vmatprep.subr.bf16.mxu0 0
        %7363 = vmatpush1.bf16.msra.mxu0 0
        %7364 = vmatprep.subr.bf16.mxu0 0
        %7365 = vmatpush1.bf16.msra.mxu0 0
        %7366 = vmatprep.subr.bf16.mxu0 0
        %7367 = vmatpush1.bf16.msra.mxu0 0
        %7368 = vmatprep.subr.bf16.mxu0 0
        %7369 = vmatpush1.bf16.msra.mxu0 0
        %7370 = vmatprep.subr.bf16.mxu0 0
        %7371 = vmatpush1.bf16.msra.mxu0 0
        %7372 = vmatprep.subr.bf16.mxu0 0
        %7373 = vmatpush1.bf16.msra.mxu0 0
        %7374 = vmatprep.subr.bf16.mxu0 0
        %7375 = vmatpush1.bf16.msra.mxu0 0
        %7376 = vmatprep.subr.bf16.mxu0 0
        %7377 = vmatpush1.bf16.msra.mxu0 0
        %7378 = vmatprep.subr.bf16.mxu0 0
        %7379 = vmatpush1.bf16.msra.mxu0 0
        %7380 = vmatprep.mubr.bf16.mxu0 0
        %7381 = vmatmul.mubr.bf16.gmra.mrb[0].mxu0 %v7337
        %v7382 = vpop.f32.mrb[0].mxu0
        %v7383 = vadd.f32 0.0, %v7382
        %v7384 = vpop.f32.mrb[0].mxu0
        %v7385 = vadd.f32 0.0, %v7384
        %v7386 = vpop.f32.mrb[0].mxu0
        %v7387 = vadd.f32 0.0, %v7386
        %v7388 = vpop.f32.mrb[0].mxu0
        %v7389 = vadd.f32 0.0, %v7388
        %7390 = vdwg.mxu0
        %7391 = vmatprep.subr.bf16.mxu0 0
        %7392 = vmatpush1.bf16.msra.mxu0 %v7317
        %7393 = vmatprep.subr.bf16.mxu0 0
        %7394 = vmatpush1.bf16.msra.mxu0 %v7320
        %7395 = vmatprep.subr.bf16.mxu0 0
        %7396 = vmatpush1.bf16.msra.mxu0 %v7323
        %7397 = vmatprep.subr.bf16.mxu0 0
        %7398 = vmatpush1.bf16.msra.mxu0 %v7346
        %7399 = vmatprep.subr.bf16.mxu0 0
        %7400 = vmatpush1.bf16.msra.mxu0 0
        %7401 = vmatprep.subr.bf16.mxu0 0
        %7402 = vmatpush1.bf16.msra.mxu0 0
        %7403 = vmatprep.subr.bf16.mxu0 0
        %7404 = vmatpush1.bf16.msra.mxu0 0
        %7405 = vmatprep.subr.bf16.mxu0 0
        %7406 = vmatpush1.bf16.msra.mxu0 0
        %7407 = vmatprep.subr.bf16.mxu0 0
        %7408 = vmatpush1.bf16.msra.mxu0 0
        %7409 = vmatprep.subr.bf16.mxu0 0
        %7410 = vmatpush1.bf16.msra.mxu0 0
        %7411 = vmatprep.subr.bf16.mxu0 0
        %7412 = vmatpush1.bf16.msra.mxu0 0
        %7413 = vmatprep.subr.bf16.mxu0 0
        %7414 = vmatpush1.bf16.msra.mxu0 0
        %7415 = vmatprep.subr.bf16.mxu0 0
        %7416 = vmatpush1.bf16.msra.mxu0 0
        %7417 = vmatprep.subr.bf16.mxu0 0
        %7418 = vmatpush1.bf16.msra.mxu0 0
        %7419 = vmatprep.subr.bf16.mxu0 0
        %7420 = vmatpush1.bf16.msra.mxu0 0
        %7421 = vmatprep.subr.bf16.mxu0 0
        %7422 = vmatpush1.bf16.msra.mxu0 0
        %7423 = vmatprep.mubr.bf16.mxu0 0
        %7424 = vmatmul.mubr.bf16.gmra.mrb[0].mxu0 %v7337
        %v7425 = vpop.f32.mrb[0].mxu0
        %v7426 = vadd.f32 0.0, %v7425
        %v7427 = vpop.f32.mrb[0].mxu0
        %v7428 = vpop.f32.mrb[0].mxu0
        %v7429 = vadd.f32 0.0, %v7428
        %v7430 = vpop.f32.mrb[0].mxu0
        %7431 = vdwg.mxu0
        %v7432 = vadd.f32 %v7269, %v7383
        %v7433 = vadd.f32 %v7270, %v7385
        %v7434 = vadd.f32 %v7271, %v7426
        %v7435 = vadd.f32 %v7272, %v7387
        %v7436 = vadd.f32 %v7273, %v7389
        %v7437 = vadd.f32 %v7274, %v7429
        %s7438 = scalar_lea.vmem %s13, 144
        %v7439 = vld [vmem:[%s7438] sm:$0xf]
        %v7440 = vld [vmem:[%s7438 + $0x4] sm:$0x3]
        %v7443 = vunpack.c.l.b16 %v7439
        %v7444 = vunpack.c.l.b16 %v7440
        %v7445 = vpack.c.b16 %v7444, %v7443
        %7446 = vrot.lane.b32.xlu0 %v6615, 103
        %v7447 = vpop.permute.xlu0 %7446
        %7448 = vrot.lane.b32.xlu0 %v6616, 103
        %v7449 = vpop.permute.xlu0 %7448
        %7450 = vrot.lane.b32.xlu0 %v6617, 103
        %v7451 = vpop.permute.xlu0 %7450
        %7452 = vrot.lane.b32.xlu0 %v6618, 103
        %v7453 = vpop.permute.xlu0 %7452
        %7454 = vrot.lane.b32.xlu0 %v6619, 103
        %v7455 = vpop.permute.xlu0 %7454
        %7456 = vrot.lane.b32.xlu0 %v6620, 103
        %v7457 = vpop.permute.xlu0 %7456
        %7458 = vrot.lane.b32.xlu0 %v6621, 103
        %v7459 = vpop.permute.xlu0 %7458
        %7460 = vrot.lane.b32.xlu0 %v6622, 103
        %v7461 = vpop.permute.xlu0 %7460
        %7462 = vrot.lane.b32.xlu0 %v6623, 103
        %v7463 = vpop.permute.xlu0 %7462
        %7464 = vrot.lane.b32.xlu0 %v6624, 103
        %v7465 = vpop.permute.xlu0 %7464
        %7466 = vrot.lane.b32.xlu0 %v6625, 103
        %v7467 = vpop.permute.xlu0 %7466
        %7468 = vrot.lane.b32.xlu0 %v6626, 103
        %v7469 = vpop.permute.xlu0 %7468
        %7470 = vrot.lane.b32.xlu0 %v6627, 103
        %v7471 = vpop.permute.xlu0 %7470
        %7472 = vrot.lane.b32.xlu0 %v6628, 103
        %v7473 = vpop.permute.xlu0 %7472
        %7474 = vrot.lane.b32.xlu0 %v6629, 103
        %v7475 = vpop.permute.xlu0 %7474
        %7476 = vrot.lane.b32.xlu0 %v6630, 103
        %v7477 = vpop.permute.xlu0 %7476
        %v7478 = vsel %vm1221, %v7447, %v7449
        %v7479 = vsel %vm1221, %v7449, %v7451
        %v7480 = vsel %vm1221, %v7451, %v7453
        %v7481 = vsel %vm1221, %v7455, %v7457
        %v7482 = vsel %vm1221, %v7457, %v7459
        %v7483 = vsel %vm1221, %v7459, %v7461
        %v7484 = vsel %vm1221, %v7463, %v7465
        %v7485 = vsel %vm1221, %v7465, %v7467
        %v7486 = vsel %vm1221, %v7467, %v7469
        %v7487 = vsel %vm1221, %v7471, %v7473
        %v7488 = vsel %vm1221, %v7473, %v7475
        %v7489 = vsel %vm1221, %v7475, %v7477
        %v7500 = vsel %vm2014, %v7445, 0
        %v7503 = vsel %vm2018, %v7487, 0
        %v7506 = vsel %vm2018, %v7488, 0
        %v7509 = vsel %vm2018, %v7489, 0
        %7511 = vmatprep.subr.bf16.mxu0 %v7479
        %7512 = vmatpush1.bf16.msra.mxu0 %v7478
        %7513 = vmatprep.subr.bf16.mxu0 %v7482
        %7514 = vmatpush1.bf16.msra.mxu0 %v7481
        %7515 = vmatprep.subr.bf16.mxu0 %v7485
        %7516 = vmatpush1.bf16.msra.mxu0 %v7484
        %7517 = vmatprep.subr.bf16.mxu0 %v7506
        %7518 = vmatpush1.bf16.msra.mxu0 %v7503
        %7519 = vmatprep.subr.bf16.mxu0 0
        %7520 = vmatpush1.bf16.msra.mxu0 0
        %7521 = vmatprep.subr.bf16.mxu0 0
        %7522 = vmatpush1.bf16.msra.mxu0 0
        %7523 = vmatprep.subr.bf16.mxu0 0
        %7524 = vmatpush1.bf16.msra.mxu0 0
        %7525 = vmatprep.subr.bf16.mxu0 0
        %7526 = vmatpush1.bf16.msra.mxu0 0
        %7527 = vmatprep.subr.bf16.mxu0 0
        %7528 = vmatpush1.bf16.msra.mxu0 0
        %7529 = vmatprep.subr.bf16.mxu0 0
        %7530 = vmatpush1.bf16.msra.mxu0 0
        %7531 = vmatprep.subr.bf16.mxu0 0
        %7532 = vmatpush1.bf16.msra.mxu0 0
        %7533 = vmatprep.subr.bf16.mxu0 0
        %7534 = vmatpush1.bf16.msra.mxu0 0
        %7535 = vmatprep.subr.bf16.mxu0 0
        %7536 = vmatpush1.bf16.msra.mxu0 0
        %7537 = vmatprep.subr.bf16.mxu0 0
        %7538 = vmatpush1.bf16.msra.mxu0 0
        %7539 = vmatprep.subr.bf16.mxu0 0
        %7540 = vmatpush1.bf16.msra.mxu0 0
        %7541 = vmatprep.subr.bf16.mxu0 0
        %7542 = vmatpush1.bf16.msra.mxu0 0
        %7543 = vmatprep.mubr.bf16.mxu0 0
        %7544 = vmatmul.mubr.bf16.gmra.mrb[0].mxu0 %v7500
        %v7545 = vpop.f32.mrb[0].mxu0
        %v7546 = vadd.f32 0.0, %v7545
        %v7547 = vpop.f32.mrb[0].mxu0
        %v7548 = vadd.f32 0.0, %v7547
        %v7549 = vpop.f32.mrb[0].mxu0
        %v7550 = vadd.f32 0.0, %v7549
        %v7551 = vpop.f32.mrb[0].mxu0
        %v7552 = vadd.f32 0.0, %v7551
        %7553 = vdwg.mxu0
        %7554 = vmatprep.subr.bf16.mxu0 0
        %7555 = vmatpush1.bf16.msra.mxu0 %v7480
        %7556 = vmatprep.subr.bf16.mxu0 0
        %7557 = vmatpush1.bf16.msra.mxu0 %v7483
        %7558 = vmatprep.subr.bf16.mxu0 0
        %7559 = vmatpush1.bf16.msra.mxu0 %v7486
        %7560 = vmatprep.subr.bf16.mxu0 0
        %7561 = vmatpush1.bf16.msra.mxu0 %v7509
        %7562 = vmatprep.subr.bf16.mxu0 0
        %7563 = vmatpush1.bf16.msra.mxu0 0
        %7564 = vmatprep.subr.bf16.mxu0 0
        %7565 = vmatpush1.bf16.msra.mxu0 0
        %7566 = vmatprep.subr.bf16.mxu0 0
        %7567 = vmatpush1.bf16.msra.mxu0 0
        %7568 = vmatprep.subr.bf16.mxu0 0
        %7569 = vmatpush1.bf16.msra.mxu0 0
        %7570 = vmatprep.subr.bf16.mxu0 0
        %7571 = vmatpush1.bf16.msra.mxu0 0
        %7572 = vmatprep.subr.bf16.mxu0 0
        %7573 = vmatpush1.bf16.msra.mxu0 0
        %7574 = vmatprep.subr.bf16.mxu0 0
        %7575 = vmatpush1.bf16.msra.mxu0 0
        %7576 = vmatprep.subr.bf16.mxu0 0
        %7577 = vmatpush1.bf16.msra.mxu0 0
        %7578 = vmatprep.subr.bf16.mxu0 0
        %7579 = vmatpush1.bf16.msra.mxu0 0
        %7580 = vmatprep.subr.bf16.mxu0 0
        %7581 = vmatpush1.bf16.msra.mxu0 0
        %7582 = vmatprep.subr.bf16.mxu0 0
        %7583 = vmatpush1.bf16.msra.mxu0 0
        %7584 = vmatprep.subr.bf16.mxu0 0
        %7585 = vmatpush1.bf16.msra.mxu0 0
        %7586 = vmatprep.mubr.bf16.mxu0 0
        %7587 = vmatmul.mubr.bf16.gmra.mrb[0].mxu0 %v7500
        %v7588 = vpop.f32.mrb[0].mxu0
        %v7589 = vadd.f32 0.0, %v7588
        %v7590 = vpop.f32.mrb[0].mxu0
        %v7591 = vpop.f32.mrb[0].mxu0
        %v7592 = vadd.f32 0.0, %v7591
        %v7593 = vpop.f32.mrb[0].mxu0
        %7594 = vdwg.mxu0
        %v7595 = vadd.f32 %v7432, %v7546
        %v7596 = vadd.f32 %v7433, %v7548
        %v7597 = vadd.f32 %v7434, %v7589
        %v7598 = vadd.f32 %v7435, %v7550
        %v7599 = vadd.f32 %v7436, %v7552
        %v7600 = vadd.f32 %v7437, %v7592
        %s7601 = scalar_lea.vmem %s13, 152
        %v7602 = vld [vmem:[%s7601] sm:$0xf]
        %v7603 = vld [vmem:[%s7601 + $0x4] sm:$0x3]
        %v7606 = vunpack.c.l.b16 %v7602
        %v7607 = vunpack.c.l.b16 %v7603
        %v7608 = vpack.c.b16 %v7607, %v7606
        %7609 = vrot.lane.b32.xlu0 %v6615, 102
        %v7610 = vpop.permute.xlu0 %7609
        %7611 = vrot.lane.b32.xlu0 %v6616, 102
        %v7612 = vpop.permute.xlu0 %7611
        %7613 = vrot.lane.b32.xlu0 %v6617, 102
        %v7614 = vpop.permute.xlu0 %7613
        %7615 = vrot.lane.b32.xlu0 %v6618, 102
        %v7616 = vpop.permute.xlu0 %7615
        %7617 = vrot.lane.b32.xlu0 %v6619, 102
        %v7618 = vpop.permute.xlu0 %7617
        %7619 = vrot.lane.b32.xlu0 %v6620, 102
        %v7620 = vpop.permute.xlu0 %7619
        %7621 = vrot.lane.b32.xlu0 %v6621, 102
        %v7622 = vpop.permute.xlu0 %7621
        %7623 = vrot.lane.b32.xlu0 %v6622, 102
        %v7624 = vpop.permute.xlu0 %7623
        %7625 = vrot.lane.b32.xlu0 %v6623, 102
        %v7626 = vpop.permute.xlu0 %7625
        %7627 = vrot.lane.b32.xlu0 %v6624, 102
        %v7628 = vpop.permute.xlu0 %7627
        %7629 = vrot.lane.b32.xlu0 %v6625, 102
        %v7630 = vpop.permute.xlu0 %7629
        %7631 = vrot.lane.b32.xlu0 %v6626, 102
        %v7632 = vpop.permute.xlu0 %7631
        %7633 = vrot.lane.b32.xlu0 %v6627, 102
        %v7634 = vpop.permute.xlu0 %7633
        %7635 = vrot.lane.b32.xlu0 %v6628, 102
        %v7636 = vpop.permute.xlu0 %7635
        %7637 = vrot.lane.b32.xlu0 %v6629, 102
        %v7638 = vpop.permute.xlu0 %7637
        %7639 = vrot.lane.b32.xlu0 %v6630, 102
        %v7640 = vpop.permute.xlu0 %7639
        %v7641 = vsel %vm1252, %v7610, %v7612
        %v7642 = vsel %vm1252, %v7612, %v7614
        %v7643 = vsel %vm1252, %v7614, %v7616
        %v7644 = vsel %vm1252, %v7618, %v7620
        %v7645 = vsel %vm1252, %v7620, %v7622
        %v7646 = vsel %vm1252, %v7622, %v7624
        %v7647 = vsel %vm1252, %v7626, %v7628
        %v7648 = vsel %vm1252, %v7628, %v7630
        %v7649 = vsel %vm1252, %v7630, %v7632
        %v7650 = vsel %vm1252, %v7634, %v7636
        %v7651 = vsel %vm1252, %v7636, %v7638
        %v7652 = vsel %vm1252, %v7638, %v7640
        %v7663 = vsel %vm2014, %v7608, 0
        %v7666 = vsel %vm2018, %v7650, 0
        %v7669 = vsel %vm2018, %v7651, 0
        %v7672 = vsel %vm2018, %v7652, 0
        %7674 = vmatprep.subr.bf16.mxu0 %v7642
        %7675 = vmatpush1.bf16.msra.mxu0 %v7641
        %7676 = vmatprep.subr.bf16.mxu0 %v7645
        %7677 = vmatpush1.bf16.msra.mxu0 %v7644
        %7678 = vmatprep.subr.bf16.mxu0 %v7648
        %7679 = vmatpush1.bf16.msra.mxu0 %v7647
        %7680 = vmatprep.subr.bf16.mxu0 %v7669
        %7681 = vmatpush1.bf16.msra.mxu0 %v7666
        %7682 = vmatprep.subr.bf16.mxu0 0
        %7683 = vmatpush1.bf16.msra.mxu0 0
        %7684 = vmatprep.subr.bf16.mxu0 0
        %7685 = vmatpush1.bf16.msra.mxu0 0
        %7686 = vmatprep.subr.bf16.mxu0 0
        %7687 = vmatpush1.bf16.msra.mxu0 0
        %7688 = vmatprep.subr.bf16.mxu0 0
        %7689 = vmatpush1.bf16.msra.mxu0 0
        %7690 = vmatprep.subr.bf16.mxu0 0
        %7691 = vmatpush1.bf16.msra.mxu0 0
        %7692 = vmatprep.subr.bf16.mxu0 0
        %7693 = vmatpush1.bf16.msra.mxu0 0
        %7694 = vmatprep.subr.bf16.mxu0 0
        %7695 = vmatpush1.bf16.msra.mxu0 0
        %7696 = vmatprep.subr.bf16.mxu0 0
        %7697 = vmatpush1.bf16.msra.mxu0 0
        %7698 = vmatprep.subr.bf16.mxu0 0
        %7699 = vmatpush1.bf16.msra.mxu0 0
        %7700 = vmatprep.subr.bf16.mxu0 0
        %7701 = vmatpush1.bf16.msra.mxu0 0
        %7702 = vmatprep.subr.bf16.mxu0 0
        %7703 = vmatpush1.bf16.msra.mxu0 0
        %7704 = vmatprep.subr.bf16.mxu0 0
        %7705 = vmatpush1.bf16.msra.mxu0 0
        %7706 = vmatprep.mubr.bf16.mxu0 0
        %7707 = vmatmul.mubr.bf16.gmra.mrb[0].mxu0 %v7663
        %v7708 = vpop.f32.mrb[0].mxu0
        %v7709 = vadd.f32 0.0, %v7708
        %v7710 = vpop.f32.mrb[0].mxu0
        %v7711 = vadd.f32 0.0, %v7710
        %v7712 = vpop.f32.mrb[0].mxu0
        %v7713 = vadd.f32 0.0, %v7712
        %v7714 = vpop.f32.mrb[0].mxu0
        %v7715 = vadd.f32 0.0, %v7714
        %7716 = vdwg.mxu0
        %7717 = vmatprep.subr.bf16.mxu0 0
        %7718 = vmatpush1.bf16.msra.mxu0 %v7643
        %7719 = vmatprep.subr.bf16.mxu0 0
        %7720 = vmatpush1.bf16.msra.mxu0 %v7646
        %7721 = vmatprep.subr.bf16.mxu0 0
        %7722 = vmatpush1.bf16.msra.mxu0 %v7649
        %7723 = vmatprep.subr.bf16.mxu0 0
        %7724 = vmatpush1.bf16.msra.mxu0 %v7672
        %7725 = vmatprep.subr.bf16.mxu0 0
        %7726 = vmatpush1.bf16.msra.mxu0 0
        %7727 = vmatprep.subr.bf16.mxu0 0
        %7728 = vmatpush1.bf16.msra.mxu0 0
        %7729 = vmatprep.subr.bf16.mxu0 0
        %7730 = vmatpush1.bf16.msra.mxu0 0
        %7731 = vmatprep.subr.bf16.mxu0 0
        %7732 = vmatpush1.bf16.msra.mxu0 0
        %7733 = vmatprep.subr.bf16.mxu0 0
        %7734 = vmatpush1.bf16.msra.mxu0 0
        %7735 = vmatprep.subr.bf16.mxu0 0
        %7736 = vmatpush1.bf16.msra.mxu0 0
        %7737 = vmatprep.subr.bf16.mxu0 0
        %7738 = vmatpush1.bf16.msra.mxu0 0
        %7739 = vmatprep.subr.bf16.mxu0 0
        %7740 = vmatpush1.bf16.msra.mxu0 0
        %7741 = vmatprep.subr.bf16.mxu0 0
        %7742 = vmatpush1.bf16.msra.mxu0 0
        %7743 = vmatprep.subr.bf16.mxu0 0
        %7744 = vmatpush1.bf16.msra.mxu0 0
        %7745 = vmatprep.subr.bf16.mxu0 0
        %7746 = vmatpush1.bf16.msra.mxu0 0
        %7747 = vmatprep.subr.bf16.mxu0 0
        %7748 = vmatpush1.bf16.msra.mxu0 0
        %7749 = vmatprep.mubr.bf16.mxu0 0
        %7750 = vmatmul.mubr.bf16.gmra.mrb[0].mxu0 %v7663
        %v7751 = vpop.f32.mrb[0].mxu0
        %v7752 = vadd.f32 0.0, %v7751
        %v7753 = vpop.f32.mrb[0].mxu0
        %v7754 = vpop.f32.mrb[0].mxu0
        %v7755 = vadd.f32 0.0, %v7754
        %v7756 = vpop.f32.mrb[0].mxu0
        %7757 = vdwg.mxu0
        %v7758 = vadd.f32 %v7595, %v7709
        %v7759 = vadd.f32 %v7596, %v7711
        %v7760 = vadd.f32 %v7597, %v7752
        %v7761 = vadd.f32 %v7598, %v7713
        %v7762 = vadd.f32 %v7599, %v7715
        %v7763 = vadd.f32 %v7600, %v7755
        %s7764 = scalar_lea.vmem %s13, 160
        %v7765 = vld [vmem:[%s7764] sm:$0xf]
        %v7766 = vld [vmem:[%s7764 + $0x4] sm:$0x3]
        %v7769 = vunpack.c.l.b16 %v7765
        %v7770 = vunpack.c.l.b16 %v7766
        %v7771 = vpack.c.b16 %v7770, %v7769
        %7772 = vrot.lane.b32.xlu0 %v6615, 82
        %v7773 = vpop.permute.xlu0 %7772
        %7774 = vrot.lane.b32.xlu0 %v6616, 82
        %v7775 = vpop.permute.xlu0 %7774
        %7776 = vrot.lane.b32.xlu0 %v6617, 82
        %v7777 = vpop.permute.xlu0 %7776
        %7778 = vrot.lane.b32.xlu0 %v6618, 82
        %v7779 = vpop.permute.xlu0 %7778
        %7780 = vrot.lane.b32.xlu0 %v6619, 82
        %v7781 = vpop.permute.xlu0 %7780
        %7782 = vrot.lane.b32.xlu0 %v6620, 82
        %v7783 = vpop.permute.xlu0 %7782
        %7784 = vrot.lane.b32.xlu0 %v6621, 82
        %v7785 = vpop.permute.xlu0 %7784
        %7786 = vrot.lane.b32.xlu0 %v6622, 82
        %v7787 = vpop.permute.xlu0 %7786
        %7788 = vrot.lane.b32.xlu0 %v6623, 82
        %v7789 = vpop.permute.xlu0 %7788
        %7790 = vrot.lane.b32.xlu0 %v6624, 82
        %v7791 = vpop.permute.xlu0 %7790
        %7792 = vrot.lane.b32.xlu0 %v6625, 82
        %v7793 = vpop.permute.xlu0 %7792
        %7794 = vrot.lane.b32.xlu0 %v6626, 82
        %v7795 = vpop.permute.xlu0 %7794
        %7796 = vrot.lane.b32.xlu0 %v6627, 82
        %v7797 = vpop.permute.xlu0 %7796
        %7798 = vrot.lane.b32.xlu0 %v6628, 82
        %v7799 = vpop.permute.xlu0 %7798
        %7800 = vrot.lane.b32.xlu0 %v6629, 82
        %v7801 = vpop.permute.xlu0 %7800
        %7802 = vrot.lane.b32.xlu0 %v6630, 82
        %v7803 = vpop.permute.xlu0 %7802
        %v7804 = vsel %vm1283, %v7773, %v7775
        %v7805 = vsel %vm1283, %v7775, %v7777
        %v7806 = vsel %vm1283, %v7777, %v7779
        %v7807 = vsel %vm1283, %v7781, %v7783
        %v7808 = vsel %vm1283, %v7783, %v7785
        %v7809 = vsel %vm1283, %v7785, %v7787
        %v7810 = vsel %vm1283, %v7789, %v7791
        %v7811 = vsel %vm1283, %v7791, %v7793
        %v7812 = vsel %vm1283, %v7793, %v7795
        %v7813 = vsel %vm1283, %v7797, %v7799
        %v7814 = vsel %vm1283, %v7799, %v7801
        %v7815 = vsel %vm1283, %v7801, %v7803
        %v7826 = vsel %vm2014, %v7771, 0
        %v7829 = vsel %vm2018, %v7813, 0
        %v7832 = vsel %vm2018, %v7814, 0
        %v7835 = vsel %vm2018, %v7815, 0
        %7837 = vmatprep.subr.bf16.mxu0 %v7805
        %7838 = vmatpush1.bf16.msra.mxu0 %v7804
        %7839 = vmatprep.subr.bf16.mxu0 %v7808
        %7840 = vmatpush1.bf16.msra.mxu0 %v7807
        %7841 = vmatprep.subr.bf16.mxu0 %v7811
        %7842 = vmatpush1.bf16.msra.mxu0 %v7810
        %7843 = vmatprep.subr.bf16.mxu0 %v7832
        %7844 = vmatpush1.bf16.msra.mxu0 %v7829
        %7845 = vmatprep.subr.bf16.mxu0 0
        %7846 = vmatpush1.bf16.msra.mxu0 0
        %7847 = vmatprep.subr.bf16.mxu0 0
        %7848 = vmatpush1.bf16.msra.mxu0 0
        %7849 = vmatprep.subr.bf16.mxu0 0
        %7850 = vmatpush1.bf16.msra.mxu0 0
        %7851 = vmatprep.subr.bf16.mxu0 0
        %7852 = vmatpush1.bf16.msra.mxu0 0
        %7853 = vmatprep.subr.bf16.mxu0 0
        %7854 = vmatpush1.bf16.msra.mxu0 0
        %7855 = vmatprep.subr.bf16.mxu0 0
        %7856 = vmatpush1.bf16.msra.mxu0 0
        %7857 = vmatprep.subr.bf16.mxu0 0
        %7858 = vmatpush1.bf16.msra.mxu0 0
        %7859 = vmatprep.subr.bf16.mxu0 0
        %7860 = vmatpush1.bf16.msra.mxu0 0
        %7861 = vmatprep.subr.bf16.mxu0 0
        %7862 = vmatpush1.bf16.msra.mxu0 0
        %7863 = vmatprep.subr.bf16.mxu0 0
        %7864 = vmatpush1.bf16.msra.mxu0 0
        %7865 = vmatprep.subr.bf16.mxu0 0
        %7866 = vmatpush1.bf16.msra.mxu0 0
        %7867 = vmatprep.subr.bf16.mxu0 0
        %7868 = vmatpush1.bf16.msra.mxu0 0
        %7869 = vmatprep.mubr.bf16.mxu0 0
        %7870 = vmatmul.mubr.bf16.gmra.mrb[0].mxu0 %v7826
        %v7871 = vpop.f32.mrb[0].mxu0
        %v7872 = vadd.f32 0.0, %v7871
        %v7873 = vpop.f32.mrb[0].mxu0
        %v7874 = vadd.f32 0.0, %v7873
        %v7875 = vpop.f32.mrb[0].mxu0
        %v7876 = vadd.f32 0.0, %v7875
        %v7877 = vpop.f32.mrb[0].mxu0
        %v7878 = vadd.f32 0.0, %v7877
        %7879 = vdwg.mxu0
        %7880 = vmatprep.subr.bf16.mxu0 0
        %7881 = vmatpush1.bf16.msra.mxu0 %v7806
        %7882 = vmatprep.subr.bf16.mxu0 0
        %7883 = vmatpush1.bf16.msra.mxu0 %v7809
        %7884 = vmatprep.subr.bf16.mxu0 0
        %7885 = vmatpush1.bf16.msra.mxu0 %v7812
        %7886 = vmatprep.subr.bf16.mxu0 0
        %7887 = vmatpush1.bf16.msra.mxu0 %v7835
        %7888 = vmatprep.subr.bf16.mxu0 0
        %7889 = vmatpush1.bf16.msra.mxu0 0
        %7890 = vmatprep.subr.bf16.mxu0 0
        %7891 = vmatpush1.bf16.msra.mxu0 0
        %7892 = vmatprep.subr.bf16.mxu0 0
        %7893 = vmatpush1.bf16.msra.mxu0 0
        %7894 = vmatprep.subr.bf16.mxu0 0
        %7895 = vmatpush1.bf16.msra.mxu0 0
        %7896 = vmatprep.subr.bf16.mxu0 0
        %7897 = vmatpush1.bf16.msra.mxu0 0
        %7898 = vmatprep.subr.bf16.mxu0 0
        %7899 = vmatpush1.bf16.msra.mxu0 0
        %7900 = vmatprep.subr.bf16.mxu0 0
        %7901 = vmatpush1.bf16.msra.mxu0 0
        %7902 = vmatprep.subr.bf16.mxu0 0
        %7903 = vmatpush1.bf16.msra.mxu0 0
        %7904 = vmatprep.subr.bf16.mxu0 0
        %7905 = vmatpush1.bf16.msra.mxu0 0
        %7906 = vmatprep.subr.bf16.mxu0 0
        %7907 = vmatpush1.bf16.msra.mxu0 0
        %7908 = vmatprep.subr.bf16.mxu0 0
        %7909 = vmatpush1.bf16.msra.mxu0 0
        %7910 = vmatprep.subr.bf16.mxu0 0
        %7911 = vmatpush1.bf16.msra.mxu0 0
        %7912 = vmatprep.mubr.bf16.mxu0 0
        %7913 = vmatmul.mubr.bf16.gmra.mrb[0].mxu0 %v7826
        %v7914 = vpop.f32.mrb[0].mxu0
        %v7915 = vadd.f32 0.0, %v7914
        %v7916 = vpop.f32.mrb[0].mxu0
        %v7917 = vpop.f32.mrb[0].mxu0
        %v7918 = vadd.f32 0.0, %v7917
        %v7919 = vpop.f32.mrb[0].mxu0
        %7920 = vdwg.mxu0
        %v7921 = vadd.f32 %v7758, %v7872
        %v7922 = vadd.f32 %v7759, %v7874
        %v7923 = vadd.f32 %v7760, %v7915
        %v7924 = vadd.f32 %v7761, %v7876
        %v7925 = vadd.f32 %v7762, %v7878
        %v7926 = vadd.f32 %v7763, %v7918
        %s7927 = scalar_lea.vmem %s13, 168
        %v7928 = vld [vmem:[%s7927] sm:$0xf]
        %v7929 = vld [vmem:[%s7927 + $0x4] sm:$0x3]
        %v7932 = vunpack.c.l.b16 %v7928
        %v7933 = vunpack.c.l.b16 %v7929
        %v7934 = vpack.c.b16 %v7933, %v7932
        %7935 = vrot.lane.b32.xlu0 %v6615, 81
        %v7936 = vpop.permute.xlu0 %7935
        %7937 = vrot.lane.b32.xlu0 %v6616, 81
        %v7938 = vpop.permute.xlu0 %7937
        %7939 = vrot.lane.b32.xlu0 %v6617, 81
        %v7940 = vpop.permute.xlu0 %7939
        %7941 = vrot.lane.b32.xlu0 %v6618, 81
        %v7942 = vpop.permute.xlu0 %7941
        %7943 = vrot.lane.b32.xlu0 %v6619, 81
        %v7944 = vpop.permute.xlu0 %7943
        %7945 = vrot.lane.b32.xlu0 %v6620, 81
        %v7946 = vpop.permute.xlu0 %7945
        %7947 = vrot.lane.b32.xlu0 %v6621, 81
        %v7948 = vpop.permute.xlu0 %7947
        %7949 = vrot.lane.b32.xlu0 %v6622, 81
        %v7950 = vpop.permute.xlu0 %7949
        %7951 = vrot.lane.b32.xlu0 %v6623, 81
        %v7952 = vpop.permute.xlu0 %7951
        %7953 = vrot.lane.b32.xlu0 %v6624, 81
        %v7954 = vpop.permute.xlu0 %7953
        %7955 = vrot.lane.b32.xlu0 %v6625, 81
        %v7956 = vpop.permute.xlu0 %7955
        %7957 = vrot.lane.b32.xlu0 %v6626, 81
        %v7958 = vpop.permute.xlu0 %7957
        %7959 = vrot.lane.b32.xlu0 %v6627, 81
        %v7960 = vpop.permute.xlu0 %7959
        %7961 = vrot.lane.b32.xlu0 %v6628, 81
        %v7962 = vpop.permute.xlu0 %7961
        %7963 = vrot.lane.b32.xlu0 %v6629, 81
        %v7964 = vpop.permute.xlu0 %7963
        %7965 = vrot.lane.b32.xlu0 %v6630, 81
        %v7966 = vpop.permute.xlu0 %7965
        %v7967 = vsel %vm1314, %v7936, %v7938
        %v7968 = vsel %vm1314, %v7938, %v7940
        %v7969 = vsel %vm1314, %v7940, %v7942
        %v7970 = vsel %vm1314, %v7944, %v7946
        %v7971 = vsel %vm1314, %v7946, %v7948
        %v7972 = vsel %vm1314, %v7948, %v7950
        %v7973 = vsel %vm1314, %v7952, %v7954
        %v7974 = vsel %vm1314, %v7954, %v7956
        %v7975 = vsel %vm1314, %v7956, %v7958
        %v7976 = vsel %vm1314, %v7960, %v7962
        %v7977 = vsel %vm1314, %v7962, %v7964
        %v7978 = vsel %vm1314, %v7964, %v7966
        %v7989 = vsel %vm2014, %v7934, 0
        %v7992 = vsel %vm2018, %v7976, 0
        %v7995 = vsel %vm2018, %v7977, 0
        %v7998 = vsel %vm2018, %v7978, 0
        %8000 = vmatprep.subr.bf16.mxu0 %v7968
        %8001 = vmatpush1.bf16.msra.mxu0 %v7967
        %8002 = vmatprep.subr.bf16.mxu0 %v7971
        %8003 = vmatpush1.bf16.msra.mxu0 %v7970
        %8004 = vmatprep.subr.bf16.mxu0 %v7974
        %8005 = vmatpush1.bf16.msra.mxu0 %v7973
        %8006 = vmatprep.subr.bf16.mxu0 %v7995
        %8007 = vmatpush1.bf16.msra.mxu0 %v7992
        %8008 = vmatprep.subr.bf16.mxu0 0
        %8009 = vmatpush1.bf16.msra.mxu0 0
        %8010 = vmatprep.subr.bf16.mxu0 0
        %8011 = vmatpush1.bf16.msra.mxu0 0
        %8012 = vmatprep.subr.bf16.mxu0 0
        %8013 = vmatpush1.bf16.msra.mxu0 0
        %8014 = vmatprep.subr.bf16.mxu0 0
        %8015 = vmatpush1.bf16.msra.mxu0 0
        %8016 = vmatprep.subr.bf16.mxu0 0
        %8017 = vmatpush1.bf16.msra.mxu0 0
        %8018 = vmatprep.subr.bf16.mxu0 0
        %8019 = vmatpush1.bf16.msra.mxu0 0
        %8020 = vmatprep.subr.bf16.mxu0 0
        %8021 = vmatpush1.bf16.msra.mxu0 0
        %8022 = vmatprep.subr.bf16.mxu0 0
        %8023 = vmatpush1.bf16.msra.mxu0 0
        %8024 = vmatprep.subr.bf16.mxu0 0
        %8025 = vmatpush1.bf16.msra.mxu0 0
        %8026 = vmatprep.subr.bf16.mxu0 0
        %8027 = vmatpush1.bf16.msra.mxu0 0
        %8028 = vmatprep.subr.bf16.mxu0 0
        %8029 = vmatpush1.bf16.msra.mxu0 0
        %8030 = vmatprep.subr.bf16.mxu0 0
        %8031 = vmatpush1.bf16.msra.mxu0 0
        %8032 = vmatprep.mubr.bf16.mxu0 0
        %8033 = vmatmul.mubr.bf16.gmra.mrb[0].mxu0 %v7989
        %v8034 = vpop.f32.mrb[0].mxu0
        %v8035 = vadd.f32 0.0, %v8034
        %v8036 = vpop.f32.mrb[0].mxu0
        %v8037 = vadd.f32 0.0, %v8036
        %v8038 = vpop.f32.mrb[0].mxu0
        %v8039 = vadd.f32 0.0, %v8038
        %v8040 = vpop.f32.mrb[0].mxu0
        %v8041 = vadd.f32 0.0, %v8040
        %8042 = vdwg.mxu0
        %8043 = vmatprep.subr.bf16.mxu0 0
        %8044 = vmatpush1.bf16.msra.mxu0 %v7969
        %8045 = vmatprep.subr.bf16.mxu0 0
        %8046 = vmatpush1.bf16.msra.mxu0 %v7972
        %8047 = vmatprep.subr.bf16.mxu0 0
        %8048 = vmatpush1.bf16.msra.mxu0 %v7975
        %8049 = vmatprep.subr.bf16.mxu0 0
        %8050 = vmatpush1.bf16.msra.mxu0 %v7998
        %8051 = vmatprep.subr.bf16.mxu0 0
        %8052 = vmatpush1.bf16.msra.mxu0 0
        %8053 = vmatprep.subr.bf16.mxu0 0
        %8054 = vmatpush1.bf16.msra.mxu0 0
        %8055 = vmatprep.subr.bf16.mxu0 0
        %8056 = vmatpush1.bf16.msra.mxu0 0
        %8057 = vmatprep.subr.bf16.mxu0 0
        %8058 = vmatpush1.bf16.msra.mxu0 0
        %8059 = vmatprep.subr.bf16.mxu0 0
        %8060 = vmatpush1.bf16.msra.mxu0 0
        %8061 = vmatprep.subr.bf16.mxu0 0
        %8062 = vmatpush1.bf16.msra.mxu0 0
        %8063 = vmatprep.subr.bf16.mxu0 0
        %8064 = vmatpush1.bf16.msra.mxu0 0
        %8065 = vmatprep.subr.bf16.mxu0 0
        %8066 = vmatpush1.bf16.msra.mxu0 0
        %8067 = vmatprep.subr.bf16.mxu0 0
        %8068 = vmatpush1.bf16.msra.mxu0 0
        %8069 = vmatprep.subr.bf16.mxu0 0
        %8070 = vmatpush1.bf16.msra.mxu0 0
        %8071 = vmatprep.subr.bf16.mxu0 0
        %8072 = vmatpush1.bf16.msra.mxu0 0
        %8073 = vmatprep.subr.bf16.mxu0 0
        %8074 = vmatpush1.bf16.msra.mxu0 0
        %8075 = vmatprep.mubr.bf16.mxu0 0
        %8076 = vmatmul.mubr.bf16.gmra.mrb[0].mxu0 %v7989
        %v8077 = vpop.f32.mrb[0].mxu0
        %v8078 = vadd.f32 0.0, %v8077
        %v8079 = vpop.f32.mrb[0].mxu0
        %v8080 = vpop.f32.mrb[0].mxu0
        %v8081 = vadd.f32 0.0, %v8080
        %v8082 = vpop.f32.mrb[0].mxu0
        %8083 = vdwg.mxu0
        %v8084 = vadd.f32 %v7921, %v8035
        %v8085 = vadd.f32 %v7922, %v8037
        %v8086 = vadd.f32 %v7923, %v8078
        %v8087 = vadd.f32 %v7924, %v8039
        %v8088 = vadd.f32 %v7925, %v8041
        %v8089 = vadd.f32 %v7926, %v8081
        %s8090 = scalar_lea.vmem %s13, 176
        %v8091 = vld [vmem:[%s8090] sm:$0xf]
        %v8092 = vld [vmem:[%s8090 + $0x4] sm:$0x3]
        %v8095 = vunpack.c.l.b16 %v8091
        %v8096 = vunpack.c.l.b16 %v8092
        %v8097 = vpack.c.b16 %v8096, %v8095
        %8098 = vrot.lane.b32.xlu0 %v6615, 80
        %v8099 = vpop.permute.xlu0 %8098
        %8100 = vrot.lane.b32.xlu0 %v6616, 80
        %v8101 = vpop.permute.xlu0 %8100
        %8102 = vrot.lane.b32.xlu0 %v6617, 80
        %v8103 = vpop.permute.xlu0 %8102
        %8104 = vrot.lane.b32.xlu0 %v6618, 80
        %v8105 = vpop.permute.xlu0 %8104
        %8106 = vrot.lane.b32.xlu0 %v6619, 80
        %v8107 = vpop.permute.xlu0 %8106
        %8108 = vrot.lane.b32.xlu0 %v6620, 80
        %v8109 = vpop.permute.xlu0 %8108
        %8110 = vrot.lane.b32.xlu0 %v6621, 80
        %v8111 = vpop.permute.xlu0 %8110
        %8112 = vrot.lane.b32.xlu0 %v6622, 80
        %v8113 = vpop.permute.xlu0 %8112
        %8114 = vrot.lane.b32.xlu0 %v6623, 80
        %v8115 = vpop.permute.xlu0 %8114
        %8116 = vrot.lane.b32.xlu0 %v6624, 80
        %v8117 = vpop.permute.xlu0 %8116
        %8118 = vrot.lane.b32.xlu0 %v6625, 80
        %v8119 = vpop.permute.xlu0 %8118
        %8120 = vrot.lane.b32.xlu0 %v6626, 80
        %v8121 = vpop.permute.xlu0 %8120
        %8122 = vrot.lane.b32.xlu0 %v6627, 80
        %v8123 = vpop.permute.xlu0 %8122
        %8124 = vrot.lane.b32.xlu0 %v6628, 80
        %v8125 = vpop.permute.xlu0 %8124
        %8126 = vrot.lane.b32.xlu0 %v6629, 80
        %v8127 = vpop.permute.xlu0 %8126
        %8128 = vrot.lane.b32.xlu0 %v6630, 80
        %v8129 = vpop.permute.xlu0 %8128
        %v8130 = vsel %vm1345, %v8099, %v8101
        %v8131 = vsel %vm1345, %v8101, %v8103
        %v8132 = vsel %vm1345, %v8103, %v8105
        %v8133 = vsel %vm1345, %v8107, %v8109
        %v8134 = vsel %vm1345, %v8109, %v8111
        %v8135 = vsel %vm1345, %v8111, %v8113
        %v8136 = vsel %vm1345, %v8115, %v8117
        %v8137 = vsel %vm1345, %v8117, %v8119
        %v8138 = vsel %vm1345, %v8119, %v8121
        %v8139 = vsel %vm1345, %v8123, %v8125
        %v8140 = vsel %vm1345, %v8125, %v8127
        %v8141 = vsel %vm1345, %v8127, %v8129
        %v8152 = vsel %vm2014, %v8097, 0
        %v8155 = vsel %vm2018, %v8139, 0
        %v8158 = vsel %vm2018, %v8140, 0
        %v8161 = vsel %vm2018, %v8141, 0
        %8163 = vmatprep.subr.bf16.mxu0 %v8131
        %8164 = vmatpush1.bf16.msra.mxu0 %v8130
        %8165 = vmatprep.subr.bf16.mxu0 %v8134
        %8166 = vmatpush1.bf16.msra.mxu0 %v8133
        %8167 = vmatprep.subr.bf16.mxu0 %v8137
        %8168 = vmatpush1.bf16.msra.mxu0 %v8136
        %8169 = vmatprep.subr.bf16.mxu0 %v8158
        %8170 = vmatpush1.bf16.msra.mxu0 %v8155
        %8171 = vmatprep.subr.bf16.mxu0 0
        %8172 = vmatpush1.bf16.msra.mxu0 0
        %8173 = vmatprep.subr.bf16.mxu0 0
        %8174 = vmatpush1.bf16.msra.mxu0 0
        %8175 = vmatprep.subr.bf16.mxu0 0
        %8176 = vmatpush1.bf16.msra.mxu0 0
        %8177 = vmatprep.subr.bf16.mxu0 0
        %8178 = vmatpush1.bf16.msra.mxu0 0
        %8179 = vmatprep.subr.bf16.mxu0 0
        %8180 = vmatpush1.bf16.msra.mxu0 0
        %8181 = vmatprep.subr.bf16.mxu0 0
        %8182 = vmatpush1.bf16.msra.mxu0 0
        %8183 = vmatprep.subr.bf16.mxu0 0
        %8184 = vmatpush1.bf16.msra.mxu0 0
        %8185 = vmatprep.subr.bf16.mxu0 0
        %8186 = vmatpush1.bf16.msra.mxu0 0
        %8187 = vmatprep.subr.bf16.mxu0 0
        %8188 = vmatpush1.bf16.msra.mxu0 0
        %8189 = vmatprep.subr.bf16.mxu0 0
        %8190 = vmatpush1.bf16.msra.mxu0 0
        %8191 = vmatprep.subr.bf16.mxu0 0
        %8192 = vmatpush1.bf16.msra.mxu0 0
        %8193 = vmatprep.subr.bf16.mxu0 0
        %8194 = vmatpush1.bf16.msra.mxu0 0
        %8195 = vmatprep.mubr.bf16.mxu0 0
        %8196 = vmatmul.mubr.bf16.gmra.mrb[0].mxu0 %v8152
        %v8197 = vpop.f32.mrb[0].mxu0
        %v8198 = vadd.f32 0.0, %v8197
        %v8199 = vpop.f32.mrb[0].mxu0
        %v8200 = vadd.f32 0.0, %v8199
        %v8201 = vpop.f32.mrb[0].mxu0
        %v8202 = vadd.f32 0.0, %v8201
        %v8203 = vpop.f32.mrb[0].mxu0
        %v8204 = vadd.f32 0.0, %v8203
        %8205 = vdwg.mxu0
        %8206 = vmatprep.subr.bf16.mxu0 0
        %8207 = vmatpush1.bf16.msra.mxu0 %v8132
        %8208 = vmatprep.subr.bf16.mxu0 0
        %8209 = vmatpush1.bf16.msra.mxu0 %v8135
        %8210 = vmatprep.subr.bf16.mxu0 0
        %8211 = vmatpush1.bf16.msra.mxu0 %v8138
        %8212 = vmatprep.subr.bf16.mxu0 0
        %8213 = vmatpush1.bf16.msra.mxu0 %v8161
        %8214 = vmatprep.subr.bf16.mxu0 0
        %8215 = vmatpush1.bf16.msra.mxu0 0
        %8216 = vmatprep.subr.bf16.mxu0 0
        %8217 = vmatpush1.bf16.msra.mxu0 0
        %8218 = vmatprep.subr.bf16.mxu0 0
        %8219 = vmatpush1.bf16.msra.mxu0 0
        %8220 = vmatprep.subr.bf16.mxu0 0
        %8221 = vmatpush1.bf16.msra.mxu0 0
        %8222 = vmatprep.subr.bf16.mxu0 0
        %8223 = vmatpush1.bf16.msra.mxu0 0
        %8224 = vmatprep.subr.bf16.mxu0 0
        %8225 = vmatpush1.bf16.msra.mxu0 0
        %8226 = vmatprep.subr.bf16.mxu0 0
        %8227 = vmatpush1.bf16.msra.mxu0 0
        %8228 = vmatprep.subr.bf16.mxu0 0
        %8229 = vmatpush1.bf16.msra.mxu0 0
        %8230 = vmatprep.subr.bf16.mxu0 0
        %8231 = vmatpush1.bf16.msra.mxu0 0
        %8232 = vmatprep.subr.bf16.mxu0 0
        %8233 = vmatpush1.bf16.msra.mxu0 0
        %8234 = vmatprep.subr.bf16.mxu0 0
        %8235 = vmatpush1.bf16.msra.mxu0 0
        %8236 = vmatprep.subr.bf16.mxu0 0
        %8237 = vmatpush1.bf16.msra.mxu0 0
        %8238 = vmatprep.mubr.bf16.mxu0 0
        %8239 = vmatmul.mubr.bf16.gmra.mrb[0].mxu0 %v8152
        %v8240 = vpop.f32.mrb[0].mxu0
        %v8241 = vadd.f32 0.0, %v8240
        %v8242 = vpop.f32.mrb[0].mxu0
        %v8243 = vpop.f32.mrb[0].mxu0
        %v8244 = vadd.f32 0.0, %v8243
        %v8245 = vpop.f32.mrb[0].mxu0
        %8246 = vdwg.mxu0
        %v8247 = vadd.f32 %v8084, %v8198
        %v8248 = vadd.f32 %v8085, %v8200
        %v8249 = vadd.f32 %v8086, %v8241
        %v8250 = vadd.f32 %v8087, %v8202
        %v8251 = vadd.f32 %v8088, %v8204
        %v8252 = vadd.f32 %v8089, %v8244
        %s8253 = scalar_lea.vmem %s13, 184
        %v8254 = vld [vmem:[%s8253] sm:$0xf]
        %v8255 = vld [vmem:[%s8253 + $0x4] sm:$0x3]
        %v8258 = vunpack.c.l.b16 %v8254
        %v8259 = vunpack.c.l.b16 %v8255
        %v8260 = vpack.c.b16 %v8259, %v8258
        %8261 = vrot.lane.b32.xlu0 %v6615, 79
        %v8262 = vpop.permute.xlu0 %8261
        %8263 = vrot.lane.b32.xlu0 %v6616, 79
        %v8264 = vpop.permute.xlu0 %8263
        %8265 = vrot.lane.b32.xlu0 %v6617, 79
        %v8266 = vpop.permute.xlu0 %8265
        %8267 = vrot.lane.b32.xlu0 %v6618, 79
        %v8268 = vpop.permute.xlu0 %8267
        %8269 = vrot.lane.b32.xlu0 %v6619, 79
        %v8270 = vpop.permute.xlu0 %8269
        %8271 = vrot.lane.b32.xlu0 %v6620, 79
        %v8272 = vpop.permute.xlu0 %8271
        %8273 = vrot.lane.b32.xlu0 %v6621, 79
        %v8274 = vpop.permute.xlu0 %8273
        %8275 = vrot.lane.b32.xlu0 %v6622, 79
        %v8276 = vpop.permute.xlu0 %8275
        %8277 = vrot.lane.b32.xlu0 %v6623, 79
        %v8278 = vpop.permute.xlu0 %8277
        %8279 = vrot.lane.b32.xlu0 %v6624, 79
        %v8280 = vpop.permute.xlu0 %8279
        %8281 = vrot.lane.b32.xlu0 %v6625, 79
        %v8282 = vpop.permute.xlu0 %8281
        %8283 = vrot.lane.b32.xlu0 %v6626, 79
        %v8284 = vpop.permute.xlu0 %8283
        %8285 = vrot.lane.b32.xlu0 %v6627, 79
        %v8286 = vpop.permute.xlu0 %8285
        %8287 = vrot.lane.b32.xlu0 %v6628, 79
        %v8288 = vpop.permute.xlu0 %8287
        %8289 = vrot.lane.b32.xlu0 %v6629, 79
        %v8290 = vpop.permute.xlu0 %8289
        %8291 = vrot.lane.b32.xlu0 %v6630, 79
        %v8292 = vpop.permute.xlu0 %8291
        %v8293 = vsel %vm1376, %v8262, %v8264
        %v8294 = vsel %vm1376, %v8264, %v8266
        %v8295 = vsel %vm1376, %v8266, %v8268
        %v8296 = vsel %vm1376, %v8270, %v8272
        %v8297 = vsel %vm1376, %v8272, %v8274
        %v8298 = vsel %vm1376, %v8274, %v8276
        %v8299 = vsel %vm1376, %v8278, %v8280
        %v8300 = vsel %vm1376, %v8280, %v8282
        %v8301 = vsel %vm1376, %v8282, %v8284
        %v8302 = vsel %vm1376, %v8286, %v8288
        %v8303 = vsel %vm1376, %v8288, %v8290
        %v8304 = vsel %vm1376, %v8290, %v8292
        %v8315 = vsel %vm2014, %v8260, 0
        %v8318 = vsel %vm2018, %v8302, 0
        %v8321 = vsel %vm2018, %v8303, 0
        %v8324 = vsel %vm2018, %v8304, 0
        %8326 = vmatprep.subr.bf16.mxu0 %v8294
        %8327 = vmatpush1.bf16.msra.mxu0 %v8293
        %8328 = vmatprep.subr.bf16.mxu0 %v8297
        %8329 = vmatpush1.bf16.msra.mxu0 %v8296
        %8330 = vmatprep.subr.bf16.mxu0 %v8300
        %8331 = vmatpush1.bf16.msra.mxu0 %v8299
        %8332 = vmatprep.subr.bf16.mxu0 %v8321
        %8333 = vmatpush1.bf16.msra.mxu0 %v8318
        %8334 = vmatprep.subr.bf16.mxu0 0
        %8335 = vmatpush1.bf16.msra.mxu0 0
        %8336 = vmatprep.subr.bf16.mxu0 0
        %8337 = vmatpush1.bf16.msra.mxu0 0
        %8338 = vmatprep.subr.bf16.mxu0 0
        %8339 = vmatpush1.bf16.msra.mxu0 0
        %8340 = vmatprep.subr.bf16.mxu0 0
        %8341 = vmatpush1.bf16.msra.mxu0 0
        %8342 = vmatprep.subr.bf16.mxu0 0
        %8343 = vmatpush1.bf16.msra.mxu0 0
        %8344 = vmatprep.subr.bf16.mxu0 0
        %8345 = vmatpush1.bf16.msra.mxu0 0
        %8346 = vmatprep.subr.bf16.mxu0 0
        %8347 = vmatpush1.bf16.msra.mxu0 0
        %8348 = vmatprep.subr.bf16.mxu0 0
        %8349 = vmatpush1.bf16.msra.mxu0 0
        %8350 = vmatprep.subr.bf16.mxu0 0
        %8351 = vmatpush1.bf16.msra.mxu0 0
        %8352 = vmatprep.subr.bf16.mxu0 0
        %8353 = vmatpush1.bf16.msra.mxu0 0
        %8354 = vmatprep.subr.bf16.mxu0 0
        %8355 = vmatpush1.bf16.msra.mxu0 0
        %8356 = vmatprep.subr.bf16.mxu0 0
        %8357 = vmatpush1.bf16.msra.mxu0 0
        %8358 = vmatprep.mubr.bf16.mxu0 0
        %8359 = vmatmul.mubr.bf16.gmra.mrb[0].mxu0 %v8315
        %v8360 = vpop.f32.mrb[0].mxu0
        %v8361 = vadd.f32 0.0, %v8360
        %v8362 = vpop.f32.mrb[0].mxu0
        %v8363 = vadd.f32 0.0, %v8362
        %v8364 = vpop.f32.mrb[0].mxu0
        %v8365 = vadd.f32 0.0, %v8364
        %v8366 = vpop.f32.mrb[0].mxu0
        %v8367 = vadd.f32 0.0, %v8366
        %8368 = vdwg.mxu0
        %8369 = vmatprep.subr.bf16.mxu0 0
        %8370 = vmatpush1.bf16.msra.mxu0 %v8295
        %8371 = vmatprep.subr.bf16.mxu0 0
        %8372 = vmatpush1.bf16.msra.mxu0 %v8298
        %8373 = vmatprep.subr.bf16.mxu0 0
        %8374 = vmatpush1.bf16.msra.mxu0 %v8301
        %8375 = vmatprep.subr.bf16.mxu0 0
        %8376 = vmatpush1.bf16.msra.mxu0 %v8324
        %8377 = vmatprep.subr.bf16.mxu0 0
        %8378 = vmatpush1.bf16.msra.mxu0 0
        %8379 = vmatprep.subr.bf16.mxu0 0
        %8380 = vmatpush1.bf16.msra.mxu0 0
        %8381 = vmatprep.subr.bf16.mxu0 0
        %8382 = vmatpush1.bf16.msra.mxu0 0
        %8383 = vmatprep.subr.bf16.mxu0 0
        %8384 = vmatpush1.bf16.msra.mxu0 0
        %8385 = vmatprep.subr.bf16.mxu0 0
        %8386 = vmatpush1.bf16.msra.mxu0 0
        %8387 = vmatprep.subr.bf16.mxu0 0
        %8388 = vmatpush1.bf16.msra.mxu0 0
        %8389 = vmatprep.subr.bf16.mxu0 0
        %8390 = vmatpush1.bf16.msra.mxu0 0
        %8391 = vmatprep.subr.bf16.mxu0 0
        %8392 = vmatpush1.bf16.msra.mxu0 0
        %8393 = vmatprep.subr.bf16.mxu0 0
        %8394 = vmatpush1.bf16.msra.mxu0 0
        %8395 = vmatprep.subr.bf16.mxu0 0
        %8396 = vmatpush1.bf16.msra.mxu0 0
        %8397 = vmatprep.subr.bf16.mxu0 0
        %8398 = vmatpush1.bf16.msra.mxu0 0
        %8399 = vmatprep.subr.bf16.mxu0 0
        %8400 = vmatpush1.bf16.msra.mxu0 0
        %8401 = vmatprep.mubr.bf16.mxu0 0
        %8402 = vmatmul.mubr.bf16.gmra.mrb[0].mxu0 %v8315
        %v8403 = vpop.f32.mrb[0].mxu0
        %v8404 = vadd.f32 0.0, %v8403
        %v8405 = vpop.f32.mrb[0].mxu0
        %v8406 = vpop.f32.mrb[0].mxu0
        %v8407 = vadd.f32 0.0, %v8406
        %v8408 = vpop.f32.mrb[0].mxu0
        %8409 = vdwg.mxu0
        %v8410 = vadd.f32 %v8247, %v8361
        %v8411 = vadd.f32 %v8248, %v8363
        %v8412 = vadd.f32 %v8249, %v8404
        %v8413 = vadd.f32 %v8250, %v8365
        %v8414 = vadd.f32 %v8251, %v8367
        %v8415 = vadd.f32 %v8252, %v8407
        %s8416 = scalar_lea.vmem %s13, 192
        %v8417 = vld [vmem:[%s8416] sm:$0xf]
        %v8418 = vld [vmem:[%s8416 + $0x4] sm:$0x3]
        %v8421 = vunpack.c.l.b16 %v8417
        %v8422 = vunpack.c.l.b16 %v8418
        %v8423 = vpack.c.b16 %v8422, %v8421
        %8424 = vrot.lane.b32.xlu0 %v6615, 78
        %v8425 = vpop.permute.xlu0 %8424
        %8426 = vrot.lane.b32.xlu0 %v6616, 78
        %v8427 = vpop.permute.xlu0 %8426
        %8428 = vrot.lane.b32.xlu0 %v6617, 78
        %v8429 = vpop.permute.xlu0 %8428
        %8430 = vrot.lane.b32.xlu0 %v6618, 78
        %v8431 = vpop.permute.xlu0 %8430
        %8432 = vrot.lane.b32.xlu0 %v6619, 78
        %v8433 = vpop.permute.xlu0 %8432
        %8434 = vrot.lane.b32.xlu0 %v6620, 78
        %v8435 = vpop.permute.xlu0 %8434
        %8436 = vrot.lane.b32.xlu0 %v6621, 78
        %v8437 = vpop.permute.xlu0 %8436
        %8438 = vrot.lane.b32.xlu0 %v6622, 78
        %v8439 = vpop.permute.xlu0 %8438
        %8440 = vrot.lane.b32.xlu0 %v6623, 78
        %v8441 = vpop.permute.xlu0 %8440
        %8442 = vrot.lane.b32.xlu0 %v6624, 78
        %v8443 = vpop.permute.xlu0 %8442
        %8444 = vrot.lane.b32.xlu0 %v6625, 78
        %v8445 = vpop.permute.xlu0 %8444
        %8446 = vrot.lane.b32.xlu0 %v6626, 78
        %v8447 = vpop.permute.xlu0 %8446
        %8448 = vrot.lane.b32.xlu0 %v6627, 78
        %v8449 = vpop.permute.xlu0 %8448
        %8450 = vrot.lane.b32.xlu0 %v6628, 78
        %v8451 = vpop.permute.xlu0 %8450
        %8452 = vrot.lane.b32.xlu0 %v6629, 78
        %v8453 = vpop.permute.xlu0 %8452
        %8454 = vrot.lane.b32.xlu0 %v6630, 78
        %v8455 = vpop.permute.xlu0 %8454
        %v8456 = vsel %vm1407, %v8425, %v8427
        %v8457 = vsel %vm1407, %v8427, %v8429
        %v8458 = vsel %vm1407, %v8429, %v8431
        %v8459 = vsel %vm1407, %v8433, %v8435
        %v8460 = vsel %vm1407, %v8435, %v8437
        %v8461 = vsel %vm1407, %v8437, %v8439
        %v8462 = vsel %vm1407, %v8441, %v8443
        %v8463 = vsel %vm1407, %v8443, %v8445
        %v8464 = vsel %vm1407, %v8445, %v8447
        %v8465 = vsel %vm1407, %v8449, %v8451
        %v8466 = vsel %vm1407, %v8451, %v8453
        %v8467 = vsel %vm1407, %v8453, %v8455
        %v8478 = vsel %vm2014, %v8423, 0
        %v8481 = vsel %vm2018, %v8465, 0
        %v8484 = vsel %vm2018, %v8466, 0
        %v8487 = vsel %vm2018, %v8467, 0
        %8489 = vmatprep.subr.bf16.mxu0 %v8457
        %8490 = vmatpush1.bf16.msra.mxu0 %v8456
        %8491 = vmatprep.subr.bf16.mxu0 %v8460
        %8492 = vmatpush1.bf16.msra.mxu0 %v8459
        %8493 = vmatprep.subr.bf16.mxu0 %v8463
        %8494 = vmatpush1.bf16.msra.mxu0 %v8462
        %8495 = vmatprep.subr.bf16.mxu0 %v8484
        %8496 = vmatpush1.bf16.msra.mxu0 %v8481
        %8497 = vmatprep.subr.bf16.mxu0 0
        %8498 = vmatpush1.bf16.msra.mxu0 0
        %8499 = vmatprep.subr.bf16.mxu0 0
        %8500 = vmatpush1.bf16.msra.mxu0 0
        %8501 = vmatprep.subr.bf16.mxu0 0
        %8502 = vmatpush1.bf16.msra.mxu0 0
        %8503 = vmatprep.subr.bf16.mxu0 0
        %8504 = vmatpush1.bf16.msra.mxu0 0
        %8505 = vmatprep.subr.bf16.mxu0 0
        %8506 = vmatpush1.bf16.msra.mxu0 0
        %8507 = vmatprep.subr.bf16.mxu0 0
        %8508 = vmatpush1.bf16.msra.mxu0 0
        %8509 = vmatprep.subr.bf16.mxu0 0
        %8510 = vmatpush1.bf16.msra.mxu0 0
        %8511 = vmatprep.subr.bf16.mxu0 0
        %8512 = vmatpush1.bf16.msra.mxu0 0
        %8513 = vmatprep.subr.bf16.mxu0 0
        %8514 = vmatpush1.bf16.msra.mxu0 0
        %8515 = vmatprep.subr.bf16.mxu0 0
        %8516 = vmatpush1.bf16.msra.mxu0 0
        %8517 = vmatprep.subr.bf16.mxu0 0
        %8518 = vmatpush1.bf16.msra.mxu0 0
        %8519 = vmatprep.subr.bf16.mxu0 0
        %8520 = vmatpush1.bf16.msra.mxu0 0
        %8521 = vmatprep.mubr.bf16.mxu0 0
        %8522 = vmatmul.mubr.bf16.gmra.mrb[0].mxu0 %v8478
        %v8523 = vpop.f32.mrb[0].mxu0
        %v8524 = vadd.f32 0.0, %v8523
        %v8525 = vpop.f32.mrb[0].mxu0
        %v8526 = vadd.f32 0.0, %v8525
        %v8527 = vpop.f32.mrb[0].mxu0
        %v8528 = vadd.f32 0.0, %v8527
        %v8529 = vpop.f32.mrb[0].mxu0
        %v8530 = vadd.f32 0.0, %v8529
        %8531 = vdwg.mxu0
        %8532 = vmatprep.subr.bf16.mxu0 0
        %8533 = vmatpush1.bf16.msra.mxu0 %v8458
        %8534 = vmatprep.subr.bf16.mxu0 0
        %8535 = vmatpush1.bf16.msra.mxu0 %v8461
        %8536 = vmatprep.subr.bf16.mxu0 0
        %8537 = vmatpush1.bf16.msra.mxu0 %v8464
        %8538 = vmatprep.subr.bf16.mxu0 0
        %8539 = vmatpush1.bf16.msra.mxu0 %v8487
        %8540 = vmatprep.subr.bf16.mxu0 0
        %8541 = vmatpush1.bf16.msra.mxu0 0
        %8542 = vmatprep.subr.bf16.mxu0 0
        %8543 = vmatpush1.bf16.msra.mxu0 0
        %8544 = vmatprep.subr.bf16.mxu0 0
        %8545 = vmatpush1.bf16.msra.mxu0 0
        %8546 = vmatprep.subr.bf16.mxu0 0
        %8547 = vmatpush1.bf16.msra.mxu0 0
        %8548 = vmatprep.subr.bf16.mxu0 0
        %8549 = vmatpush1.bf16.msra.mxu0 0
        %8550 = vmatprep.subr.bf16.mxu0 0
        %8551 = vmatpush1.bf16.msra.mxu0 0
        %8552 = vmatprep.subr.bf16.mxu0 0
        %8553 = vmatpush1.bf16.msra.mxu0 0
        %8554 = vmatprep.subr.bf16.mxu0 0
        %8555 = vmatpush1.bf16.msra.mxu0 0
        %8556 = vmatprep.subr.bf16.mxu0 0
        %8557 = vmatpush1.bf16.msra.mxu0 0
        %8558 = vmatprep.subr.bf16.mxu0 0
        %8559 = vmatpush1.bf16.msra.mxu0 0
        %8560 = vmatprep.subr.bf16.mxu0 0
        %8561 = vmatpush1.bf16.msra.mxu0 0
        %8562 = vmatprep.subr.bf16.mxu0 0
        %8563 = vmatpush1.bf16.msra.mxu0 0
        %8564 = vmatprep.mubr.bf16.mxu0 0
        %8565 = vmatmul.mubr.bf16.gmra.mrb[0].mxu0 %v8478
        %v8566 = vpop.f32.mrb[0].mxu0
        %v8567 = vadd.f32 0.0, %v8566
        %v8568 = vpop.f32.mrb[0].mxu0
        %v8569 = vpop.f32.mrb[0].mxu0
        %v8570 = vadd.f32 0.0, %v8569
        %v8571 = vpop.f32.mrb[0].mxu0
        %8572 = vdwg.mxu0
        %v8573 = vadd.f32 %v8410, %v8524
        %v8574 = vadd.f32 %v8411, %v8526
        %v8575 = vadd.f32 %v8412, %v8567
        %v8576 = vadd.f32 %v8413, %v8528
        %v8577 = vadd.f32 %v8414, %v8530
        %v8578 = vadd.f32 %v8415, %v8570
        %v8579 = vld [vmem:[%s14] sm:$0xff]
        %v8580 = vld [vmem:[%s14 + $0x8] sm:$0xf]
        %8582 = vset.pattern.permute.xlu0 0
        %8583 = vperm.xlu0 %8582, %v8579
        %v8584 = vpop.permute.xlu0 %8583
        %8587 = vset.pattern.permute.xlu0 0
        %8588 = vperm.xlu0 %8587, %v8580
        %v8589 = vpop.permute.xlu0 %8588
        %v8591 = vadd.f32 %v8573, %v8584
        %v8592 = vadd.f32 %v8574, %v8584
        %v8593 = vadd.f32 %v8575, %v8584
        %v8594 = vadd.f32 %v8576, %v8589
        %v8595 = vadd.f32 %v8577, %v8589
        %v8596 = vadd.f32 %v8578, %v8589
        %8597 = vst [vmem:[%s567] sm:$0xff] %v8591
        %8598 = vst [vmem:[%s567 + $0x8] sm:$0xff] %v8592
        %8599 = vst [vmem:[%s567 + $0x10] sm:$0xff] %v8593
        %8600 = vst [vmem:[%s567 + $0x18] sm:$0xf] %v8594
        %8601 = vst [vmem:[%s567 + $0x20] sm:$0xf] %v8595
        %8602 = vst [vmem:[%s567 + $0x28] sm:$0xf] %v8596
        %p8603 = scmp.lt.s32.totalorder %s29, 1
        %s8604 = scalar_select %p8603, %s29, 1
        %s8605 = smul.addr %s8604, 6
        %s8606 = smul.addr %s8605, 8
        %s8607 = scalar_lea.vmem %s15, %s8606
        // Predicated region
        $region101: #{fsrcnn_pallas.1} parent=79 // pred_check
          %p8608 = pneg %p367
        $region102: #{fsrcnn_pallas.1} parent=79 // pred_check_branch
          %8610 = sbr.rel (%p8608) target = $region104
        $region103: #{fsrcnn_pallas.1} parent=79 // pred_region
          _
        $region104: #{fsrcnn_pallas.1} parent=79 // pred_fallthru
          _
      $region80: #{fsrcnn_pallas.1} parent=5 // pred_fallthru
        _
      %p8611 = scmp.le.s32.totalorder 2, %s24
      // Predicated region
      $region105: #{fsrcnn_pallas.1} parent=5 // pred_check
        %p8612 = pneg %p8611
      $region106: #{fsrcnn_pallas.1} parent=5 // pred_check_branch
        %8614 = sbr.rel (%p8612) target = $region108
      $region107: #{fsrcnn_pallas.1} parent=5 // pred_region
        %s8615 = ssub.s32 %s24, 2
        // Predicated region
        $region109: #{fsrcnn_pallas.1} parent=107 // pred_check
          %p8616 = pneg %p373
        $region110: #{fsrcnn_pallas.1} parent=107 // pred_check_branch
          %8618 = sbr.rel (%p8616) target = $region112
        $region111: #{fsrcnn_pallas.1} parent=107 // pred_region
          %p8619 = scmp.lt.s32.totalorder %s30, 1
          %s8620 = scalar_select %p8619, %s30, 1
          %s8621 = smul.addr %s8620, 6
          %s8622 = smul.addr %s8621, 8
          %s8623 = scalar_lea.vmem %s15, %s8622
        $region112: #{fsrcnn_pallas.1} parent=107 // pred_fallthru
          _
      $region108: #{fsrcnn_pallas.1} parent=5 // pred_fallthru
        _
    $region6: #{fsrcnn_pallas.1} parent=1 // loop_footer
      %s28 = sadd.s32 1, %s24
    $region7: #{fsrcnn_pallas.1} parent=1 // loop_footer_branch
      %23 = sbr.rel target = $region3
    $region8: #{fsrcnn_pallas.1} parent=1 // loop_exit
      _
    %8624 = vsyncpa [#allocation7], 1
    %s8625 = scalar_lea.sflag [#allocation7], 1
    %8626 = vsyncpa %s8625, 1
    %8627 = vsyncpa [#allocation9], 1
    %8628 = vsyncpa [#allocation12], 1

</llo_original>
